<compile_context>
chip_gen: v6e
topology: v6e:2x2x1
jax: 0.10.0
libtpu: 0.0.40
codegen_flags: <defaults>
</compile_context>

<pallas_src>
import functools

import jax
import jax.numpy as jnp
from jax import lax
from jax.experimental import pallas as pl
from jax.experimental.pallas import tpu as pltpu

# Physical constants from the PyTorch module.
G = 9.8
L = 1.0
M = 1.0
MU = 0.01

_INV_ML2 = 1.0 / (M * L ** 2)


def _pendulum_kernel(num_steps, dt_ref, ctrl_ref, x_ref, o_ref):
    """Explicit-Euler pendulum step(s) on one (2, TB, D) state tile.

    dt_ref   : SMEM (1,)        -- time step (runtime scalar, no retrace on change).
    ctrl_ref : SMEM (dim_ctrl,) -- control parameter; only ctrl_ref[0] is used.
    x_ref    : VMEM (2, TB, D)  -- [theta; omega] tile.
    o_ref    : VMEM (2, TB, D)  -- next-state tile.
    num_steps: static Python int -- number of fused integration steps (1 = module).
    """
    dt = dt_ref[0]
    c0 = ctrl_ref[0]

    # Fold scalar constants once (scalar path; free relative to vector work).
    a_sin = dt * (G / L)                  # dt * g/l
    a_damp = 1.0 - dt * (MU * _INV_ML2)   # 1 - dt * mu/(m l^2)
    a_ctrl = dt * (c0 * _INV_ML2)         # dt * c0/(m l^2)

    def step(_, carry):
        x0, x1 = carry
        n0 = x0 + dt * x1
        n1 = x1 * a_damp + a_sin * jnp.sin(x0) + a_ctrl
        return n0, n1

    x0, x1 = lax.fori_loop(
        0, num_steps, step, (x_ref[0], x_ref[1]), unroll=(num_steps <= 8)
    )
    o_ref[0] = x0
    o_ref[1] = x1


@functools.partial(jax.jit, static_argnames=("block_rows", "num_steps"))
def inverse_pendulum_forward(x, control, time_step, *, block_rows=512, num_steps=1):
    """x: (2, B, D) f32, control: (dim_ctrl,) f32, time_step: scalar -> (2, B, D) f32.

    num_steps=1 matches the PyTorch module exactly; num_steps>1 fuses that many
    Euler steps in-kernel (state stays resident in VMEM between steps).
    """
    assert x.ndim == 3 and x.shape[0] == 2
    _, B, D = x.shape

    # Large lane-dense tiles: full D (multiple-of-128 or full-extent), up to
    # 512 rows of B per tile. tb is either a multiple of 8 (512) or the full
    # B extent, so the (8, 128) block constraint is always satisfied.
    tb = min(block_rows, B)
    grid = (pl.cdiv(B, tb),)

    dt_arr = jnp.asarray(time_step, dtype=jnp.float32).reshape(1)
    ctrl_arr = control.astype(jnp.float32)

    kernel = functools.partial(_pendulum_kernel, num_steps)

    return pl.pallas_call(
        kernel,
        out_shape=jax.ShapeDtypeStruct(x.shape, x.dtype),
        grid=grid,
        in_specs=[
            pl.BlockSpec(memory_space=pltpu.SMEM),            # dt      (1,)
            pl.BlockSpec(memory_space=pltpu.SMEM),            # control (dim_ctrl,)
            pl.BlockSpec((2, tb, D), lambda i: (0, i, 0)),    # state tile
        ],
        out_specs=pl.BlockSpec((2, tb, D), lambda i: (0, i, 0)),
        compiler_params=pltpu.CompilerParams(
            dimension_semantics=("parallel",),                # megacore-shard over B tiles
        ),
    )(dt_arr, ctrl_arr, x)


def inverse_pendulum_reference(x, control, time_step):
    """Pure-JAX reference mirroring the PyTorch forward exactly."""
    sinx0 = jnp.sin(x[0])
    nxt0 = x[0] + time_step * x[1]
    nxt1 = x[1] + time_step * (G / L * sinx0
                               - MU / (M * L ** 2) * x[1]
                               + 1.0 / (M * L ** 2) * control[0])
    return jnp.stack((nxt0, nxt1))


if __name__ == "__main__":
    key = jax.random.PRNGKey(0)
    k_ctrl, k_x = jax.random.split(key)

    time_step = 0.01
    dim_ctrl = 4

    # Deterministic "torch.rand(dim_ctrl)"-style init in [0, 1).
    control = jax.random.uniform(k_ctrl, (dim_ctrl,), dtype=jnp.float32)

    # State: (2, B, D) -- state index, then (sublane, lane) dims.
    # B=1024 with tb=512 exercises a 2-step pipelined grid; still ~1 MiB total.
    B, D = 1024, 128
    x = jax.random.normal(k_x, (2, B, D), dtype=jnp.float32)

    # Single step (matches the PyTorch module).
    out = inverse_pendulum_forward(x, control, time_step)
    out = jax.block_until_ready(out)
    ref = inverse_pendulum_reference(x, control, time_step)
    assert out.shape == (2, B, D) and out.dtype == jnp.float32
    assert jnp.allclose(out, ref, atol=1e-5, rtol=1e-5)

    # Fused multi-step rollout (3 Euler steps in one kernel call).
    out3 = inverse_pendulum_forward(x, control, time_step, num_steps=3)
    out3 = jax.block_until_ready(out3)
    ref3 = x
    for _ in range(3):
        ref3 = inverse_pendulum_reference(ref3, control, time_step)
    assert jnp.allclose(out3, ref3, atol=1e-5, rtol=1e-5)

    print("KERNEL_OK")
</pallas_src>

<mosaic_0001>
module attributes {stable_mosaic.version = 11 : i64} {
  func.func @_pendulum_kernel(%arg0: i32, %arg1: memref<1xf32, #tpu.memory_space<smem>>, %arg2: memref<4xf32, #tpu.memory_space<smem>>, %arg3: memref<2x512x128xf32, #tpu.memory_space<vmem>>, %arg4: memref<2x512x128xf32, #tpu.memory_space<vmem>>) attributes {dimension_semantics = [#tpu.dimension_semantics<parallel>], iteration_bounds = array<i64: 2>, scalar_prefetch = 0 : i64, scratch_operands = 0 : i64, tpu.core_type = #tpu.core_type<tc>, window_params = [{transform_indices = @transform_0, window_bounds = array<i64: 1>}, {transform_indices = @transform_1, window_bounds = array<i64: 4>}, {transform_indices = @transform_2, window_bounds = array<i64: 2, 512, 128>}, {transform_indices = @transform_3, window_bounds = array<i64: 2, 512, 128>}]} {
    %c0 = arith.constant 0 : index
    %0 = memref.load %arg1[%c0] : memref<1xf32, #tpu.memory_space<smem>>
    %c0_0 = arith.constant 0 : index
    %1 = memref.load %arg2[%c0_0] : memref<4xf32, #tpu.memory_space<smem>>
    %cst = arith.constant 9.800000e+00 : f32
    %2 = arith.mulf %0, %cst : f32
    %cst_1 = arith.constant 0.00999999977 : f32
    %3 = arith.mulf %0, %cst_1 : f32
    %cst_2 = arith.constant 1.000000e+00 : f32
    %4 = arith.subf %cst_2, %3 : f32
    %cst_3 = arith.constant 1.000000e+00 : f32
    %5 = arith.mulf %1, %cst_3 : f32
    %6 = arith.mulf %0, %5 : f32
    %c0_4 = arith.constant 0 : index
    %c0_5 = arith.constant 0 : index
    %c0_6 = arith.constant 0 : index
    %7 = vector.load %arg3[%c0_4, %c0_5, %c0_6] : memref<2x512x128xf32, #tpu.memory_space<vmem>>, vector<1x512x128xf32>
    %8 = vector.shape_cast %7 : vector<1x512x128xf32> to vector<512x128xf32>
    %c1 = arith.constant 1 : index
    %c0_7 = arith.constant 0 : index
    %c0_8 = arith.constant 0 : index
    %9 = vector.load %arg3[%c1, %c0_7, %c0_8] : memref<2x512x128xf32, #tpu.memory_space<vmem>>, vector<1x512x128xf32>
    %10 = vector.shape_cast %9 : vector<1x512x128xf32> to vector<512x128xf32>
    %c0_i32 = arith.constant 0 : i32
    %11 = vector.broadcast %0 : f32 to vector<512x128xf32>
    %12 = arith.mulf %11, %10 : vector<512x128xf32>
    %13 = arith.addf %8, %12 : vector<512x128xf32>
    %14 = vector.broadcast %4 : f32 to vector<512x128xf32>
    %15 = arith.mulf %10, %14 : vector<512x128xf32>
    %16 = math.sin %8 : vector<512x128xf32>
    %17 = vector.broadcast %2 : f32 to vector<512x128xf32>
    %18 = arith.mulf %17, %16 : vector<512x128xf32>
    %19 = arith.addf %15, %18 : vector<512x128xf32>
    %20 = vector.broadcast %6 : f32 to vector<512x128xf32>
    %21 = arith.addf %19, %20 : vector<512x128xf32>
    %c0_9 = arith.constant 0 : index
    %c0_10 = arith.constant 0 : index
    %c0_11 = arith.constant 0 : index
    %22 = vector.load %arg4[%c0_9, %c0_10, %c0_11] : memref<2x512x128xf32, #tpu.memory_space<vmem>>, vector<1x512x128xf32>
    %23 = vector.shape_cast %22 : vector<1x512x128xf32> to vector<512x128xf32>
    %24 = vector.shape_cast %13 : vector<512x128xf32> to vector<1x512x128xf32>
    tpu.vector_store %arg4[%c0_9, %c0_10, %c0_11], %24 {strides = array<i32>} : memref<2x512x128xf32, #tpu.memory_space<vmem>>, vector<1x512x128xf32>,
    %c1_12 = arith.constant 1 : index
    %c0_13 = arith.constant 0 : index
    %c0_14 = arith.constant 0 : index
    %25 = vector.load %arg4[%c1_12, %c0_13, %c0_14] : memref<2x512x128xf32, #tpu.memory_space<vmem>>, vector<1x512x128xf32>
    %26 = vector.shape_cast %25 : vector<1x512x128xf32> to vector<512x128xf32>
    %27 = vector.shape_cast %21 : vector<512x128xf32> to vector<1x512x128xf32>
    tpu.vector_store %arg4[%c1_12, %c0_13, %c0_14], %27 {strides = array<i32>} : memref<2x512x128xf32, #tpu.memory_space<vmem>>, vector<1x512x128xf32>,
    return
  }
  func.func @transform_0(%arg0: i32) -> i32 {
    %c0_i32 = arith.constant 0 : i32
    %c0_i32_0 = arith.constant 0 : i32
    return %c0_i32 : i32
  }
  func.func @transform_1(%arg0: i32) -> i32 {
    %c0_i32 = arith.constant 0 : i32
    %c0_i32_0 = arith.constant 0 : i32
    return %c0_i32 : i32
  }
  func.func @transform_2(%arg0: i32) -> (i32, i32, i32) {
    %c0_i32 = arith.constant 0 : i32
    %c0_i32_0 = arith.constant 0 : i32
    %c0_i32_1 = arith.constant 0 : i32
    return %c0_i32, %arg0, %c0_i32_0 : i32, i32, i32
  }
  func.func @transform_3(%arg0: i32) -> (i32, i32, i32) {
    %c0_i32 = arith.constant 0 : i32
    %c0_i32_0 = arith.constant 0 : i32
    %c0_i32_1 = arith.constant 0 : i32
    return %c0_i32, %arg0, %c0_i32_0 : i32, i32, i32
  }
}

</mosaic_0001>

<llo_original>
// kernel: inverse_pendulum_forward.1
$region0: #{inverse_pendulum_forward.1}
  #allocation0 [shape = 'u32[]', space=smem, size = 0x4, offset = 0x4, fixed_abs, tag = 'smem constant byte address 0x4 - core index']
  #allocation1 [shape = 'u32[144,128]{1,0:T(1,128)}', space=vmem, size = 0x12000, scoped, tag = 'internal scratch']
  #allocation2 [shape = 'f32[1]{0:T(128)S(6)}', space=smem, size = 0x200, scoped, tag = 'scoped memory for inverse_pendulum_forward.1']
  #allocation9 [shape = 's32[]', space=sflag, size = 0x4, offset = 0, fixed_abs, tag = 'sflag constant byte address 0x0 - dummy sync flag']
  #allocation11 [shape = 's32[]', space=sflag, size = 0x4, offset = 0, fixed_abs, tag = 'sflag constant byte address 0x0 - dummy sync flag']
  %s0 = inlined_call_operand.<no memory space> [shape: f32[1], index: 0, kind: input, shape index: {}]
  %s1 = inlined_call_operand.vmem [shape: f32[4], index: 1, kind: input, shape index: {}]
  %s2 = inlined_call_operand.hbm [shape: f32[2,1024,128], index: 2, kind: input, shape index: {}]
  %s3 = inlined_call_operand.hbm [shape: f32[2,1024,128], index: 3, kind: output, shape index: {}]
  %s4 = sld [smem:[#allocation0]]
  $region53: #{inverse_pendulum_forward.1} parent=0
    _
  %s6 = ssub.s32 1, %s4
  %s7 = scalar_select 0, %s6, %s4
  %8 = sst [smem:[#allocation2]] %s0
  $region1: #{inverse_pendulum_forward.1} parent=0
    #allocation3 [shape = 'u8[512]{0}', space=smem, size = 0x200, scoped, tag = 'input window, operand 1, single buffered']
    #allocation4 [shape = 's32[2]{0}', space=sflag, size = 0x8, scoped, tag = 'scoped memory for inverse_pendulum_forward.1']
    #allocation5 [shape = 's32[2]{0}', space=sflag, size = 0x8, scoped, tag = 'scoped memory for inverse_pendulum_forward.1']
    #allocation6 [shape = 's32[2]{0}', space=sflag, size = 0x8, scoped, tag = 'scoped memory for inverse_pendulum_forward.1']
    #allocation7 [shape = 'u8[1048576]{0}', space=vmem, size = 0x100000, scoped, tag = 'input window, operand 2']
    #allocation8 [shape = 'u8[1048576]{0}', space=vmem, size = 0x100000, scoped, tag = 'output window, operand 0']
    %9 = vsyncpa [#allocation6], 0
    %10 = vsyncpa [#allocation4], 0
    %s11 = scalar_lea.sflag [#allocation4], 1
    %12 = vsyncpa %s11, 0
    %13 = vsyncpa [#allocation5], 0
    %s14 = scalar_lea.sflag [#allocation5], 1
    %15 = vsyncpa %s14, 0
    loop: start=0, step=1, limit=4
    $region2: #{inverse_pendulum_forward.1} parent=1 // loop_pre_header
      _
    $region3: #{inverse_pendulum_forward.1} parent=1 // loop_header
      %s17 = sphi 0, %s21
      %p18 = scmp.ge.s32.totalorder %s17, 4
      %s25 = sphi 0, %s25
      %s27 = sphi 0, %s25
      %s28 = sphi 0, %s27
      %s42 = sphi 0, %s28
      %s46 = sphi 0, %s46
      %s48 = sphi 0, %s46
      %s49 = sphi 0, %s48
      %s63 = sphi 0, %s49
      %s69 = sphi 0, %s71
      %s72 = sphi 0, %s69
      %s73 = sphi 0, %s72
      %s89 = sphi 0, %s73
      %s95 = sphi 0, %s97
      %s98 = sphi 0, %s95
      %s99 = sphi 0, %s98
      %s115 = sphi 0, %s99
    $region4: #{inverse_pendulum_forward.1} parent=1 // loop_header_branch
      %20 = sbr.rel (%p18) target = $region8
    $region5: #{inverse_pendulum_forward.1} parent=1 // loop_body
      %s22 = ssub.s32 %s17, 1
      %s23 = ssub.s32 %s17, 2
      %s24 = sadd.s32 %s17, 1
      %s26 = sadd.s32 %s25, 1
      %p29 = scmp.eq.s32.totalorder %s17, 1
      %p30 = scmp.ne.s32.totalorder %s25, %s27
      %p31 = scmp.eq.s32.totalorder %s17, 0
      %p32 = por %p30, %p31
      %p33 = scmp.ne.s32.totalorder %s25, %s27
      %p34 = scmp.eq.s32.totalorder %s22, 1
      %p35 = por %p33, %p34
      %p36 = scmp.ne.s32.totalorder %s27, %s28
      %p37 = scmp.eq.s32.totalorder %s22, 0
      %p38 = por %p36, %p37
      %p39 = scmp.ne.s32.totalorder %s27, %s28
      %p40 = scmp.eq.s32.totalorder %s23, 1
      %p41 = por %p39, %p40
      %p43 = scmp.ne.s32.totalorder %s28, %s42
      %p44 = scmp.eq.s32.totalorder %s23, 0
      %p45 = por %p43, %p44
      %s47 = sadd.s32 %s46, 1
      %p50 = scmp.eq.s32.totalorder %s17, 1
      %p51 = scmp.ne.s32.totalorder %s46, %s48
      %p52 = scmp.eq.s32.totalorder %s17, 0
      %p53 = por %p51, %p52
      %p54 = scmp.ne.s32.totalorder %s46, %s48
      %p55 = scmp.eq.s32.totalorder %s22, 1
      %p56 = por %p54, %p55
      %p57 = scmp.ne.s32.totalorder %s48, %s49
      %p58 = scmp.eq.s32.totalorder %s22, 0
      %p59 = por %p57, %p58
      %p60 = scmp.ne.s32.totalorder %s48, %s49
      %p61 = scmp.eq.s32.totalorder %s23, 1
      %p62 = por %p60, %p61
      %p64 = scmp.ne.s32.totalorder %s49, %s63
      %p65 = scmp.eq.s32.totalorder %s23, 0
      %p66 = por %p64, %p65
      %s67 = ssub.s32 %s17, %s24
      %p68 = scmp.eq.s32.totalorder %s67, 0
      %s70 = sadd.s32 %s69, 1
      %s71 = scalar_select %p68, %s69, %s70
      %p74 = pneg %p68
      %p75 = scmp.eq.s32.totalorder %s17, 1
      %p76 = por %p74, %p75
      %p77 = scmp.ne.s32.totalorder %s69, %s72
      %p78 = scmp.eq.s32.totalorder %s17, 0
      %p79 = por %p77, %p78
      %p80 = scmp.ne.s32.totalorder %s69, %s72
      %p81 = scmp.eq.s32.totalorder %s22, 1
      %p82 = por %p80, %p81
      %p83 = scmp.ne.s32.totalorder %s72, %s73
      %p84 = scmp.eq.s32.totalorder %s22, 0
      %p85 = por %p83, %p84
      %p86 = scmp.ne.s32.totalorder %s72, %s73
      %p87 = scmp.eq.s32.totalorder %s23, 1
      %p88 = por %p86, %p87
      %p90 = scmp.ne.s32.totalorder %s73, %s89
      %p91 = scmp.eq.s32.totalorder %s23, 0
      %p92 = por %p90, %p91
      %s93 = ssub.s32 %s17, %s24
      %p94 = scmp.eq.s32.totalorder %s93, 0
      %s96 = sadd.s32 %s95, 1
      %s97 = scalar_select %p94, %s95, %s96
      %p100 = pneg %p94
      %p101 = scmp.eq.s32.totalorder %s17, 1
      %p102 = por %p100, %p101
      %p103 = scmp.ne.s32.totalorder %s95, %s98
      %p104 = scmp.eq.s32.totalorder %s17, 0
      %p105 = por %p103, %p104
      %p106 = scmp.ne.s32.totalorder %s95, %s98
      %p107 = scmp.eq.s32.totalorder %s22, 1
      %p108 = por %p106, %p107
      %p109 = scmp.ne.s32.totalorder %s98, %s99
      %p110 = scmp.eq.s32.totalorder %s22, 0
      %p111 = por %p109, %p110
      %p112 = scmp.ne.s32.totalorder %s98, %s99
      %p113 = scmp.eq.s32.totalorder %s23, 1
      %p114 = por %p112, %p113
      %p116 = scmp.ne.s32.totalorder %s99, %s115
      %p117 = scmp.eq.s32.totalorder %s23, 0
      %p118 = por %p116, %p117
      %p119 = scmp.le.s32.totalorder 1, %s17
      %p120 = scmp.lt.s32.totalorder %s17, 3
      %p121 = pnand %p119, %p120
      %p122 = pneg %p121
      // Predicated region
      $region9: #{inverse_pendulum_forward.1} parent=5 // pred_check
        _
      $region10: #{inverse_pendulum_forward.1} parent=5 // pred_check_branch
        %124 = sbr.rel (%p121) target = $region12
      $region11: #{inverse_pendulum_forward.1} parent=5 // pred_region
        %s125 = ssub.s32 %s17, 1
        // Predicated region
        $region13: #{inverse_pendulum_forward.1} parent=11 // pred_check
          %p126 = pneg %p38
        $region14: #{inverse_pendulum_forward.1} parent=11 // pred_check_branch
          %128 = sbr.rel (%p126) target = $region16
        $region15: #{inverse_pendulum_forward.1} parent=11 // pred_region
          _
        $region16: #{inverse_pendulum_forward.1} parent=11 // pred_fallthru
          _
        // Predicated region
        $region17: #{inverse_pendulum_forward.1} parent=11 // pred_check
          %p129 = pneg %p59
        $region18: #{inverse_pendulum_forward.1} parent=11 // pred_check_branch
          %131 = sbr.rel (%p129) target = $region20
        $region19: #{inverse_pendulum_forward.1} parent=11 // pred_region
          %s133 = ssub.s32 16, 16
          %134 = vsyncadd [#allocation6], %s133
          %s136 = sshll.u32 %s1, 4
          %s137 = int_to_ptr.vmem [resolvable:$true] %s136
          %139 = dma.vmem_to_smem %s137, 16, [#allocation3], [#allocation6]
        $region20: #{inverse_pendulum_forward.1} parent=11 // pred_fallthru
          _
      $region12: #{inverse_pendulum_forward.1} parent=5 // pred_fallthru
        _
      %p140 = scmp.lt.s32.totalorder %s17, 2
      // Predicated region
      $region21: #{inverse_pendulum_forward.1} parent=5 // pred_check
        %p141 = pneg %p140
      $region22: #{inverse_pendulum_forward.1} parent=5 // pred_check_branch
        %143 = sbr.rel (%p141) target = $region24
      $region23: #{inverse_pendulum_forward.1} parent=5 // pred_region
        // Predicated region
        $region25: #{inverse_pendulum_forward.1} parent=23 // pred_check
          %p144 = pneg %p79
        $region26: #{inverse_pendulum_forward.1} parent=23 // pred_check_branch
          %146 = sbr.rel (%p144) target = $region28
        $region27: #{inverse_pendulum_forward.1} parent=23 // pred_region
          #allocation10 [shape = 'u32[6]{0}', space=smem, size = 0x18, scoped, tag = 'DMA stride descriptor']
          %s147 = sand.u32 %s69, 1
          %s148 = scalar_lea.sflag [#allocation4], %s147
          %s149 = sand.u32 %s69, 1
          %s150 = smul.addr %s149, 1024
          %s151 = scalar_lea.vmem [#allocation7], %s150
          %s152 = smul.u32 64, %s17
          %s154 = ssub.s32 16384, 16384
          %155 = vsyncadd %s148, %s154
          %s156 = smul.addr %s152, 128
          %s157 = scalar_lea.hbm %s2, %s156
          %s159 = sshll.u32 1, 14
          %s160 = sxor.u32 4294967295, %s159
          %s162 = sld [smem:[#allocation0]]
          %s163 = sadd.s32 2, %s162
          %s165 = sshll.u32 7, 26
          %s166 = sxor.u32 4294967295, %s165
          %s167 = sand.u32 0, %s166
          %s168 = sshll.u32 %s163, 26
          %s169 = sor.u32 %s167, %s168
          %s170 = sshll.u32 %s151, 4
          %s171 = int_to_ptr.vmem [resolvable:$true] %s170
          %177 = sst [smem:[#allocation10]] 16384
          %s178 = scalar_lea.smem [#allocation10], 1
          %179 = sst [smem:[%s178]] 8192
          %s180 = scalar_lea.smem [#allocation10], 2
          %181 = sst [smem:[%s180]] 64
          %s182 = scalar_lea.smem [#allocation10], 3
          %183 = sst [smem:[%s182]] 128
          %s184 = scalar_lea.smem [#allocation10], 4
          %185 = sst [smem:[%s184]] 128
          %s186 = scalar_lea.smem [#allocation10], 5
          %187 = sst [smem:[%s186]] 8
          %189 = dma.general %s157, 16384, %s171, %s148, 131072, [#allocation10], %s169, 0
        $region28: #{inverse_pendulum_forward.1} parent=23 // pred_fallthru
          _
      $region24: #{inverse_pendulum_forward.1} parent=5 // pred_fallthru
        _
      %p190 = scmp.le.s32.totalorder 1, %s17
      %p191 = scmp.lt.s32.totalorder %s17, 3
      %p192 = pnand %p190, %p191
      %p193 = pneg %p192
      // Predicated region
      $region29: #{inverse_pendulum_forward.1} parent=5 // pred_check
        _
      $region30: #{inverse_pendulum_forward.1} parent=5 // pred_check_branch
        %195 = sbr.rel (%p192) target = $region32
      $region31: #{inverse_pendulum_forward.1} parent=5 // pred_region
        %s196 = ssub.s32 %s17, 1
        // Predicated region
        $region33: #{inverse_pendulum_forward.1} parent=31 // pred_check
          %p197 = pneg %p59
        $region34: #{inverse_pendulum_forward.1} parent=31 // pred_check_branch
          %199 = sbr.rel (%p197) target = $region36
        $region35: #{inverse_pendulum_forward.1} parent=31 // pred_region
          %200 = dma.done [#allocation6], 16
        $region36: #{inverse_pendulum_forward.1} parent=31 // pred_fallthru
          _
        %s201 = sand.u32 %s72, 1
        %s202 = scalar_lea.sflag [#allocation4], %s201
        %s203 = sand.u32 %s72, 1
        %s204 = smul.addr %s203, 1024
        %s205 = scalar_lea.vmem [#allocation7], %s204
        // Predicated region
        $region37: #{inverse_pendulum_forward.1} parent=31 // pred_check
          %p206 = pneg %p85
        $region38: #{inverse_pendulum_forward.1} parent=31 // pred_check_branch
          %208 = sbr.rel (%p206) target = $region40
        $region39: #{inverse_pendulum_forward.1} parent=31 // pred_region
          %209 = dma.done %s202, 16384
        $region40: #{inverse_pendulum_forward.1} parent=31 // pred_fallthru
          _
        %210 = sfence
        %p211 = pneg %p38
        %p212 = pneg %p35
        %p213 = pneg %p59
        %p214 = pneg %p56
        %s215 = sand.u32 %s72, 1
        %s216 = scalar_lea.sflag [#allocation4], %s215
        %s217 = sand.u32 %s72, 1
        %s218 = smul.addr %s217, 1024
        %s219 = scalar_lea.vmem [#allocation7], %s218
        %p220 = pneg %p85
        %p221 = pneg %p82
        %p222 = pneg %p111
        %p223 = pneg %p108
        %s224 = sand.u32 %s98, 1
        %s225 = scalar_lea.sflag [#allocation5], %s224
        %s226 = sand.u32 %s98, 1
        %s227 = smul.addr %s226, 1024
        %s228 = scalar_lea.vmem [#allocation8], %s227
        %s229 = smul.u32 64, %s22
        %s230 = smul.u32 64, %s22
        %s231 = sld [smem:[#allocation2]]
        %s232 = sld [smem:[#allocation3]]
        %s233 = smul.f32 %s231, 9.8
        %s234 = smul.f32 %s231, 0.01
        %s235 = ssub.f32 1.0, %s234
        %s236 = smul.f32 %s231, %s232
        %v237 = vld [vmem:[%s205] sm:$0xff]
        %v238 = vld [vmem:[%s205 + $0x8] sm:$0xff]
        %v239 = vld [vmem:[%s205 + $0x10] sm:$0xff]
        %v240 = vld [vmem:[%s205 + $0x18] sm:$0xff]
        %v241 = vld [vmem:[%s205 + $0x20] sm:$0xff]
        %v242 = vld [vmem:[%s205 + $0x28] sm:$0xff]
        %v243 = vld [vmem:[%s205 + $0x30] sm:$0xff]
        %v244 = vld [vmem:[%s205 + $0x38] sm:$0xff]
        %v245 = vld [vmem:[%s205 + $0x40] sm:$0xff]
        %v246 = vld [vmem:[%s205 + $0x48] sm:$0xff]
        %v247 = vld [vmem:[%s205 + $0x50] sm:$0xff]
        %v248 = vld [vmem:[%s205 + $0x58] sm:$0xff]
        %v249 = vld [vmem:[%s205 + $0x60] sm:$0xff]
        %v250 = vld [vmem:[%s205 + $0x68] sm:$0xff]
        %v251 = vld [vmem:[%s205 + $0x70] sm:$0xff]
        %v252 = vld [vmem:[%s205 + $0x78] sm:$0xff]
        %v253 = vld [vmem:[%s205 + $0x80] sm:$0xff]
        %v254 = vld [vmem:[%s205 + $0x88] sm:$0xff]
        %v255 = vld [vmem:[%s205 + $0x90] sm:$0xff]
        %v256 = vld [vmem:[%s205 + $0x98] sm:$0xff]
        %v257 = vld [vmem:[%s205 + $0xa0] sm:$0xff]
        %v258 = vld [vmem:[%s205 + $0xa8] sm:$0xff]
        %v259 = vld [vmem:[%s205 + $0xb0] sm:$0xff]
        %v260 = vld [vmem:[%s205 + $0xb8] sm:$0xff]
        %v261 = vld [vmem:[%s205 + $0xc0] sm:$0xff]
        %v262 = vld [vmem:[%s205 + $0xc8] sm:$0xff]
        %v263 = vld [vmem:[%s205 + $0xd0] sm:$0xff]
        %v264 = vld [vmem:[%s205 + $0xd8] sm:$0xff]
        %v265 = vld [vmem:[%s205 + $0xe0] sm:$0xff]
        %v266 = vld [vmem:[%s205 + $0xe8] sm:$0xff]
        %v267 = vld [vmem:[%s205 + $0xf0] sm:$0xff]
        %v268 = vld [vmem:[%s205 + $0xf8] sm:$0xff]
        %v269 = vld [vmem:[%s205 + $0x100] sm:$0xff]
        %v270 = vld [vmem:[%s205 + $0x108] sm:$0xff]
        %v271 = vld [vmem:[%s205 + $0x110] sm:$0xff]
        %v272 = vld [vmem:[%s205 + $0x118] sm:$0xff]
        %v273 = vld [vmem:[%s205 + $0x120] sm:$0xff]
        %v274 = vld [vmem:[%s205 + $0x128] sm:$0xff]
        %v275 = vld [vmem:[%s205 + $0x130] sm:$0xff]
        %v276 = vld [vmem:[%s205 + $0x138] sm:$0xff]
        %v277 = vld [vmem:[%s205 + $0x140] sm:$0xff]
        %v278 = vld [vmem:[%s205 + $0x148] sm:$0xff]
        %v279 = vld [vmem:[%s205 + $0x150] sm:$0xff]
        %v280 = vld [vmem:[%s205 + $0x158] sm:$0xff]
        %v281 = vld [vmem:[%s205 + $0x160] sm:$0xff]
        %v282 = vld [vmem:[%s205 + $0x168] sm:$0xff]
        %v283 = vld [vmem:[%s205 + $0x170] sm:$0xff]
        %v284 = vld [vmem:[%s205 + $0x178] sm:$0xff]
        %v285 = vld [vmem:[%s205 + $0x180] sm:$0xff]
        %v286 = vld [vmem:[%s205 + $0x188] sm:$0xff]
        %v287 = vld [vmem:[%s205 + $0x190] sm:$0xff]
        %v288 = vld [vmem:[%s205 + $0x198] sm:$0xff]
        %v289 = vld [vmem:[%s205 + $0x1a0] sm:$0xff]
        %v290 = vld [vmem:[%s205 + $0x1a8] sm:$0xff]
        %v291 = vld [vmem:[%s205 + $0x1b0] sm:$0xff]
        %v292 = vld [vmem:[%s205 + $0x1b8] sm:$0xff]
        %v293 = vld [vmem:[%s205 + $0x1c0] sm:$0xff]
        %v294 = vld [vmem:[%s205 + $0x1c8] sm:$0xff]
        %v295 = vld [vmem:[%s205 + $0x1d0] sm:$0xff]
        %v296 = vld [vmem:[%s205 + $0x1d8] sm:$0xff]
        %v297 = vld [vmem:[%s205 + $0x1e0] sm:$0xff]
        %v298 = vld [vmem:[%s205 + $0x1e8] sm:$0xff]
        %v299 = vld [vmem:[%s205 + $0x1f0] sm:$0xff]
        %v300 = vld [vmem:[%s205 + $0x1f8] sm:$0xff]
        %s301 = scalar_lea.vmem %s205, 512 [#allocation7]
        %v302 = vld [vmem:[%s301] sm:$0xff]
        %v303 = vld [vmem:[%s301 + $0x8] sm:$0xff]
        %v304 = vld [vmem:[%s301 + $0x10] sm:$0xff]
        %v305 = vld [vmem:[%s301 + $0x18] sm:$0xff]
        %v306 = vld [vmem:[%s301 + $0x20] sm:$0xff]
        %v307 = vld [vmem:[%s301 + $0x28] sm:$0xff]
        %v308 = vld [vmem:[%s301 + $0x30] sm:$0xff]
        %v309 = vld [vmem:[%s301 + $0x38] sm:$0xff]
        %v310 = vld [vmem:[%s301 + $0x40] sm:$0xff]
        %v311 = vld [vmem:[%s301 + $0x48] sm:$0xff]
        %v312 = vld [vmem:[%s301 + $0x50] sm:$0xff]
        %v313 = vld [vmem:[%s301 + $0x58] sm:$0xff]
        %v314 = vld [vmem:[%s301 + $0x60] sm:$0xff]
        %v315 = vld [vmem:[%s301 + $0x68] sm:$0xff]
        %v316 = vld [vmem:[%s301 + $0x70] sm:$0xff]
        %v317 = vld [vmem:[%s301 + $0x78] sm:$0xff]
        %v318 = vld [vmem:[%s301 + $0x80] sm:$0xff]
        %v319 = vld [vmem:[%s301 + $0x88] sm:$0xff]
        %v320 = vld [vmem:[%s301 + $0x90] sm:$0xff]
        %v321 = vld [vmem:[%s301 + $0x98] sm:$0xff]
        %v322 = vld [vmem:[%s301 + $0xa0] sm:$0xff]
        %v323 = vld [vmem:[%s301 + $0xa8] sm:$0xff]
        %v324 = vld [vmem:[%s301 + $0xb0] sm:$0xff]
        %v325 = vld [vmem:[%s301 + $0xb8] sm:$0xff]
        %v326 = vld [vmem:[%s301 + $0xc0] sm:$0xff]
        %v327 = vld [vmem:[%s301 + $0xc8] sm:$0xff]
        %v328 = vld [vmem:[%s301 + $0xd0] sm:$0xff]
        %v329 = vld [vmem:[%s301 + $0xd8] sm:$0xff]
        %v330 = vld [vmem:[%s301 + $0xe0] sm:$0xff]
        %v331 = vld [vmem:[%s301 + $0xe8] sm:$0xff]
        %v332 = vld [vmem:[%s301 + $0xf0] sm:$0xff]
        %v333 = vld [vmem:[%s301 + $0xf8] sm:$0xff]
        %v334 = vld [vmem:[%s301 + $0x100] sm:$0xff]
        %v335 = vld [vmem:[%s301 + $0x108] sm:$0xff]
        %v336 = vld [vmem:[%s301 + $0x110] sm:$0xff]
        %v337 = vld [vmem:[%s301 + $0x118] sm:$0xff]
        %v338 = vld [vmem:[%s301 + $0x120] sm:$0xff]
        %v339 = vld [vmem:[%s301 + $0x128] sm:$0xff]
        %v340 = vld [vmem:[%s301 + $0x130] sm:$0xff]
        %v341 = vld [vmem:[%s301 + $0x138] sm:$0xff]
        %v342 = vld [vmem:[%s301 + $0x140] sm:$0xff]
        %v343 = vld [vmem:[%s301 + $0x148] sm:$0xff]
        %v344 = vld [vmem:[%s301 + $0x150] sm:$0xff]
        %v345 = vld [vmem:[%s301 + $0x158] sm:$0xff]
        %v346 = vld [vmem:[%s301 + $0x160] sm:$0xff]
        %v347 = vld [vmem:[%s301 + $0x168] sm:$0xff]
        %v348 = vld [vmem:[%s301 + $0x170] sm:$0xff]
        %v349 = vld [vmem:[%s301 + $0x178] sm:$0xff]
        %v350 = vld [vmem:[%s301 + $0x180] sm:$0xff]
        %v351 = vld [vmem:[%s301 + $0x188] sm:$0xff]
        %v352 = vld [vmem:[%s301 + $0x190] sm:$0xff]
        %v353 = vld [vmem:[%s301 + $0x198] sm:$0xff]
        %v354 = vld [vmem:[%s301 + $0x1a0] sm:$0xff]
        %v355 = vld [vmem:[%s301 + $0x1a8] sm:$0xff]
        %v356 = vld [vmem:[%s301 + $0x1b0] sm:$0xff]
        %v357 = vld [vmem:[%s301 + $0x1b8] sm:$0xff]
        %v358 = vld [vmem:[%s301 + $0x1c0] sm:$0xff]
        %v359 = vld [vmem:[%s301 + $0x1c8] sm:$0xff]
        %v360 = vld [vmem:[%s301 + $0x1d0] sm:$0xff]
        %v361 = vld [vmem:[%s301 + $0x1d8] sm:$0xff]
        %v362 = vld [vmem:[%s301 + $0x1e0] sm:$0xff]
        %v363 = vld [vmem:[%s301 + $0x1e8] sm:$0xff]
        %v364 = vld [vmem:[%s301 + $0x1f0] sm:$0xff]
        %v365 = vld [vmem:[%s301 + $0x1f8] sm:$0xff]
        %v366 = vstv %s231
        %v367 = vmul.f32 %v366, %v302
        %v368 = vmul.f32 %v366, %v303
        %v369 = vmul.f32 %v366, %v304
        %v370 = vmul.f32 %v366, %v305
        %v371 = vmul.f32 %v366, %v306
        %v372 = vmul.f32 %v366, %v307
        %v373 = vmul.f32 %v366, %v308
        %v374 = vmul.f32 %v366, %v309
        %v375 = vmul.f32 %v366, %v310
        %v376 = vmul.f32 %v366, %v311
        %v377 = vmul.f32 %v366, %v312
        %v378 = vmul.f32 %v366, %v313
        %v379 = vmul.f32 %v366, %v314
        %v380 = vmul.f32 %v366, %v315
        %v381 = vmul.f32 %v366, %v316
        %v382 = vmul.f32 %v366, %v317
        %v383 = vmul.f32 %v366, %v318
        %v384 = vmul.f32 %v366, %v319
        %v385 = vmul.f32 %v366, %v320
        %v386 = vmul.f32 %v366, %v321
        %v387 = vmul.f32 %v366, %v322
        %v388 = vmul.f32 %v366, %v323
        %v389 = vmul.f32 %v366, %v324
        %v390 = vmul.f32 %v366, %v325
        %v391 = vmul.f32 %v366, %v326
        %v392 = vmul.f32 %v366, %v327
        %v393 = vmul.f32 %v366, %v328
        %v394 = vmul.f32 %v366, %v329
        %v395 = vmul.f32 %v366, %v330
        %v396 = vmul.f32 %v366, %v331
        %v397 = vmul.f32 %v366, %v332
        %v398 = vmul.f32 %v366, %v333
        %v399 = vmul.f32 %v366, %v334
        %v400 = vmul.f32 %v366, %v335
        %v401 = vmul.f32 %v366, %v336
        %v402 = vmul.f32 %v366, %v337
        %v403 = vmul.f32 %v366, %v338
        %v404 = vmul.f32 %v366, %v339
        %v405 = vmul.f32 %v366, %v340
        %v406 = vmul.f32 %v366, %v341
        %v407 = vmul.f32 %v366, %v342
        %v408 = vmul.f32 %v366, %v343
        %v409 = vmul.f32 %v366, %v344
        %v410 = vmul.f32 %v366, %v345
        %v411 = vmul.f32 %v366, %v346
        %v412 = vmul.f32 %v366, %v347
        %v413 = vmul.f32 %v366, %v348
        %v414 = vmul.f32 %v366, %v349
        %v415 = vmul.f32 %v366, %v350
        %v416 = vmul.f32 %v366, %v351
        %v417 = vmul.f32 %v366, %v352
        %v418 = vmul.f32 %v366, %v353
        %v419 = vmul.f32 %v366, %v354
        %v420 = vmul.f32 %v366, %v355
        %v421 = vmul.f32 %v366, %v356
        %v422 = vmul.f32 %v366, %v357
        %v423 = vmul.f32 %v366, %v358
        %v424 = vmul.f32 %v366, %v359
        %v425 = vmul.f32 %v366, %v360
        %v426 = vmul.f32 %v366, %v361
        %v427 = vmul.f32 %v366, %v362
        %v428 = vmul.f32 %v366, %v363
        %v429 = vmul.f32 %v366, %v364
        %v430 = vmul.f32 %v366, %v365
        %v431 = vadd.f32 %v237, %v367
        %v432 = vadd.f32 %v238, %v368
        %v433 = vadd.f32 %v239, %v369
        %v434 = vadd.f32 %v240, %v370
        %v435 = vadd.f32 %v241, %v371
        %v436 = vadd.f32 %v242, %v372
        %v437 = vadd.f32 %v243, %v373
        %v438 = vadd.f32 %v244, %v374
        %v439 = vadd.f32 %v245, %v375
        %v440 = vadd.f32 %v246, %v376
        %v441 = vadd.f32 %v247, %v377
        %v442 = vadd.f32 %v248, %v378
        %v443 = vadd.f32 %v249, %v379
        %v444 = vadd.f32 %v250, %v380
        %v445 = vadd.f32 %v251, %v381
        %v446 = vadd.f32 %v252, %v382
        %v447 = vadd.f32 %v253, %v383
        %v448 = vadd.f32 %v254, %v384
        %v449 = vadd.f32 %v255, %v385
        %v450 = vadd.f32 %v256, %v386
        %v451 = vadd.f32 %v257, %v387
        %v452 = vadd.f32 %v258, %v388
        %v453 = vadd.f32 %v259, %v389
        %v454 = vadd.f32 %v260, %v390
        %v455 = vadd.f32 %v261, %v391
        %v456 = vadd.f32 %v262, %v392
        %v457 = vadd.f32 %v263, %v393
        %v458 = vadd.f32 %v264, %v394
        %v459 = vadd.f32 %v265, %v395
        %v460 = vadd.f32 %v266, %v396
        %v461 = vadd.f32 %v267, %v397
        %v462 = vadd.f32 %v268, %v398
        %v463 = vadd.f32 %v269, %v399
        %v464 = vadd.f32 %v270, %v400
        %v465 = vadd.f32 %v271, %v401
        %v466 = vadd.f32 %v272, %v402
        %v467 = vadd.f32 %v273, %v403
        %v468 = vadd.f32 %v274, %v404
        %v469 = vadd.f32 %v275, %v405
        %v470 = vadd.f32 %v276, %v406
        %v471 = vadd.f32 %v277, %v407
        %v472 = vadd.f32 %v278, %v408
        %v473 = vadd.f32 %v279, %v409
        %v474 = vadd.f32 %v280, %v410
        %v475 = vadd.f32 %v281, %v411
        %v476 = vadd.f32 %v282, %v412
        %v477 = vadd.f32 %v283, %v413
        %v478 = vadd.f32 %v284, %v414
        %v479 = vadd.f32 %v285, %v415
        %v480 = vadd.f32 %v286, %v416
        %v481 = vadd.f32 %v287, %v417
        %v482 = vadd.f32 %v288, %v418
        %v483 = vadd.f32 %v289, %v419
        %v484 = vadd.f32 %v290, %v420
        %v485 = vadd.f32 %v291, %v421
        %v486 = vadd.f32 %v292, %v422
        %v487 = vadd.f32 %v293, %v423
        %v488 = vadd.f32 %v294, %v424
        %v489 = vadd.f32 %v295, %v425
        %v490 = vadd.f32 %v296, %v426
        %v491 = vadd.f32 %v297, %v427
        %v492 = vadd.f32 %v298, %v428
        %v493 = vadd.f32 %v299, %v429
        %v494 = vadd.f32 %v300, %v430
        %v495 = vstv %s235
        %v496 = vmul.f32 %v302, %v495
        %v497 = vmul.f32 %v303, %v495
        %v498 = vmul.f32 %v304, %v495
        %v499 = vmul.f32 %v305, %v495
        %v500 = vmul.f32 %v306, %v495
        %v501 = vmul.f32 %v307, %v495
        %v502 = vmul.f32 %v308, %v495
        %v503 = vmul.f32 %v309, %v495
        %v504 = vmul.f32 %v310, %v495
        %v505 = vmul.f32 %v311, %v495
        %v506 = vmul.f32 %v312, %v495
        %v507 = vmul.f32 %v313, %v495
        %v508 = vmul.f32 %v314, %v495
        %v509 = vmul.f32 %v315, %v495
        %v510 = vmul.f32 %v316, %v495
        %v511 = vmul.f32 %v317, %v495
        %v512 = vmul.f32 %v318, %v495
        %v513 = vmul.f32 %v319, %v495
        %v514 = vmul.f32 %v320, %v495
        %v515 = vmul.f32 %v321, %v495
        %v516 = vmul.f32 %v322, %v495
        %v517 = vmul.f32 %v323, %v495
        %v518 = vmul.f32 %v324, %v495
        %v519 = vmul.f32 %v325, %v495
        %v520 = vmul.f32 %v326, %v495
        %v521 = vmul.f32 %v327, %v495
        %v522 = vmul.f32 %v328, %v495
        %v523 = vmul.f32 %v329, %v495
        %v524 = vmul.f32 %v330, %v495
        %v525 = vmul.f32 %v331, %v495
        %v526 = vmul.f32 %v332, %v495
        %v527 = vmul.f32 %v333, %v495
        %v528 = vmul.f32 %v334, %v495
        %v529 = vmul.f32 %v335, %v495
        %v530 = vmul.f32 %v336, %v495
        %v531 = vmul.f32 %v337, %v495
        %v532 = vmul.f32 %v338, %v495
        %v533 = vmul.f32 %v339, %v495
        %v534 = vmul.f32 %v340, %v495
        %v535 = vmul.f32 %v341, %v495
        %v536 = vmul.f32 %v342, %v495
        %v537 = vmul.f32 %v343, %v495
        %v538 = vmul.f32 %v344, %v495
        %v539 = vmul.f32 %v345, %v495
        %v540 = vmul.f32 %v346, %v495
        %v541 = vmul.f32 %v347, %v495
        %v542 = vmul.f32 %v348, %v495
        %v543 = vmul.f32 %v349, %v495
        %v544 = vmul.f32 %v350, %v495
        %v545 = vmul.f32 %v351, %v495
        %v546 = vmul.f32 %v352, %v495
        %v547 = vmul.f32 %v353, %v495
        %v548 = vmul.f32 %v354, %v495
        %v549 = vmul.f32 %v355, %v495
        %v550 = vmul.f32 %v356, %v495
        %v551 = vmul.f32 %v357, %v495
        %v552 = vmul.f32 %v358, %v495
        %v553 = vmul.f32 %v359, %v495
        %v554 = vmul.f32 %v360, %v495
        %v555 = vmul.f32 %v361, %v495
        %v556 = vmul.f32 %v362, %v495
        %v557 = vmul.f32 %v363, %v495
        %v558 = vmul.f32 %v364, %v495
        %v559 = vmul.f32 %v365, %v495
        %v560 = vand.u32 2147483647, %v237
        %vm561 = vcmp.le.f32.partialorder %v560, 0.7853982
        %vm562 = vcmp.lt.s32.totalorder %v237, 0
        %v563 = vand.u32 %v237, 2139095040
        %v564 = vshrl.u32 %v563, 23
        %v565 = vsub.s32 %v564, 127
        %v566 = vand.u32 2147483647, %v237
        %v567 = vand.u32 %v566, 8388607
        %v568 = vor.u32 %v567, 8388608
        %v569 = vsub.s32 0, %v568
        %v570 = vadd.s32 %v565, 1
        %vm571 = vcmp.gt.s32.totalorder %v570, 0
        %v572 = vsel %vm571, %v570, 0
        %v573 = vshrl.u32 %v572, 5
        %v574 = vand.u32 %v572, 31
        %v575 = vsub.s32 32, %v574
        %v576 = vshrl.u32 683565275, %v575
        %v577 = vshll.u32 683565275, %v574
        %v578 = vshrl.u32 2475754826, %v575
        %v579 = vor.u32 %v577, %v578
        %v580 = vshll.u32 2475754826, %v574
        %v581 = vshrl.u32 2131351028, %v575
        %v582 = vor.u32 %v580, %v581
        %v583 = vshll.u32 2131351028, %v574
        %v584 = vshrl.u32 2102212464, %v575
        %v585 = vor.u32 %v583, %v584
        %v586 = vshll.u32 2102212464, %v574
        %v587 = vshrl.u32 920167782, %v575
        %v588 = vor.u32 %v586, %v587
        %v589 = vshll.u32 920167782, %v574
        %v590 = vshrl.u32 1326507024, %v575
        %v591 = vor.u32 %v589, %v590
        %vm592 = vcmp.lt.s32.totalorder %v573, 1
        %vm593 = vcmp.lt.s32.totalorder %v573, 2
        %vm594 = vcmp.lt.s32.totalorder %v573, 3
        %vm595 = vcmp.lt.s32.totalorder %v573, 4
        %v596 = vsel %vm592, %v576, %v579
        %v597 = vsel %vm595, %v585, 2102212464
        %v598 = vsel %vm594, %v582, %v597
        %v599 = vsel %vm593, %v596, %v598
        %v600 = vsel %vm592, %v579, %v582
        %v601 = vsel %vm595, %v588, 920167782
        %v602 = vsel %vm594, %v585, %v601
        %v603 = vsel %vm593, %v600, %v602
        %v604 = vsel %vm592, %v582, %v585
        %v605 = vsel %vm595, %v591, 1326507024
        %v606 = vsel %vm594, %v588, %v605
        %v607 = vsel %vm593, %v604, %v606
        %v608 = vshll.u32 %v568, 8
        %v609 = vmul.u32.u64.compose %v608, %v607
        %v610 = vextract.low.u32 %v609
        %v611 = vextract.high.u32 %v609
        %v612 = vmul.u32.u64.compose %v608, %v603
        %v613 = vextract.low.u32 %v612
        %v614 = vextract.high.u32 %v612
        %v615 = vmul.u32 %v608, %v599
        %v616 = vadd.s32 %v611, %v613
        %vm617 = vc.u32 %v611, %v613
        %v618 = vadd.s32 %v614, 1
        %v619 = vsel %vm617, %v618, %v614
        %v620 = vadd.s32 %v615, %v619
        %v621 = vadd.s32 %v620, 536870912
        %v622 = vshrl.u32 %v621, 30
        %v623 = vshll.u32 %v622, 30
        %v624 = vsub.s32 %v620, %v623
        %vm625 = vcmp.lt.s32.totalorder %v624, 0
        %v626 = vsub.s32 0, %v624
        %v627 = vsel %vm625, %v626, %v624
        %v628 = vclz %v627
        %v629 = vsub.s32 %v628, 2
        %vm630 = vcmp.gt.s32.totalorder 0, %v629
        %v631 = vsel %vm630, 0, %v629
        %v632 = vsub.s32 32, %v631
        %v633 = vshll.u32 %v624, %v631
        %v634 = vshrl.u32 %v616, %v632
        %v635 = vor.u32 %v633, %v634
        %v636 = vsub.s32 4294967266, %v631
        %v637 = vadd.s32 %v636, 127
        %v638 = vshll.u32 %v637, 23
        %v639 = vor.u32 4788187, %v638
        %v640 = vand.u32 2147483647, %v639
        %v642 = vcvt.s32.f32 %v635
        %v643 = vmul.f32 %v642, %v640
        %v644 = vxor.u32 %v643, 2147483648
        %v645 = vsel %vm562, %v644, %v643
        %v646 = vsub.s32 4, %v622
        %v647 = vsel %vm562, %v646, %v622
        %v648 = vsel %vm561, %v237, %v645
        %v649 = vsel %vm561, 0, %v647
        %v650 = vcosq.f32.pop %v648
        %v651 = vsinq.f32.pop %v648
        %vm652 = vweird.f32 %v237
        %v653 = vadd.s32 %v649, 3
        %v654 = vand.u32 %v653, 3
        %vm655 = vcmp.lt.s32.totalorder %v654, 2
        %vm656 = vcmp.eq.s32.totalorder %v654, 0
        %v657 = vxor.u32 %v651, 2147483648
        %v658 = vsel %vm656, %v650, %v657
        %vm659 = vcmp.eq.s32.totalorder %v654, 2
        %v660 = vxor.u32 %v650, 2147483648
        %v661 = vsel %vm659, %v660, %v651
        %v662 = vsel %vm655, %v658, %v661
        %v663 = vsel %vm652, nan, %v662
        %v664 = vand.u32 2147483647, %v238
        %vm665 = vcmp.le.f32.partialorder %v664, 0.7853982
        %vm666 = vcmp.lt.s32.totalorder %v238, 0
        %v667 = vand.u32 %v238, 2139095040
        %v668 = vshrl.u32 %v667, 23
        %v669 = vsub.s32 %v668, 127
        %v670 = vand.u32 2147483647, %v238
        %v671 = vand.u32 %v670, 8388607
        %v672 = vor.u32 %v671, 8388608
        %v673 = vsub.s32 0, %v672
        %v674 = vadd.s32 %v669, 1
        %vm675 = vcmp.gt.s32.totalorder %v674, 0
        %v676 = vsel %vm675, %v674, 0
        %v677 = vshrl.u32 %v676, 5
        %v678 = vand.u32 %v676, 31
        %v679 = vsub.s32 32, %v678
        %v680 = vshrl.u32 683565275, %v679
        %v681 = vshll.u32 683565275, %v678
        %v682 = vshrl.u32 2475754826, %v679
        %v683 = vor.u32 %v681, %v682
        %v684 = vshll.u32 2475754826, %v678
        %v685 = vshrl.u32 2131351028, %v679
        %v686 = vor.u32 %v684, %v685
        %v687 = vshll.u32 2131351028, %v678
        %v688 = vshrl.u32 2102212464, %v679
        %v689 = vor.u32 %v687, %v688
        %v690 = vshll.u32 2102212464, %v678
        %v691 = vshrl.u32 920167782, %v679
        %v692 = vor.u32 %v690, %v691
        %v693 = vshll.u32 920167782, %v678
        %v694 = vshrl.u32 1326507024, %v679
        %v695 = vor.u32 %v693, %v694
        %vm696 = vcmp.lt.s32.totalorder %v677, 1
        %vm697 = vcmp.lt.s32.totalorder %v677, 2
        %vm698 = vcmp.lt.s32.totalorder %v677, 3
        %vm699 = vcmp.lt.s32.totalorder %v677, 4
        %v700 = vsel %vm696, %v680, %v683
        %v701 = vsel %vm699, %v689, 2102212464
        %v702 = vsel %vm698, %v686, %v701
        %v703 = vsel %vm697, %v700, %v702
        %v704 = vsel %vm696, %v683, %v686
        %v705 = vsel %vm699, %v692, 920167782
        %v706 = vsel %vm698, %v689, %v705
        %v707 = vsel %vm697, %v704, %v706
        %v708 = vsel %vm696, %v686, %v689
        %v709 = vsel %vm699, %v695, 1326507024
        %v710 = vsel %vm698, %v692, %v709
        %v711 = vsel %vm697, %v708, %v710
        %v712 = vshll.u32 %v672, 8
        %v713 = vmul.u32.u64.compose %v712, %v711
        %v714 = vextract.low.u32 %v713
        %v715 = vextract.high.u32 %v713
        %v716 = vmul.u32.u64.compose %v712, %v707
        %v717 = vextract.low.u32 %v716
        %v718 = vextract.high.u32 %v716
        %v719 = vmul.u32 %v712, %v703
        %v720 = vadd.s32 %v715, %v717
        %vm721 = vc.u32 %v715, %v717
        %v722 = vadd.s32 %v718, 1
        %v723 = vsel %vm721, %v722, %v718
        %v724 = vadd.s32 %v719, %v723
        %v725 = vadd.s32 %v724, 536870912
        %v726 = vshrl.u32 %v725, 30
        %v727 = vshll.u32 %v726, 30
        %v728 = vsub.s32 %v724, %v727
        %vm729 = vcmp.lt.s32.totalorder %v728, 0
        %v730 = vsub.s32 0, %v728
        %v731 = vsel %vm729, %v730, %v728
        %v732 = vclz %v731
        %v733 = vsub.s32 %v732, 2
        %vm734 = vcmp.gt.s32.totalorder 0, %v733
        %v735 = vsel %vm734, 0, %v733
        %v736 = vsub.s32 32, %v735
        %v737 = vshll.u32 %v728, %v735
        %v738 = vshrl.u32 %v720, %v736
        %v739 = vor.u32 %v737, %v738
        %v740 = vsub.s32 4294967266, %v735
        %v741 = vadd.s32 %v740, 127
        %v742 = vshll.u32 %v741, 23
        %v743 = vor.u32 4788187, %v742
        %v744 = vand.u32 2147483647, %v743
        %v746 = vcvt.s32.f32 %v739
        %v747 = vmul.f32 %v746, %v744
        %v748 = vxor.u32 %v747, 2147483648
        %v749 = vsel %vm666, %v748, %v747
        %v750 = vsub.s32 4, %v726
        %v751 = vsel %vm666, %v750, %v726
        %v752 = vsel %vm665, %v238, %v749
        %v753 = vsel %vm665, 0, %v751
        %v754 = vcosq.f32.pop %v752
        %v755 = vsinq.f32.pop %v752
        %vm756 = vweird.f32 %v238
        %v757 = vadd.s32 %v753, 3
        %v758 = vand.u32 %v757, 3
        %vm759 = vcmp.lt.s32.totalorder %v758, 2
        %vm760 = vcmp.eq.s32.totalorder %v758, 0
        %v761 = vxor.u32 %v755, 2147483648
        %v762 = vsel %vm760, %v754, %v761
        %vm763 = vcmp.eq.s32.totalorder %v758, 2
        %v764 = vxor.u32 %v754, 2147483648
        %v765 = vsel %vm763, %v764, %v755
        %v766 = vsel %vm759, %v762, %v765
        %v767 = vsel %vm756, nan, %v766
        %v768 = vand.u32 2147483647, %v239
        %vm769 = vcmp.le.f32.partialorder %v768, 0.7853982
        %vm770 = vcmp.lt.s32.totalorder %v239, 0
        %v771 = vand.u32 %v239, 2139095040
        %v772 = vshrl.u32 %v771, 23
        %v773 = vsub.s32 %v772, 127
        %v774 = vand.u32 2147483647, %v239
        %v775 = vand.u32 %v774, 8388607
        %v776 = vor.u32 %v775, 8388608
        %v777 = vsub.s32 0, %v776
        %v778 = vadd.s32 %v773, 1
        %vm779 = vcmp.gt.s32.totalorder %v778, 0
        %v780 = vsel %vm779, %v778, 0
        %v781 = vshrl.u32 %v780, 5
        %v782 = vand.u32 %v780, 31
        %v783 = vsub.s32 32, %v782
        %v784 = vshrl.u32 683565275, %v783
        %v785 = vshll.u32 683565275, %v782
        %v786 = vshrl.u32 2475754826, %v783
        %v787 = vor.u32 %v785, %v786
        %v788 = vshll.u32 2475754826, %v782
        %v789 = vshrl.u32 2131351028, %v783
        %v790 = vor.u32 %v788, %v789
        %v791 = vshll.u32 2131351028, %v782
        %v792 = vshrl.u32 2102212464, %v783
        %v793 = vor.u32 %v791, %v792
        %v794 = vshll.u32 2102212464, %v782
        %v795 = vshrl.u32 920167782, %v783
        %v796 = vor.u32 %v794, %v795
        %v797 = vshll.u32 920167782, %v782
        %v798 = vshrl.u32 1326507024, %v783
        %v799 = vor.u32 %v797, %v798
        %vm800 = vcmp.lt.s32.totalorder %v781, 1
        %vm801 = vcmp.lt.s32.totalorder %v781, 2
        %vm802 = vcmp.lt.s32.totalorder %v781, 3
        %vm803 = vcmp.lt.s32.totalorder %v781, 4
        %v804 = vsel %vm800, %v784, %v787
        %v805 = vsel %vm803, %v793, 2102212464
        %v806 = vsel %vm802, %v790, %v805
        %v807 = vsel %vm801, %v804, %v806
        %v808 = vsel %vm800, %v787, %v790
        %v809 = vsel %vm803, %v796, 920167782
        %v810 = vsel %vm802, %v793, %v809
        %v811 = vsel %vm801, %v808, %v810
        %v812 = vsel %vm800, %v790, %v793
        %v813 = vsel %vm803, %v799, 1326507024
        %v814 = vsel %vm802, %v796, %v813
        %v815 = vsel %vm801, %v812, %v814
        %v816 = vshll.u32 %v776, 8
        %v817 = vmul.u32.u64.compose %v816, %v815
        %v818 = vextract.low.u32 %v817
        %v819 = vextract.high.u32 %v817
        %v820 = vmul.u32.u64.compose %v816, %v811
        %v821 = vextract.low.u32 %v820
        %v822 = vextract.high.u32 %v820
        %v823 = vmul.u32 %v816, %v807
        %v824 = vadd.s32 %v819, %v821
        %vm825 = vc.u32 %v819, %v821
        %v826 = vadd.s32 %v822, 1
        %v827 = vsel %vm825, %v826, %v822
        %v828 = vadd.s32 %v823, %v827
        %v829 = vadd.s32 %v828, 536870912
        %v830 = vshrl.u32 %v829, 30
        %v831 = vshll.u32 %v830, 30
        %v832 = vsub.s32 %v828, %v831
        %vm833 = vcmp.lt.s32.totalorder %v832, 0
        %v834 = vsub.s32 0, %v832
        %v835 = vsel %vm833, %v834, %v832
        %v836 = vclz %v835
        %v837 = vsub.s32 %v836, 2
        %vm838 = vcmp.gt.s32.totalorder 0, %v837
        %v839 = vsel %vm838, 0, %v837
        %v840 = vsub.s32 32, %v839
        %v841 = vshll.u32 %v832, %v839
        %v842 = vshrl.u32 %v824, %v840
        %v843 = vor.u32 %v841, %v842
        %v844 = vsub.s32 4294967266, %v839
        %v845 = vadd.s32 %v844, 127
        %v846 = vshll.u32 %v845, 23
        %v847 = vor.u32 4788187, %v846
        %v848 = vand.u32 2147483647, %v847
        %v850 = vcvt.s32.f32 %v843
        %v851 = vmul.f32 %v850, %v848
        %v852 = vxor.u32 %v851, 2147483648
        %v853 = vsel %vm770, %v852, %v851
        %v854 = vsub.s32 4, %v830
        %v855 = vsel %vm770, %v854, %v830
        %v856 = vsel %vm769, %v239, %v853
        %v857 = vsel %vm769, 0, %v855
        %v858 = vcosq.f32.pop %v856
        %v859 = vsinq.f32.pop %v856
        %vm860 = vweird.f32 %v239
        %v861 = vadd.s32 %v857, 3
        %v862 = vand.u32 %v861, 3
        %vm863 = vcmp.lt.s32.totalorder %v862, 2
        %vm864 = vcmp.eq.s32.totalorder %v862, 0
        %v865 = vxor.u32 %v859, 2147483648
        %v866 = vsel %vm864, %v858, %v865
        %vm867 = vcmp.eq.s32.totalorder %v862, 2
        %v868 = vxor.u32 %v858, 2147483648
        %v869 = vsel %vm867, %v868, %v859
        %v870 = vsel %vm863, %v866, %v869
        %v871 = vsel %vm860, nan, %v870
        %v872 = vand.u32 2147483647, %v240
        %vm873 = vcmp.le.f32.partialorder %v872, 0.7853982
        %vm874 = vcmp.lt.s32.totalorder %v240, 0
        %v875 = vand.u32 %v240, 2139095040
        %v876 = vshrl.u32 %v875, 23
        %v877 = vsub.s32 %v876, 127
        %v878 = vand.u32 2147483647, %v240
        %v879 = vand.u32 %v878, 8388607
        %v880 = vor.u32 %v879, 8388608
        %v881 = vsub.s32 0, %v880
        %v882 = vadd.s32 %v877, 1
        %vm883 = vcmp.gt.s32.totalorder %v882, 0
        %v884 = vsel %vm883, %v882, 0
        %v885 = vshrl.u32 %v884, 5
        %v886 = vand.u32 %v884, 31
        %v887 = vsub.s32 32, %v886
        %v888 = vshrl.u32 683565275, %v887
        %v889 = vshll.u32 683565275, %v886
        %v890 = vshrl.u32 2475754826, %v887
        %v891 = vor.u32 %v889, %v890
        %v892 = vshll.u32 2475754826, %v886
        %v893 = vshrl.u32 2131351028, %v887
        %v894 = vor.u32 %v892, %v893
        %v895 = vshll.u32 2131351028, %v886
        %v896 = vshrl.u32 2102212464, %v887
        %v897 = vor.u32 %v895, %v896
        %v898 = vshll.u32 2102212464, %v886
        %v899 = vshrl.u32 920167782, %v887
        %v900 = vor.u32 %v898, %v899
        %v901 = vshll.u32 920167782, %v886
        %v902 = vshrl.u32 1326507024, %v887
        %v903 = vor.u32 %v901, %v902
        %vm904 = vcmp.lt.s32.totalorder %v885, 1
        %vm905 = vcmp.lt.s32.totalorder %v885, 2
        %vm906 = vcmp.lt.s32.totalorder %v885, 3
        %vm907 = vcmp.lt.s32.totalorder %v885, 4
        %v908 = vsel %vm904, %v888, %v891
        %v909 = vsel %vm907, %v897, 2102212464
        %v910 = vsel %vm906, %v894, %v909
        %v911 = vsel %vm905, %v908, %v910
        %v912 = vsel %vm904, %v891, %v894
        %v913 = vsel %vm907, %v900, 920167782
        %v914 = vsel %vm906, %v897, %v913
        %v915 = vsel %vm905, %v912, %v914
        %v916 = vsel %vm904, %v894, %v897
        %v917 = vsel %vm907, %v903, 1326507024
        %v918 = vsel %vm906, %v900, %v917
        %v919 = vsel %vm905, %v916, %v918
        %v920 = vshll.u32 %v880, 8
        %v921 = vmul.u32.u64.compose %v920, %v919
        %v922 = vextract.low.u32 %v921
        %v923 = vextract.high.u32 %v921
        %v924 = vmul.u32.u64.compose %v920, %v915
        %v925 = vextract.low.u32 %v924
        %v926 = vextract.high.u32 %v924
        %v927 = vmul.u32 %v920, %v911
        %v928 = vadd.s32 %v923, %v925
        %vm929 = vc.u32 %v923, %v925
        %v930 = vadd.s32 %v926, 1
        %v931 = vsel %vm929, %v930, %v926
        %v932 = vadd.s32 %v927, %v931
        %v933 = vadd.s32 %v932, 536870912
        %v934 = vshrl.u32 %v933, 30
        %v935 = vshll.u32 %v934, 30
        %v936 = vsub.s32 %v932, %v935
        %vm937 = vcmp.lt.s32.totalorder %v936, 0
        %v938 = vsub.s32 0, %v936
        %v939 = vsel %vm937, %v938, %v936
        %v940 = vclz %v939
        %v941 = vsub.s32 %v940, 2
        %vm942 = vcmp.gt.s32.totalorder 0, %v941
        %v943 = vsel %vm942, 0, %v941
        %v944 = vsub.s32 32, %v943
        %v945 = vshll.u32 %v936, %v943
        %v946 = vshrl.u32 %v928, %v944
        %v947 = vor.u32 %v945, %v946
        %v948 = vsub.s32 4294967266, %v943
        %v949 = vadd.s32 %v948, 127
        %v950 = vshll.u32 %v949, 23
        %v951 = vor.u32 4788187, %v950
        %v952 = vand.u32 2147483647, %v951
        %v954 = vcvt.s32.f32 %v947
        %v955 = vmul.f32 %v954, %v952
        %v956 = vxor.u32 %v955, 2147483648
        %v957 = vsel %vm874, %v956, %v955
        %v958 = vsub.s32 4, %v934
        %v959 = vsel %vm874, %v958, %v934
        %v960 = vsel %vm873, %v240, %v957
        %v961 = vsel %vm873, 0, %v959
        %v962 = vcosq.f32.pop %v960
        %v963 = vsinq.f32.pop %v960
        %vm964 = vweird.f32 %v240
        %v965 = vadd.s32 %v961, 3
        %v966 = vand.u32 %v965, 3
        %vm967 = vcmp.lt.s32.totalorder %v966, 2
        %vm968 = vcmp.eq.s32.totalorder %v966, 0
        %v969 = vxor.u32 %v963, 2147483648
        %v970 = vsel %vm968, %v962, %v969
        %vm971 = vcmp.eq.s32.totalorder %v966, 2
        %v972 = vxor.u32 %v962, 2147483648
        %v973 = vsel %vm971, %v972, %v963
        %v974 = vsel %vm967, %v970, %v973
        %v975 = vsel %vm964, nan, %v974
        %v976 = vand.u32 2147483647, %v241
        %vm977 = vcmp.le.f32.partialorder %v976, 0.7853982
        %vm978 = vcmp.lt.s32.totalorder %v241, 0
        %v979 = vand.u32 %v241, 2139095040
        %v980 = vshrl.u32 %v979, 23
        %v981 = vsub.s32 %v980, 127
        %v982 = vand.u32 2147483647, %v241
        %v983 = vand.u32 %v982, 8388607
        %v984 = vor.u32 %v983, 8388608
        %v985 = vsub.s32 0, %v984
        %v986 = vadd.s32 %v981, 1
        %vm987 = vcmp.gt.s32.totalorder %v986, 0
        %v988 = vsel %vm987, %v986, 0
        %v989 = vshrl.u32 %v988, 5
        %v990 = vand.u32 %v988, 31
        %v991 = vsub.s32 32, %v990
        %v992 = vshrl.u32 683565275, %v991
        %v993 = vshll.u32 683565275, %v990
        %v994 = vshrl.u32 2475754826, %v991
        %v995 = vor.u32 %v993, %v994
        %v996 = vshll.u32 2475754826, %v990
        %v997 = vshrl.u32 2131351028, %v991
        %v998 = vor.u32 %v996, %v997
        %v999 = vshll.u32 2131351028, %v990
        %v1000 = vshrl.u32 2102212464, %v991
        %v1001 = vor.u32 %v999, %v1000
        %v1002 = vshll.u32 2102212464, %v990
        %v1003 = vshrl.u32 920167782, %v991
        %v1004 = vor.u32 %v1002, %v1003
        %v1005 = vshll.u32 920167782, %v990
        %v1006 = vshrl.u32 1326507024, %v991
        %v1007 = vor.u32 %v1005, %v1006
        %vm1008 = vcmp.lt.s32.totalorder %v989, 1
        %vm1009 = vcmp.lt.s32.totalorder %v989, 2
        %vm1010 = vcmp.lt.s32.totalorder %v989, 3
        %vm1011 = vcmp.lt.s32.totalorder %v989, 4
        %v1012 = vsel %vm1008, %v992, %v995
        %v1013 = vsel %vm1011, %v1001, 2102212464
        %v1014 = vsel %vm1010, %v998, %v1013
        %v1015 = vsel %vm1009, %v1012, %v1014
        %v1016 = vsel %vm1008, %v995, %v998
        %v1017 = vsel %vm1011, %v1004, 920167782
        %v1018 = vsel %vm1010, %v1001, %v1017
        %v1019 = vsel %vm1009, %v1016, %v1018
        %v1020 = vsel %vm1008, %v998, %v1001
        %v1021 = vsel %vm1011, %v1007, 1326507024
        %v1022 = vsel %vm1010, %v1004, %v1021
        %v1023 = vsel %vm1009, %v1020, %v1022
        %v1024 = vshll.u32 %v984, 8
        %v1025 = vmul.u32.u64.compose %v1024, %v1023
        %v1026 = vextract.low.u32 %v1025
        %v1027 = vextract.high.u32 %v1025
        %v1028 = vmul.u32.u64.compose %v1024, %v1019
        %v1029 = vextract.low.u32 %v1028
        %v1030 = vextract.high.u32 %v1028
        %v1031 = vmul.u32 %v1024, %v1015
        %v1032 = vadd.s32 %v1027, %v1029
        %vm1033 = vc.u32 %v1027, %v1029
        %v1034 = vadd.s32 %v1030, 1
        %v1035 = vsel %vm1033, %v1034, %v1030
        %v1036 = vadd.s32 %v1031, %v1035
        %v1037 = vadd.s32 %v1036, 536870912
        %v1038 = vshrl.u32 %v1037, 30
        %v1039 = vshll.u32 %v1038, 30
        %v1040 = vsub.s32 %v1036, %v1039
        %vm1041 = vcmp.lt.s32.totalorder %v1040, 0
        %v1042 = vsub.s32 0, %v1040
        %v1043 = vsel %vm1041, %v1042, %v1040
        %v1044 = vclz %v1043
        %v1045 = vsub.s32 %v1044, 2
        %vm1046 = vcmp.gt.s32.totalorder 0, %v1045
        %v1047 = vsel %vm1046, 0, %v1045
        %v1048 = vsub.s32 32, %v1047
        %v1049 = vshll.u32 %v1040, %v1047
        %v1050 = vshrl.u32 %v1032, %v1048
        %v1051 = vor.u32 %v1049, %v1050
        %v1052 = vsub.s32 4294967266, %v1047
        %v1053 = vadd.s32 %v1052, 127
        %v1054 = vshll.u32 %v1053, 23
        %v1055 = vor.u32 4788187, %v1054
        %v1056 = vand.u32 2147483647, %v1055
        %v1058 = vcvt.s32.f32 %v1051
        %v1059 = vmul.f32 %v1058, %v1056
        %v1060 = vxor.u32 %v1059, 2147483648
        %v1061 = vsel %vm978, %v1060, %v1059
        %v1062 = vsub.s32 4, %v1038
        %v1063 = vsel %vm978, %v1062, %v1038
        %v1064 = vsel %vm977, %v241, %v1061
        %v1065 = vsel %vm977, 0, %v1063
        %v1066 = vcosq.f32.pop %v1064
        %v1067 = vsinq.f32.pop %v1064
        %vm1068 = vweird.f32 %v241
        %v1069 = vadd.s32 %v1065, 3
        %v1070 = vand.u32 %v1069, 3
        %vm1071 = vcmp.lt.s32.totalorder %v1070, 2
        %vm1072 = vcmp.eq.s32.totalorder %v1070, 0
        %v1073 = vxor.u32 %v1067, 2147483648
        %v1074 = vsel %vm1072, %v1066, %v1073
        %vm1075 = vcmp.eq.s32.totalorder %v1070, 2
        %v1076 = vxor.u32 %v1066, 2147483648
        %v1077 = vsel %vm1075, %v1076, %v1067
        %v1078 = vsel %vm1071, %v1074, %v1077
        %v1079 = vsel %vm1068, nan, %v1078
        %v1080 = vand.u32 2147483647, %v242
        %vm1081 = vcmp.le.f32.partialorder %v1080, 0.7853982
        %vm1082 = vcmp.lt.s32.totalorder %v242, 0
        %v1083 = vand.u32 %v242, 2139095040
        %v1084 = vshrl.u32 %v1083, 23
        %v1085 = vsub.s32 %v1084, 127
        %v1086 = vand.u32 2147483647, %v242
        %v1087 = vand.u32 %v1086, 8388607
        %v1088 = vor.u32 %v1087, 8388608
        %v1089 = vsub.s32 0, %v1088
        %v1090 = vadd.s32 %v1085, 1
        %vm1091 = vcmp.gt.s32.totalorder %v1090, 0
        %v1092 = vsel %vm1091, %v1090, 0
        %v1093 = vshrl.u32 %v1092, 5
        %v1094 = vand.u32 %v1092, 31
        %v1095 = vsub.s32 32, %v1094
        %v1096 = vshrl.u32 683565275, %v1095
        %v1097 = vshll.u32 683565275, %v1094
        %v1098 = vshrl.u32 2475754826, %v1095
        %v1099 = vor.u32 %v1097, %v1098
        %v1100 = vshll.u32 2475754826, %v1094
        %v1101 = vshrl.u32 2131351028, %v1095
        %v1102 = vor.u32 %v1100, %v1101
        %v1103 = vshll.u32 2131351028, %v1094
        %v1104 = vshrl.u32 2102212464, %v1095
        %v1105 = vor.u32 %v1103, %v1104
        %v1106 = vshll.u32 2102212464, %v1094
        %v1107 = vshrl.u32 920167782, %v1095
        %v1108 = vor.u32 %v1106, %v1107
        %v1109 = vshll.u32 920167782, %v1094
        %v1110 = vshrl.u32 1326507024, %v1095
        %v1111 = vor.u32 %v1109, %v1110
        %vm1112 = vcmp.lt.s32.totalorder %v1093, 1
        %vm1113 = vcmp.lt.s32.totalorder %v1093, 2
        %vm1114 = vcmp.lt.s32.totalorder %v1093, 3
        %vm1115 = vcmp.lt.s32.totalorder %v1093, 4
        %v1116 = vsel %vm1112, %v1096, %v1099
        %v1117 = vsel %vm1115, %v1105, 2102212464
        %v1118 = vsel %vm1114, %v1102, %v1117
        %v1119 = vsel %vm1113, %v1116, %v1118
        %v1120 = vsel %vm1112, %v1099, %v1102
        %v1121 = vsel %vm1115, %v1108, 920167782
        %v1122 = vsel %vm1114, %v1105, %v1121
        %v1123 = vsel %vm1113, %v1120, %v1122
        %v1124 = vsel %vm1112, %v1102, %v1105
        %v1125 = vsel %vm1115, %v1111, 1326507024
        %v1126 = vsel %vm1114, %v1108, %v1125
        %v1127 = vsel %vm1113, %v1124, %v1126
        %v1128 = vshll.u32 %v1088, 8
        %v1129 = vmul.u32.u64.compose %v1128, %v1127
        %v1130 = vextract.low.u32 %v1129
        %v1131 = vextract.high.u32 %v1129
        %v1132 = vmul.u32.u64.compose %v1128, %v1123
        %v1133 = vextract.low.u32 %v1132
        %v1134 = vextract.high.u32 %v1132
        %v1135 = vmul.u32 %v1128, %v1119
        %v1136 = vadd.s32 %v1131, %v1133
        %vm1137 = vc.u32 %v1131, %v1133
        %v1138 = vadd.s32 %v1134, 1
        %v1139 = vsel %vm1137, %v1138, %v1134
        %v1140 = vadd.s32 %v1135, %v1139
        %v1141 = vadd.s32 %v1140, 536870912
        %v1142 = vshrl.u32 %v1141, 30
        %v1143 = vshll.u32 %v1142, 30
        %v1144 = vsub.s32 %v1140, %v1143
        %vm1145 = vcmp.lt.s32.totalorder %v1144, 0
        %v1146 = vsub.s32 0, %v1144
        %v1147 = vsel %vm1145, %v1146, %v1144
        %v1148 = vclz %v1147
        %v1149 = vsub.s32 %v1148, 2
        %vm1150 = vcmp.gt.s32.totalorder 0, %v1149
        %v1151 = vsel %vm1150, 0, %v1149
        %v1152 = vsub.s32 32, %v1151
        %v1153 = vshll.u32 %v1144, %v1151
        %v1154 = vshrl.u32 %v1136, %v1152
        %v1155 = vor.u32 %v1153, %v1154
        %v1156 = vsub.s32 4294967266, %v1151
        %v1157 = vadd.s32 %v1156, 127
        %v1158 = vshll.u32 %v1157, 23
        %v1159 = vor.u32 4788187, %v1158
        %v1160 = vand.u32 2147483647, %v1159
        %v1162 = vcvt.s32.f32 %v1155
        %v1163 = vmul.f32 %v1162, %v1160
        %v1164 = vxor.u32 %v1163, 2147483648
        %v1165 = vsel %vm1082, %v1164, %v1163
        %v1166 = vsub.s32 4, %v1142
        %v1167 = vsel %vm1082, %v1166, %v1142
        %v1168 = vsel %vm1081, %v242, %v1165
        %v1169 = vsel %vm1081, 0, %v1167
        %v1170 = vcosq.f32.pop %v1168
        %v1171 = vsinq.f32.pop %v1168
        %vm1172 = vweird.f32 %v242
        %v1173 = vadd.s32 %v1169, 3
        %v1174 = vand.u32 %v1173, 3
        %vm1175 = vcmp.lt.s32.totalorder %v1174, 2
        %vm1176 = vcmp.eq.s32.totalorder %v1174, 0
        %v1177 = vxor.u32 %v1171, 2147483648
        %v1178 = vsel %vm1176, %v1170, %v1177
        %vm1179 = vcmp.eq.s32.totalorder %v1174, 2
        %v1180 = vxor.u32 %v1170, 2147483648
        %v1181 = vsel %vm1179, %v1180, %v1171
        %v1182 = vsel %vm1175, %v1178, %v1181
        %v1183 = vsel %vm1172, nan, %v1182
        %v1184 = vand.u32 2147483647, %v243
        %vm1185 = vcmp.le.f32.partialorder %v1184, 0.7853982
        %vm1186 = vcmp.lt.s32.totalorder %v243, 0
        %v1187 = vand.u32 %v243, 2139095040
        %v1188 = vshrl.u32 %v1187, 23
        %v1189 = vsub.s32 %v1188, 127
        %v1190 = vand.u32 2147483647, %v243
        %v1191 = vand.u32 %v1190, 8388607
        %v1192 = vor.u32 %v1191, 8388608
        %v1193 = vsub.s32 0, %v1192
        %v1194 = vadd.s32 %v1189, 1
        %vm1195 = vcmp.gt.s32.totalorder %v1194, 0
        %v1196 = vsel %vm1195, %v1194, 0
        %v1197 = vshrl.u32 %v1196, 5
        %v1198 = vand.u32 %v1196, 31
        %v1199 = vsub.s32 32, %v1198
        %v1200 = vshrl.u32 683565275, %v1199
        %v1201 = vshll.u32 683565275, %v1198
        %v1202 = vshrl.u32 2475754826, %v1199
        %v1203 = vor.u32 %v1201, %v1202
        %v1204 = vshll.u32 2475754826, %v1198
        %v1205 = vshrl.u32 2131351028, %v1199
        %v1206 = vor.u32 %v1204, %v1205
        %v1207 = vshll.u32 2131351028, %v1198
        %v1208 = vshrl.u32 2102212464, %v1199
        %v1209 = vor.u32 %v1207, %v1208
        %v1210 = vshll.u32 2102212464, %v1198
        %v1211 = vshrl.u32 920167782, %v1199
        %v1212 = vor.u32 %v1210, %v1211
        %v1213 = vshll.u32 920167782, %v1198
        %v1214 = vshrl.u32 1326507024, %v1199
        %v1215 = vor.u32 %v1213, %v1214
        %vm1216 = vcmp.lt.s32.totalorder %v1197, 1
        %vm1217 = vcmp.lt.s32.totalorder %v1197, 2
        %vm1218 = vcmp.lt.s32.totalorder %v1197, 3
        %vm1219 = vcmp.lt.s32.totalorder %v1197, 4
        %v1220 = vsel %vm1216, %v1200, %v1203
        %v1221 = vsel %vm1219, %v1209, 2102212464
        %v1222 = vsel %vm1218, %v1206, %v1221
        %v1223 = vsel %vm1217, %v1220, %v1222
        %v1224 = vsel %vm1216, %v1203, %v1206
        %v1225 = vsel %vm1219, %v1212, 920167782
        %v1226 = vsel %vm1218, %v1209, %v1225
        %v1227 = vsel %vm1217, %v1224, %v1226
        %v1228 = vsel %vm1216, %v1206, %v1209
        %v1229 = vsel %vm1219, %v1215, 1326507024
        %v1230 = vsel %vm1218, %v1212, %v1229
        %v1231 = vsel %vm1217, %v1228, %v1230
        %v1232 = vshll.u32 %v1192, 8
        %v1233 = vmul.u32.u64.compose %v1232, %v1231
        %v1234 = vextract.low.u32 %v1233
        %v1235 = vextract.high.u32 %v1233
        %v1236 = vmul.u32.u64.compose %v1232, %v1227
        %v1237 = vextract.low.u32 %v1236
        %v1238 = vextract.high.u32 %v1236
        %v1239 = vmul.u32 %v1232, %v1223
        %v1240 = vadd.s32 %v1235, %v1237
        %vm1241 = vc.u32 %v1235, %v1237
        %v1242 = vadd.s32 %v1238, 1
        %v1243 = vsel %vm1241, %v1242, %v1238
        %v1244 = vadd.s32 %v1239, %v1243
        %v1245 = vadd.s32 %v1244, 536870912
        %v1246 = vshrl.u32 %v1245, 30
        %v1247 = vshll.u32 %v1246, 30
        %v1248 = vsub.s32 %v1244, %v1247
        %vm1249 = vcmp.lt.s32.totalorder %v1248, 0
        %v1250 = vsub.s32 0, %v1248
        %v1251 = vsel %vm1249, %v1250, %v1248
        %v1252 = vclz %v1251
        %v1253 = vsub.s32 %v1252, 2
        %vm1254 = vcmp.gt.s32.totalorder 0, %v1253
        %v1255 = vsel %vm1254, 0, %v1253
        %v1256 = vsub.s32 32, %v1255
        %v1257 = vshll.u32 %v1248, %v1255
        %v1258 = vshrl.u32 %v1240, %v1256
        %v1259 = vor.u32 %v1257, %v1258
        %v1260 = vsub.s32 4294967266, %v1255
        %v1261 = vadd.s32 %v1260, 127
        %v1262 = vshll.u32 %v1261, 23
        %v1263 = vor.u32 4788187, %v1262
        %v1264 = vand.u32 2147483647, %v1263
        %v1266 = vcvt.s32.f32 %v1259
        %v1267 = vmul.f32 %v1266, %v1264
        %v1268 = vxor.u32 %v1267, 2147483648
        %v1269 = vsel %vm1186, %v1268, %v1267
        %v1270 = vsub.s32 4, %v1246
        %v1271 = vsel %vm1186, %v1270, %v1246
        %v1272 = vsel %vm1185, %v243, %v1269
        %v1273 = vsel %vm1185, 0, %v1271
        %v1274 = vcosq.f32.pop %v1272
        %v1275 = vsinq.f32.pop %v1272
        %vm1276 = vweird.f32 %v243
        %v1277 = vadd.s32 %v1273, 3
        %v1278 = vand.u32 %v1277, 3
        %vm1279 = vcmp.lt.s32.totalorder %v1278, 2
        %vm1280 = vcmp.eq.s32.totalorder %v1278, 0
        %v1281 = vxor.u32 %v1275, 2147483648
        %v1282 = vsel %vm1280, %v1274, %v1281
        %vm1283 = vcmp.eq.s32.totalorder %v1278, 2
        %v1284 = vxor.u32 %v1274, 2147483648
        %v1285 = vsel %vm1283, %v1284, %v1275
        %v1286 = vsel %vm1279, %v1282, %v1285
        %v1287 = vsel %vm1276, nan, %v1286
        %v1288 = vand.u32 2147483647, %v244
        %vm1289 = vcmp.le.f32.partialorder %v1288, 0.7853982
        %vm1290 = vcmp.lt.s32.totalorder %v244, 0
        %v1291 = vand.u32 %v244, 2139095040
        %v1292 = vshrl.u32 %v1291, 23
        %v1293 = vsub.s32 %v1292, 127
        %v1294 = vand.u32 2147483647, %v244
        %v1295 = vand.u32 %v1294, 8388607
        %v1296 = vor.u32 %v1295, 8388608
        %v1297 = vsub.s32 0, %v1296
        %v1298 = vadd.s32 %v1293, 1
        %vm1299 = vcmp.gt.s32.totalorder %v1298, 0
        %v1300 = vsel %vm1299, %v1298, 0
        %v1301 = vshrl.u32 %v1300, 5
        %v1302 = vand.u32 %v1300, 31
        %v1303 = vsub.s32 32, %v1302
        %v1304 = vshrl.u32 683565275, %v1303
        %v1305 = vshll.u32 683565275, %v1302
        %v1306 = vshrl.u32 2475754826, %v1303
        %v1307 = vor.u32 %v1305, %v1306
        %v1308 = vshll.u32 2475754826, %v1302
        %v1309 = vshrl.u32 2131351028, %v1303
        %v1310 = vor.u32 %v1308, %v1309
        %v1311 = vshll.u32 2131351028, %v1302
        %v1312 = vshrl.u32 2102212464, %v1303
        %v1313 = vor.u32 %v1311, %v1312
        %v1314 = vshll.u32 2102212464, %v1302
        %v1315 = vshrl.u32 920167782, %v1303
        %v1316 = vor.u32 %v1314, %v1315
        %v1317 = vshll.u32 920167782, %v1302
        %v1318 = vshrl.u32 1326507024, %v1303
        %v1319 = vor.u32 %v1317, %v1318
        %vm1320 = vcmp.lt.s32.totalorder %v1301, 1
        %vm1321 = vcmp.lt.s32.totalorder %v1301, 2
        %vm1322 = vcmp.lt.s32.totalorder %v1301, 3
        %vm1323 = vcmp.lt.s32.totalorder %v1301, 4
        %v1324 = vsel %vm1320, %v1304, %v1307
        %v1325 = vsel %vm1323, %v1313, 2102212464
        %v1326 = vsel %vm1322, %v1310, %v1325
        %v1327 = vsel %vm1321, %v1324, %v1326
        %v1328 = vsel %vm1320, %v1307, %v1310
        %v1329 = vsel %vm1323, %v1316, 920167782
        %v1330 = vsel %vm1322, %v1313, %v1329
        %v1331 = vsel %vm1321, %v1328, %v1330
        %v1332 = vsel %vm1320, %v1310, %v1313
        %v1333 = vsel %vm1323, %v1319, 1326507024
        %v1334 = vsel %vm1322, %v1316, %v1333
        %v1335 = vsel %vm1321, %v1332, %v1334
        %v1336 = vshll.u32 %v1296, 8
        %v1337 = vmul.u32.u64.compose %v1336, %v1335
        %v1338 = vextract.low.u32 %v1337
        %v1339 = vextract.high.u32 %v1337
        %v1340 = vmul.u32.u64.compose %v1336, %v1331
        %v1341 = vextract.low.u32 %v1340
        %v1342 = vextract.high.u32 %v1340
        %v1343 = vmul.u32 %v1336, %v1327
        %v1344 = vadd.s32 %v1339, %v1341
        %vm1345 = vc.u32 %v1339, %v1341
        %v1346 = vadd.s32 %v1342, 1
        %v1347 = vsel %vm1345, %v1346, %v1342
        %v1348 = vadd.s32 %v1343, %v1347
        %v1349 = vadd.s32 %v1348, 536870912
        %v1350 = vshrl.u32 %v1349, 30
        %v1351 = vshll.u32 %v1350, 30
        %v1352 = vsub.s32 %v1348, %v1351
        %vm1353 = vcmp.lt.s32.totalorder %v1352, 0
        %v1354 = vsub.s32 0, %v1352
        %v1355 = vsel %vm1353, %v1354, %v1352
        %v1356 = vclz %v1355
        %v1357 = vsub.s32 %v1356, 2
        %vm1358 = vcmp.gt.s32.totalorder 0, %v1357
        %v1359 = vsel %vm1358, 0, %v1357
        %v1360 = vsub.s32 32, %v1359
        %v1361 = vshll.u32 %v1352, %v1359
        %v1362 = vshrl.u32 %v1344, %v1360
        %v1363 = vor.u32 %v1361, %v1362
        %v1364 = vsub.s32 4294967266, %v1359
        %v1365 = vadd.s32 %v1364, 127
        %v1366 = vshll.u32 %v1365, 23
        %v1367 = vor.u32 4788187, %v1366
        %v1368 = vand.u32 2147483647, %v1367
        %v1370 = vcvt.s32.f32 %v1363
        %v1371 = vmul.f32 %v1370, %v1368
        %v1372 = vxor.u32 %v1371, 2147483648
        %v1373 = vsel %vm1290, %v1372, %v1371
        %v1374 = vsub.s32 4, %v1350
        %v1375 = vsel %vm1290, %v1374, %v1350
        %v1376 = vsel %vm1289, %v244, %v1373
        %v1377 = vsel %vm1289, 0, %v1375
        %v1378 = vcosq.f32.pop %v1376
        %v1379 = vsinq.f32.pop %v1376
        %vm1380 = vweird.f32 %v244
        %v1381 = vadd.s32 %v1377, 3
        %v1382 = vand.u32 %v1381, 3
        %vm1383 = vcmp.lt.s32.totalorder %v1382, 2
        %vm1384 = vcmp.eq.s32.totalorder %v1382, 0
        %v1385 = vxor.u32 %v1379, 2147483648
        %v1386 = vsel %vm1384, %v1378, %v1385
        %vm1387 = vcmp.eq.s32.totalorder %v1382, 2
        %v1388 = vxor.u32 %v1378, 2147483648
        %v1389 = vsel %vm1387, %v1388, %v1379
        %v1390 = vsel %vm1383, %v1386, %v1389
        %v1391 = vsel %vm1380, nan, %v1390
        %v1392 = vand.u32 2147483647, %v245
        %vm1393 = vcmp.le.f32.partialorder %v1392, 0.7853982
        %vm1394 = vcmp.lt.s32.totalorder %v245, 0
        %v1395 = vand.u32 %v245, 2139095040
        %v1396 = vshrl.u32 %v1395, 23
        %v1397 = vsub.s32 %v1396, 127
        %v1398 = vand.u32 2147483647, %v245
        %v1399 = vand.u32 %v1398, 8388607
        %v1400 = vor.u32 %v1399, 8388608
        %v1401 = vsub.s32 0, %v1400
        %v1402 = vadd.s32 %v1397, 1
        %vm1403 = vcmp.gt.s32.totalorder %v1402, 0
        %v1404 = vsel %vm1403, %v1402, 0
        %v1405 = vshrl.u32 %v1404, 5
        %v1406 = vand.u32 %v1404, 31
        %v1407 = vsub.s32 32, %v1406
        %v1408 = vshrl.u32 683565275, %v1407
        %v1409 = vshll.u32 683565275, %v1406
        %v1410 = vshrl.u32 2475754826, %v1407
        %v1411 = vor.u32 %v1409, %v1410
        %v1412 = vshll.u32 2475754826, %v1406
        %v1413 = vshrl.u32 2131351028, %v1407
        %v1414 = vor.u32 %v1412, %v1413
        %v1415 = vshll.u32 2131351028, %v1406
        %v1416 = vshrl.u32 2102212464, %v1407
        %v1417 = vor.u32 %v1415, %v1416
        %v1418 = vshll.u32 2102212464, %v1406
        %v1419 = vshrl.u32 920167782, %v1407
        %v1420 = vor.u32 %v1418, %v1419
        %v1421 = vshll.u32 920167782, %v1406
        %v1422 = vshrl.u32 1326507024, %v1407
        %v1423 = vor.u32 %v1421, %v1422
        %vm1424 = vcmp.lt.s32.totalorder %v1405, 1
        %vm1425 = vcmp.lt.s32.totalorder %v1405, 2
        %vm1426 = vcmp.lt.s32.totalorder %v1405, 3
        %vm1427 = vcmp.lt.s32.totalorder %v1405, 4
        %v1428 = vsel %vm1424, %v1408, %v1411
        %v1429 = vsel %vm1427, %v1417, 2102212464
        %v1430 = vsel %vm1426, %v1414, %v1429
        %v1431 = vsel %vm1425, %v1428, %v1430
        %v1432 = vsel %vm1424, %v1411, %v1414
        %v1433 = vsel %vm1427, %v1420, 920167782
        %v1434 = vsel %vm1426, %v1417, %v1433
        %v1435 = vsel %vm1425, %v1432, %v1434
        %v1436 = vsel %vm1424, %v1414, %v1417
        %v1437 = vsel %vm1427, %v1423, 1326507024
        %v1438 = vsel %vm1426, %v1420, %v1437
        %v1439 = vsel %vm1425, %v1436, %v1438
        %v1440 = vshll.u32 %v1400, 8
        %v1441 = vmul.u32.u64.compose %v1440, %v1439
        %v1442 = vextract.low.u32 %v1441
        %v1443 = vextract.high.u32 %v1441
        %v1444 = vmul.u32.u64.compose %v1440, %v1435
        %v1445 = vextract.low.u32 %v1444
        %v1446 = vextract.high.u32 %v1444
        %v1447 = vmul.u32 %v1440, %v1431
        %v1448 = vadd.s32 %v1443, %v1445
        %vm1449 = vc.u32 %v1443, %v1445
        %v1450 = vadd.s32 %v1446, 1
        %v1451 = vsel %vm1449, %v1450, %v1446
        %v1452 = vadd.s32 %v1447, %v1451
        %v1453 = vadd.s32 %v1452, 536870912
        %v1454 = vshrl.u32 %v1453, 30
        %v1455 = vshll.u32 %v1454, 30
        %v1456 = vsub.s32 %v1452, %v1455
        %vm1457 = vcmp.lt.s32.totalorder %v1456, 0
        %v1458 = vsub.s32 0, %v1456
        %v1459 = vsel %vm1457, %v1458, %v1456
        %v1460 = vclz %v1459
        %v1461 = vsub.s32 %v1460, 2
        %vm1462 = vcmp.gt.s32.totalorder 0, %v1461
        %v1463 = vsel %vm1462, 0, %v1461
        %v1464 = vsub.s32 32, %v1463
        %v1465 = vshll.u32 %v1456, %v1463
        %v1466 = vshrl.u32 %v1448, %v1464
        %v1467 = vor.u32 %v1465, %v1466
        %v1468 = vsub.s32 4294967266, %v1463
        %v1469 = vadd.s32 %v1468, 127
        %v1470 = vshll.u32 %v1469, 23
        %v1471 = vor.u32 4788187, %v1470
        %v1472 = vand.u32 2147483647, %v1471
        %v1474 = vcvt.s32.f32 %v1467
        %v1475 = vmul.f32 %v1474, %v1472
        %v1476 = vxor.u32 %v1475, 2147483648
        %v1477 = vsel %vm1394, %v1476, %v1475
        %v1478 = vsub.s32 4, %v1454
        %v1479 = vsel %vm1394, %v1478, %v1454
        %v1480 = vsel %vm1393, %v245, %v1477
        %v1481 = vsel %vm1393, 0, %v1479
        %v1482 = vcosq.f32.pop %v1480
        %v1483 = vsinq.f32.pop %v1480
        %vm1484 = vweird.f32 %v245
        %v1485 = vadd.s32 %v1481, 3
        %v1486 = vand.u32 %v1485, 3
        %vm1487 = vcmp.lt.s32.totalorder %v1486, 2
        %vm1488 = vcmp.eq.s32.totalorder %v1486, 0
        %v1489 = vxor.u32 %v1483, 2147483648
        %v1490 = vsel %vm1488, %v1482, %v1489
        %vm1491 = vcmp.eq.s32.totalorder %v1486, 2
        %v1492 = vxor.u32 %v1482, 2147483648
        %v1493 = vsel %vm1491, %v1492, %v1483
        %v1494 = vsel %vm1487, %v1490, %v1493
        %v1495 = vsel %vm1484, nan, %v1494
        %v1496 = vand.u32 2147483647, %v246
        %vm1497 = vcmp.le.f32.partialorder %v1496, 0.7853982
        %vm1498 = vcmp.lt.s32.totalorder %v246, 0
        %v1499 = vand.u32 %v246, 2139095040
        %v1500 = vshrl.u32 %v1499, 23
        %v1501 = vsub.s32 %v1500, 127
        %v1502 = vand.u32 2147483647, %v246
        %v1503 = vand.u32 %v1502, 8388607
        %v1504 = vor.u32 %v1503, 8388608
        %v1505 = vsub.s32 0, %v1504
        %v1506 = vadd.s32 %v1501, 1
        %vm1507 = vcmp.gt.s32.totalorder %v1506, 0
        %v1508 = vsel %vm1507, %v1506, 0
        %v1509 = vshrl.u32 %v1508, 5
        %v1510 = vand.u32 %v1508, 31
        %v1511 = vsub.s32 32, %v1510
        %v1512 = vshrl.u32 683565275, %v1511
        %v1513 = vshll.u32 683565275, %v1510
        %v1514 = vshrl.u32 2475754826, %v1511
        %v1515 = vor.u32 %v1513, %v1514
        %v1516 = vshll.u32 2475754826, %v1510
        %v1517 = vshrl.u32 2131351028, %v1511
        %v1518 = vor.u32 %v1516, %v1517
        %v1519 = vshll.u32 2131351028, %v1510
        %v1520 = vshrl.u32 2102212464, %v1511
        %v1521 = vor.u32 %v1519, %v1520
        %v1522 = vshll.u32 2102212464, %v1510
        %v1523 = vshrl.u32 920167782, %v1511
        %v1524 = vor.u32 %v1522, %v1523
        %v1525 = vshll.u32 920167782, %v1510
        %v1526 = vshrl.u32 1326507024, %v1511
        %v1527 = vor.u32 %v1525, %v1526
        %vm1528 = vcmp.lt.s32.totalorder %v1509, 1
        %vm1529 = vcmp.lt.s32.totalorder %v1509, 2
        %vm1530 = vcmp.lt.s32.totalorder %v1509, 3
        %vm1531 = vcmp.lt.s32.totalorder %v1509, 4
        %v1532 = vsel %vm1528, %v1512, %v1515
        %v1533 = vsel %vm1531, %v1521, 2102212464
        %v1534 = vsel %vm1530, %v1518, %v1533
        %v1535 = vsel %vm1529, %v1532, %v1534
        %v1536 = vsel %vm1528, %v1515, %v1518
        %v1537 = vsel %vm1531, %v1524, 920167782
        %v1538 = vsel %vm1530, %v1521, %v1537
        %v1539 = vsel %vm1529, %v1536, %v1538
        %v1540 = vsel %vm1528, %v1518, %v1521
        %v1541 = vsel %vm1531, %v1527, 1326507024
        %v1542 = vsel %vm1530, %v1524, %v1541
        %v1543 = vsel %vm1529, %v1540, %v1542
        %v1544 = vshll.u32 %v1504, 8
        %v1545 = vmul.u32.u64.compose %v1544, %v1543
        %v1546 = vextract.low.u32 %v1545
        %v1547 = vextract.high.u32 %v1545
        %v1548 = vmul.u32.u64.compose %v1544, %v1539
        %v1549 = vextract.low.u32 %v1548
        %v1550 = vextract.high.u32 %v1548
        %v1551 = vmul.u32 %v1544, %v1535
        %v1552 = vadd.s32 %v1547, %v1549
        %vm1553 = vc.u32 %v1547, %v1549
        %v1554 = vadd.s32 %v1550, 1
        %v1555 = vsel %vm1553, %v1554, %v1550
        %v1556 = vadd.s32 %v1551, %v1555
        %v1557 = vadd.s32 %v1556, 536870912
        %v1558 = vshrl.u32 %v1557, 30
        %v1559 = vshll.u32 %v1558, 30
        %v1560 = vsub.s32 %v1556, %v1559
        %vm1561 = vcmp.lt.s32.totalorder %v1560, 0
        %v1562 = vsub.s32 0, %v1560
        %v1563 = vsel %vm1561, %v1562, %v1560
        %v1564 = vclz %v1563
        %v1565 = vsub.s32 %v1564, 2
        %vm1566 = vcmp.gt.s32.totalorder 0, %v1565
        %v1567 = vsel %vm1566, 0, %v1565
        %v1568 = vsub.s32 32, %v1567
        %v1569 = vshll.u32 %v1560, %v1567
        %v1570 = vshrl.u32 %v1552, %v1568
        %v1571 = vor.u32 %v1569, %v1570
        %v1572 = vsub.s32 4294967266, %v1567
        %v1573 = vadd.s32 %v1572, 127
        %v1574 = vshll.u32 %v1573, 23
        %v1575 = vor.u32 4788187, %v1574
        %v1576 = vand.u32 2147483647, %v1575
        %v1578 = vcvt.s32.f32 %v1571
        %v1579 = vmul.f32 %v1578, %v1576
        %v1580 = vxor.u32 %v1579, 2147483648
        %v1581 = vsel %vm1498, %v1580, %v1579
        %v1582 = vsub.s32 4, %v1558
        %v1583 = vsel %vm1498, %v1582, %v1558
        %v1584 = vsel %vm1497, %v246, %v1581
        %v1585 = vsel %vm1497, 0, %v1583
        %v1586 = vcosq.f32.pop %v1584
        %v1587 = vsinq.f32.pop %v1584
        %vm1588 = vweird.f32 %v246
        %v1589 = vadd.s32 %v1585, 3
        %v1590 = vand.u32 %v1589, 3
        %vm1591 = vcmp.lt.s32.totalorder %v1590, 2
        %vm1592 = vcmp.eq.s32.totalorder %v1590, 0
        %v1593 = vxor.u32 %v1587, 2147483648
        %v1594 = vsel %vm1592, %v1586, %v1593
        %vm1595 = vcmp.eq.s32.totalorder %v1590, 2
        %v1596 = vxor.u32 %v1586, 2147483648
        %v1597 = vsel %vm1595, %v1596, %v1587
        %v1598 = vsel %vm1591, %v1594, %v1597
        %v1599 = vsel %vm1588, nan, %v1598
        %v1600 = vand.u32 2147483647, %v247
        %vm1601 = vcmp.le.f32.partialorder %v1600, 0.7853982
        %vm1602 = vcmp.lt.s32.totalorder %v247, 0
        %v1603 = vand.u32 %v247, 2139095040
        %v1604 = vshrl.u32 %v1603, 23
        %v1605 = vsub.s32 %v1604, 127
        %v1606 = vand.u32 2147483647, %v247
        %v1607 = vand.u32 %v1606, 8388607
        %v1608 = vor.u32 %v1607, 8388608
        %v1609 = vsub.s32 0, %v1608
        %v1610 = vadd.s32 %v1605, 1
        %vm1611 = vcmp.gt.s32.totalorder %v1610, 0
        %v1612 = vsel %vm1611, %v1610, 0
        %v1613 = vshrl.u32 %v1612, 5
        %v1614 = vand.u32 %v1612, 31
        %v1615 = vsub.s32 32, %v1614
        %v1616 = vshrl.u32 683565275, %v1615
        %v1617 = vshll.u32 683565275, %v1614
        %v1618 = vshrl.u32 2475754826, %v1615
        %v1619 = vor.u32 %v1617, %v1618
        %v1620 = vshll.u32 2475754826, %v1614
        %v1621 = vshrl.u32 2131351028, %v1615
        %v1622 = vor.u32 %v1620, %v1621
        %v1623 = vshll.u32 2131351028, %v1614
        %v1624 = vshrl.u32 2102212464, %v1615
        %v1625 = vor.u32 %v1623, %v1624
        %v1626 = vshll.u32 2102212464, %v1614
        %v1627 = vshrl.u32 920167782, %v1615
        %v1628 = vor.u32 %v1626, %v1627
        %v1629 = vshll.u32 920167782, %v1614
        %v1630 = vshrl.u32 1326507024, %v1615
        %v1631 = vor.u32 %v1629, %v1630
        %vm1632 = vcmp.lt.s32.totalorder %v1613, 1
        %vm1633 = vcmp.lt.s32.totalorder %v1613, 2
        %vm1634 = vcmp.lt.s32.totalorder %v1613, 3
        %vm1635 = vcmp.lt.s32.totalorder %v1613, 4
        %v1636 = vsel %vm1632, %v1616, %v1619
        %v1637 = vsel %vm1635, %v1625, 2102212464
        %v1638 = vsel %vm1634, %v1622, %v1637
        %v1639 = vsel %vm1633, %v1636, %v1638
        %v1640 = vsel %vm1632, %v1619, %v1622
        %v1641 = vsel %vm1635, %v1628, 920167782
        %v1642 = vsel %vm1634, %v1625, %v1641
        %v1643 = vsel %vm1633, %v1640, %v1642
        %v1644 = vsel %vm1632, %v1622, %v1625
        %v1645 = vsel %vm1635, %v1631, 1326507024
        %v1646 = vsel %vm1634, %v1628, %v1645
        %v1647 = vsel %vm1633, %v1644, %v1646
        %v1648 = vshll.u32 %v1608, 8
        %v1649 = vmul.u32.u64.compose %v1648, %v1647
        %v1650 = vextract.low.u32 %v1649
        %v1651 = vextract.high.u32 %v1649
        %v1652 = vmul.u32.u64.compose %v1648, %v1643
        %v1653 = vextract.low.u32 %v1652
        %v1654 = vextract.high.u32 %v1652
        %v1655 = vmul.u32 %v1648, %v1639
        %v1656 = vadd.s32 %v1651, %v1653
        %vm1657 = vc.u32 %v1651, %v1653
        %v1658 = vadd.s32 %v1654, 1
        %v1659 = vsel %vm1657, %v1658, %v1654
        %v1660 = vadd.s32 %v1655, %v1659
        %v1661 = vadd.s32 %v1660, 536870912
        %v1662 = vshrl.u32 %v1661, 30
        %v1663 = vshll.u32 %v1662, 30
        %v1664 = vsub.s32 %v1660, %v1663
        %vm1665 = vcmp.lt.s32.totalorder %v1664, 0
        %v1666 = vsub.s32 0, %v1664
        %v1667 = vsel %vm1665, %v1666, %v1664
        %v1668 = vclz %v1667
        %v1669 = vsub.s32 %v1668, 2
        %vm1670 = vcmp.gt.s32.totalorder 0, %v1669
        %v1671 = vsel %vm1670, 0, %v1669
        %v1672 = vsub.s32 32, %v1671
        %v1673 = vshll.u32 %v1664, %v1671
        %v1674 = vshrl.u32 %v1656, %v1672
        %v1675 = vor.u32 %v1673, %v1674
        %v1676 = vsub.s32 4294967266, %v1671
        %v1677 = vadd.s32 %v1676, 127
        %v1678 = vshll.u32 %v1677, 23
        %v1679 = vor.u32 4788187, %v1678
        %v1680 = vand.u32 2147483647, %v1679
        %v1682 = vcvt.s32.f32 %v1675
        %v1683 = vmul.f32 %v1682, %v1680
        %v1684 = vxor.u32 %v1683, 2147483648
        %v1685 = vsel %vm1602, %v1684, %v1683
        %v1686 = vsub.s32 4, %v1662
        %v1687 = vsel %vm1602, %v1686, %v1662
        %v1688 = vsel %vm1601, %v247, %v1685
        %v1689 = vsel %vm1601, 0, %v1687
        %v1690 = vcosq.f32.pop %v1688
        %v1691 = vsinq.f32.pop %v1688
        %vm1692 = vweird.f32 %v247
        %v1693 = vadd.s32 %v1689, 3
        %v1694 = vand.u32 %v1693, 3
        %vm1695 = vcmp.lt.s32.totalorder %v1694, 2
        %vm1696 = vcmp.eq.s32.totalorder %v1694, 0
        %v1697 = vxor.u32 %v1691, 2147483648
        %v1698 = vsel %vm1696, %v1690, %v1697
        %vm1699 = vcmp.eq.s32.totalorder %v1694, 2
        %v1700 = vxor.u32 %v1690, 2147483648
        %v1701 = vsel %vm1699, %v1700, %v1691
        %v1702 = vsel %vm1695, %v1698, %v1701
        %v1703 = vsel %vm1692, nan, %v1702
        %v1704 = vand.u32 2147483647, %v248
        %vm1705 = vcmp.le.f32.partialorder %v1704, 0.7853982
        %vm1706 = vcmp.lt.s32.totalorder %v248, 0
        %v1707 = vand.u32 %v248, 2139095040
        %v1708 = vshrl.u32 %v1707, 23
        %v1709 = vsub.s32 %v1708, 127
        %v1710 = vand.u32 2147483647, %v248
        %v1711 = vand.u32 %v1710, 8388607
        %v1712 = vor.u32 %v1711, 8388608
        %v1713 = vsub.s32 0, %v1712
        %v1714 = vadd.s32 %v1709, 1
        %vm1715 = vcmp.gt.s32.totalorder %v1714, 0
        %v1716 = vsel %vm1715, %v1714, 0
        %v1717 = vshrl.u32 %v1716, 5
        %v1718 = vand.u32 %v1716, 31
        %v1719 = vsub.s32 32, %v1718
        %v1720 = vshrl.u32 683565275, %v1719
        %v1721 = vshll.u32 683565275, %v1718
        %v1722 = vshrl.u32 2475754826, %v1719
        %v1723 = vor.u32 %v1721, %v1722
        %v1724 = vshll.u32 2475754826, %v1718
        %v1725 = vshrl.u32 2131351028, %v1719
        %v1726 = vor.u32 %v1724, %v1725
        %v1727 = vshll.u32 2131351028, %v1718
        %v1728 = vshrl.u32 2102212464, %v1719
        %v1729 = vor.u32 %v1727, %v1728
        %v1730 = vshll.u32 2102212464, %v1718
        %v1731 = vshrl.u32 920167782, %v1719
        %v1732 = vor.u32 %v1730, %v1731
        %v1733 = vshll.u32 920167782, %v1718
        %v1734 = vshrl.u32 1326507024, %v1719
        %v1735 = vor.u32 %v1733, %v1734
        %vm1736 = vcmp.lt.s32.totalorder %v1717, 1
        %vm1737 = vcmp.lt.s32.totalorder %v1717, 2
        %vm1738 = vcmp.lt.s32.totalorder %v1717, 3
        %vm1739 = vcmp.lt.s32.totalorder %v1717, 4
        %v1740 = vsel %vm1736, %v1720, %v1723
        %v1741 = vsel %vm1739, %v1729, 2102212464
        %v1742 = vsel %vm1738, %v1726, %v1741
        %v1743 = vsel %vm1737, %v1740, %v1742
        %v1744 = vsel %vm1736, %v1723, %v1726
        %v1745 = vsel %vm1739, %v1732, 920167782
        %v1746 = vsel %vm1738, %v1729, %v1745
        %v1747 = vsel %vm1737, %v1744, %v1746
        %v1748 = vsel %vm1736, %v1726, %v1729
        %v1749 = vsel %vm1739, %v1735, 1326507024
        %v1750 = vsel %vm1738, %v1732, %v1749
        %v1751 = vsel %vm1737, %v1748, %v1750
        %v1752 = vshll.u32 %v1712, 8
        %v1753 = vmul.u32.u64.compose %v1752, %v1751
        %v1754 = vextract.low.u32 %v1753
        %v1755 = vextract.high.u32 %v1753
        %v1756 = vmul.u32.u64.compose %v1752, %v1747
        %v1757 = vextract.low.u32 %v1756
        %v1758 = vextract.high.u32 %v1756
        %v1759 = vmul.u32 %v1752, %v1743
        %v1760 = vadd.s32 %v1755, %v1757
        %vm1761 = vc.u32 %v1755, %v1757
        %v1762 = vadd.s32 %v1758, 1
        %v1763 = vsel %vm1761, %v1762, %v1758
        %v1764 = vadd.s32 %v1759, %v1763
        %v1765 = vadd.s32 %v1764, 536870912
        %v1766 = vshrl.u32 %v1765, 30
        %v1767 = vshll.u32 %v1766, 30
        %v1768 = vsub.s32 %v1764, %v1767
        %vm1769 = vcmp.lt.s32.totalorder %v1768, 0
        %v1770 = vsub.s32 0, %v1768
        %v1771 = vsel %vm1769, %v1770, %v1768
        %v1772 = vclz %v1771
        %v1773 = vsub.s32 %v1772, 2
        %vm1774 = vcmp.gt.s32.totalorder 0, %v1773
        %v1775 = vsel %vm1774, 0, %v1773
        %v1776 = vsub.s32 32, %v1775
        %v1777 = vshll.u32 %v1768, %v1775
        %v1778 = vshrl.u32 %v1760, %v1776
        %v1779 = vor.u32 %v1777, %v1778
        %v1780 = vsub.s32 4294967266, %v1775
        %v1781 = vadd.s32 %v1780, 127
        %v1782 = vshll.u32 %v1781, 23
        %v1783 = vor.u32 4788187, %v1782
        %v1784 = vand.u32 2147483647, %v1783
        %v1786 = vcvt.s32.f32 %v1779
        %v1787 = vmul.f32 %v1786, %v1784
        %v1788 = vxor.u32 %v1787, 2147483648
        %v1789 = vsel %vm1706, %v1788, %v1787
        %v1790 = vsub.s32 4, %v1766
        %v1791 = vsel %vm1706, %v1790, %v1766
        %v1792 = vsel %vm1705, %v248, %v1789
        %v1793 = vsel %vm1705, 0, %v1791
        %v1794 = vcosq.f32.pop %v1792
        %v1795 = vsinq.f32.pop %v1792
        %vm1796 = vweird.f32 %v248
        %v1797 = vadd.s32 %v1793, 3
        %v1798 = vand.u32 %v1797, 3
        %vm1799 = vcmp.lt.s32.totalorder %v1798, 2
        %vm1800 = vcmp.eq.s32.totalorder %v1798, 0
        %v1801 = vxor.u32 %v1795, 2147483648
        %v1802 = vsel %vm1800, %v1794, %v1801
        %vm1803 = vcmp.eq.s32.totalorder %v1798, 2
        %v1804 = vxor.u32 %v1794, 2147483648
        %v1805 = vsel %vm1803, %v1804, %v1795
        %v1806 = vsel %vm1799, %v1802, %v1805
        %v1807 = vsel %vm1796, nan, %v1806
        %v1808 = vand.u32 2147483647, %v249
        %vm1809 = vcmp.le.f32.partialorder %v1808, 0.7853982
        %vm1810 = vcmp.lt.s32.totalorder %v249, 0
        %v1811 = vand.u32 %v249, 2139095040
        %v1812 = vshrl.u32 %v1811, 23
        %v1813 = vsub.s32 %v1812, 127
        %v1814 = vand.u32 2147483647, %v249
        %v1815 = vand.u32 %v1814, 8388607
        %v1816 = vor.u32 %v1815, 8388608
        %v1817 = vsub.s32 0, %v1816
        %v1818 = vadd.s32 %v1813, 1
        %vm1819 = vcmp.gt.s32.totalorder %v1818, 0
        %v1820 = vsel %vm1819, %v1818, 0
        %v1821 = vshrl.u32 %v1820, 5
        %v1822 = vand.u32 %v1820, 31
        %v1823 = vsub.s32 32, %v1822
        %v1824 = vshrl.u32 683565275, %v1823
        %v1825 = vshll.u32 683565275, %v1822
        %v1826 = vshrl.u32 2475754826, %v1823
        %v1827 = vor.u32 %v1825, %v1826
        %v1828 = vshll.u32 2475754826, %v1822
        %v1829 = vshrl.u32 2131351028, %v1823
        %v1830 = vor.u32 %v1828, %v1829
        %v1831 = vshll.u32 2131351028, %v1822
        %v1832 = vshrl.u32 2102212464, %v1823
        %v1833 = vor.u32 %v1831, %v1832
        %v1834 = vshll.u32 2102212464, %v1822
        %v1835 = vshrl.u32 920167782, %v1823
        %v1836 = vor.u32 %v1834, %v1835
        %v1837 = vshll.u32 920167782, %v1822
        %v1838 = vshrl.u32 1326507024, %v1823
        %v1839 = vor.u32 %v1837, %v1838
        %vm1840 = vcmp.lt.s32.totalorder %v1821, 1
        %vm1841 = vcmp.lt.s32.totalorder %v1821, 2
        %vm1842 = vcmp.lt.s32.totalorder %v1821, 3
        %vm1843 = vcmp.lt.s32.totalorder %v1821, 4
        %v1844 = vsel %vm1840, %v1824, %v1827
        %v1845 = vsel %vm1843, %v1833, 2102212464
        %v1846 = vsel %vm1842, %v1830, %v1845
        %v1847 = vsel %vm1841, %v1844, %v1846
        %v1848 = vsel %vm1840, %v1827, %v1830
        %v1849 = vsel %vm1843, %v1836, 920167782
        %v1850 = vsel %vm1842, %v1833, %v1849
        %v1851 = vsel %vm1841, %v1848, %v1850
        %v1852 = vsel %vm1840, %v1830, %v1833
        %v1853 = vsel %vm1843, %v1839, 1326507024
        %v1854 = vsel %vm1842, %v1836, %v1853
        %v1855 = vsel %vm1841, %v1852, %v1854
        %v1856 = vshll.u32 %v1816, 8
        %v1857 = vmul.u32.u64.compose %v1856, %v1855
        %v1858 = vextract.low.u32 %v1857
        %v1859 = vextract.high.u32 %v1857
        %v1860 = vmul.u32.u64.compose %v1856, %v1851
        %v1861 = vextract.low.u32 %v1860
        %v1862 = vextract.high.u32 %v1860
        %v1863 = vmul.u32 %v1856, %v1847
        %v1864 = vadd.s32 %v1859, %v1861
        %vm1865 = vc.u32 %v1859, %v1861
        %v1866 = vadd.s32 %v1862, 1
        %v1867 = vsel %vm1865, %v1866, %v1862
        %v1868 = vadd.s32 %v1863, %v1867
        %v1869 = vadd.s32 %v1868, 536870912
        %v1870 = vshrl.u32 %v1869, 30
        %v1871 = vshll.u32 %v1870, 30
        %v1872 = vsub.s32 %v1868, %v1871
        %vm1873 = vcmp.lt.s32.totalorder %v1872, 0
        %v1874 = vsub.s32 0, %v1872
        %v1875 = vsel %vm1873, %v1874, %v1872
        %v1876 = vclz %v1875
        %v1877 = vsub.s32 %v1876, 2
        %vm1878 = vcmp.gt.s32.totalorder 0, %v1877
        %v1879 = vsel %vm1878, 0, %v1877
        %v1880 = vsub.s32 32, %v1879
        %v1881 = vshll.u32 %v1872, %v1879
        %v1882 = vshrl.u32 %v1864, %v1880
        %v1883 = vor.u32 %v1881, %v1882
        %v1884 = vsub.s32 4294967266, %v1879
        %v1885 = vadd.s32 %v1884, 127
        %v1886 = vshll.u32 %v1885, 23
        %v1887 = vor.u32 4788187, %v1886
        %v1888 = vand.u32 2147483647, %v1887
        %v1890 = vcvt.s32.f32 %v1883
        %v1891 = vmul.f32 %v1890, %v1888
        %v1892 = vxor.u32 %v1891, 2147483648
        %v1893 = vsel %vm1810, %v1892, %v1891
        %v1894 = vsub.s32 4, %v1870
        %v1895 = vsel %vm1810, %v1894, %v1870
        %v1896 = vsel %vm1809, %v249, %v1893
        %v1897 = vsel %vm1809, 0, %v1895
        %v1898 = vcosq.f32.pop %v1896
        %v1899 = vsinq.f32.pop %v1896
        %vm1900 = vweird.f32 %v249
        %v1901 = vadd.s32 %v1897, 3
        %v1902 = vand.u32 %v1901, 3
        %vm1903 = vcmp.lt.s32.totalorder %v1902, 2
        %vm1904 = vcmp.eq.s32.totalorder %v1902, 0
        %v1905 = vxor.u32 %v1899, 2147483648
        %v1906 = vsel %vm1904, %v1898, %v1905
        %vm1907 = vcmp.eq.s32.totalorder %v1902, 2
        %v1908 = vxor.u32 %v1898, 2147483648
        %v1909 = vsel %vm1907, %v1908, %v1899
        %v1910 = vsel %vm1903, %v1906, %v1909
        %v1911 = vsel %vm1900, nan, %v1910
        %v1912 = vand.u32 2147483647, %v250
        %vm1913 = vcmp.le.f32.partialorder %v1912, 0.7853982
        %vm1914 = vcmp.lt.s32.totalorder %v250, 0
        %v1915 = vand.u32 %v250, 2139095040
        %v1916 = vshrl.u32 %v1915, 23
        %v1917 = vsub.s32 %v1916, 127
        %v1918 = vand.u32 2147483647, %v250
        %v1919 = vand.u32 %v1918, 8388607
        %v1920 = vor.u32 %v1919, 8388608
        %v1921 = vsub.s32 0, %v1920
        %v1922 = vadd.s32 %v1917, 1
        %vm1923 = vcmp.gt.s32.totalorder %v1922, 0
        %v1924 = vsel %vm1923, %v1922, 0
        %v1925 = vshrl.u32 %v1924, 5
        %v1926 = vand.u32 %v1924, 31
        %v1927 = vsub.s32 32, %v1926
        %v1928 = vshrl.u32 683565275, %v1927
        %v1929 = vshll.u32 683565275, %v1926
        %v1930 = vshrl.u32 2475754826, %v1927
        %v1931 = vor.u32 %v1929, %v1930
        %v1932 = vshll.u32 2475754826, %v1926
        %v1933 = vshrl.u32 2131351028, %v1927
        %v1934 = vor.u32 %v1932, %v1933
        %v1935 = vshll.u32 2131351028, %v1926
        %v1936 = vshrl.u32 2102212464, %v1927
        %v1937 = vor.u32 %v1935, %v1936
        %v1938 = vshll.u32 2102212464, %v1926
        %v1939 = vshrl.u32 920167782, %v1927
        %v1940 = vor.u32 %v1938, %v1939
        %v1941 = vshll.u32 920167782, %v1926
        %v1942 = vshrl.u32 1326507024, %v1927
        %v1943 = vor.u32 %v1941, %v1942
        %vm1944 = vcmp.lt.s32.totalorder %v1925, 1
        %vm1945 = vcmp.lt.s32.totalorder %v1925, 2
        %vm1946 = vcmp.lt.s32.totalorder %v1925, 3
        %vm1947 = vcmp.lt.s32.totalorder %v1925, 4
        %v1948 = vsel %vm1944, %v1928, %v1931
        %v1949 = vsel %vm1947, %v1937, 2102212464
        %v1950 = vsel %vm1946, %v1934, %v1949
        %v1951 = vsel %vm1945, %v1948, %v1950
        %v1952 = vsel %vm1944, %v1931, %v1934
        %v1953 = vsel %vm1947, %v1940, 920167782
        %v1954 = vsel %vm1946, %v1937, %v1953
        %v1955 = vsel %vm1945, %v1952, %v1954
        %v1956 = vsel %vm1944, %v1934, %v1937
        %v1957 = vsel %vm1947, %v1943, 1326507024
        %v1958 = vsel %vm1946, %v1940, %v1957
        %v1959 = vsel %vm1945, %v1956, %v1958
        %v1960 = vshll.u32 %v1920, 8
        %v1961 = vmul.u32.u64.compose %v1960, %v1959
        %v1962 = vextract.low.u32 %v1961
        %v1963 = vextract.high.u32 %v1961
        %v1964 = vmul.u32.u64.compose %v1960, %v1955
        %v1965 = vextract.low.u32 %v1964
        %v1966 = vextract.high.u32 %v1964
        %v1967 = vmul.u32 %v1960, %v1951
        %v1968 = vadd.s32 %v1963, %v1965
        %vm1969 = vc.u32 %v1963, %v1965
        %v1970 = vadd.s32 %v1966, 1
        %v1971 = vsel %vm1969, %v1970, %v1966
        %v1972 = vadd.s32 %v1967, %v1971
        %v1973 = vadd.s32 %v1972, 536870912
        %v1974 = vshrl.u32 %v1973, 30
        %v1975 = vshll.u32 %v1974, 30
        %v1976 = vsub.s32 %v1972, %v1975
        %vm1977 = vcmp.lt.s32.totalorder %v1976, 0
        %v1978 = vsub.s32 0, %v1976
        %v1979 = vsel %vm1977, %v1978, %v1976
        %v1980 = vclz %v1979
        %v1981 = vsub.s32 %v1980, 2
        %vm1982 = vcmp.gt.s32.totalorder 0, %v1981
        %v1983 = vsel %vm1982, 0, %v1981
        %v1984 = vsub.s32 32, %v1983
        %v1985 = vshll.u32 %v1976, %v1983
        %v1986 = vshrl.u32 %v1968, %v1984
        %v1987 = vor.u32 %v1985, %v1986
        %v1988 = vsub.s32 4294967266, %v1983
        %v1989 = vadd.s32 %v1988, 127
        %v1990 = vshll.u32 %v1989, 23
        %v1991 = vor.u32 4788187, %v1990
        %v1992 = vand.u32 2147483647, %v1991
        %v1994 = vcvt.s32.f32 %v1987
        %v1995 = vmul.f32 %v1994, %v1992
        %v1996 = vxor.u32 %v1995, 2147483648
        %v1997 = vsel %vm1914, %v1996, %v1995
        %v1998 = vsub.s32 4, %v1974
        %v1999 = vsel %vm1914, %v1998, %v1974
        %v2000 = vsel %vm1913, %v250, %v1997
        %v2001 = vsel %vm1913, 0, %v1999
        %v2002 = vcosq.f32.pop %v2000
        %v2003 = vsinq.f32.pop %v2000
        %vm2004 = vweird.f32 %v250
        %v2005 = vadd.s32 %v2001, 3
        %v2006 = vand.u32 %v2005, 3
        %vm2007 = vcmp.lt.s32.totalorder %v2006, 2
        %vm2008 = vcmp.eq.s32.totalorder %v2006, 0
        %v2009 = vxor.u32 %v2003, 2147483648
        %v2010 = vsel %vm2008, %v2002, %v2009
        %vm2011 = vcmp.eq.s32.totalorder %v2006, 2
        %v2012 = vxor.u32 %v2002, 2147483648
        %v2013 = vsel %vm2011, %v2012, %v2003
        %v2014 = vsel %vm2007, %v2010, %v2013
        %v2015 = vsel %vm2004, nan, %v2014
        %v2016 = vand.u32 2147483647, %v251
        %vm2017 = vcmp.le.f32.partialorder %v2016, 0.7853982
        %vm2018 = vcmp.lt.s32.totalorder %v251, 0
        %v2019 = vand.u32 %v251, 2139095040
        %v2020 = vshrl.u32 %v2019, 23
        %v2021 = vsub.s32 %v2020, 127
        %v2022 = vand.u32 2147483647, %v251
        %v2023 = vand.u32 %v2022, 8388607
        %v2024 = vor.u32 %v2023, 8388608
        %v2025 = vsub.s32 0, %v2024
        %v2026 = vadd.s32 %v2021, 1
        %vm2027 = vcmp.gt.s32.totalorder %v2026, 0
        %v2028 = vsel %vm2027, %v2026, 0
        %v2029 = vshrl.u32 %v2028, 5
        %v2030 = vand.u32 %v2028, 31
        %v2031 = vsub.s32 32, %v2030
        %v2032 = vshrl.u32 683565275, %v2031
        %v2033 = vshll.u32 683565275, %v2030
        %v2034 = vshrl.u32 2475754826, %v2031
        %v2035 = vor.u32 %v2033, %v2034
        %v2036 = vshll.u32 2475754826, %v2030
        %v2037 = vshrl.u32 2131351028, %v2031
        %v2038 = vor.u32 %v2036, %v2037
        %v2039 = vshll.u32 2131351028, %v2030
        %v2040 = vshrl.u32 2102212464, %v2031
        %v2041 = vor.u32 %v2039, %v2040
        %v2042 = vshll.u32 2102212464, %v2030
        %v2043 = vshrl.u32 920167782, %v2031
        %v2044 = vor.u32 %v2042, %v2043
        %v2045 = vshll.u32 920167782, %v2030
        %v2046 = vshrl.u32 1326507024, %v2031
        %v2047 = vor.u32 %v2045, %v2046
        %vm2048 = vcmp.lt.s32.totalorder %v2029, 1
        %vm2049 = vcmp.lt.s32.totalorder %v2029, 2
        %vm2050 = vcmp.lt.s32.totalorder %v2029, 3
        %vm2051 = vcmp.lt.s32.totalorder %v2029, 4
        %v2052 = vsel %vm2048, %v2032, %v2035
        %v2053 = vsel %vm2051, %v2041, 2102212464
        %v2054 = vsel %vm2050, %v2038, %v2053
        %v2055 = vsel %vm2049, %v2052, %v2054
        %v2056 = vsel %vm2048, %v2035, %v2038
        %v2057 = vsel %vm2051, %v2044, 920167782
        %v2058 = vsel %vm2050, %v2041, %v2057
        %v2059 = vsel %vm2049, %v2056, %v2058
        %v2060 = vsel %vm2048, %v2038, %v2041
        %v2061 = vsel %vm2051, %v2047, 1326507024
        %v2062 = vsel %vm2050, %v2044, %v2061
        %v2063 = vsel %vm2049, %v2060, %v2062
        %v2064 = vshll.u32 %v2024, 8
        %v2065 = vmul.u32.u64.compose %v2064, %v2063
        %v2066 = vextract.low.u32 %v2065
        %v2067 = vextract.high.u32 %v2065
        %v2068 = vmul.u32.u64.compose %v2064, %v2059
        %v2069 = vextract.low.u32 %v2068
        %v2070 = vextract.high.u32 %v2068
        %v2071 = vmul.u32 %v2064, %v2055
        %v2072 = vadd.s32 %v2067, %v2069
        %vm2073 = vc.u32 %v2067, %v2069
        %v2074 = vadd.s32 %v2070, 1
        %v2075 = vsel %vm2073, %v2074, %v2070
        %v2076 = vadd.s32 %v2071, %v2075
        %v2077 = vadd.s32 %v2076, 536870912
        %v2078 = vshrl.u32 %v2077, 30
        %v2079 = vshll.u32 %v2078, 30
        %v2080 = vsub.s32 %v2076, %v2079
        %vm2081 = vcmp.lt.s32.totalorder %v2080, 0
        %v2082 = vsub.s32 0, %v2080
        %v2083 = vsel %vm2081, %v2082, %v2080
        %v2084 = vclz %v2083
        %v2085 = vsub.s32 %v2084, 2
        %vm2086 = vcmp.gt.s32.totalorder 0, %v2085
        %v2087 = vsel %vm2086, 0, %v2085
        %v2088 = vsub.s32 32, %v2087
        %v2089 = vshll.u32 %v2080, %v2087
        %v2090 = vshrl.u32 %v2072, %v2088
        %v2091 = vor.u32 %v2089, %v2090
        %v2092 = vsub.s32 4294967266, %v2087
        %v2093 = vadd.s32 %v2092, 127
        %v2094 = vshll.u32 %v2093, 23
        %v2095 = vor.u32 4788187, %v2094
        %v2096 = vand.u32 2147483647, %v2095
        %v2098 = vcvt.s32.f32 %v2091
        %v2099 = vmul.f32 %v2098, %v2096
        %v2100 = vxor.u32 %v2099, 2147483648
        %v2101 = vsel %vm2018, %v2100, %v2099
        %v2102 = vsub.s32 4, %v2078
        %v2103 = vsel %vm2018, %v2102, %v2078
        %v2104 = vsel %vm2017, %v251, %v2101
        %v2105 = vsel %vm2017, 0, %v2103
        %v2106 = vcosq.f32.pop %v2104
        %v2107 = vsinq.f32.pop %v2104
        %vm2108 = vweird.f32 %v251
        %v2109 = vadd.s32 %v2105, 3
        %v2110 = vand.u32 %v2109, 3
        %vm2111 = vcmp.lt.s32.totalorder %v2110, 2
        %vm2112 = vcmp.eq.s32.totalorder %v2110, 0
        %v2113 = vxor.u32 %v2107, 2147483648
        %v2114 = vsel %vm2112, %v2106, %v2113
        %vm2115 = vcmp.eq.s32.totalorder %v2110, 2
        %v2116 = vxor.u32 %v2106, 2147483648
        %v2117 = vsel %vm2115, %v2116, %v2107
        %v2118 = vsel %vm2111, %v2114, %v2117
        %v2119 = vsel %vm2108, nan, %v2118
        %v2120 = vand.u32 2147483647, %v252
        %vm2121 = vcmp.le.f32.partialorder %v2120, 0.7853982
        %vm2122 = vcmp.lt.s32.totalorder %v252, 0
        %v2123 = vand.u32 %v252, 2139095040
        %v2124 = vshrl.u32 %v2123, 23
        %v2125 = vsub.s32 %v2124, 127
        %v2126 = vand.u32 2147483647, %v252
        %v2127 = vand.u32 %v2126, 8388607
        %v2128 = vor.u32 %v2127, 8388608
        %v2129 = vsub.s32 0, %v2128
        %v2130 = vadd.s32 %v2125, 1
        %vm2131 = vcmp.gt.s32.totalorder %v2130, 0
        %v2132 = vsel %vm2131, %v2130, 0
        %v2133 = vshrl.u32 %v2132, 5
        %v2134 = vand.u32 %v2132, 31
        %v2135 = vsub.s32 32, %v2134
        %v2136 = vshrl.u32 683565275, %v2135
        %v2137 = vshll.u32 683565275, %v2134
        %v2138 = vshrl.u32 2475754826, %v2135
        %v2139 = vor.u32 %v2137, %v2138
        %v2140 = vshll.u32 2475754826, %v2134
        %v2141 = vshrl.u32 2131351028, %v2135
        %v2142 = vor.u32 %v2140, %v2141
        %v2143 = vshll.u32 2131351028, %v2134
        %v2144 = vshrl.u32 2102212464, %v2135
        %v2145 = vor.u32 %v2143, %v2144
        %v2146 = vshll.u32 2102212464, %v2134
        %v2147 = vshrl.u32 920167782, %v2135
        %v2148 = vor.u32 %v2146, %v2147
        %v2149 = vshll.u32 920167782, %v2134
        %v2150 = vshrl.u32 1326507024, %v2135
        %v2151 = vor.u32 %v2149, %v2150
        %vm2152 = vcmp.lt.s32.totalorder %v2133, 1
        %vm2153 = vcmp.lt.s32.totalorder %v2133, 2
        %vm2154 = vcmp.lt.s32.totalorder %v2133, 3
        %vm2155 = vcmp.lt.s32.totalorder %v2133, 4
        %v2156 = vsel %vm2152, %v2136, %v2139
        %v2157 = vsel %vm2155, %v2145, 2102212464
        %v2158 = vsel %vm2154, %v2142, %v2157
        %v2159 = vsel %vm2153, %v2156, %v2158
        %v2160 = vsel %vm2152, %v2139, %v2142
        %v2161 = vsel %vm2155, %v2148, 920167782
        %v2162 = vsel %vm2154, %v2145, %v2161
        %v2163 = vsel %vm2153, %v2160, %v2162
        %v2164 = vsel %vm2152, %v2142, %v2145
        %v2165 = vsel %vm2155, %v2151, 1326507024
        %v2166 = vsel %vm2154, %v2148, %v2165
        %v2167 = vsel %vm2153, %v2164, %v2166
        %v2168 = vshll.u32 %v2128, 8
        %v2169 = vmul.u32.u64.compose %v2168, %v2167
        %v2170 = vextract.low.u32 %v2169
        %v2171 = vextract.high.u32 %v2169
        %v2172 = vmul.u32.u64.compose %v2168, %v2163
        %v2173 = vextract.low.u32 %v2172
        %v2174 = vextract.high.u32 %v2172
        %v2175 = vmul.u32 %v2168, %v2159
        %v2176 = vadd.s32 %v2171, %v2173
        %vm2177 = vc.u32 %v2171, %v2173
        %v2178 = vadd.s32 %v2174, 1
        %v2179 = vsel %vm2177, %v2178, %v2174
        %v2180 = vadd.s32 %v2175, %v2179
        %v2181 = vadd.s32 %v2180, 536870912
        %v2182 = vshrl.u32 %v2181, 30
        %v2183 = vshll.u32 %v2182, 30
        %v2184 = vsub.s32 %v2180, %v2183
        %vm2185 = vcmp.lt.s32.totalorder %v2184, 0
        %v2186 = vsub.s32 0, %v2184
        %v2187 = vsel %vm2185, %v2186, %v2184
        %v2188 = vclz %v2187
        %v2189 = vsub.s32 %v2188, 2
        %vm2190 = vcmp.gt.s32.totalorder 0, %v2189
        %v2191 = vsel %vm2190, 0, %v2189
        %v2192 = vsub.s32 32, %v2191
        %v2193 = vshll.u32 %v2184, %v2191
        %v2194 = vshrl.u32 %v2176, %v2192
        %v2195 = vor.u32 %v2193, %v2194
        %v2196 = vsub.s32 4294967266, %v2191
        %v2197 = vadd.s32 %v2196, 127
        %v2198 = vshll.u32 %v2197, 23
        %v2199 = vor.u32 4788187, %v2198
        %v2200 = vand.u32 2147483647, %v2199
        %v2202 = vcvt.s32.f32 %v2195
        %v2203 = vmul.f32 %v2202, %v2200
        %v2204 = vxor.u32 %v2203, 2147483648
        %v2205 = vsel %vm2122, %v2204, %v2203
        %v2206 = vsub.s32 4, %v2182
        %v2207 = vsel %vm2122, %v2206, %v2182
        %v2208 = vsel %vm2121, %v252, %v2205
        %v2209 = vsel %vm2121, 0, %v2207
        %v2210 = vcosq.f32.pop %v2208
        %v2211 = vsinq.f32.pop %v2208
        %vm2212 = vweird.f32 %v252
        %v2213 = vadd.s32 %v2209, 3
        %v2214 = vand.u32 %v2213, 3
        %vm2215 = vcmp.lt.s32.totalorder %v2214, 2
        %vm2216 = vcmp.eq.s32.totalorder %v2214, 0
        %v2217 = vxor.u32 %v2211, 2147483648
        %v2218 = vsel %vm2216, %v2210, %v2217
        %vm2219 = vcmp.eq.s32.totalorder %v2214, 2
        %v2220 = vxor.u32 %v2210, 2147483648
        %v2221 = vsel %vm2219, %v2220, %v2211
        %v2222 = vsel %vm2215, %v2218, %v2221
        %v2223 = vsel %vm2212, nan, %v2222
        %v2224 = vand.u32 2147483647, %v253
        %vm2225 = vcmp.le.f32.partialorder %v2224, 0.7853982
        %vm2226 = vcmp.lt.s32.totalorder %v253, 0
        %v2227 = vand.u32 %v253, 2139095040
        %v2228 = vshrl.u32 %v2227, 23
        %v2229 = vsub.s32 %v2228, 127
        %v2230 = vand.u32 2147483647, %v253
        %v2231 = vand.u32 %v2230, 8388607
        %v2232 = vor.u32 %v2231, 8388608
        %v2233 = vsub.s32 0, %v2232
        %v2234 = vadd.s32 %v2229, 1
        %vm2235 = vcmp.gt.s32.totalorder %v2234, 0
        %v2236 = vsel %vm2235, %v2234, 0
        %v2237 = vshrl.u32 %v2236, 5
        %v2238 = vand.u32 %v2236, 31
        %v2239 = vsub.s32 32, %v2238
        %v2240 = vshrl.u32 683565275, %v2239
        %v2241 = vshll.u32 683565275, %v2238
        %v2242 = vshrl.u32 2475754826, %v2239
        %v2243 = vor.u32 %v2241, %v2242
        %v2244 = vshll.u32 2475754826, %v2238
        %v2245 = vshrl.u32 2131351028, %v2239
        %v2246 = vor.u32 %v2244, %v2245
        %v2247 = vshll.u32 2131351028, %v2238
        %v2248 = vshrl.u32 2102212464, %v2239
        %v2249 = vor.u32 %v2247, %v2248
        %v2250 = vshll.u32 2102212464, %v2238
        %v2251 = vshrl.u32 920167782, %v2239
        %v2252 = vor.u32 %v2250, %v2251
        %v2253 = vshll.u32 920167782, %v2238
        %v2254 = vshrl.u32 1326507024, %v2239
        %v2255 = vor.u32 %v2253, %v2254
        %vm2256 = vcmp.lt.s32.totalorder %v2237, 1
        %vm2257 = vcmp.lt.s32.totalorder %v2237, 2
        %vm2258 = vcmp.lt.s32.totalorder %v2237, 3
        %vm2259 = vcmp.lt.s32.totalorder %v2237, 4
        %v2260 = vsel %vm2256, %v2240, %v2243
        %v2261 = vsel %vm2259, %v2249, 2102212464
        %v2262 = vsel %vm2258, %v2246, %v2261
        %v2263 = vsel %vm2257, %v2260, %v2262
        %v2264 = vsel %vm2256, %v2243, %v2246
        %v2265 = vsel %vm2259, %v2252, 920167782
        %v2266 = vsel %vm2258, %v2249, %v2265
        %v2267 = vsel %vm2257, %v2264, %v2266
        %v2268 = vsel %vm2256, %v2246, %v2249
        %v2269 = vsel %vm2259, %v2255, 1326507024
        %v2270 = vsel %vm2258, %v2252, %v2269
        %v2271 = vsel %vm2257, %v2268, %v2270
        %v2272 = vshll.u32 %v2232, 8
        %v2273 = vmul.u32.u64.compose %v2272, %v2271
        %v2274 = vextract.low.u32 %v2273
        %v2275 = vextract.high.u32 %v2273
        %v2276 = vmul.u32.u64.compose %v2272, %v2267
        %v2277 = vextract.low.u32 %v2276
        %v2278 = vextract.high.u32 %v2276
        %v2279 = vmul.u32 %v2272, %v2263
        %v2280 = vadd.s32 %v2275, %v2277
        %vm2281 = vc.u32 %v2275, %v2277
        %v2282 = vadd.s32 %v2278, 1
        %v2283 = vsel %vm2281, %v2282, %v2278
        %v2284 = vadd.s32 %v2279, %v2283
        %v2285 = vadd.s32 %v2284, 536870912
        %v2286 = vshrl.u32 %v2285, 30
        %v2287 = vshll.u32 %v2286, 30
        %v2288 = vsub.s32 %v2284, %v2287
        %vm2289 = vcmp.lt.s32.totalorder %v2288, 0
        %v2290 = vsub.s32 0, %v2288
        %v2291 = vsel %vm2289, %v2290, %v2288
        %v2292 = vclz %v2291
        %v2293 = vsub.s32 %v2292, 2
        %vm2294 = vcmp.gt.s32.totalorder 0, %v2293
        %v2295 = vsel %vm2294, 0, %v2293
        %v2296 = vsub.s32 32, %v2295
        %v2297 = vshll.u32 %v2288, %v2295
        %v2298 = vshrl.u32 %v2280, %v2296
        %v2299 = vor.u32 %v2297, %v2298
        %v2300 = vsub.s32 4294967266, %v2295
        %v2301 = vadd.s32 %v2300, 127
        %v2302 = vshll.u32 %v2301, 23
        %v2303 = vor.u32 4788187, %v2302
        %v2304 = vand.u32 2147483647, %v2303
        %v2306 = vcvt.s32.f32 %v2299
        %v2307 = vmul.f32 %v2306, %v2304
        %v2308 = vxor.u32 %v2307, 2147483648
        %v2309 = vsel %vm2226, %v2308, %v2307
        %v2310 = vsub.s32 4, %v2286
        %v2311 = vsel %vm2226, %v2310, %v2286
        %v2312 = vsel %vm2225, %v253, %v2309
        %v2313 = vsel %vm2225, 0, %v2311
        %v2314 = vcosq.f32.pop %v2312
        %v2315 = vsinq.f32.pop %v2312
        %vm2316 = vweird.f32 %v253
        %v2317 = vadd.s32 %v2313, 3
        %v2318 = vand.u32 %v2317, 3
        %vm2319 = vcmp.lt.s32.totalorder %v2318, 2
        %vm2320 = vcmp.eq.s32.totalorder %v2318, 0
        %v2321 = vxor.u32 %v2315, 2147483648
        %v2322 = vsel %vm2320, %v2314, %v2321
        %vm2323 = vcmp.eq.s32.totalorder %v2318, 2
        %v2324 = vxor.u32 %v2314, 2147483648
        %v2325 = vsel %vm2323, %v2324, %v2315
        %v2326 = vsel %vm2319, %v2322, %v2325
        %v2327 = vsel %vm2316, nan, %v2326
        %v2328 = vand.u32 2147483647, %v254
        %vm2329 = vcmp.le.f32.partialorder %v2328, 0.7853982
        %vm2330 = vcmp.lt.s32.totalorder %v254, 0
        %v2331 = vand.u32 %v254, 2139095040
        %v2332 = vshrl.u32 %v2331, 23
        %v2333 = vsub.s32 %v2332, 127
        %v2334 = vand.u32 2147483647, %v254
        %v2335 = vand.u32 %v2334, 8388607
        %v2336 = vor.u32 %v2335, 8388608
        %v2337 = vsub.s32 0, %v2336
        %v2338 = vadd.s32 %v2333, 1
        %vm2339 = vcmp.gt.s32.totalorder %v2338, 0
        %v2340 = vsel %vm2339, %v2338, 0
        %v2341 = vshrl.u32 %v2340, 5
        %v2342 = vand.u32 %v2340, 31
        %v2343 = vsub.s32 32, %v2342
        %v2344 = vshrl.u32 683565275, %v2343
        %v2345 = vshll.u32 683565275, %v2342
        %v2346 = vshrl.u32 2475754826, %v2343
        %v2347 = vor.u32 %v2345, %v2346
        %v2348 = vshll.u32 2475754826, %v2342
        %v2349 = vshrl.u32 2131351028, %v2343
        %v2350 = vor.u32 %v2348, %v2349
        %v2351 = vshll.u32 2131351028, %v2342
        %v2352 = vshrl.u32 2102212464, %v2343
        %v2353 = vor.u32 %v2351, %v2352
        %v2354 = vshll.u32 2102212464, %v2342
        %v2355 = vshrl.u32 920167782, %v2343
        %v2356 = vor.u32 %v2354, %v2355
        %v2357 = vshll.u32 920167782, %v2342
        %v2358 = vshrl.u32 1326507024, %v2343
        %v2359 = vor.u32 %v2357, %v2358
        %vm2360 = vcmp.lt.s32.totalorder %v2341, 1
        %vm2361 = vcmp.lt.s32.totalorder %v2341, 2
        %vm2362 = vcmp.lt.s32.totalorder %v2341, 3
        %vm2363 = vcmp.lt.s32.totalorder %v2341, 4
        %v2364 = vsel %vm2360, %v2344, %v2347
        %v2365 = vsel %vm2363, %v2353, 2102212464
        %v2366 = vsel %vm2362, %v2350, %v2365
        %v2367 = vsel %vm2361, %v2364, %v2366
        %v2368 = vsel %vm2360, %v2347, %v2350
        %v2369 = vsel %vm2363, %v2356, 920167782
        %v2370 = vsel %vm2362, %v2353, %v2369
        %v2371 = vsel %vm2361, %v2368, %v2370
        %v2372 = vsel %vm2360, %v2350, %v2353
        %v2373 = vsel %vm2363, %v2359, 1326507024
        %v2374 = vsel %vm2362, %v2356, %v2373
        %v2375 = vsel %vm2361, %v2372, %v2374
        %v2376 = vshll.u32 %v2336, 8
        %v2377 = vmul.u32.u64.compose %v2376, %v2375
        %v2378 = vextract.low.u32 %v2377
        %v2379 = vextract.high.u32 %v2377
        %v2380 = vmul.u32.u64.compose %v2376, %v2371
        %v2381 = vextract.low.u32 %v2380
        %v2382 = vextract.high.u32 %v2380
        %v2383 = vmul.u32 %v2376, %v2367
        %v2384 = vadd.s32 %v2379, %v2381
        %vm2385 = vc.u32 %v2379, %v2381
        %v2386 = vadd.s32 %v2382, 1
        %v2387 = vsel %vm2385, %v2386, %v2382
        %v2388 = vadd.s32 %v2383, %v2387
        %v2389 = vadd.s32 %v2388, 536870912
        %v2390 = vshrl.u32 %v2389, 30
        %v2391 = vshll.u32 %v2390, 30
        %v2392 = vsub.s32 %v2388, %v2391
        %vm2393 = vcmp.lt.s32.totalorder %v2392, 0
        %v2394 = vsub.s32 0, %v2392
        %v2395 = vsel %vm2393, %v2394, %v2392
        %v2396 = vclz %v2395
        %v2397 = vsub.s32 %v2396, 2
        %vm2398 = vcmp.gt.s32.totalorder 0, %v2397
        %v2399 = vsel %vm2398, 0, %v2397
        %v2400 = vsub.s32 32, %v2399
        %v2401 = vshll.u32 %v2392, %v2399
        %v2402 = vshrl.u32 %v2384, %v2400
        %v2403 = vor.u32 %v2401, %v2402
        %v2404 = vsub.s32 4294967266, %v2399
        %v2405 = vadd.s32 %v2404, 127
        %v2406 = vshll.u32 %v2405, 23
        %v2407 = vor.u32 4788187, %v2406
        %v2408 = vand.u32 2147483647, %v2407
        %v2410 = vcvt.s32.f32 %v2403
        %v2411 = vmul.f32 %v2410, %v2408
        %v2412 = vxor.u32 %v2411, 2147483648
        %v2413 = vsel %vm2330, %v2412, %v2411
        %v2414 = vsub.s32 4, %v2390
        %v2415 = vsel %vm2330, %v2414, %v2390
        %v2416 = vsel %vm2329, %v254, %v2413
        %v2417 = vsel %vm2329, 0, %v2415
        %v2418 = vcosq.f32.pop %v2416
        %v2419 = vsinq.f32.pop %v2416
        %vm2420 = vweird.f32 %v254
        %v2421 = vadd.s32 %v2417, 3
        %v2422 = vand.u32 %v2421, 3
        %vm2423 = vcmp.lt.s32.totalorder %v2422, 2
        %vm2424 = vcmp.eq.s32.totalorder %v2422, 0
        %v2425 = vxor.u32 %v2419, 2147483648
        %v2426 = vsel %vm2424, %v2418, %v2425
        %vm2427 = vcmp.eq.s32.totalorder %v2422, 2
        %v2428 = vxor.u32 %v2418, 2147483648
        %v2429 = vsel %vm2427, %v2428, %v2419
        %v2430 = vsel %vm2423, %v2426, %v2429
        %v2431 = vsel %vm2420, nan, %v2430
        %v2432 = vand.u32 2147483647, %v255
        %vm2433 = vcmp.le.f32.partialorder %v2432, 0.7853982
        %vm2434 = vcmp.lt.s32.totalorder %v255, 0
        %v2435 = vand.u32 %v255, 2139095040
        %v2436 = vshrl.u32 %v2435, 23
        %v2437 = vsub.s32 %v2436, 127
        %v2438 = vand.u32 2147483647, %v255
        %v2439 = vand.u32 %v2438, 8388607
        %v2440 = vor.u32 %v2439, 8388608
        %v2441 = vsub.s32 0, %v2440
        %v2442 = vadd.s32 %v2437, 1
        %vm2443 = vcmp.gt.s32.totalorder %v2442, 0
        %v2444 = vsel %vm2443, %v2442, 0
        %v2445 = vshrl.u32 %v2444, 5
        %v2446 = vand.u32 %v2444, 31
        %v2447 = vsub.s32 32, %v2446
        %v2448 = vshrl.u32 683565275, %v2447
        %v2449 = vshll.u32 683565275, %v2446
        %v2450 = vshrl.u32 2475754826, %v2447
        %v2451 = vor.u32 %v2449, %v2450
        %v2452 = vshll.u32 2475754826, %v2446
        %v2453 = vshrl.u32 2131351028, %v2447
        %v2454 = vor.u32 %v2452, %v2453
        %v2455 = vshll.u32 2131351028, %v2446
        %v2456 = vshrl.u32 2102212464, %v2447
        %v2457 = vor.u32 %v2455, %v2456
        %v2458 = vshll.u32 2102212464, %v2446
        %v2459 = vshrl.u32 920167782, %v2447
        %v2460 = vor.u32 %v2458, %v2459
        %v2461 = vshll.u32 920167782, %v2446
        %v2462 = vshrl.u32 1326507024, %v2447
        %v2463 = vor.u32 %v2461, %v2462
        %vm2464 = vcmp.lt.s32.totalorder %v2445, 1
        %vm2465 = vcmp.lt.s32.totalorder %v2445, 2
        %vm2466 = vcmp.lt.s32.totalorder %v2445, 3
        %vm2467 = vcmp.lt.s32.totalorder %v2445, 4
        %v2468 = vsel %vm2464, %v2448, %v2451
        %v2469 = vsel %vm2467, %v2457, 2102212464
        %v2470 = vsel %vm2466, %v2454, %v2469
        %v2471 = vsel %vm2465, %v2468, %v2470
        %v2472 = vsel %vm2464, %v2451, %v2454
        %v2473 = vsel %vm2467, %v2460, 920167782
        %v2474 = vsel %vm2466, %v2457, %v2473
        %v2475 = vsel %vm2465, %v2472, %v2474
        %v2476 = vsel %vm2464, %v2454, %v2457
        %v2477 = vsel %vm2467, %v2463, 1326507024
        %v2478 = vsel %vm2466, %v2460, %v2477
        %v2479 = vsel %vm2465, %v2476, %v2478
        %v2480 = vshll.u32 %v2440, 8
        %v2481 = vmul.u32.u64.compose %v2480, %v2479
        %v2482 = vextract.low.u32 %v2481
        %v2483 = vextract.high.u32 %v2481
        %v2484 = vmul.u32.u64.compose %v2480, %v2475
        %v2485 = vextract.low.u32 %v2484
        %v2486 = vextract.high.u32 %v2484
        %v2487 = vmul.u32 %v2480, %v2471
        %v2488 = vadd.s32 %v2483, %v2485
        %vm2489 = vc.u32 %v2483, %v2485
        %v2490 = vadd.s32 %v2486, 1
        %v2491 = vsel %vm2489, %v2490, %v2486
        %v2492 = vadd.s32 %v2487, %v2491
        %v2493 = vadd.s32 %v2492, 536870912
        %v2494 = vshrl.u32 %v2493, 30
        %v2495 = vshll.u32 %v2494, 30
        %v2496 = vsub.s32 %v2492, %v2495
        %vm2497 = vcmp.lt.s32.totalorder %v2496, 0
        %v2498 = vsub.s32 0, %v2496
        %v2499 = vsel %vm2497, %v2498, %v2496
        %v2500 = vclz %v2499
        %v2501 = vsub.s32 %v2500, 2
        %vm2502 = vcmp.gt.s32.totalorder 0, %v2501
        %v2503 = vsel %vm2502, 0, %v2501
        %v2504 = vsub.s32 32, %v2503
        %v2505 = vshll.u32 %v2496, %v2503
        %v2506 = vshrl.u32 %v2488, %v2504
        %v2507 = vor.u32 %v2505, %v2506
        %v2508 = vsub.s32 4294967266, %v2503
        %v2509 = vadd.s32 %v2508, 127
        %v2510 = vshll.u32 %v2509, 23
        %v2511 = vor.u32 4788187, %v2510
        %v2512 = vand.u32 2147483647, %v2511
        %v2514 = vcvt.s32.f32 %v2507
        %v2515 = vmul.f32 %v2514, %v2512
        %v2516 = vxor.u32 %v2515, 2147483648
        %v2517 = vsel %vm2434, %v2516, %v2515
        %v2518 = vsub.s32 4, %v2494
        %v2519 = vsel %vm2434, %v2518, %v2494
        %v2520 = vsel %vm2433, %v255, %v2517
        %v2521 = vsel %vm2433, 0, %v2519
        %v2522 = vcosq.f32.pop %v2520
        %v2523 = vsinq.f32.pop %v2520
        %vm2524 = vweird.f32 %v255
        %v2525 = vadd.s32 %v2521, 3
        %v2526 = vand.u32 %v2525, 3
        %vm2527 = vcmp.lt.s32.totalorder %v2526, 2
        %vm2528 = vcmp.eq.s32.totalorder %v2526, 0
        %v2529 = vxor.u32 %v2523, 2147483648
        %v2530 = vsel %vm2528, %v2522, %v2529
        %vm2531 = vcmp.eq.s32.totalorder %v2526, 2
        %v2532 = vxor.u32 %v2522, 2147483648
        %v2533 = vsel %vm2531, %v2532, %v2523
        %v2534 = vsel %vm2527, %v2530, %v2533
        %v2535 = vsel %vm2524, nan, %v2534
        %v2536 = vand.u32 2147483647, %v256
        %vm2537 = vcmp.le.f32.partialorder %v2536, 0.7853982
        %vm2538 = vcmp.lt.s32.totalorder %v256, 0
        %v2539 = vand.u32 %v256, 2139095040
        %v2540 = vshrl.u32 %v2539, 23
        %v2541 = vsub.s32 %v2540, 127
        %v2542 = vand.u32 2147483647, %v256
        %v2543 = vand.u32 %v2542, 8388607
        %v2544 = vor.u32 %v2543, 8388608
        %v2545 = vsub.s32 0, %v2544
        %v2546 = vadd.s32 %v2541, 1
        %vm2547 = vcmp.gt.s32.totalorder %v2546, 0
        %v2548 = vsel %vm2547, %v2546, 0
        %v2549 = vshrl.u32 %v2548, 5
        %v2550 = vand.u32 %v2548, 31
        %v2551 = vsub.s32 32, %v2550
        %v2552 = vshrl.u32 683565275, %v2551
        %v2553 = vshll.u32 683565275, %v2550
        %v2554 = vshrl.u32 2475754826, %v2551
        %v2555 = vor.u32 %v2553, %v2554
        %v2556 = vshll.u32 2475754826, %v2550
        %v2557 = vshrl.u32 2131351028, %v2551
        %v2558 = vor.u32 %v2556, %v2557
        %v2559 = vshll.u32 2131351028, %v2550
        %v2560 = vshrl.u32 2102212464, %v2551
        %v2561 = vor.u32 %v2559, %v2560
        %v2562 = vshll.u32 2102212464, %v2550
        %v2563 = vshrl.u32 920167782, %v2551
        %v2564 = vor.u32 %v2562, %v2563
        %v2565 = vshll.u32 920167782, %v2550
        %v2566 = vshrl.u32 1326507024, %v2551
        %v2567 = vor.u32 %v2565, %v2566
        %vm2568 = vcmp.lt.s32.totalorder %v2549, 1
        %vm2569 = vcmp.lt.s32.totalorder %v2549, 2
        %vm2570 = vcmp.lt.s32.totalorder %v2549, 3
        %vm2571 = vcmp.lt.s32.totalorder %v2549, 4
        %v2572 = vsel %vm2568, %v2552, %v2555
        %v2573 = vsel %vm2571, %v2561, 2102212464
        %v2574 = vsel %vm2570, %v2558, %v2573
        %v2575 = vsel %vm2569, %v2572, %v2574
        %v2576 = vsel %vm2568, %v2555, %v2558
        %v2577 = vsel %vm2571, %v2564, 920167782
        %v2578 = vsel %vm2570, %v2561, %v2577
        %v2579 = vsel %vm2569, %v2576, %v2578
        %v2580 = vsel %vm2568, %v2558, %v2561
        %v2581 = vsel %vm2571, %v2567, 1326507024
        %v2582 = vsel %vm2570, %v2564, %v2581
        %v2583 = vsel %vm2569, %v2580, %v2582
        %v2584 = vshll.u32 %v2544, 8
        %v2585 = vmul.u32.u64.compose %v2584, %v2583
        %v2586 = vextract.low.u32 %v2585
        %v2587 = vextract.high.u32 %v2585
        %v2588 = vmul.u32.u64.compose %v2584, %v2579
        %v2589 = vextract.low.u32 %v2588
        %v2590 = vextract.high.u32 %v2588
        %v2591 = vmul.u32 %v2584, %v2575
        %v2592 = vadd.s32 %v2587, %v2589
        %vm2593 = vc.u32 %v2587, %v2589
        %v2594 = vadd.s32 %v2590, 1
        %v2595 = vsel %vm2593, %v2594, %v2590
        %v2596 = vadd.s32 %v2591, %v2595
        %v2597 = vadd.s32 %v2596, 536870912
        %v2598 = vshrl.u32 %v2597, 30
        %v2599 = vshll.u32 %v2598, 30
        %v2600 = vsub.s32 %v2596, %v2599
        %vm2601 = vcmp.lt.s32.totalorder %v2600, 0
        %v2602 = vsub.s32 0, %v2600
        %v2603 = vsel %vm2601, %v2602, %v2600
        %v2604 = vclz %v2603
        %v2605 = vsub.s32 %v2604, 2
        %vm2606 = vcmp.gt.s32.totalorder 0, %v2605
        %v2607 = vsel %vm2606, 0, %v2605
        %v2608 = vsub.s32 32, %v2607
        %v2609 = vshll.u32 %v2600, %v2607
        %v2610 = vshrl.u32 %v2592, %v2608
        %v2611 = vor.u32 %v2609, %v2610
        %v2612 = vsub.s32 4294967266, %v2607
        %v2613 = vadd.s32 %v2612, 127
        %v2614 = vshll.u32 %v2613, 23
        %v2615 = vor.u32 4788187, %v2614
        %v2616 = vand.u32 2147483647, %v2615
        %v2618 = vcvt.s32.f32 %v2611
        %v2619 = vmul.f32 %v2618, %v2616
        %v2620 = vxor.u32 %v2619, 2147483648
        %v2621 = vsel %vm2538, %v2620, %v2619
        %v2622 = vsub.s32 4, %v2598
        %v2623 = vsel %vm2538, %v2622, %v2598
        %v2624 = vsel %vm2537, %v256, %v2621
        %v2625 = vsel %vm2537, 0, %v2623
        %v2626 = vcosq.f32.pop %v2624
        %v2627 = vsinq.f32.pop %v2624
        %vm2628 = vweird.f32 %v256
        %v2629 = vadd.s32 %v2625, 3
        %v2630 = vand.u32 %v2629, 3
        %vm2631 = vcmp.lt.s32.totalorder %v2630, 2
        %vm2632 = vcmp.eq.s32.totalorder %v2630, 0
        %v2633 = vxor.u32 %v2627, 2147483648
        %v2634 = vsel %vm2632, %v2626, %v2633
        %vm2635 = vcmp.eq.s32.totalorder %v2630, 2
        %v2636 = vxor.u32 %v2626, 2147483648
        %v2637 = vsel %vm2635, %v2636, %v2627
        %v2638 = vsel %vm2631, %v2634, %v2637
        %v2639 = vsel %vm2628, nan, %v2638
        %v2640 = vand.u32 2147483647, %v257
        %vm2641 = vcmp.le.f32.partialorder %v2640, 0.7853982
        %vm2642 = vcmp.lt.s32.totalorder %v257, 0
        %v2643 = vand.u32 %v257, 2139095040
        %v2644 = vshrl.u32 %v2643, 23
        %v2645 = vsub.s32 %v2644, 127
        %v2646 = vand.u32 2147483647, %v257
        %v2647 = vand.u32 %v2646, 8388607
        %v2648 = vor.u32 %v2647, 8388608
        %v2649 = vsub.s32 0, %v2648
        %v2650 = vadd.s32 %v2645, 1
        %vm2651 = vcmp.gt.s32.totalorder %v2650, 0
        %v2652 = vsel %vm2651, %v2650, 0
        %v2653 = vshrl.u32 %v2652, 5
        %v2654 = vand.u32 %v2652, 31
        %v2655 = vsub.s32 32, %v2654
        %v2656 = vshrl.u32 683565275, %v2655
        %v2657 = vshll.u32 683565275, %v2654
        %v2658 = vshrl.u32 2475754826, %v2655
        %v2659 = vor.u32 %v2657, %v2658
        %v2660 = vshll.u32 2475754826, %v2654
        %v2661 = vshrl.u32 2131351028, %v2655
        %v2662 = vor.u32 %v2660, %v2661
        %v2663 = vshll.u32 2131351028, %v2654
        %v2664 = vshrl.u32 2102212464, %v2655
        %v2665 = vor.u32 %v2663, %v2664
        %v2666 = vshll.u32 2102212464, %v2654
        %v2667 = vshrl.u32 920167782, %v2655
        %v2668 = vor.u32 %v2666, %v2667
        %v2669 = vshll.u32 920167782, %v2654
        %v2670 = vshrl.u32 1326507024, %v2655
        %v2671 = vor.u32 %v2669, %v2670
        %vm2672 = vcmp.lt.s32.totalorder %v2653, 1
        %vm2673 = vcmp.lt.s32.totalorder %v2653, 2
        %vm2674 = vcmp.lt.s32.totalorder %v2653, 3
        %vm2675 = vcmp.lt.s32.totalorder %v2653, 4
        %v2676 = vsel %vm2672, %v2656, %v2659
        %v2677 = vsel %vm2675, %v2665, 2102212464
        %v2678 = vsel %vm2674, %v2662, %v2677
        %v2679 = vsel %vm2673, %v2676, %v2678
        %v2680 = vsel %vm2672, %v2659, %v2662
        %v2681 = vsel %vm2675, %v2668, 920167782
        %v2682 = vsel %vm2674, %v2665, %v2681
        %v2683 = vsel %vm2673, %v2680, %v2682
        %v2684 = vsel %vm2672, %v2662, %v2665
        %v2685 = vsel %vm2675, %v2671, 1326507024
        %v2686 = vsel %vm2674, %v2668, %v2685
        %v2687 = vsel %vm2673, %v2684, %v2686
        %v2688 = vshll.u32 %v2648, 8
        %v2689 = vmul.u32.u64.compose %v2688, %v2687
        %v2690 = vextract.low.u32 %v2689
        %v2691 = vextract.high.u32 %v2689
        %v2692 = vmul.u32.u64.compose %v2688, %v2683
        %v2693 = vextract.low.u32 %v2692
        %v2694 = vextract.high.u32 %v2692
        %v2695 = vmul.u32 %v2688, %v2679
        %v2696 = vadd.s32 %v2691, %v2693
        %vm2697 = vc.u32 %v2691, %v2693
        %v2698 = vadd.s32 %v2694, 1
        %v2699 = vsel %vm2697, %v2698, %v2694
        %v2700 = vadd.s32 %v2695, %v2699
        %v2701 = vadd.s32 %v2700, 536870912
        %v2702 = vshrl.u32 %v2701, 30
        %v2703 = vshll.u32 %v2702, 30
        %v2704 = vsub.s32 %v2700, %v2703
        %vm2705 = vcmp.lt.s32.totalorder %v2704, 0
        %v2706 = vsub.s32 0, %v2704
        %v2707 = vsel %vm2705, %v2706, %v2704
        %v2708 = vclz %v2707
        %v2709 = vsub.s32 %v2708, 2
        %vm2710 = vcmp.gt.s32.totalorder 0, %v2709
        %v2711 = vsel %vm2710, 0, %v2709
        %v2712 = vsub.s32 32, %v2711
        %v2713 = vshll.u32 %v2704, %v2711
        %v2714 = vshrl.u32 %v2696, %v2712
        %v2715 = vor.u32 %v2713, %v2714
        %v2716 = vsub.s32 4294967266, %v2711
        %v2717 = vadd.s32 %v2716, 127
        %v2718 = vshll.u32 %v2717, 23
        %v2719 = vor.u32 4788187, %v2718
        %v2720 = vand.u32 2147483647, %v2719
        %v2722 = vcvt.s32.f32 %v2715
        %v2723 = vmul.f32 %v2722, %v2720
        %v2724 = vxor.u32 %v2723, 2147483648
        %v2725 = vsel %vm2642, %v2724, %v2723
        %v2726 = vsub.s32 4, %v2702
        %v2727 = vsel %vm2642, %v2726, %v2702
        %v2728 = vsel %vm2641, %v257, %v2725
        %v2729 = vsel %vm2641, 0, %v2727
        %v2730 = vcosq.f32.pop %v2728
        %v2731 = vsinq.f32.pop %v2728
        %vm2732 = vweird.f32 %v257
        %v2733 = vadd.s32 %v2729, 3
        %v2734 = vand.u32 %v2733, 3
        %vm2735 = vcmp.lt.s32.totalorder %v2734, 2
        %vm2736 = vcmp.eq.s32.totalorder %v2734, 0
        %v2737 = vxor.u32 %v2731, 2147483648
        %v2738 = vsel %vm2736, %v2730, %v2737
        %vm2739 = vcmp.eq.s32.totalorder %v2734, 2
        %v2740 = vxor.u32 %v2730, 2147483648
        %v2741 = vsel %vm2739, %v2740, %v2731
        %v2742 = vsel %vm2735, %v2738, %v2741
        %v2743 = vsel %vm2732, nan, %v2742
        %v2744 = vand.u32 2147483647, %v258
        %vm2745 = vcmp.le.f32.partialorder %v2744, 0.7853982
        %vm2746 = vcmp.lt.s32.totalorder %v258, 0
        %v2747 = vand.u32 %v258, 2139095040
        %v2748 = vshrl.u32 %v2747, 23
        %v2749 = vsub.s32 %v2748, 127
        %v2750 = vand.u32 2147483647, %v258
        %v2751 = vand.u32 %v2750, 8388607
        %v2752 = vor.u32 %v2751, 8388608
        %v2753 = vsub.s32 0, %v2752
        %v2754 = vadd.s32 %v2749, 1
        %vm2755 = vcmp.gt.s32.totalorder %v2754, 0
        %v2756 = vsel %vm2755, %v2754, 0
        %v2757 = vshrl.u32 %v2756, 5
        %v2758 = vand.u32 %v2756, 31
        %v2759 = vsub.s32 32, %v2758
        %v2760 = vshrl.u32 683565275, %v2759
        %v2761 = vshll.u32 683565275, %v2758
        %v2762 = vshrl.u32 2475754826, %v2759
        %v2763 = vor.u32 %v2761, %v2762
        %v2764 = vshll.u32 2475754826, %v2758
        %v2765 = vshrl.u32 2131351028, %v2759
        %v2766 = vor.u32 %v2764, %v2765
        %v2767 = vshll.u32 2131351028, %v2758
        %v2768 = vshrl.u32 2102212464, %v2759
        %v2769 = vor.u32 %v2767, %v2768
        %v2770 = vshll.u32 2102212464, %v2758
        %v2771 = vshrl.u32 920167782, %v2759
        %v2772 = vor.u32 %v2770, %v2771
        %v2773 = vshll.u32 920167782, %v2758
        %v2774 = vshrl.u32 1326507024, %v2759
        %v2775 = vor.u32 %v2773, %v2774
        %vm2776 = vcmp.lt.s32.totalorder %v2757, 1
        %vm2777 = vcmp.lt.s32.totalorder %v2757, 2
        %vm2778 = vcmp.lt.s32.totalorder %v2757, 3
        %vm2779 = vcmp.lt.s32.totalorder %v2757, 4
        %v2780 = vsel %vm2776, %v2760, %v2763
        %v2781 = vsel %vm2779, %v2769, 2102212464
        %v2782 = vsel %vm2778, %v2766, %v2781
        %v2783 = vsel %vm2777, %v2780, %v2782
        %v2784 = vsel %vm2776, %v2763, %v2766
        %v2785 = vsel %vm2779, %v2772, 920167782
        %v2786 = vsel %vm2778, %v2769, %v2785
        %v2787 = vsel %vm2777, %v2784, %v2786
        %v2788 = vsel %vm2776, %v2766, %v2769
        %v2789 = vsel %vm2779, %v2775, 1326507024
        %v2790 = vsel %vm2778, %v2772, %v2789
        %v2791 = vsel %vm2777, %v2788, %v2790
        %v2792 = vshll.u32 %v2752, 8
        %v2793 = vmul.u32.u64.compose %v2792, %v2791
        %v2794 = vextract.low.u32 %v2793
        %v2795 = vextract.high.u32 %v2793
        %v2796 = vmul.u32.u64.compose %v2792, %v2787
        %v2797 = vextract.low.u32 %v2796
        %v2798 = vextract.high.u32 %v2796
        %v2799 = vmul.u32 %v2792, %v2783
        %v2800 = vadd.s32 %v2795, %v2797
        %vm2801 = vc.u32 %v2795, %v2797
        %v2802 = vadd.s32 %v2798, 1
        %v2803 = vsel %vm2801, %v2802, %v2798
        %v2804 = vadd.s32 %v2799, %v2803
        %v2805 = vadd.s32 %v2804, 536870912
        %v2806 = vshrl.u32 %v2805, 30
        %v2807 = vshll.u32 %v2806, 30
        %v2808 = vsub.s32 %v2804, %v2807
        %vm2809 = vcmp.lt.s32.totalorder %v2808, 0
        %v2810 = vsub.s32 0, %v2808
        %v2811 = vsel %vm2809, %v2810, %v2808
        %v2812 = vclz %v2811
        %v2813 = vsub.s32 %v2812, 2
        %vm2814 = vcmp.gt.s32.totalorder 0, %v2813
        %v2815 = vsel %vm2814, 0, %v2813
        %v2816 = vsub.s32 32, %v2815
        %v2817 = vshll.u32 %v2808, %v2815
        %v2818 = vshrl.u32 %v2800, %v2816
        %v2819 = vor.u32 %v2817, %v2818
        %v2820 = vsub.s32 4294967266, %v2815
        %v2821 = vadd.s32 %v2820, 127
        %v2822 = vshll.u32 %v2821, 23
        %v2823 = vor.u32 4788187, %v2822
        %v2824 = vand.u32 2147483647, %v2823
        %v2826 = vcvt.s32.f32 %v2819
        %v2827 = vmul.f32 %v2826, %v2824
        %v2828 = vxor.u32 %v2827, 2147483648
        %v2829 = vsel %vm2746, %v2828, %v2827
        %v2830 = vsub.s32 4, %v2806
        %v2831 = vsel %vm2746, %v2830, %v2806
        %v2832 = vsel %vm2745, %v258, %v2829
        %v2833 = vsel %vm2745, 0, %v2831
        %v2834 = vcosq.f32.pop %v2832
        %v2835 = vsinq.f32.pop %v2832
        %vm2836 = vweird.f32 %v258
        %v2837 = vadd.s32 %v2833, 3
        %v2838 = vand.u32 %v2837, 3
        %vm2839 = vcmp.lt.s32.totalorder %v2838, 2
        %vm2840 = vcmp.eq.s32.totalorder %v2838, 0
        %v2841 = vxor.u32 %v2835, 2147483648
        %v2842 = vsel %vm2840, %v2834, %v2841
        %vm2843 = vcmp.eq.s32.totalorder %v2838, 2
        %v2844 = vxor.u32 %v2834, 2147483648
        %v2845 = vsel %vm2843, %v2844, %v2835
        %v2846 = vsel %vm2839, %v2842, %v2845
        %v2847 = vsel %vm2836, nan, %v2846
        %v2848 = vand.u32 2147483647, %v259
        %vm2849 = vcmp.le.f32.partialorder %v2848, 0.7853982
        %vm2850 = vcmp.lt.s32.totalorder %v259, 0
        %v2851 = vand.u32 %v259, 2139095040
        %v2852 = vshrl.u32 %v2851, 23
        %v2853 = vsub.s32 %v2852, 127
        %v2854 = vand.u32 2147483647, %v259
        %v2855 = vand.u32 %v2854, 8388607
        %v2856 = vor.u32 %v2855, 8388608
        %v2857 = vsub.s32 0, %v2856
        %v2858 = vadd.s32 %v2853, 1
        %vm2859 = vcmp.gt.s32.totalorder %v2858, 0
        %v2860 = vsel %vm2859, %v2858, 0
        %v2861 = vshrl.u32 %v2860, 5
        %v2862 = vand.u32 %v2860, 31
        %v2863 = vsub.s32 32, %v2862
        %v2864 = vshrl.u32 683565275, %v2863
        %v2865 = vshll.u32 683565275, %v2862
        %v2866 = vshrl.u32 2475754826, %v2863
        %v2867 = vor.u32 %v2865, %v2866
        %v2868 = vshll.u32 2475754826, %v2862
        %v2869 = vshrl.u32 2131351028, %v2863
        %v2870 = vor.u32 %v2868, %v2869
        %v2871 = vshll.u32 2131351028, %v2862
        %v2872 = vshrl.u32 2102212464, %v2863
        %v2873 = vor.u32 %v2871, %v2872
        %v2874 = vshll.u32 2102212464, %v2862
        %v2875 = vshrl.u32 920167782, %v2863
        %v2876 = vor.u32 %v2874, %v2875
        %v2877 = vshll.u32 920167782, %v2862
        %v2878 = vshrl.u32 1326507024, %v2863
        %v2879 = vor.u32 %v2877, %v2878
        %vm2880 = vcmp.lt.s32.totalorder %v2861, 1
        %vm2881 = vcmp.lt.s32.totalorder %v2861, 2
        %vm2882 = vcmp.lt.s32.totalorder %v2861, 3
        %vm2883 = vcmp.lt.s32.totalorder %v2861, 4
        %v2884 = vsel %vm2880, %v2864, %v2867
        %v2885 = vsel %vm2883, %v2873, 2102212464
        %v2886 = vsel %vm2882, %v2870, %v2885
        %v2887 = vsel %vm2881, %v2884, %v2886
        %v2888 = vsel %vm2880, %v2867, %v2870
        %v2889 = vsel %vm2883, %v2876, 920167782
        %v2890 = vsel %vm2882, %v2873, %v2889
        %v2891 = vsel %vm2881, %v2888, %v2890
        %v2892 = vsel %vm2880, %v2870, %v2873
        %v2893 = vsel %vm2883, %v2879, 1326507024
        %v2894 = vsel %vm2882, %v2876, %v2893
        %v2895 = vsel %vm2881, %v2892, %v2894
        %v2896 = vshll.u32 %v2856, 8
        %v2897 = vmul.u32.u64.compose %v2896, %v2895
        %v2898 = vextract.low.u32 %v2897
        %v2899 = vextract.high.u32 %v2897
        %v2900 = vmul.u32.u64.compose %v2896, %v2891
        %v2901 = vextract.low.u32 %v2900
        %v2902 = vextract.high.u32 %v2900
        %v2903 = vmul.u32 %v2896, %v2887
        %v2904 = vadd.s32 %v2899, %v2901
        %vm2905 = vc.u32 %v2899, %v2901
        %v2906 = vadd.s32 %v2902, 1
        %v2907 = vsel %vm2905, %v2906, %v2902
        %v2908 = vadd.s32 %v2903, %v2907
        %v2909 = vadd.s32 %v2908, 536870912
        %v2910 = vshrl.u32 %v2909, 30
        %v2911 = vshll.u32 %v2910, 30
        %v2912 = vsub.s32 %v2908, %v2911
        %vm2913 = vcmp.lt.s32.totalorder %v2912, 0
        %v2914 = vsub.s32 0, %v2912
        %v2915 = vsel %vm2913, %v2914, %v2912
        %v2916 = vclz %v2915
        %v2917 = vsub.s32 %v2916, 2
        %vm2918 = vcmp.gt.s32.totalorder 0, %v2917
        %v2919 = vsel %vm2918, 0, %v2917
        %v2920 = vsub.s32 32, %v2919
        %v2921 = vshll.u32 %v2912, %v2919
        %v2922 = vshrl.u32 %v2904, %v2920
        %v2923 = vor.u32 %v2921, %v2922
        %v2924 = vsub.s32 4294967266, %v2919
        %v2925 = vadd.s32 %v2924, 127
        %v2926 = vshll.u32 %v2925, 23
        %v2927 = vor.u32 4788187, %v2926
        %v2928 = vand.u32 2147483647, %v2927
        %v2930 = vcvt.s32.f32 %v2923
        %v2931 = vmul.f32 %v2930, %v2928
        %v2932 = vxor.u32 %v2931, 2147483648
        %v2933 = vsel %vm2850, %v2932, %v2931
        %v2934 = vsub.s32 4, %v2910
        %v2935 = vsel %vm2850, %v2934, %v2910
        %v2936 = vsel %vm2849, %v259, %v2933
        %v2937 = vsel %vm2849, 0, %v2935
        %v2938 = vcosq.f32.pop %v2936
        %v2939 = vsinq.f32.pop %v2936
        %vm2940 = vweird.f32 %v259
        %v2941 = vadd.s32 %v2937, 3
        %v2942 = vand.u32 %v2941, 3
        %vm2943 = vcmp.lt.s32.totalorder %v2942, 2
        %vm2944 = vcmp.eq.s32.totalorder %v2942, 0
        %v2945 = vxor.u32 %v2939, 2147483648
        %v2946 = vsel %vm2944, %v2938, %v2945
        %vm2947 = vcmp.eq.s32.totalorder %v2942, 2
        %v2948 = vxor.u32 %v2938, 2147483648
        %v2949 = vsel %vm2947, %v2948, %v2939
        %v2950 = vsel %vm2943, %v2946, %v2949
        %v2951 = vsel %vm2940, nan, %v2950
        %v2952 = vand.u32 2147483647, %v260
        %vm2953 = vcmp.le.f32.partialorder %v2952, 0.7853982
        %vm2954 = vcmp.lt.s32.totalorder %v260, 0
        %v2955 = vand.u32 %v260, 2139095040
        %v2956 = vshrl.u32 %v2955, 23
        %v2957 = vsub.s32 %v2956, 127
        %v2958 = vand.u32 2147483647, %v260
        %v2959 = vand.u32 %v2958, 8388607
        %v2960 = vor.u32 %v2959, 8388608
        %v2961 = vsub.s32 0, %v2960
        %v2962 = vadd.s32 %v2957, 1
        %vm2963 = vcmp.gt.s32.totalorder %v2962, 0
        %v2964 = vsel %vm2963, %v2962, 0
        %v2965 = vshrl.u32 %v2964, 5
        %v2966 = vand.u32 %v2964, 31
        %v2967 = vsub.s32 32, %v2966
        %v2968 = vshrl.u32 683565275, %v2967
        %v2969 = vshll.u32 683565275, %v2966
        %v2970 = vshrl.u32 2475754826, %v2967
        %v2971 = vor.u32 %v2969, %v2970
        %v2972 = vshll.u32 2475754826, %v2966
        %v2973 = vshrl.u32 2131351028, %v2967
        %v2974 = vor.u32 %v2972, %v2973
        %v2975 = vshll.u32 2131351028, %v2966
        %v2976 = vshrl.u32 2102212464, %v2967
        %v2977 = vor.u32 %v2975, %v2976
        %v2978 = vshll.u32 2102212464, %v2966
        %v2979 = vshrl.u32 920167782, %v2967
        %v2980 = vor.u32 %v2978, %v2979
        %v2981 = vshll.u32 920167782, %v2966
        %v2982 = vshrl.u32 1326507024, %v2967
        %v2983 = vor.u32 %v2981, %v2982
        %vm2984 = vcmp.lt.s32.totalorder %v2965, 1
        %vm2985 = vcmp.lt.s32.totalorder %v2965, 2
        %vm2986 = vcmp.lt.s32.totalorder %v2965, 3
        %vm2987 = vcmp.lt.s32.totalorder %v2965, 4
        %v2988 = vsel %vm2984, %v2968, %v2971
        %v2989 = vsel %vm2987, %v2977, 2102212464
        %v2990 = vsel %vm2986, %v2974, %v2989
        %v2991 = vsel %vm2985, %v2988, %v2990
        %v2992 = vsel %vm2984, %v2971, %v2974
        %v2993 = vsel %vm2987, %v2980, 920167782
        %v2994 = vsel %vm2986, %v2977, %v2993
        %v2995 = vsel %vm2985, %v2992, %v2994
        %v2996 = vsel %vm2984, %v2974, %v2977
        %v2997 = vsel %vm2987, %v2983, 1326507024
        %v2998 = vsel %vm2986, %v2980, %v2997
        %v2999 = vsel %vm2985, %v2996, %v2998
        %v3000 = vshll.u32 %v2960, 8
        %v3001 = vmul.u32.u64.compose %v3000, %v2999
        %v3002 = vextract.low.u32 %v3001
        %v3003 = vextract.high.u32 %v3001
        %v3004 = vmul.u32.u64.compose %v3000, %v2995
        %v3005 = vextract.low.u32 %v3004
        %v3006 = vextract.high.u32 %v3004
        %v3007 = vmul.u32 %v3000, %v2991
        %v3008 = vadd.s32 %v3003, %v3005
        %vm3009 = vc.u32 %v3003, %v3005
        %v3010 = vadd.s32 %v3006, 1
        %v3011 = vsel %vm3009, %v3010, %v3006
        %v3012 = vadd.s32 %v3007, %v3011
        %v3013 = vadd.s32 %v3012, 536870912
        %v3014 = vshrl.u32 %v3013, 30
        %v3015 = vshll.u32 %v3014, 30
        %v3016 = vsub.s32 %v3012, %v3015
        %vm3017 = vcmp.lt.s32.totalorder %v3016, 0
        %v3018 = vsub.s32 0, %v3016
        %v3019 = vsel %vm3017, %v3018, %v3016
        %v3020 = vclz %v3019
        %v3021 = vsub.s32 %v3020, 2
        %vm3022 = vcmp.gt.s32.totalorder 0, %v3021
        %v3023 = vsel %vm3022, 0, %v3021
        %v3024 = vsub.s32 32, %v3023
        %v3025 = vshll.u32 %v3016, %v3023
        %v3026 = vshrl.u32 %v3008, %v3024
        %v3027 = vor.u32 %v3025, %v3026
        %v3028 = vsub.s32 4294967266, %v3023
        %v3029 = vadd.s32 %v3028, 127
        %v3030 = vshll.u32 %v3029, 23
        %v3031 = vor.u32 4788187, %v3030
        %v3032 = vand.u32 2147483647, %v3031
        %v3034 = vcvt.s32.f32 %v3027
        %v3035 = vmul.f32 %v3034, %v3032
        %v3036 = vxor.u32 %v3035, 2147483648
        %v3037 = vsel %vm2954, %v3036, %v3035
        %v3038 = vsub.s32 4, %v3014
        %v3039 = vsel %vm2954, %v3038, %v3014
        %v3040 = vsel %vm2953, %v260, %v3037
        %v3041 = vsel %vm2953, 0, %v3039
        %v3042 = vcosq.f32.pop %v3040
        %v3043 = vsinq.f32.pop %v3040
        %vm3044 = vweird.f32 %v260
        %v3045 = vadd.s32 %v3041, 3
        %v3046 = vand.u32 %v3045, 3
        %vm3047 = vcmp.lt.s32.totalorder %v3046, 2
        %vm3048 = vcmp.eq.s32.totalorder %v3046, 0
        %v3049 = vxor.u32 %v3043, 2147483648
        %v3050 = vsel %vm3048, %v3042, %v3049
        %vm3051 = vcmp.eq.s32.totalorder %v3046, 2
        %v3052 = vxor.u32 %v3042, 2147483648
        %v3053 = vsel %vm3051, %v3052, %v3043
        %v3054 = vsel %vm3047, %v3050, %v3053
        %v3055 = vsel %vm3044, nan, %v3054
        %v3056 = vand.u32 2147483647, %v261
        %vm3057 = vcmp.le.f32.partialorder %v3056, 0.7853982
        %vm3058 = vcmp.lt.s32.totalorder %v261, 0
        %v3059 = vand.u32 %v261, 2139095040
        %v3060 = vshrl.u32 %v3059, 23
        %v3061 = vsub.s32 %v3060, 127
        %v3062 = vand.u32 2147483647, %v261
        %v3063 = vand.u32 %v3062, 8388607
        %v3064 = vor.u32 %v3063, 8388608
        %v3065 = vsub.s32 0, %v3064
        %v3066 = vadd.s32 %v3061, 1
        %vm3067 = vcmp.gt.s32.totalorder %v3066, 0
        %v3068 = vsel %vm3067, %v3066, 0
        %v3069 = vshrl.u32 %v3068, 5
        %v3070 = vand.u32 %v3068, 31
        %v3071 = vsub.s32 32, %v3070
        %v3072 = vshrl.u32 683565275, %v3071
        %v3073 = vshll.u32 683565275, %v3070
        %v3074 = vshrl.u32 2475754826, %v3071
        %v3075 = vor.u32 %v3073, %v3074
        %v3076 = vshll.u32 2475754826, %v3070
        %v3077 = vshrl.u32 2131351028, %v3071
        %v3078 = vor.u32 %v3076, %v3077
        %v3079 = vshll.u32 2131351028, %v3070
        %v3080 = vshrl.u32 2102212464, %v3071
        %v3081 = vor.u32 %v3079, %v3080
        %v3082 = vshll.u32 2102212464, %v3070
        %v3083 = vshrl.u32 920167782, %v3071
        %v3084 = vor.u32 %v3082, %v3083
        %v3085 = vshll.u32 920167782, %v3070
        %v3086 = vshrl.u32 1326507024, %v3071
        %v3087 = vor.u32 %v3085, %v3086
        %vm3088 = vcmp.lt.s32.totalorder %v3069, 1
        %vm3089 = vcmp.lt.s32.totalorder %v3069, 2
        %vm3090 = vcmp.lt.s32.totalorder %v3069, 3
        %vm3091 = vcmp.lt.s32.totalorder %v3069, 4
        %v3092 = vsel %vm3088, %v3072, %v3075
        %v3093 = vsel %vm3091, %v3081, 2102212464
        %v3094 = vsel %vm3090, %v3078, %v3093
        %v3095 = vsel %vm3089, %v3092, %v3094
        %v3096 = vsel %vm3088, %v3075, %v3078
        %v3097 = vsel %vm3091, %v3084, 920167782
        %v3098 = vsel %vm3090, %v3081, %v3097
        %v3099 = vsel %vm3089, %v3096, %v3098
        %v3100 = vsel %vm3088, %v3078, %v3081
        %v3101 = vsel %vm3091, %v3087, 1326507024
        %v3102 = vsel %vm3090, %v3084, %v3101
        %v3103 = vsel %vm3089, %v3100, %v3102
        %v3104 = vshll.u32 %v3064, 8
        %v3105 = vmul.u32.u64.compose %v3104, %v3103
        %v3106 = vextract.low.u32 %v3105
        %v3107 = vextract.high.u32 %v3105
        %v3108 = vmul.u32.u64.compose %v3104, %v3099
        %v3109 = vextract.low.u32 %v3108
        %v3110 = vextract.high.u32 %v3108
        %v3111 = vmul.u32 %v3104, %v3095
        %v3112 = vadd.s32 %v3107, %v3109
        %vm3113 = vc.u32 %v3107, %v3109
        %v3114 = vadd.s32 %v3110, 1
        %v3115 = vsel %vm3113, %v3114, %v3110
        %v3116 = vadd.s32 %v3111, %v3115
        %v3117 = vadd.s32 %v3116, 536870912
        %v3118 = vshrl.u32 %v3117, 30
        %v3119 = vshll.u32 %v3118, 30
        %v3120 = vsub.s32 %v3116, %v3119
        %vm3121 = vcmp.lt.s32.totalorder %v3120, 0
        %v3122 = vsub.s32 0, %v3120
        %v3123 = vsel %vm3121, %v3122, %v3120
        %v3124 = vclz %v3123
        %v3125 = vsub.s32 %v3124, 2
        %vm3126 = vcmp.gt.s32.totalorder 0, %v3125
        %v3127 = vsel %vm3126, 0, %v3125
        %v3128 = vsub.s32 32, %v3127
        %v3129 = vshll.u32 %v3120, %v3127
        %v3130 = vshrl.u32 %v3112, %v3128
        %v3131 = vor.u32 %v3129, %v3130
        %v3132 = vsub.s32 4294967266, %v3127
        %v3133 = vadd.s32 %v3132, 127
        %v3134 = vshll.u32 %v3133, 23
        %v3135 = vor.u32 4788187, %v3134
        %v3136 = vand.u32 2147483647, %v3135
        %v3138 = vcvt.s32.f32 %v3131
        %v3139 = vmul.f32 %v3138, %v3136
        %v3140 = vxor.u32 %v3139, 2147483648
        %v3141 = vsel %vm3058, %v3140, %v3139
        %v3142 = vsub.s32 4, %v3118
        %v3143 = vsel %vm3058, %v3142, %v3118
        %v3144 = vsel %vm3057, %v261, %v3141
        %v3145 = vsel %vm3057, 0, %v3143
        %v3146 = vcosq.f32.pop %v3144
        %v3147 = vsinq.f32.pop %v3144
        %vm3148 = vweird.f32 %v261
        %v3149 = vadd.s32 %v3145, 3
        %v3150 = vand.u32 %v3149, 3
        %vm3151 = vcmp.lt.s32.totalorder %v3150, 2
        %vm3152 = vcmp.eq.s32.totalorder %v3150, 0
        %v3153 = vxor.u32 %v3147, 2147483648
        %v3154 = vsel %vm3152, %v3146, %v3153
        %vm3155 = vcmp.eq.s32.totalorder %v3150, 2
        %v3156 = vxor.u32 %v3146, 2147483648
        %v3157 = vsel %vm3155, %v3156, %v3147
        %v3158 = vsel %vm3151, %v3154, %v3157
        %v3159 = vsel %vm3148, nan, %v3158
        %v3160 = vand.u32 2147483647, %v262
        %vm3161 = vcmp.le.f32.partialorder %v3160, 0.7853982
        %vm3162 = vcmp.lt.s32.totalorder %v262, 0
        %v3163 = vand.u32 %v262, 2139095040
        %v3164 = vshrl.u32 %v3163, 23
        %v3165 = vsub.s32 %v3164, 127
        %v3166 = vand.u32 2147483647, %v262
        %v3167 = vand.u32 %v3166, 8388607
        %v3168 = vor.u32 %v3167, 8388608
        %v3169 = vsub.s32 0, %v3168
        %v3170 = vadd.s32 %v3165, 1
        %vm3171 = vcmp.gt.s32.totalorder %v3170, 0
        %v3172 = vsel %vm3171, %v3170, 0
        %v3173 = vshrl.u32 %v3172, 5
        %v3174 = vand.u32 %v3172, 31
        %v3175 = vsub.s32 32, %v3174
        %v3176 = vshrl.u32 683565275, %v3175
        %v3177 = vshll.u32 683565275, %v3174
        %v3178 = vshrl.u32 2475754826, %v3175
        %v3179 = vor.u32 %v3177, %v3178
        %v3180 = vshll.u32 2475754826, %v3174
        %v3181 = vshrl.u32 2131351028, %v3175
        %v3182 = vor.u32 %v3180, %v3181
        %v3183 = vshll.u32 2131351028, %v3174
        %v3184 = vshrl.u32 2102212464, %v3175
        %v3185 = vor.u32 %v3183, %v3184
        %v3186 = vshll.u32 2102212464, %v3174
        %v3187 = vshrl.u32 920167782, %v3175
        %v3188 = vor.u32 %v3186, %v3187
        %v3189 = vshll.u32 920167782, %v3174
        %v3190 = vshrl.u32 1326507024, %v3175
        %v3191 = vor.u32 %v3189, %v3190
        %vm3192 = vcmp.lt.s32.totalorder %v3173, 1
        %vm3193 = vcmp.lt.s32.totalorder %v3173, 2
        %vm3194 = vcmp.lt.s32.totalorder %v3173, 3
        %vm3195 = vcmp.lt.s32.totalorder %v3173, 4
        %v3196 = vsel %vm3192, %v3176, %v3179
        %v3197 = vsel %vm3195, %v3185, 2102212464
        %v3198 = vsel %vm3194, %v3182, %v3197
        %v3199 = vsel %vm3193, %v3196, %v3198
        %v3200 = vsel %vm3192, %v3179, %v3182
        %v3201 = vsel %vm3195, %v3188, 920167782
        %v3202 = vsel %vm3194, %v3185, %v3201
        %v3203 = vsel %vm3193, %v3200, %v3202
        %v3204 = vsel %vm3192, %v3182, %v3185
        %v3205 = vsel %vm3195, %v3191, 1326507024
        %v3206 = vsel %vm3194, %v3188, %v3205
        %v3207 = vsel %vm3193, %v3204, %v3206
        %v3208 = vshll.u32 %v3168, 8
        %v3209 = vmul.u32.u64.compose %v3208, %v3207
        %v3210 = vextract.low.u32 %v3209
        %v3211 = vextract.high.u32 %v3209
        %v3212 = vmul.u32.u64.compose %v3208, %v3203
        %v3213 = vextract.low.u32 %v3212
        %v3214 = vextract.high.u32 %v3212
        %v3215 = vmul.u32 %v3208, %v3199
        %v3216 = vadd.s32 %v3211, %v3213
        %vm3217 = vc.u32 %v3211, %v3213
        %v3218 = vadd.s32 %v3214, 1
        %v3219 = vsel %vm3217, %v3218, %v3214
        %v3220 = vadd.s32 %v3215, %v3219
        %v3221 = vadd.s32 %v3220, 536870912
        %v3222 = vshrl.u32 %v3221, 30
        %v3223 = vshll.u32 %v3222, 30
        %v3224 = vsub.s32 %v3220, %v3223
        %vm3225 = vcmp.lt.s32.totalorder %v3224, 0
        %v3226 = vsub.s32 0, %v3224
        %v3227 = vsel %vm3225, %v3226, %v3224
        %v3228 = vclz %v3227
        %v3229 = vsub.s32 %v3228, 2
        %vm3230 = vcmp.gt.s32.totalorder 0, %v3229
        %v3231 = vsel %vm3230, 0, %v3229
        %v3232 = vsub.s32 32, %v3231
        %v3233 = vshll.u32 %v3224, %v3231
        %v3234 = vshrl.u32 %v3216, %v3232
        %v3235 = vor.u32 %v3233, %v3234
        %v3236 = vsub.s32 4294967266, %v3231
        %v3237 = vadd.s32 %v3236, 127
        %v3238 = vshll.u32 %v3237, 23
        %v3239 = vor.u32 4788187, %v3238
        %v3240 = vand.u32 2147483647, %v3239
        %v3242 = vcvt.s32.f32 %v3235
        %v3243 = vmul.f32 %v3242, %v3240
        %v3244 = vxor.u32 %v3243, 2147483648
        %v3245 = vsel %vm3162, %v3244, %v3243
        %v3246 = vsub.s32 4, %v3222
        %v3247 = vsel %vm3162, %v3246, %v3222
        %v3248 = vsel %vm3161, %v262, %v3245
        %v3249 = vsel %vm3161, 0, %v3247
        %v3250 = vcosq.f32.pop %v3248
        %v3251 = vsinq.f32.pop %v3248
        %vm3252 = vweird.f32 %v262
        %v3253 = vadd.s32 %v3249, 3
        %v3254 = vand.u32 %v3253, 3
        %vm3255 = vcmp.lt.s32.totalorder %v3254, 2
        %vm3256 = vcmp.eq.s32.totalorder %v3254, 0
        %v3257 = vxor.u32 %v3251, 2147483648
        %v3258 = vsel %vm3256, %v3250, %v3257
        %vm3259 = vcmp.eq.s32.totalorder %v3254, 2
        %v3260 = vxor.u32 %v3250, 2147483648
        %v3261 = vsel %vm3259, %v3260, %v3251
        %v3262 = vsel %vm3255, %v3258, %v3261
        %v3263 = vsel %vm3252, nan, %v3262
        %v3264 = vand.u32 2147483647, %v263
        %vm3265 = vcmp.le.f32.partialorder %v3264, 0.7853982
        %vm3266 = vcmp.lt.s32.totalorder %v263, 0
        %v3267 = vand.u32 %v263, 2139095040
        %v3268 = vshrl.u32 %v3267, 23
        %v3269 = vsub.s32 %v3268, 127
        %v3270 = vand.u32 2147483647, %v263
        %v3271 = vand.u32 %v3270, 8388607
        %v3272 = vor.u32 %v3271, 8388608
        %v3273 = vsub.s32 0, %v3272
        %v3274 = vadd.s32 %v3269, 1
        %vm3275 = vcmp.gt.s32.totalorder %v3274, 0
        %v3276 = vsel %vm3275, %v3274, 0
        %v3277 = vshrl.u32 %v3276, 5
        %v3278 = vand.u32 %v3276, 31
        %v3279 = vsub.s32 32, %v3278
        %v3280 = vshrl.u32 683565275, %v3279
        %v3281 = vshll.u32 683565275, %v3278
        %v3282 = vshrl.u32 2475754826, %v3279
        %v3283 = vor.u32 %v3281, %v3282
        %v3284 = vshll.u32 2475754826, %v3278
        %v3285 = vshrl.u32 2131351028, %v3279
        %v3286 = vor.u32 %v3284, %v3285
        %v3287 = vshll.u32 2131351028, %v3278
        %v3288 = vshrl.u32 2102212464, %v3279
        %v3289 = vor.u32 %v3287, %v3288
        %v3290 = vshll.u32 2102212464, %v3278
        %v3291 = vshrl.u32 920167782, %v3279
        %v3292 = vor.u32 %v3290, %v3291
        %v3293 = vshll.u32 920167782, %v3278
        %v3294 = vshrl.u32 1326507024, %v3279
        %v3295 = vor.u32 %v3293, %v3294
        %vm3296 = vcmp.lt.s32.totalorder %v3277, 1
        %vm3297 = vcmp.lt.s32.totalorder %v3277, 2
        %vm3298 = vcmp.lt.s32.totalorder %v3277, 3
        %vm3299 = vcmp.lt.s32.totalorder %v3277, 4
        %v3300 = vsel %vm3296, %v3280, %v3283
        %v3301 = vsel %vm3299, %v3289, 2102212464
        %v3302 = vsel %vm3298, %v3286, %v3301
        %v3303 = vsel %vm3297, %v3300, %v3302
        %v3304 = vsel %vm3296, %v3283, %v3286
        %v3305 = vsel %vm3299, %v3292, 920167782
        %v3306 = vsel %vm3298, %v3289, %v3305
        %v3307 = vsel %vm3297, %v3304, %v3306
        %v3308 = vsel %vm3296, %v3286, %v3289
        %v3309 = vsel %vm3299, %v3295, 1326507024
        %v3310 = vsel %vm3298, %v3292, %v3309
        %v3311 = vsel %vm3297, %v3308, %v3310
        %v3312 = vshll.u32 %v3272, 8
        %v3313 = vmul.u32.u64.compose %v3312, %v3311
        %v3314 = vextract.low.u32 %v3313
        %v3315 = vextract.high.u32 %v3313
        %v3316 = vmul.u32.u64.compose %v3312, %v3307
        %v3317 = vextract.low.u32 %v3316
        %v3318 = vextract.high.u32 %v3316
        %v3319 = vmul.u32 %v3312, %v3303
        %v3320 = vadd.s32 %v3315, %v3317
        %vm3321 = vc.u32 %v3315, %v3317
        %v3322 = vadd.s32 %v3318, 1
        %v3323 = vsel %vm3321, %v3322, %v3318
        %v3324 = vadd.s32 %v3319, %v3323
        %v3325 = vadd.s32 %v3324, 536870912
        %v3326 = vshrl.u32 %v3325, 30
        %v3327 = vshll.u32 %v3326, 30
        %v3328 = vsub.s32 %v3324, %v3327
        %vm3329 = vcmp.lt.s32.totalorder %v3328, 0
        %v3330 = vsub.s32 0, %v3328
        %v3331 = vsel %vm3329, %v3330, %v3328
        %v3332 = vclz %v3331
        %v3333 = vsub.s32 %v3332, 2
        %vm3334 = vcmp.gt.s32.totalorder 0, %v3333
        %v3335 = vsel %vm3334, 0, %v3333
        %v3336 = vsub.s32 32, %v3335
        %v3337 = vshll.u32 %v3328, %v3335
        %v3338 = vshrl.u32 %v3320, %v3336
        %v3339 = vor.u32 %v3337, %v3338
        %v3340 = vsub.s32 4294967266, %v3335
        %v3341 = vadd.s32 %v3340, 127
        %v3342 = vshll.u32 %v3341, 23
        %v3343 = vor.u32 4788187, %v3342
        %v3344 = vand.u32 2147483647, %v3343
        %v3346 = vcvt.s32.f32 %v3339
        %v3347 = vmul.f32 %v3346, %v3344
        %v3348 = vxor.u32 %v3347, 2147483648
        %v3349 = vsel %vm3266, %v3348, %v3347
        %v3350 = vsub.s32 4, %v3326
        %v3351 = vsel %vm3266, %v3350, %v3326
        %v3352 = vsel %vm3265, %v263, %v3349
        %v3353 = vsel %vm3265, 0, %v3351
        %v3354 = vcosq.f32.pop %v3352
        %v3355 = vsinq.f32.pop %v3352
        %vm3356 = vweird.f32 %v263
        %v3357 = vadd.s32 %v3353, 3
        %v3358 = vand.u32 %v3357, 3
        %vm3359 = vcmp.lt.s32.totalorder %v3358, 2
        %vm3360 = vcmp.eq.s32.totalorder %v3358, 0
        %v3361 = vxor.u32 %v3355, 2147483648
        %v3362 = vsel %vm3360, %v3354, %v3361
        %vm3363 = vcmp.eq.s32.totalorder %v3358, 2
        %v3364 = vxor.u32 %v3354, 2147483648
        %v3365 = vsel %vm3363, %v3364, %v3355
        %v3366 = vsel %vm3359, %v3362, %v3365
        %v3367 = vsel %vm3356, nan, %v3366
        %v3368 = vand.u32 2147483647, %v264
        %vm3369 = vcmp.le.f32.partialorder %v3368, 0.7853982
        %vm3370 = vcmp.lt.s32.totalorder %v264, 0
        %v3371 = vand.u32 %v264, 2139095040
        %v3372 = vshrl.u32 %v3371, 23
        %v3373 = vsub.s32 %v3372, 127
        %v3374 = vand.u32 2147483647, %v264
        %v3375 = vand.u32 %v3374, 8388607
        %v3376 = vor.u32 %v3375, 8388608
        %v3377 = vsub.s32 0, %v3376
        %v3378 = vadd.s32 %v3373, 1
        %vm3379 = vcmp.gt.s32.totalorder %v3378, 0
        %v3380 = vsel %vm3379, %v3378, 0
        %v3381 = vshrl.u32 %v3380, 5
        %v3382 = vand.u32 %v3380, 31
        %v3383 = vsub.s32 32, %v3382
        %v3384 = vshrl.u32 683565275, %v3383
        %v3385 = vshll.u32 683565275, %v3382
        %v3386 = vshrl.u32 2475754826, %v3383
        %v3387 = vor.u32 %v3385, %v3386
        %v3388 = vshll.u32 2475754826, %v3382
        %v3389 = vshrl.u32 2131351028, %v3383
        %v3390 = vor.u32 %v3388, %v3389
        %v3391 = vshll.u32 2131351028, %v3382
        %v3392 = vshrl.u32 2102212464, %v3383
        %v3393 = vor.u32 %v3391, %v3392
        %v3394 = vshll.u32 2102212464, %v3382
        %v3395 = vshrl.u32 920167782, %v3383
        %v3396 = vor.u32 %v3394, %v3395
        %v3397 = vshll.u32 920167782, %v3382
        %v3398 = vshrl.u32 1326507024, %v3383
        %v3399 = vor.u32 %v3397, %v3398
        %vm3400 = vcmp.lt.s32.totalorder %v3381, 1
        %vm3401 = vcmp.lt.s32.totalorder %v3381, 2
        %vm3402 = vcmp.lt.s32.totalorder %v3381, 3
        %vm3403 = vcmp.lt.s32.totalorder %v3381, 4
        %v3404 = vsel %vm3400, %v3384, %v3387
        %v3405 = vsel %vm3403, %v3393, 2102212464
        %v3406 = vsel %vm3402, %v3390, %v3405
        %v3407 = vsel %vm3401, %v3404, %v3406
        %v3408 = vsel %vm3400, %v3387, %v3390
        %v3409 = vsel %vm3403, %v3396, 920167782
        %v3410 = vsel %vm3402, %v3393, %v3409
        %v3411 = vsel %vm3401, %v3408, %v3410
        %v3412 = vsel %vm3400, %v3390, %v3393
        %v3413 = vsel %vm3403, %v3399, 1326507024
        %v3414 = vsel %vm3402, %v3396, %v3413
        %v3415 = vsel %vm3401, %v3412, %v3414
        %v3416 = vshll.u32 %v3376, 8
        %v3417 = vmul.u32.u64.compose %v3416, %v3415
        %v3418 = vextract.low.u32 %v3417
        %v3419 = vextract.high.u32 %v3417
        %v3420 = vmul.u32.u64.compose %v3416, %v3411
        %v3421 = vextract.low.u32 %v3420
        %v3422 = vextract.high.u32 %v3420
        %v3423 = vmul.u32 %v3416, %v3407
        %v3424 = vadd.s32 %v3419, %v3421
        %vm3425 = vc.u32 %v3419, %v3421
        %v3426 = vadd.s32 %v3422, 1
        %v3427 = vsel %vm3425, %v3426, %v3422
        %v3428 = vadd.s32 %v3423, %v3427
        %v3429 = vadd.s32 %v3428, 536870912
        %v3430 = vshrl.u32 %v3429, 30
        %v3431 = vshll.u32 %v3430, 30
        %v3432 = vsub.s32 %v3428, %v3431
        %vm3433 = vcmp.lt.s32.totalorder %v3432, 0
        %v3434 = vsub.s32 0, %v3432
        %v3435 = vsel %vm3433, %v3434, %v3432
        %v3436 = vclz %v3435
        %v3437 = vsub.s32 %v3436, 2
        %vm3438 = vcmp.gt.s32.totalorder 0, %v3437
        %v3439 = vsel %vm3438, 0, %v3437
        %v3440 = vsub.s32 32, %v3439
        %v3441 = vshll.u32 %v3432, %v3439
        %v3442 = vshrl.u32 %v3424, %v3440
        %v3443 = vor.u32 %v3441, %v3442
        %v3444 = vsub.s32 4294967266, %v3439
        %v3445 = vadd.s32 %v3444, 127
        %v3446 = vshll.u32 %v3445, 23
        %v3447 = vor.u32 4788187, %v3446
        %v3448 = vand.u32 2147483647, %v3447
        %v3450 = vcvt.s32.f32 %v3443
        %v3451 = vmul.f32 %v3450, %v3448
        %v3452 = vxor.u32 %v3451, 2147483648
        %v3453 = vsel %vm3370, %v3452, %v3451
        %v3454 = vsub.s32 4, %v3430
        %v3455 = vsel %vm3370, %v3454, %v3430
        %v3456 = vsel %vm3369, %v264, %v3453
        %v3457 = vsel %vm3369, 0, %v3455
        %v3458 = vcosq.f32.pop %v3456
        %v3459 = vsinq.f32.pop %v3456
        %vm3460 = vweird.f32 %v264
        %v3461 = vadd.s32 %v3457, 3
        %v3462 = vand.u32 %v3461, 3
        %vm3463 = vcmp.lt.s32.totalorder %v3462, 2
        %vm3464 = vcmp.eq.s32.totalorder %v3462, 0
        %v3465 = vxor.u32 %v3459, 2147483648
        %v3466 = vsel %vm3464, %v3458, %v3465
        %vm3467 = vcmp.eq.s32.totalorder %v3462, 2
        %v3468 = vxor.u32 %v3458, 2147483648
        %v3469 = vsel %vm3467, %v3468, %v3459
        %v3470 = vsel %vm3463, %v3466, %v3469
        %v3471 = vsel %vm3460, nan, %v3470
        %v3472 = vand.u32 2147483647, %v265
        %vm3473 = vcmp.le.f32.partialorder %v3472, 0.7853982
        %vm3474 = vcmp.lt.s32.totalorder %v265, 0
        %v3475 = vand.u32 %v265, 2139095040
        %v3476 = vshrl.u32 %v3475, 23
        %v3477 = vsub.s32 %v3476, 127
        %v3478 = vand.u32 2147483647, %v265
        %v3479 = vand.u32 %v3478, 8388607
        %v3480 = vor.u32 %v3479, 8388608
        %v3481 = vsub.s32 0, %v3480
        %v3482 = vadd.s32 %v3477, 1
        %vm3483 = vcmp.gt.s32.totalorder %v3482, 0
        %v3484 = vsel %vm3483, %v3482, 0
        %v3485 = vshrl.u32 %v3484, 5
        %v3486 = vand.u32 %v3484, 31
        %v3487 = vsub.s32 32, %v3486
        %v3488 = vshrl.u32 683565275, %v3487
        %v3489 = vshll.u32 683565275, %v3486
        %v3490 = vshrl.u32 2475754826, %v3487
        %v3491 = vor.u32 %v3489, %v3490
        %v3492 = vshll.u32 2475754826, %v3486
        %v3493 = vshrl.u32 2131351028, %v3487
        %v3494 = vor.u32 %v3492, %v3493
        %v3495 = vshll.u32 2131351028, %v3486
        %v3496 = vshrl.u32 2102212464, %v3487
        %v3497 = vor.u32 %v3495, %v3496
        %v3498 = vshll.u32 2102212464, %v3486
        %v3499 = vshrl.u32 920167782, %v3487
        %v3500 = vor.u32 %v3498, %v3499
        %v3501 = vshll.u32 920167782, %v3486
        %v3502 = vshrl.u32 1326507024, %v3487
        %v3503 = vor.u32 %v3501, %v3502
        %vm3504 = vcmp.lt.s32.totalorder %v3485, 1
        %vm3505 = vcmp.lt.s32.totalorder %v3485, 2
        %vm3506 = vcmp.lt.s32.totalorder %v3485, 3
        %vm3507 = vcmp.lt.s32.totalorder %v3485, 4
        %v3508 = vsel %vm3504, %v3488, %v3491
        %v3509 = vsel %vm3507, %v3497, 2102212464
        %v3510 = vsel %vm3506, %v3494, %v3509
        %v3511 = vsel %vm3505, %v3508, %v3510
        %v3512 = vsel %vm3504, %v3491, %v3494
        %v3513 = vsel %vm3507, %v3500, 920167782
        %v3514 = vsel %vm3506, %v3497, %v3513
        %v3515 = vsel %vm3505, %v3512, %v3514
        %v3516 = vsel %vm3504, %v3494, %v3497
        %v3517 = vsel %vm3507, %v3503, 1326507024
        %v3518 = vsel %vm3506, %v3500, %v3517
        %v3519 = vsel %vm3505, %v3516, %v3518
        %v3520 = vshll.u32 %v3480, 8
        %v3521 = vmul.u32.u64.compose %v3520, %v3519
        %v3522 = vextract.low.u32 %v3521
        %v3523 = vextract.high.u32 %v3521
        %v3524 = vmul.u32.u64.compose %v3520, %v3515
        %v3525 = vextract.low.u32 %v3524
        %v3526 = vextract.high.u32 %v3524
        %v3527 = vmul.u32 %v3520, %v3511
        %v3528 = vadd.s32 %v3523, %v3525
        %vm3529 = vc.u32 %v3523, %v3525
        %v3530 = vadd.s32 %v3526, 1
        %v3531 = vsel %vm3529, %v3530, %v3526
        %v3532 = vadd.s32 %v3527, %v3531
        %v3533 = vadd.s32 %v3532, 536870912
        %v3534 = vshrl.u32 %v3533, 30
        %v3535 = vshll.u32 %v3534, 30
        %v3536 = vsub.s32 %v3532, %v3535
        %vm3537 = vcmp.lt.s32.totalorder %v3536, 0
        %v3538 = vsub.s32 0, %v3536
        %v3539 = vsel %vm3537, %v3538, %v3536
        %v3540 = vclz %v3539
        %v3541 = vsub.s32 %v3540, 2
        %vm3542 = vcmp.gt.s32.totalorder 0, %v3541
        %v3543 = vsel %vm3542, 0, %v3541
        %v3544 = vsub.s32 32, %v3543
        %v3545 = vshll.u32 %v3536, %v3543
        %v3546 = vshrl.u32 %v3528, %v3544
        %v3547 = vor.u32 %v3545, %v3546
        %v3548 = vsub.s32 4294967266, %v3543
        %v3549 = vadd.s32 %v3548, 127
        %v3550 = vshll.u32 %v3549, 23
        %v3551 = vor.u32 4788187, %v3550
        %v3552 = vand.u32 2147483647, %v3551
        %v3554 = vcvt.s32.f32 %v3547
        %v3555 = vmul.f32 %v3554, %v3552
        %v3556 = vxor.u32 %v3555, 2147483648
        %v3557 = vsel %vm3474, %v3556, %v3555
        %v3558 = vsub.s32 4, %v3534
        %v3559 = vsel %vm3474, %v3558, %v3534
        %v3560 = vsel %vm3473, %v265, %v3557
        %v3561 = vsel %vm3473, 0, %v3559
        %v3562 = vcosq.f32.pop %v3560
        %v3563 = vsinq.f32.pop %v3560
        %vm3564 = vweird.f32 %v265
        %v3565 = vadd.s32 %v3561, 3
        %v3566 = vand.u32 %v3565, 3
        %vm3567 = vcmp.lt.s32.totalorder %v3566, 2
        %vm3568 = vcmp.eq.s32.totalorder %v3566, 0
        %v3569 = vxor.u32 %v3563, 2147483648
        %v3570 = vsel %vm3568, %v3562, %v3569
        %vm3571 = vcmp.eq.s32.totalorder %v3566, 2
        %v3572 = vxor.u32 %v3562, 2147483648
        %v3573 = vsel %vm3571, %v3572, %v3563
        %v3574 = vsel %vm3567, %v3570, %v3573
        %v3575 = vsel %vm3564, nan, %v3574
        %v3576 = vand.u32 2147483647, %v266
        %vm3577 = vcmp.le.f32.partialorder %v3576, 0.7853982
        %vm3578 = vcmp.lt.s32.totalorder %v266, 0
        %v3579 = vand.u32 %v266, 2139095040
        %v3580 = vshrl.u32 %v3579, 23
        %v3581 = vsub.s32 %v3580, 127
        %v3582 = vand.u32 2147483647, %v266
        %v3583 = vand.u32 %v3582, 8388607
        %v3584 = vor.u32 %v3583, 8388608
        %v3585 = vsub.s32 0, %v3584
        %v3586 = vadd.s32 %v3581, 1
        %vm3587 = vcmp.gt.s32.totalorder %v3586, 0
        %v3588 = vsel %vm3587, %v3586, 0
        %v3589 = vshrl.u32 %v3588, 5
        %v3590 = vand.u32 %v3588, 31
        %v3591 = vsub.s32 32, %v3590
        %v3592 = vshrl.u32 683565275, %v3591
        %v3593 = vshll.u32 683565275, %v3590
        %v3594 = vshrl.u32 2475754826, %v3591
        %v3595 = vor.u32 %v3593, %v3594
        %v3596 = vshll.u32 2475754826, %v3590
        %v3597 = vshrl.u32 2131351028, %v3591
        %v3598 = vor.u32 %v3596, %v3597
        %v3599 = vshll.u32 2131351028, %v3590
        %v3600 = vshrl.u32 2102212464, %v3591
        %v3601 = vor.u32 %v3599, %v3600
        %v3602 = vshll.u32 2102212464, %v3590
        %v3603 = vshrl.u32 920167782, %v3591
        %v3604 = vor.u32 %v3602, %v3603
        %v3605 = vshll.u32 920167782, %v3590
        %v3606 = vshrl.u32 1326507024, %v3591
        %v3607 = vor.u32 %v3605, %v3606
        %vm3608 = vcmp.lt.s32.totalorder %v3589, 1
        %vm3609 = vcmp.lt.s32.totalorder %v3589, 2
        %vm3610 = vcmp.lt.s32.totalorder %v3589, 3
        %vm3611 = vcmp.lt.s32.totalorder %v3589, 4
        %v3612 = vsel %vm3608, %v3592, %v3595
        %v3613 = vsel %vm3611, %v3601, 2102212464
        %v3614 = vsel %vm3610, %v3598, %v3613
        %v3615 = vsel %vm3609, %v3612, %v3614
        %v3616 = vsel %vm3608, %v3595, %v3598
        %v3617 = vsel %vm3611, %v3604, 920167782
        %v3618 = vsel %vm3610, %v3601, %v3617
        %v3619 = vsel %vm3609, %v3616, %v3618
        %v3620 = vsel %vm3608, %v3598, %v3601
        %v3621 = vsel %vm3611, %v3607, 1326507024
        %v3622 = vsel %vm3610, %v3604, %v3621
        %v3623 = vsel %vm3609, %v3620, %v3622
        %v3624 = vshll.u32 %v3584, 8
        %v3625 = vmul.u32.u64.compose %v3624, %v3623
        %v3626 = vextract.low.u32 %v3625
        %v3627 = vextract.high.u32 %v3625
        %v3628 = vmul.u32.u64.compose %v3624, %v3619
        %v3629 = vextract.low.u32 %v3628
        %v3630 = vextract.high.u32 %v3628
        %v3631 = vmul.u32 %v3624, %v3615
        %v3632 = vadd.s32 %v3627, %v3629
        %vm3633 = vc.u32 %v3627, %v3629
        %v3634 = vadd.s32 %v3630, 1
        %v3635 = vsel %vm3633, %v3634, %v3630
        %v3636 = vadd.s32 %v3631, %v3635
        %v3637 = vadd.s32 %v3636, 536870912
        %v3638 = vshrl.u32 %v3637, 30
        %v3639 = vshll.u32 %v3638, 30
        %v3640 = vsub.s32 %v3636, %v3639
        %vm3641 = vcmp.lt.s32.totalorder %v3640, 0
        %v3642 = vsub.s32 0, %v3640
        %v3643 = vsel %vm3641, %v3642, %v3640
        %v3644 = vclz %v3643
        %v3645 = vsub.s32 %v3644, 2
        %vm3646 = vcmp.gt.s32.totalorder 0, %v3645
        %v3647 = vsel %vm3646, 0, %v3645
        %v3648 = vsub.s32 32, %v3647
        %v3649 = vshll.u32 %v3640, %v3647
        %v3650 = vshrl.u32 %v3632, %v3648
        %v3651 = vor.u32 %v3649, %v3650
        %v3652 = vsub.s32 4294967266, %v3647
        %v3653 = vadd.s32 %v3652, 127
        %v3654 = vshll.u32 %v3653, 23
        %v3655 = vor.u32 4788187, %v3654
        %v3656 = vand.u32 2147483647, %v3655
        %v3658 = vcvt.s32.f32 %v3651
        %v3659 = vmul.f32 %v3658, %v3656
        %v3660 = vxor.u32 %v3659, 2147483648
        %v3661 = vsel %vm3578, %v3660, %v3659
        %v3662 = vsub.s32 4, %v3638
        %v3663 = vsel %vm3578, %v3662, %v3638
        %v3664 = vsel %vm3577, %v266, %v3661
        %v3665 = vsel %vm3577, 0, %v3663
        %v3666 = vcosq.f32.pop %v3664
        %v3667 = vsinq.f32.pop %v3664
        %vm3668 = vweird.f32 %v266
        %v3669 = vadd.s32 %v3665, 3
        %v3670 = vand.u32 %v3669, 3
        %vm3671 = vcmp.lt.s32.totalorder %v3670, 2
        %vm3672 = vcmp.eq.s32.totalorder %v3670, 0
        %v3673 = vxor.u32 %v3667, 2147483648
        %v3674 = vsel %vm3672, %v3666, %v3673
        %vm3675 = vcmp.eq.s32.totalorder %v3670, 2
        %v3676 = vxor.u32 %v3666, 2147483648
        %v3677 = vsel %vm3675, %v3676, %v3667
        %v3678 = vsel %vm3671, %v3674, %v3677
        %v3679 = vsel %vm3668, nan, %v3678
        %v3680 = vand.u32 2147483647, %v267
        %vm3681 = vcmp.le.f32.partialorder %v3680, 0.7853982
        %vm3682 = vcmp.lt.s32.totalorder %v267, 0
        %v3683 = vand.u32 %v267, 2139095040
        %v3684 = vshrl.u32 %v3683, 23
        %v3685 = vsub.s32 %v3684, 127
        %v3686 = vand.u32 2147483647, %v267
        %v3687 = vand.u32 %v3686, 8388607
        %v3688 = vor.u32 %v3687, 8388608
        %v3689 = vsub.s32 0, %v3688
        %v3690 = vadd.s32 %v3685, 1
        %vm3691 = vcmp.gt.s32.totalorder %v3690, 0
        %v3692 = vsel %vm3691, %v3690, 0
        %v3693 = vshrl.u32 %v3692, 5
        %v3694 = vand.u32 %v3692, 31
        %v3695 = vsub.s32 32, %v3694
        %v3696 = vshrl.u32 683565275, %v3695
        %v3697 = vshll.u32 683565275, %v3694
        %v3698 = vshrl.u32 2475754826, %v3695
        %v3699 = vor.u32 %v3697, %v3698
        %v3700 = vshll.u32 2475754826, %v3694
        %v3701 = vshrl.u32 2131351028, %v3695
        %v3702 = vor.u32 %v3700, %v3701
        %v3703 = vshll.u32 2131351028, %v3694
        %v3704 = vshrl.u32 2102212464, %v3695
        %v3705 = vor.u32 %v3703, %v3704
        %v3706 = vshll.u32 2102212464, %v3694
        %v3707 = vshrl.u32 920167782, %v3695
        %v3708 = vor.u32 %v3706, %v3707
        %v3709 = vshll.u32 920167782, %v3694
        %v3710 = vshrl.u32 1326507024, %v3695
        %v3711 = vor.u32 %v3709, %v3710
        %vm3712 = vcmp.lt.s32.totalorder %v3693, 1
        %vm3713 = vcmp.lt.s32.totalorder %v3693, 2
        %vm3714 = vcmp.lt.s32.totalorder %v3693, 3
        %vm3715 = vcmp.lt.s32.totalorder %v3693, 4
        %v3716 = vsel %vm3712, %v3696, %v3699
        %v3717 = vsel %vm3715, %v3705, 2102212464
        %v3718 = vsel %vm3714, %v3702, %v3717
        %v3719 = vsel %vm3713, %v3716, %v3718
        %v3720 = vsel %vm3712, %v3699, %v3702
        %v3721 = vsel %vm3715, %v3708, 920167782
        %v3722 = vsel %vm3714, %v3705, %v3721
        %v3723 = vsel %vm3713, %v3720, %v3722
        %v3724 = vsel %vm3712, %v3702, %v3705
        %v3725 = vsel %vm3715, %v3711, 1326507024
        %v3726 = vsel %vm3714, %v3708, %v3725
        %v3727 = vsel %vm3713, %v3724, %v3726
        %v3728 = vshll.u32 %v3688, 8
        %v3729 = vmul.u32.u64.compose %v3728, %v3727
        %v3730 = vextract.low.u32 %v3729
        %v3731 = vextract.high.u32 %v3729
        %v3732 = vmul.u32.u64.compose %v3728, %v3723
        %v3733 = vextract.low.u32 %v3732
        %v3734 = vextract.high.u32 %v3732
        %v3735 = vmul.u32 %v3728, %v3719
        %v3736 = vadd.s32 %v3731, %v3733
        %vm3737 = vc.u32 %v3731, %v3733
        %v3738 = vadd.s32 %v3734, 1
        %v3739 = vsel %vm3737, %v3738, %v3734
        %v3740 = vadd.s32 %v3735, %v3739
        %v3741 = vadd.s32 %v3740, 536870912
        %v3742 = vshrl.u32 %v3741, 30
        %v3743 = vshll.u32 %v3742, 30
        %v3744 = vsub.s32 %v3740, %v3743
        %vm3745 = vcmp.lt.s32.totalorder %v3744, 0
        %v3746 = vsub.s32 0, %v3744
        %v3747 = vsel %vm3745, %v3746, %v3744
        %v3748 = vclz %v3747
        %v3749 = vsub.s32 %v3748, 2
        %vm3750 = vcmp.gt.s32.totalorder 0, %v3749
        %v3751 = vsel %vm3750, 0, %v3749
        %v3752 = vsub.s32 32, %v3751
        %v3753 = vshll.u32 %v3744, %v3751
        %v3754 = vshrl.u32 %v3736, %v3752
        %v3755 = vor.u32 %v3753, %v3754
        %v3756 = vsub.s32 4294967266, %v3751
        %v3757 = vadd.s32 %v3756, 127
        %v3758 = vshll.u32 %v3757, 23
        %v3759 = vor.u32 4788187, %v3758
        %v3760 = vand.u32 2147483647, %v3759
        %v3762 = vcvt.s32.f32 %v3755
        %v3763 = vmul.f32 %v3762, %v3760
        %v3764 = vxor.u32 %v3763, 2147483648
        %v3765 = vsel %vm3682, %v3764, %v3763
        %v3766 = vsub.s32 4, %v3742
        %v3767 = vsel %vm3682, %v3766, %v3742
        %v3768 = vsel %vm3681, %v267, %v3765
        %v3769 = vsel %vm3681, 0, %v3767
        %v3770 = vcosq.f32.pop %v3768
        %v3771 = vsinq.f32.pop %v3768
        %vm3772 = vweird.f32 %v267
        %v3773 = vadd.s32 %v3769, 3
        %v3774 = vand.u32 %v3773, 3
        %vm3775 = vcmp.lt.s32.totalorder %v3774, 2
        %vm3776 = vcmp.eq.s32.totalorder %v3774, 0
        %v3777 = vxor.u32 %v3771, 2147483648
        %v3778 = vsel %vm3776, %v3770, %v3777
        %vm3779 = vcmp.eq.s32.totalorder %v3774, 2
        %v3780 = vxor.u32 %v3770, 2147483648
        %v3781 = vsel %vm3779, %v3780, %v3771
        %v3782 = vsel %vm3775, %v3778, %v3781
        %v3783 = vsel %vm3772, nan, %v3782
        %v3784 = vand.u32 2147483647, %v268
        %vm3785 = vcmp.le.f32.partialorder %v3784, 0.7853982
        %vm3786 = vcmp.lt.s32.totalorder %v268, 0
        %v3787 = vand.u32 %v268, 2139095040
        %v3788 = vshrl.u32 %v3787, 23
        %v3789 = vsub.s32 %v3788, 127
        %v3790 = vand.u32 2147483647, %v268
        %v3791 = vand.u32 %v3790, 8388607
        %v3792 = vor.u32 %v3791, 8388608
        %v3793 = vsub.s32 0, %v3792
        %v3794 = vadd.s32 %v3789, 1
        %vm3795 = vcmp.gt.s32.totalorder %v3794, 0
        %v3796 = vsel %vm3795, %v3794, 0
        %v3797 = vshrl.u32 %v3796, 5
        %v3798 = vand.u32 %v3796, 31
        %v3799 = vsub.s32 32, %v3798
        %v3800 = vshrl.u32 683565275, %v3799
        %v3801 = vshll.u32 683565275, %v3798
        %v3802 = vshrl.u32 2475754826, %v3799
        %v3803 = vor.u32 %v3801, %v3802
        %v3804 = vshll.u32 2475754826, %v3798
        %v3805 = vshrl.u32 2131351028, %v3799
        %v3806 = vor.u32 %v3804, %v3805
        %v3807 = vshll.u32 2131351028, %v3798
        %v3808 = vshrl.u32 2102212464, %v3799
        %v3809 = vor.u32 %v3807, %v3808
        %v3810 = vshll.u32 2102212464, %v3798
        %v3811 = vshrl.u32 920167782, %v3799
        %v3812 = vor.u32 %v3810, %v3811
        %v3813 = vshll.u32 920167782, %v3798
        %v3814 = vshrl.u32 1326507024, %v3799
        %v3815 = vor.u32 %v3813, %v3814
        %vm3816 = vcmp.lt.s32.totalorder %v3797, 1
        %vm3817 = vcmp.lt.s32.totalorder %v3797, 2
        %vm3818 = vcmp.lt.s32.totalorder %v3797, 3
        %vm3819 = vcmp.lt.s32.totalorder %v3797, 4
        %v3820 = vsel %vm3816, %v3800, %v3803
        %v3821 = vsel %vm3819, %v3809, 2102212464
        %v3822 = vsel %vm3818, %v3806, %v3821
        %v3823 = vsel %vm3817, %v3820, %v3822
        %v3824 = vsel %vm3816, %v3803, %v3806
        %v3825 = vsel %vm3819, %v3812, 920167782
        %v3826 = vsel %vm3818, %v3809, %v3825
        %v3827 = vsel %vm3817, %v3824, %v3826
        %v3828 = vsel %vm3816, %v3806, %v3809
        %v3829 = vsel %vm3819, %v3815, 1326507024
        %v3830 = vsel %vm3818, %v3812, %v3829
        %v3831 = vsel %vm3817, %v3828, %v3830
        %v3832 = vshll.u32 %v3792, 8
        %v3833 = vmul.u32.u64.compose %v3832, %v3831
        %v3834 = vextract.low.u32 %v3833
        %v3835 = vextract.high.u32 %v3833
        %v3836 = vmul.u32.u64.compose %v3832, %v3827
        %v3837 = vextract.low.u32 %v3836
        %v3838 = vextract.high.u32 %v3836
        %v3839 = vmul.u32 %v3832, %v3823
        %v3840 = vadd.s32 %v3835, %v3837
        %vm3841 = vc.u32 %v3835, %v3837
        %v3842 = vadd.s32 %v3838, 1
        %v3843 = vsel %vm3841, %v3842, %v3838
        %v3844 = vadd.s32 %v3839, %v3843
        %v3845 = vadd.s32 %v3844, 536870912
        %v3846 = vshrl.u32 %v3845, 30
        %v3847 = vshll.u32 %v3846, 30
        %v3848 = vsub.s32 %v3844, %v3847
        %vm3849 = vcmp.lt.s32.totalorder %v3848, 0
        %v3850 = vsub.s32 0, %v3848
        %v3851 = vsel %vm3849, %v3850, %v3848
        %v3852 = vclz %v3851
        %v3853 = vsub.s32 %v3852, 2
        %vm3854 = vcmp.gt.s32.totalorder 0, %v3853
        %v3855 = vsel %vm3854, 0, %v3853
        %v3856 = vsub.s32 32, %v3855
        %v3857 = vshll.u32 %v3848, %v3855
        %v3858 = vshrl.u32 %v3840, %v3856
        %v3859 = vor.u32 %v3857, %v3858
        %v3860 = vsub.s32 4294967266, %v3855
        %v3861 = vadd.s32 %v3860, 127
        %v3862 = vshll.u32 %v3861, 23
        %v3863 = vor.u32 4788187, %v3862
        %v3864 = vand.u32 2147483647, %v3863
        %v3866 = vcvt.s32.f32 %v3859
        %v3867 = vmul.f32 %v3866, %v3864
        %v3868 = vxor.u32 %v3867, 2147483648
        %v3869 = vsel %vm3786, %v3868, %v3867
        %v3870 = vsub.s32 4, %v3846
        %v3871 = vsel %vm3786, %v3870, %v3846
        %v3872 = vsel %vm3785, %v268, %v3869
        %v3873 = vsel %vm3785, 0, %v3871
        %v3874 = vcosq.f32.pop %v3872
        %v3875 = vsinq.f32.pop %v3872
        %vm3876 = vweird.f32 %v268
        %v3877 = vadd.s32 %v3873, 3
        %v3878 = vand.u32 %v3877, 3
        %vm3879 = vcmp.lt.s32.totalorder %v3878, 2
        %vm3880 = vcmp.eq.s32.totalorder %v3878, 0
        %v3881 = vxor.u32 %v3875, 2147483648
        %v3882 = vsel %vm3880, %v3874, %v3881
        %vm3883 = vcmp.eq.s32.totalorder %v3878, 2
        %v3884 = vxor.u32 %v3874, 2147483648
        %v3885 = vsel %vm3883, %v3884, %v3875
        %v3886 = vsel %vm3879, %v3882, %v3885
        %v3887 = vsel %vm3876, nan, %v3886
        %v3888 = vand.u32 2147483647, %v269
        %vm3889 = vcmp.le.f32.partialorder %v3888, 0.7853982
        %vm3890 = vcmp.lt.s32.totalorder %v269, 0
        %v3891 = vand.u32 %v269, 2139095040
        %v3892 = vshrl.u32 %v3891, 23
        %v3893 = vsub.s32 %v3892, 127
        %v3894 = vand.u32 2147483647, %v269
        %v3895 = vand.u32 %v3894, 8388607
        %v3896 = vor.u32 %v3895, 8388608
        %v3897 = vsub.s32 0, %v3896
        %v3898 = vadd.s32 %v3893, 1
        %vm3899 = vcmp.gt.s32.totalorder %v3898, 0
        %v3900 = vsel %vm3899, %v3898, 0
        %v3901 = vshrl.u32 %v3900, 5
        %v3902 = vand.u32 %v3900, 31
        %v3903 = vsub.s32 32, %v3902
        %v3904 = vshrl.u32 683565275, %v3903
        %v3905 = vshll.u32 683565275, %v3902
        %v3906 = vshrl.u32 2475754826, %v3903
        %v3907 = vor.u32 %v3905, %v3906
        %v3908 = vshll.u32 2475754826, %v3902
        %v3909 = vshrl.u32 2131351028, %v3903
        %v3910 = vor.u32 %v3908, %v3909
        %v3911 = vshll.u32 2131351028, %v3902
        %v3912 = vshrl.u32 2102212464, %v3903
        %v3913 = vor.u32 %v3911, %v3912
        %v3914 = vshll.u32 2102212464, %v3902
        %v3915 = vshrl.u32 920167782, %v3903
        %v3916 = vor.u32 %v3914, %v3915
        %v3917 = vshll.u32 920167782, %v3902
        %v3918 = vshrl.u32 1326507024, %v3903
        %v3919 = vor.u32 %v3917, %v3918
        %vm3920 = vcmp.lt.s32.totalorder %v3901, 1
        %vm3921 = vcmp.lt.s32.totalorder %v3901, 2
        %vm3922 = vcmp.lt.s32.totalorder %v3901, 3
        %vm3923 = vcmp.lt.s32.totalorder %v3901, 4
        %v3924 = vsel %vm3920, %v3904, %v3907
        %v3925 = vsel %vm3923, %v3913, 2102212464
        %v3926 = vsel %vm3922, %v3910, %v3925
        %v3927 = vsel %vm3921, %v3924, %v3926
        %v3928 = vsel %vm3920, %v3907, %v3910
        %v3929 = vsel %vm3923, %v3916, 920167782
        %v3930 = vsel %vm3922, %v3913, %v3929
        %v3931 = vsel %vm3921, %v3928, %v3930
        %v3932 = vsel %vm3920, %v3910, %v3913
        %v3933 = vsel %vm3923, %v3919, 1326507024
        %v3934 = vsel %vm3922, %v3916, %v3933
        %v3935 = vsel %vm3921, %v3932, %v3934
        %v3936 = vshll.u32 %v3896, 8
        %v3937 = vmul.u32.u64.compose %v3936, %v3935
        %v3938 = vextract.low.u32 %v3937
        %v3939 = vextract.high.u32 %v3937
        %v3940 = vmul.u32.u64.compose %v3936, %v3931
        %v3941 = vextract.low.u32 %v3940
        %v3942 = vextract.high.u32 %v3940
        %v3943 = vmul.u32 %v3936, %v3927
        %v3944 = vadd.s32 %v3939, %v3941
        %vm3945 = vc.u32 %v3939, %v3941
        %v3946 = vadd.s32 %v3942, 1
        %v3947 = vsel %vm3945, %v3946, %v3942
        %v3948 = vadd.s32 %v3943, %v3947
        %v3949 = vadd.s32 %v3948, 536870912
        %v3950 = vshrl.u32 %v3949, 30
        %v3951 = vshll.u32 %v3950, 30
        %v3952 = vsub.s32 %v3948, %v3951
        %vm3953 = vcmp.lt.s32.totalorder %v3952, 0
        %v3954 = vsub.s32 0, %v3952
        %v3955 = vsel %vm3953, %v3954, %v3952
        %v3956 = vclz %v3955
        %v3957 = vsub.s32 %v3956, 2
        %vm3958 = vcmp.gt.s32.totalorder 0, %v3957
        %v3959 = vsel %vm3958, 0, %v3957
        %v3960 = vsub.s32 32, %v3959
        %v3961 = vshll.u32 %v3952, %v3959
        %v3962 = vshrl.u32 %v3944, %v3960
        %v3963 = vor.u32 %v3961, %v3962
        %v3964 = vsub.s32 4294967266, %v3959
        %v3965 = vadd.s32 %v3964, 127
        %v3966 = vshll.u32 %v3965, 23
        %v3967 = vor.u32 4788187, %v3966
        %v3968 = vand.u32 2147483647, %v3967
        %v3970 = vcvt.s32.f32 %v3963
        %v3971 = vmul.f32 %v3970, %v3968
        %v3972 = vxor.u32 %v3971, 2147483648
        %v3973 = vsel %vm3890, %v3972, %v3971
        %v3974 = vsub.s32 4, %v3950
        %v3975 = vsel %vm3890, %v3974, %v3950
        %v3976 = vsel %vm3889, %v269, %v3973
        %v3977 = vsel %vm3889, 0, %v3975
        %v3978 = vcosq.f32.pop %v3976
        %v3979 = vsinq.f32.pop %v3976
        %vm3980 = vweird.f32 %v269
        %v3981 = vadd.s32 %v3977, 3
        %v3982 = vand.u32 %v3981, 3
        %vm3983 = vcmp.lt.s32.totalorder %v3982, 2
        %vm3984 = vcmp.eq.s32.totalorder %v3982, 0
        %v3985 = vxor.u32 %v3979, 2147483648
        %v3986 = vsel %vm3984, %v3978, %v3985
        %vm3987 = vcmp.eq.s32.totalorder %v3982, 2
        %v3988 = vxor.u32 %v3978, 2147483648
        %v3989 = vsel %vm3987, %v3988, %v3979
        %v3990 = vsel %vm3983, %v3986, %v3989
        %v3991 = vsel %vm3980, nan, %v3990
        %v3992 = vand.u32 2147483647, %v270
        %vm3993 = vcmp.le.f32.partialorder %v3992, 0.7853982
        %vm3994 = vcmp.lt.s32.totalorder %v270, 0
        %v3995 = vand.u32 %v270, 2139095040
        %v3996 = vshrl.u32 %v3995, 23
        %v3997 = vsub.s32 %v3996, 127
        %v3998 = vand.u32 2147483647, %v270
        %v3999 = vand.u32 %v3998, 8388607
        %v4000 = vor.u32 %v3999, 8388608
        %v4001 = vsub.s32 0, %v4000
        %v4002 = vadd.s32 %v3997, 1
        %vm4003 = vcmp.gt.s32.totalorder %v4002, 0
        %v4004 = vsel %vm4003, %v4002, 0
        %v4005 = vshrl.u32 %v4004, 5
        %v4006 = vand.u32 %v4004, 31
        %v4007 = vsub.s32 32, %v4006
        %v4008 = vshrl.u32 683565275, %v4007
        %v4009 = vshll.u32 683565275, %v4006
        %v4010 = vshrl.u32 2475754826, %v4007
        %v4011 = vor.u32 %v4009, %v4010
        %v4012 = vshll.u32 2475754826, %v4006
        %v4013 = vshrl.u32 2131351028, %v4007
        %v4014 = vor.u32 %v4012, %v4013
        %v4015 = vshll.u32 2131351028, %v4006
        %v4016 = vshrl.u32 2102212464, %v4007
        %v4017 = vor.u32 %v4015, %v4016
        %v4018 = vshll.u32 2102212464, %v4006
        %v4019 = vshrl.u32 920167782, %v4007
        %v4020 = vor.u32 %v4018, %v4019
        %v4021 = vshll.u32 920167782, %v4006
        %v4022 = vshrl.u32 1326507024, %v4007
        %v4023 = vor.u32 %v4021, %v4022
        %vm4024 = vcmp.lt.s32.totalorder %v4005, 1
        %vm4025 = vcmp.lt.s32.totalorder %v4005, 2
        %vm4026 = vcmp.lt.s32.totalorder %v4005, 3
        %vm4027 = vcmp.lt.s32.totalorder %v4005, 4
        %v4028 = vsel %vm4024, %v4008, %v4011
        %v4029 = vsel %vm4027, %v4017, 2102212464
        %v4030 = vsel %vm4026, %v4014, %v4029
        %v4031 = vsel %vm4025, %v4028, %v4030
        %v4032 = vsel %vm4024, %v4011, %v4014
        %v4033 = vsel %vm4027, %v4020, 920167782
        %v4034 = vsel %vm4026, %v4017, %v4033
        %v4035 = vsel %vm4025, %v4032, %v4034
        %v4036 = vsel %vm4024, %v4014, %v4017
        %v4037 = vsel %vm4027, %v4023, 1326507024
        %v4038 = vsel %vm4026, %v4020, %v4037
        %v4039 = vsel %vm4025, %v4036, %v4038
        %v4040 = vshll.u32 %v4000, 8
        %v4041 = vmul.u32.u64.compose %v4040, %v4039
        %v4042 = vextract.low.u32 %v4041
        %v4043 = vextract.high.u32 %v4041
        %v4044 = vmul.u32.u64.compose %v4040, %v4035
        %v4045 = vextract.low.u32 %v4044
        %v4046 = vextract.high.u32 %v4044
        %v4047 = vmul.u32 %v4040, %v4031
        %v4048 = vadd.s32 %v4043, %v4045
        %vm4049 = vc.u32 %v4043, %v4045
        %v4050 = vadd.s32 %v4046, 1
        %v4051 = vsel %vm4049, %v4050, %v4046
        %v4052 = vadd.s32 %v4047, %v4051
        %v4053 = vadd.s32 %v4052, 536870912
        %v4054 = vshrl.u32 %v4053, 30
        %v4055 = vshll.u32 %v4054, 30
        %v4056 = vsub.s32 %v4052, %v4055
        %vm4057 = vcmp.lt.s32.totalorder %v4056, 0
        %v4058 = vsub.s32 0, %v4056
        %v4059 = vsel %vm4057, %v4058, %v4056
        %v4060 = vclz %v4059
        %v4061 = vsub.s32 %v4060, 2
        %vm4062 = vcmp.gt.s32.totalorder 0, %v4061
        %v4063 = vsel %vm4062, 0, %v4061
        %v4064 = vsub.s32 32, %v4063
        %v4065 = vshll.u32 %v4056, %v4063
        %v4066 = vshrl.u32 %v4048, %v4064
        %v4067 = vor.u32 %v4065, %v4066
        %v4068 = vsub.s32 4294967266, %v4063
        %v4069 = vadd.s32 %v4068, 127
        %v4070 = vshll.u32 %v4069, 23
        %v4071 = vor.u32 4788187, %v4070
        %v4072 = vand.u32 2147483647, %v4071
        %v4074 = vcvt.s32.f32 %v4067
        %v4075 = vmul.f32 %v4074, %v4072
        %v4076 = vxor.u32 %v4075, 2147483648
        %v4077 = vsel %vm3994, %v4076, %v4075
        %v4078 = vsub.s32 4, %v4054
        %v4079 = vsel %vm3994, %v4078, %v4054
        %v4080 = vsel %vm3993, %v270, %v4077
        %v4081 = vsel %vm3993, 0, %v4079
        %v4082 = vcosq.f32.pop %v4080
        %v4083 = vsinq.f32.pop %v4080
        %vm4084 = vweird.f32 %v270
        %v4085 = vadd.s32 %v4081, 3
        %v4086 = vand.u32 %v4085, 3
        %vm4087 = vcmp.lt.s32.totalorder %v4086, 2
        %vm4088 = vcmp.eq.s32.totalorder %v4086, 0
        %v4089 = vxor.u32 %v4083, 2147483648
        %v4090 = vsel %vm4088, %v4082, %v4089
        %vm4091 = vcmp.eq.s32.totalorder %v4086, 2
        %v4092 = vxor.u32 %v4082, 2147483648
        %v4093 = vsel %vm4091, %v4092, %v4083
        %v4094 = vsel %vm4087, %v4090, %v4093
        %v4095 = vsel %vm4084, nan, %v4094
        %v4096 = vand.u32 2147483647, %v271
        %vm4097 = vcmp.le.f32.partialorder %v4096, 0.7853982
        %vm4098 = vcmp.lt.s32.totalorder %v271, 0
        %v4099 = vand.u32 %v271, 2139095040
        %v4100 = vshrl.u32 %v4099, 23
        %v4101 = vsub.s32 %v4100, 127
        %v4102 = vand.u32 2147483647, %v271
        %v4103 = vand.u32 %v4102, 8388607
        %v4104 = vor.u32 %v4103, 8388608
        %v4105 = vsub.s32 0, %v4104
        %v4106 = vadd.s32 %v4101, 1
        %vm4107 = vcmp.gt.s32.totalorder %v4106, 0
        %v4108 = vsel %vm4107, %v4106, 0
        %v4109 = vshrl.u32 %v4108, 5
        %v4110 = vand.u32 %v4108, 31
        %v4111 = vsub.s32 32, %v4110
        %v4112 = vshrl.u32 683565275, %v4111
        %v4113 = vshll.u32 683565275, %v4110
        %v4114 = vshrl.u32 2475754826, %v4111
        %v4115 = vor.u32 %v4113, %v4114
        %v4116 = vshll.u32 2475754826, %v4110
        %v4117 = vshrl.u32 2131351028, %v4111
        %v4118 = vor.u32 %v4116, %v4117
        %v4119 = vshll.u32 2131351028, %v4110
        %v4120 = vshrl.u32 2102212464, %v4111
        %v4121 = vor.u32 %v4119, %v4120
        %v4122 = vshll.u32 2102212464, %v4110
        %v4123 = vshrl.u32 920167782, %v4111
        %v4124 = vor.u32 %v4122, %v4123
        %v4125 = vshll.u32 920167782, %v4110
        %v4126 = vshrl.u32 1326507024, %v4111
        %v4127 = vor.u32 %v4125, %v4126
        %vm4128 = vcmp.lt.s32.totalorder %v4109, 1
        %vm4129 = vcmp.lt.s32.totalorder %v4109, 2
        %vm4130 = vcmp.lt.s32.totalorder %v4109, 3
        %vm4131 = vcmp.lt.s32.totalorder %v4109, 4
        %v4132 = vsel %vm4128, %v4112, %v4115
        %v4133 = vsel %vm4131, %v4121, 2102212464
        %v4134 = vsel %vm4130, %v4118, %v4133
        %v4135 = vsel %vm4129, %v4132, %v4134
        %v4136 = vsel %vm4128, %v4115, %v4118
        %v4137 = vsel %vm4131, %v4124, 920167782
        %v4138 = vsel %vm4130, %v4121, %v4137
        %v4139 = vsel %vm4129, %v4136, %v4138
        %v4140 = vsel %vm4128, %v4118, %v4121
        %v4141 = vsel %vm4131, %v4127, 1326507024
        %v4142 = vsel %vm4130, %v4124, %v4141
        %v4143 = vsel %vm4129, %v4140, %v4142
        %v4144 = vshll.u32 %v4104, 8
        %v4145 = vmul.u32.u64.compose %v4144, %v4143
        %v4146 = vextract.low.u32 %v4145
        %v4147 = vextract.high.u32 %v4145
        %v4148 = vmul.u32.u64.compose %v4144, %v4139
        %v4149 = vextract.low.u32 %v4148
        %v4150 = vextract.high.u32 %v4148
        %v4151 = vmul.u32 %v4144, %v4135
        %v4152 = vadd.s32 %v4147, %v4149
        %vm4153 = vc.u32 %v4147, %v4149
        %v4154 = vadd.s32 %v4150, 1
        %v4155 = vsel %vm4153, %v4154, %v4150
        %v4156 = vadd.s32 %v4151, %v4155
        %v4157 = vadd.s32 %v4156, 536870912
        %v4158 = vshrl.u32 %v4157, 30
        %v4159 = vshll.u32 %v4158, 30
        %v4160 = vsub.s32 %v4156, %v4159
        %vm4161 = vcmp.lt.s32.totalorder %v4160, 0
        %v4162 = vsub.s32 0, %v4160
        %v4163 = vsel %vm4161, %v4162, %v4160
        %v4164 = vclz %v4163
        %v4165 = vsub.s32 %v4164, 2
        %vm4166 = vcmp.gt.s32.totalorder 0, %v4165
        %v4167 = vsel %vm4166, 0, %v4165
        %v4168 = vsub.s32 32, %v4167
        %v4169 = vshll.u32 %v4160, %v4167
        %v4170 = vshrl.u32 %v4152, %v4168
        %v4171 = vor.u32 %v4169, %v4170
        %v4172 = vsub.s32 4294967266, %v4167
        %v4173 = vadd.s32 %v4172, 127
        %v4174 = vshll.u32 %v4173, 23
        %v4175 = vor.u32 4788187, %v4174
        %v4176 = vand.u32 2147483647, %v4175
        %v4178 = vcvt.s32.f32 %v4171
        %v4179 = vmul.f32 %v4178, %v4176
        %v4180 = vxor.u32 %v4179, 2147483648
        %v4181 = vsel %vm4098, %v4180, %v4179
        %v4182 = vsub.s32 4, %v4158
        %v4183 = vsel %vm4098, %v4182, %v4158
        %v4184 = vsel %vm4097, %v271, %v4181
        %v4185 = vsel %vm4097, 0, %v4183
        %v4186 = vcosq.f32.pop %v4184
        %v4187 = vsinq.f32.pop %v4184
        %vm4188 = vweird.f32 %v271
        %v4189 = vadd.s32 %v4185, 3
        %v4190 = vand.u32 %v4189, 3
        %vm4191 = vcmp.lt.s32.totalorder %v4190, 2
        %vm4192 = vcmp.eq.s32.totalorder %v4190, 0
        %v4193 = vxor.u32 %v4187, 2147483648
        %v4194 = vsel %vm4192, %v4186, %v4193
        %vm4195 = vcmp.eq.s32.totalorder %v4190, 2
        %v4196 = vxor.u32 %v4186, 2147483648
        %v4197 = vsel %vm4195, %v4196, %v4187
        %v4198 = vsel %vm4191, %v4194, %v4197
        %v4199 = vsel %vm4188, nan, %v4198
        %v4200 = vand.u32 2147483647, %v272
        %vm4201 = vcmp.le.f32.partialorder %v4200, 0.7853982
        %vm4202 = vcmp.lt.s32.totalorder %v272, 0
        %v4203 = vand.u32 %v272, 2139095040
        %v4204 = vshrl.u32 %v4203, 23
        %v4205 = vsub.s32 %v4204, 127
        %v4206 = vand.u32 2147483647, %v272
        %v4207 = vand.u32 %v4206, 8388607
        %v4208 = vor.u32 %v4207, 8388608
        %v4209 = vsub.s32 0, %v4208
        %v4210 = vadd.s32 %v4205, 1
        %vm4211 = vcmp.gt.s32.totalorder %v4210, 0
        %v4212 = vsel %vm4211, %v4210, 0
        %v4213 = vshrl.u32 %v4212, 5
        %v4214 = vand.u32 %v4212, 31
        %v4215 = vsub.s32 32, %v4214
        %v4216 = vshrl.u32 683565275, %v4215
        %v4217 = vshll.u32 683565275, %v4214
        %v4218 = vshrl.u32 2475754826, %v4215
        %v4219 = vor.u32 %v4217, %v4218
        %v4220 = vshll.u32 2475754826, %v4214
        %v4221 = vshrl.u32 2131351028, %v4215
        %v4222 = vor.u32 %v4220, %v4221
        %v4223 = vshll.u32 2131351028, %v4214
        %v4224 = vshrl.u32 2102212464, %v4215
        %v4225 = vor.u32 %v4223, %v4224
        %v4226 = vshll.u32 2102212464, %v4214
        %v4227 = vshrl.u32 920167782, %v4215
        %v4228 = vor.u32 %v4226, %v4227
        %v4229 = vshll.u32 920167782, %v4214
        %v4230 = vshrl.u32 1326507024, %v4215
        %v4231 = vor.u32 %v4229, %v4230
        %vm4232 = vcmp.lt.s32.totalorder %v4213, 1
        %vm4233 = vcmp.lt.s32.totalorder %v4213, 2
        %vm4234 = vcmp.lt.s32.totalorder %v4213, 3
        %vm4235 = vcmp.lt.s32.totalorder %v4213, 4
        %v4236 = vsel %vm4232, %v4216, %v4219
        %v4237 = vsel %vm4235, %v4225, 2102212464
        %v4238 = vsel %vm4234, %v4222, %v4237
        %v4239 = vsel %vm4233, %v4236, %v4238
        %v4240 = vsel %vm4232, %v4219, %v4222
        %v4241 = vsel %vm4235, %v4228, 920167782
        %v4242 = vsel %vm4234, %v4225, %v4241
        %v4243 = vsel %vm4233, %v4240, %v4242
        %v4244 = vsel %vm4232, %v4222, %v4225
        %v4245 = vsel %vm4235, %v4231, 1326507024
        %v4246 = vsel %vm4234, %v4228, %v4245
        %v4247 = vsel %vm4233, %v4244, %v4246
        %v4248 = vshll.u32 %v4208, 8
        %v4249 = vmul.u32.u64.compose %v4248, %v4247
        %v4250 = vextract.low.u32 %v4249
        %v4251 = vextract.high.u32 %v4249
        %v4252 = vmul.u32.u64.compose %v4248, %v4243
        %v4253 = vextract.low.u32 %v4252
        %v4254 = vextract.high.u32 %v4252
        %v4255 = vmul.u32 %v4248, %v4239
        %v4256 = vadd.s32 %v4251, %v4253
        %vm4257 = vc.u32 %v4251, %v4253
        %v4258 = vadd.s32 %v4254, 1
        %v4259 = vsel %vm4257, %v4258, %v4254
        %v4260 = vadd.s32 %v4255, %v4259
        %v4261 = vadd.s32 %v4260, 536870912
        %v4262 = vshrl.u32 %v4261, 30
        %v4263 = vshll.u32 %v4262, 30
        %v4264 = vsub.s32 %v4260, %v4263
        %vm4265 = vcmp.lt.s32.totalorder %v4264, 0
        %v4266 = vsub.s32 0, %v4264
        %v4267 = vsel %vm4265, %v4266, %v4264
        %v4268 = vclz %v4267
        %v4269 = vsub.s32 %v4268, 2
        %vm4270 = vcmp.gt.s32.totalorder 0, %v4269
        %v4271 = vsel %vm4270, 0, %v4269
        %v4272 = vsub.s32 32, %v4271
        %v4273 = vshll.u32 %v4264, %v4271
        %v4274 = vshrl.u32 %v4256, %v4272
        %v4275 = vor.u32 %v4273, %v4274
        %v4276 = vsub.s32 4294967266, %v4271
        %v4277 = vadd.s32 %v4276, 127
        %v4278 = vshll.u32 %v4277, 23
        %v4279 = vor.u32 4788187, %v4278
        %v4280 = vand.u32 2147483647, %v4279
        %v4282 = vcvt.s32.f32 %v4275
        %v4283 = vmul.f32 %v4282, %v4280
        %v4284 = vxor.u32 %v4283, 2147483648
        %v4285 = vsel %vm4202, %v4284, %v4283
        %v4286 = vsub.s32 4, %v4262
        %v4287 = vsel %vm4202, %v4286, %v4262
        %v4288 = vsel %vm4201, %v272, %v4285
        %v4289 = vsel %vm4201, 0, %v4287
        %v4290 = vcosq.f32.pop %v4288
        %v4291 = vsinq.f32.pop %v4288
        %vm4292 = vweird.f32 %v272
        %v4293 = vadd.s32 %v4289, 3
        %v4294 = vand.u32 %v4293, 3
        %vm4295 = vcmp.lt.s32.totalorder %v4294, 2
        %vm4296 = vcmp.eq.s32.totalorder %v4294, 0
        %v4297 = vxor.u32 %v4291, 2147483648
        %v4298 = vsel %vm4296, %v4290, %v4297
        %vm4299 = vcmp.eq.s32.totalorder %v4294, 2
        %v4300 = vxor.u32 %v4290, 2147483648
        %v4301 = vsel %vm4299, %v4300, %v4291
        %v4302 = vsel %vm4295, %v4298, %v4301
        %v4303 = vsel %vm4292, nan, %v4302
        %v4304 = vand.u32 2147483647, %v273
        %vm4305 = vcmp.le.f32.partialorder %v4304, 0.7853982
        %vm4306 = vcmp.lt.s32.totalorder %v273, 0
        %v4307 = vand.u32 %v273, 2139095040
        %v4308 = vshrl.u32 %v4307, 23
        %v4309 = vsub.s32 %v4308, 127
        %v4310 = vand.u32 2147483647, %v273
        %v4311 = vand.u32 %v4310, 8388607
        %v4312 = vor.u32 %v4311, 8388608
        %v4313 = vsub.s32 0, %v4312
        %v4314 = vadd.s32 %v4309, 1
        %vm4315 = vcmp.gt.s32.totalorder %v4314, 0
        %v4316 = vsel %vm4315, %v4314, 0
        %v4317 = vshrl.u32 %v4316, 5
        %v4318 = vand.u32 %v4316, 31
        %v4319 = vsub.s32 32, %v4318
        %v4320 = vshrl.u32 683565275, %v4319
        %v4321 = vshll.u32 683565275, %v4318
        %v4322 = vshrl.u32 2475754826, %v4319
        %v4323 = vor.u32 %v4321, %v4322
        %v4324 = vshll.u32 2475754826, %v4318
        %v4325 = vshrl.u32 2131351028, %v4319
        %v4326 = vor.u32 %v4324, %v4325
        %v4327 = vshll.u32 2131351028, %v4318
        %v4328 = vshrl.u32 2102212464, %v4319
        %v4329 = vor.u32 %v4327, %v4328
        %v4330 = vshll.u32 2102212464, %v4318
        %v4331 = vshrl.u32 920167782, %v4319
        %v4332 = vor.u32 %v4330, %v4331
        %v4333 = vshll.u32 920167782, %v4318
        %v4334 = vshrl.u32 1326507024, %v4319
        %v4335 = vor.u32 %v4333, %v4334
        %vm4336 = vcmp.lt.s32.totalorder %v4317, 1
        %vm4337 = vcmp.lt.s32.totalorder %v4317, 2
        %vm4338 = vcmp.lt.s32.totalorder %v4317, 3
        %vm4339 = vcmp.lt.s32.totalorder %v4317, 4
        %v4340 = vsel %vm4336, %v4320, %v4323
        %v4341 = vsel %vm4339, %v4329, 2102212464
        %v4342 = vsel %vm4338, %v4326, %v4341
        %v4343 = vsel %vm4337, %v4340, %v4342
        %v4344 = vsel %vm4336, %v4323, %v4326
        %v4345 = vsel %vm4339, %v4332, 920167782
        %v4346 = vsel %vm4338, %v4329, %v4345
        %v4347 = vsel %vm4337, %v4344, %v4346
        %v4348 = vsel %vm4336, %v4326, %v4329
        %v4349 = vsel %vm4339, %v4335, 1326507024
        %v4350 = vsel %vm4338, %v4332, %v4349
        %v4351 = vsel %vm4337, %v4348, %v4350
        %v4352 = vshll.u32 %v4312, 8
        %v4353 = vmul.u32.u64.compose %v4352, %v4351
        %v4354 = vextract.low.u32 %v4353
        %v4355 = vextract.high.u32 %v4353
        %v4356 = vmul.u32.u64.compose %v4352, %v4347
        %v4357 = vextract.low.u32 %v4356
        %v4358 = vextract.high.u32 %v4356
        %v4359 = vmul.u32 %v4352, %v4343
        %v4360 = vadd.s32 %v4355, %v4357
        %vm4361 = vc.u32 %v4355, %v4357
        %v4362 = vadd.s32 %v4358, 1
        %v4363 = vsel %vm4361, %v4362, %v4358
        %v4364 = vadd.s32 %v4359, %v4363
        %v4365 = vadd.s32 %v4364, 536870912
        %v4366 = vshrl.u32 %v4365, 30
        %v4367 = vshll.u32 %v4366, 30
        %v4368 = vsub.s32 %v4364, %v4367
        %vm4369 = vcmp.lt.s32.totalorder %v4368, 0
        %v4370 = vsub.s32 0, %v4368
        %v4371 = vsel %vm4369, %v4370, %v4368
        %v4372 = vclz %v4371
        %v4373 = vsub.s32 %v4372, 2
        %vm4374 = vcmp.gt.s32.totalorder 0, %v4373
        %v4375 = vsel %vm4374, 0, %v4373
        %v4376 = vsub.s32 32, %v4375
        %v4377 = vshll.u32 %v4368, %v4375
        %v4378 = vshrl.u32 %v4360, %v4376
        %v4379 = vor.u32 %v4377, %v4378
        %v4380 = vsub.s32 4294967266, %v4375
        %v4381 = vadd.s32 %v4380, 127
        %v4382 = vshll.u32 %v4381, 23
        %v4383 = vor.u32 4788187, %v4382
        %v4384 = vand.u32 2147483647, %v4383
        %v4386 = vcvt.s32.f32 %v4379
        %v4387 = vmul.f32 %v4386, %v4384
        %v4388 = vxor.u32 %v4387, 2147483648
        %v4389 = vsel %vm4306, %v4388, %v4387
        %v4390 = vsub.s32 4, %v4366
        %v4391 = vsel %vm4306, %v4390, %v4366
        %v4392 = vsel %vm4305, %v273, %v4389
        %v4393 = vsel %vm4305, 0, %v4391
        %v4394 = vcosq.f32.pop %v4392
        %v4395 = vsinq.f32.pop %v4392
        %vm4396 = vweird.f32 %v273
        %v4397 = vadd.s32 %v4393, 3
        %v4398 = vand.u32 %v4397, 3
        %vm4399 = vcmp.lt.s32.totalorder %v4398, 2
        %vm4400 = vcmp.eq.s32.totalorder %v4398, 0
        %v4401 = vxor.u32 %v4395, 2147483648
        %v4402 = vsel %vm4400, %v4394, %v4401
        %vm4403 = vcmp.eq.s32.totalorder %v4398, 2
        %v4404 = vxor.u32 %v4394, 2147483648
        %v4405 = vsel %vm4403, %v4404, %v4395
        %v4406 = vsel %vm4399, %v4402, %v4405
        %v4407 = vsel %vm4396, nan, %v4406
        %v4408 = vand.u32 2147483647, %v274
        %vm4409 = vcmp.le.f32.partialorder %v4408, 0.7853982
        %vm4410 = vcmp.lt.s32.totalorder %v274, 0
        %v4411 = vand.u32 %v274, 2139095040
        %v4412 = vshrl.u32 %v4411, 23
        %v4413 = vsub.s32 %v4412, 127
        %v4414 = vand.u32 2147483647, %v274
        %v4415 = vand.u32 %v4414, 8388607
        %v4416 = vor.u32 %v4415, 8388608
        %v4417 = vsub.s32 0, %v4416
        %v4418 = vadd.s32 %v4413, 1
        %vm4419 = vcmp.gt.s32.totalorder %v4418, 0
        %v4420 = vsel %vm4419, %v4418, 0
        %v4421 = vshrl.u32 %v4420, 5
        %v4422 = vand.u32 %v4420, 31
        %v4423 = vsub.s32 32, %v4422
        %v4424 = vshrl.u32 683565275, %v4423
        %v4425 = vshll.u32 683565275, %v4422
        %v4426 = vshrl.u32 2475754826, %v4423
        %v4427 = vor.u32 %v4425, %v4426
        %v4428 = vshll.u32 2475754826, %v4422
        %v4429 = vshrl.u32 2131351028, %v4423
        %v4430 = vor.u32 %v4428, %v4429
        %v4431 = vshll.u32 2131351028, %v4422
        %v4432 = vshrl.u32 2102212464, %v4423
        %v4433 = vor.u32 %v4431, %v4432
        %v4434 = vshll.u32 2102212464, %v4422
        %v4435 = vshrl.u32 920167782, %v4423
        %v4436 = vor.u32 %v4434, %v4435
        %v4437 = vshll.u32 920167782, %v4422
        %v4438 = vshrl.u32 1326507024, %v4423
        %v4439 = vor.u32 %v4437, %v4438
        %vm4440 = vcmp.lt.s32.totalorder %v4421, 1
        %vm4441 = vcmp.lt.s32.totalorder %v4421, 2
        %vm4442 = vcmp.lt.s32.totalorder %v4421, 3
        %vm4443 = vcmp.lt.s32.totalorder %v4421, 4
        %v4444 = vsel %vm4440, %v4424, %v4427
        %v4445 = vsel %vm4443, %v4433, 2102212464
        %v4446 = vsel %vm4442, %v4430, %v4445
        %v4447 = vsel %vm4441, %v4444, %v4446
        %v4448 = vsel %vm4440, %v4427, %v4430
        %v4449 = vsel %vm4443, %v4436, 920167782
        %v4450 = vsel %vm4442, %v4433, %v4449
        %v4451 = vsel %vm4441, %v4448, %v4450
        %v4452 = vsel %vm4440, %v4430, %v4433
        %v4453 = vsel %vm4443, %v4439, 1326507024
        %v4454 = vsel %vm4442, %v4436, %v4453
        %v4455 = vsel %vm4441, %v4452, %v4454
        %v4456 = vshll.u32 %v4416, 8
        %v4457 = vmul.u32.u64.compose %v4456, %v4455
        %v4458 = vextract.low.u32 %v4457
        %v4459 = vextract.high.u32 %v4457
        %v4460 = vmul.u32.u64.compose %v4456, %v4451
        %v4461 = vextract.low.u32 %v4460
        %v4462 = vextract.high.u32 %v4460
        %v4463 = vmul.u32 %v4456, %v4447
        %v4464 = vadd.s32 %v4459, %v4461
        %vm4465 = vc.u32 %v4459, %v4461
        %v4466 = vadd.s32 %v4462, 1
        %v4467 = vsel %vm4465, %v4466, %v4462
        %v4468 = vadd.s32 %v4463, %v4467
        %v4469 = vadd.s32 %v4468, 536870912
        %v4470 = vshrl.u32 %v4469, 30
        %v4471 = vshll.u32 %v4470, 30
        %v4472 = vsub.s32 %v4468, %v4471
        %vm4473 = vcmp.lt.s32.totalorder %v4472, 0
        %v4474 = vsub.s32 0, %v4472
        %v4475 = vsel %vm4473, %v4474, %v4472
        %v4476 = vclz %v4475
        %v4477 = vsub.s32 %v4476, 2
        %vm4478 = vcmp.gt.s32.totalorder 0, %v4477
        %v4479 = vsel %vm4478, 0, %v4477
        %v4480 = vsub.s32 32, %v4479
        %v4481 = vshll.u32 %v4472, %v4479
        %v4482 = vshrl.u32 %v4464, %v4480
        %v4483 = vor.u32 %v4481, %v4482
        %v4484 = vsub.s32 4294967266, %v4479
        %v4485 = vadd.s32 %v4484, 127
        %v4486 = vshll.u32 %v4485, 23
        %v4487 = vor.u32 4788187, %v4486
        %v4488 = vand.u32 2147483647, %v4487
        %v4490 = vcvt.s32.f32 %v4483
        %v4491 = vmul.f32 %v4490, %v4488
        %v4492 = vxor.u32 %v4491, 2147483648
        %v4493 = vsel %vm4410, %v4492, %v4491
        %v4494 = vsub.s32 4, %v4470
        %v4495 = vsel %vm4410, %v4494, %v4470
        %v4496 = vsel %vm4409, %v274, %v4493
        %v4497 = vsel %vm4409, 0, %v4495
        %v4498 = vcosq.f32.pop %v4496
        %v4499 = vsinq.f32.pop %v4496
        %vm4500 = vweird.f32 %v274
        %v4501 = vadd.s32 %v4497, 3
        %v4502 = vand.u32 %v4501, 3
        %vm4503 = vcmp.lt.s32.totalorder %v4502, 2
        %vm4504 = vcmp.eq.s32.totalorder %v4502, 0
        %v4505 = vxor.u32 %v4499, 2147483648
        %v4506 = vsel %vm4504, %v4498, %v4505
        %vm4507 = vcmp.eq.s32.totalorder %v4502, 2
        %v4508 = vxor.u32 %v4498, 2147483648
        %v4509 = vsel %vm4507, %v4508, %v4499
        %v4510 = vsel %vm4503, %v4506, %v4509
        %v4511 = vsel %vm4500, nan, %v4510
        %v4512 = vand.u32 2147483647, %v275
        %vm4513 = vcmp.le.f32.partialorder %v4512, 0.7853982
        %vm4514 = vcmp.lt.s32.totalorder %v275, 0
        %v4515 = vand.u32 %v275, 2139095040
        %v4516 = vshrl.u32 %v4515, 23
        %v4517 = vsub.s32 %v4516, 127
        %v4518 = vand.u32 2147483647, %v275
        %v4519 = vand.u32 %v4518, 8388607
        %v4520 = vor.u32 %v4519, 8388608
        %v4521 = vsub.s32 0, %v4520
        %v4522 = vadd.s32 %v4517, 1
        %vm4523 = vcmp.gt.s32.totalorder %v4522, 0
        %v4524 = vsel %vm4523, %v4522, 0
        %v4525 = vshrl.u32 %v4524, 5
        %v4526 = vand.u32 %v4524, 31
        %v4527 = vsub.s32 32, %v4526
        %v4528 = vshrl.u32 683565275, %v4527
        %v4529 = vshll.u32 683565275, %v4526
        %v4530 = vshrl.u32 2475754826, %v4527
        %v4531 = vor.u32 %v4529, %v4530
        %v4532 = vshll.u32 2475754826, %v4526
        %v4533 = vshrl.u32 2131351028, %v4527
        %v4534 = vor.u32 %v4532, %v4533
        %v4535 = vshll.u32 2131351028, %v4526
        %v4536 = vshrl.u32 2102212464, %v4527
        %v4537 = vor.u32 %v4535, %v4536
        %v4538 = vshll.u32 2102212464, %v4526
        %v4539 = vshrl.u32 920167782, %v4527
        %v4540 = vor.u32 %v4538, %v4539
        %v4541 = vshll.u32 920167782, %v4526
        %v4542 = vshrl.u32 1326507024, %v4527
        %v4543 = vor.u32 %v4541, %v4542
        %vm4544 = vcmp.lt.s32.totalorder %v4525, 1
        %vm4545 = vcmp.lt.s32.totalorder %v4525, 2
        %vm4546 = vcmp.lt.s32.totalorder %v4525, 3
        %vm4547 = vcmp.lt.s32.totalorder %v4525, 4
        %v4548 = vsel %vm4544, %v4528, %v4531
        %v4549 = vsel %vm4547, %v4537, 2102212464
        %v4550 = vsel %vm4546, %v4534, %v4549
        %v4551 = vsel %vm4545, %v4548, %v4550
        %v4552 = vsel %vm4544, %v4531, %v4534
        %v4553 = vsel %vm4547, %v4540, 920167782
        %v4554 = vsel %vm4546, %v4537, %v4553
        %v4555 = vsel %vm4545, %v4552, %v4554
        %v4556 = vsel %vm4544, %v4534, %v4537
        %v4557 = vsel %vm4547, %v4543, 1326507024
        %v4558 = vsel %vm4546, %v4540, %v4557
        %v4559 = vsel %vm4545, %v4556, %v4558
        %v4560 = vshll.u32 %v4520, 8
        %v4561 = vmul.u32.u64.compose %v4560, %v4559
        %v4562 = vextract.low.u32 %v4561
        %v4563 = vextract.high.u32 %v4561
        %v4564 = vmul.u32.u64.compose %v4560, %v4555
        %v4565 = vextract.low.u32 %v4564
        %v4566 = vextract.high.u32 %v4564
        %v4567 = vmul.u32 %v4560, %v4551
        %v4568 = vadd.s32 %v4563, %v4565
        %vm4569 = vc.u32 %v4563, %v4565
        %v4570 = vadd.s32 %v4566, 1
        %v4571 = vsel %vm4569, %v4570, %v4566
        %v4572 = vadd.s32 %v4567, %v4571
        %v4573 = vadd.s32 %v4572, 536870912
        %v4574 = vshrl.u32 %v4573, 30
        %v4575 = vshll.u32 %v4574, 30
        %v4576 = vsub.s32 %v4572, %v4575
        %vm4577 = vcmp.lt.s32.totalorder %v4576, 0
        %v4578 = vsub.s32 0, %v4576
        %v4579 = vsel %vm4577, %v4578, %v4576
        %v4580 = vclz %v4579
        %v4581 = vsub.s32 %v4580, 2
        %vm4582 = vcmp.gt.s32.totalorder 0, %v4581
        %v4583 = vsel %vm4582, 0, %v4581
        %v4584 = vsub.s32 32, %v4583
        %v4585 = vshll.u32 %v4576, %v4583
        %v4586 = vshrl.u32 %v4568, %v4584
        %v4587 = vor.u32 %v4585, %v4586
        %v4588 = vsub.s32 4294967266, %v4583
        %v4589 = vadd.s32 %v4588, 127
        %v4590 = vshll.u32 %v4589, 23
        %v4591 = vor.u32 4788187, %v4590
        %v4592 = vand.u32 2147483647, %v4591
        %v4594 = vcvt.s32.f32 %v4587
        %v4595 = vmul.f32 %v4594, %v4592
        %v4596 = vxor.u32 %v4595, 2147483648
        %v4597 = vsel %vm4514, %v4596, %v4595
        %v4598 = vsub.s32 4, %v4574
        %v4599 = vsel %vm4514, %v4598, %v4574
        %v4600 = vsel %vm4513, %v275, %v4597
        %v4601 = vsel %vm4513, 0, %v4599
        %v4602 = vcosq.f32.pop %v4600
        %v4603 = vsinq.f32.pop %v4600
        %vm4604 = vweird.f32 %v275
        %v4605 = vadd.s32 %v4601, 3
        %v4606 = vand.u32 %v4605, 3
        %vm4607 = vcmp.lt.s32.totalorder %v4606, 2
        %vm4608 = vcmp.eq.s32.totalorder %v4606, 0
        %v4609 = vxor.u32 %v4603, 2147483648
        %v4610 = vsel %vm4608, %v4602, %v4609
        %vm4611 = vcmp.eq.s32.totalorder %v4606, 2
        %v4612 = vxor.u32 %v4602, 2147483648
        %v4613 = vsel %vm4611, %v4612, %v4603
        %v4614 = vsel %vm4607, %v4610, %v4613
        %v4615 = vsel %vm4604, nan, %v4614
        %v4616 = vand.u32 2147483647, %v276
        %vm4617 = vcmp.le.f32.partialorder %v4616, 0.7853982
        %vm4618 = vcmp.lt.s32.totalorder %v276, 0
        %v4619 = vand.u32 %v276, 2139095040
        %v4620 = vshrl.u32 %v4619, 23
        %v4621 = vsub.s32 %v4620, 127
        %v4622 = vand.u32 2147483647, %v276
        %v4623 = vand.u32 %v4622, 8388607
        %v4624 = vor.u32 %v4623, 8388608
        %v4625 = vsub.s32 0, %v4624
        %v4626 = vadd.s32 %v4621, 1
        %vm4627 = vcmp.gt.s32.totalorder %v4626, 0
        %v4628 = vsel %vm4627, %v4626, 0
        %v4629 = vshrl.u32 %v4628, 5
        %v4630 = vand.u32 %v4628, 31
        %v4631 = vsub.s32 32, %v4630
        %v4632 = vshrl.u32 683565275, %v4631
        %v4633 = vshll.u32 683565275, %v4630
        %v4634 = vshrl.u32 2475754826, %v4631
        %v4635 = vor.u32 %v4633, %v4634
        %v4636 = vshll.u32 2475754826, %v4630
        %v4637 = vshrl.u32 2131351028, %v4631
        %v4638 = vor.u32 %v4636, %v4637
        %v4639 = vshll.u32 2131351028, %v4630
        %v4640 = vshrl.u32 2102212464, %v4631
        %v4641 = vor.u32 %v4639, %v4640
        %v4642 = vshll.u32 2102212464, %v4630
        %v4643 = vshrl.u32 920167782, %v4631
        %v4644 = vor.u32 %v4642, %v4643
        %v4645 = vshll.u32 920167782, %v4630
        %v4646 = vshrl.u32 1326507024, %v4631
        %v4647 = vor.u32 %v4645, %v4646
        %vm4648 = vcmp.lt.s32.totalorder %v4629, 1
        %vm4649 = vcmp.lt.s32.totalorder %v4629, 2
        %vm4650 = vcmp.lt.s32.totalorder %v4629, 3
        %vm4651 = vcmp.lt.s32.totalorder %v4629, 4
        %v4652 = vsel %vm4648, %v4632, %v4635
        %v4653 = vsel %vm4651, %v4641, 2102212464
        %v4654 = vsel %vm4650, %v4638, %v4653
        %v4655 = vsel %vm4649, %v4652, %v4654
        %v4656 = vsel %vm4648, %v4635, %v4638
        %v4657 = vsel %vm4651, %v4644, 920167782
        %v4658 = vsel %vm4650, %v4641, %v4657
        %v4659 = vsel %vm4649, %v4656, %v4658
        %v4660 = vsel %vm4648, %v4638, %v4641
        %v4661 = vsel %vm4651, %v4647, 1326507024
        %v4662 = vsel %vm4650, %v4644, %v4661
        %v4663 = vsel %vm4649, %v4660, %v4662
        %v4664 = vshll.u32 %v4624, 8
        %v4665 = vmul.u32.u64.compose %v4664, %v4663
        %v4666 = vextract.low.u32 %v4665
        %v4667 = vextract.high.u32 %v4665
        %v4668 = vmul.u32.u64.compose %v4664, %v4659
        %v4669 = vextract.low.u32 %v4668
        %v4670 = vextract.high.u32 %v4668
        %v4671 = vmul.u32 %v4664, %v4655
        %v4672 = vadd.s32 %v4667, %v4669
        %vm4673 = vc.u32 %v4667, %v4669
        %v4674 = vadd.s32 %v4670, 1
        %v4675 = vsel %vm4673, %v4674, %v4670
        %v4676 = vadd.s32 %v4671, %v4675
        %v4677 = vadd.s32 %v4676, 536870912
        %v4678 = vshrl.u32 %v4677, 30
        %v4679 = vshll.u32 %v4678, 30
        %v4680 = vsub.s32 %v4676, %v4679
        %vm4681 = vcmp.lt.s32.totalorder %v4680, 0
        %v4682 = vsub.s32 0, %v4680
        %v4683 = vsel %vm4681, %v4682, %v4680
        %v4684 = vclz %v4683
        %v4685 = vsub.s32 %v4684, 2
        %vm4686 = vcmp.gt.s32.totalorder 0, %v4685
        %v4687 = vsel %vm4686, 0, %v4685
        %v4688 = vsub.s32 32, %v4687
        %v4689 = vshll.u32 %v4680, %v4687
        %v4690 = vshrl.u32 %v4672, %v4688
        %v4691 = vor.u32 %v4689, %v4690
        %v4692 = vsub.s32 4294967266, %v4687
        %v4693 = vadd.s32 %v4692, 127
        %v4694 = vshll.u32 %v4693, 23
        %v4695 = vor.u32 4788187, %v4694
        %v4696 = vand.u32 2147483647, %v4695
        %v4698 = vcvt.s32.f32 %v4691
        %v4699 = vmul.f32 %v4698, %v4696
        %v4700 = vxor.u32 %v4699, 2147483648
        %v4701 = vsel %vm4618, %v4700, %v4699
        %v4702 = vsub.s32 4, %v4678
        %v4703 = vsel %vm4618, %v4702, %v4678
        %v4704 = vsel %vm4617, %v276, %v4701
        %v4705 = vsel %vm4617, 0, %v4703
        %v4706 = vcosq.f32.pop %v4704
        %v4707 = vsinq.f32.pop %v4704
        %vm4708 = vweird.f32 %v276
        %v4709 = vadd.s32 %v4705, 3
        %v4710 = vand.u32 %v4709, 3
        %vm4711 = vcmp.lt.s32.totalorder %v4710, 2
        %vm4712 = vcmp.eq.s32.totalorder %v4710, 0
        %v4713 = vxor.u32 %v4707, 2147483648
        %v4714 = vsel %vm4712, %v4706, %v4713
        %vm4715 = vcmp.eq.s32.totalorder %v4710, 2
        %v4716 = vxor.u32 %v4706, 2147483648
        %v4717 = vsel %vm4715, %v4716, %v4707
        %v4718 = vsel %vm4711, %v4714, %v4717
        %v4719 = vsel %vm4708, nan, %v4718
        %v4720 = vand.u32 2147483647, %v277
        %vm4721 = vcmp.le.f32.partialorder %v4720, 0.7853982
        %vm4722 = vcmp.lt.s32.totalorder %v277, 0
        %v4723 = vand.u32 %v277, 2139095040
        %v4724 = vshrl.u32 %v4723, 23
        %v4725 = vsub.s32 %v4724, 127
        %v4726 = vand.u32 2147483647, %v277
        %v4727 = vand.u32 %v4726, 8388607
        %v4728 = vor.u32 %v4727, 8388608
        %v4729 = vsub.s32 0, %v4728
        %v4730 = vadd.s32 %v4725, 1
        %vm4731 = vcmp.gt.s32.totalorder %v4730, 0
        %v4732 = vsel %vm4731, %v4730, 0
        %v4733 = vshrl.u32 %v4732, 5
        %v4734 = vand.u32 %v4732, 31
        %v4735 = vsub.s32 32, %v4734
        %v4736 = vshrl.u32 683565275, %v4735
        %v4737 = vshll.u32 683565275, %v4734
        %v4738 = vshrl.u32 2475754826, %v4735
        %v4739 = vor.u32 %v4737, %v4738
        %v4740 = vshll.u32 2475754826, %v4734
        %v4741 = vshrl.u32 2131351028, %v4735
        %v4742 = vor.u32 %v4740, %v4741
        %v4743 = vshll.u32 2131351028, %v4734
        %v4744 = vshrl.u32 2102212464, %v4735
        %v4745 = vor.u32 %v4743, %v4744
        %v4746 = vshll.u32 2102212464, %v4734
        %v4747 = vshrl.u32 920167782, %v4735
        %v4748 = vor.u32 %v4746, %v4747
        %v4749 = vshll.u32 920167782, %v4734
        %v4750 = vshrl.u32 1326507024, %v4735
        %v4751 = vor.u32 %v4749, %v4750
        %vm4752 = vcmp.lt.s32.totalorder %v4733, 1
        %vm4753 = vcmp.lt.s32.totalorder %v4733, 2
        %vm4754 = vcmp.lt.s32.totalorder %v4733, 3
        %vm4755 = vcmp.lt.s32.totalorder %v4733, 4
        %v4756 = vsel %vm4752, %v4736, %v4739
        %v4757 = vsel %vm4755, %v4745, 2102212464
        %v4758 = vsel %vm4754, %v4742, %v4757
        %v4759 = vsel %vm4753, %v4756, %v4758
        %v4760 = vsel %vm4752, %v4739, %v4742
        %v4761 = vsel %vm4755, %v4748, 920167782
        %v4762 = vsel %vm4754, %v4745, %v4761
        %v4763 = vsel %vm4753, %v4760, %v4762
        %v4764 = vsel %vm4752, %v4742, %v4745
        %v4765 = vsel %vm4755, %v4751, 1326507024
        %v4766 = vsel %vm4754, %v4748, %v4765
        %v4767 = vsel %vm4753, %v4764, %v4766
        %v4768 = vshll.u32 %v4728, 8
        %v4769 = vmul.u32.u64.compose %v4768, %v4767
        %v4770 = vextract.low.u32 %v4769
        %v4771 = vextract.high.u32 %v4769
        %v4772 = vmul.u32.u64.compose %v4768, %v4763
        %v4773 = vextract.low.u32 %v4772
        %v4774 = vextract.high.u32 %v4772
        %v4775 = vmul.u32 %v4768, %v4759
        %v4776 = vadd.s32 %v4771, %v4773
        %vm4777 = vc.u32 %v4771, %v4773
        %v4778 = vadd.s32 %v4774, 1
        %v4779 = vsel %vm4777, %v4778, %v4774
        %v4780 = vadd.s32 %v4775, %v4779
        %v4781 = vadd.s32 %v4780, 536870912
        %v4782 = vshrl.u32 %v4781, 30
        %v4783 = vshll.u32 %v4782, 30
        %v4784 = vsub.s32 %v4780, %v4783
        %vm4785 = vcmp.lt.s32.totalorder %v4784, 0
        %v4786 = vsub.s32 0, %v4784
        %v4787 = vsel %vm4785, %v4786, %v4784
        %v4788 = vclz %v4787
        %v4789 = vsub.s32 %v4788, 2
        %vm4790 = vcmp.gt.s32.totalorder 0, %v4789
        %v4791 = vsel %vm4790, 0, %v4789
        %v4792 = vsub.s32 32, %v4791
        %v4793 = vshll.u32 %v4784, %v4791
        %v4794 = vshrl.u32 %v4776, %v4792
        %v4795 = vor.u32 %v4793, %v4794
        %v4796 = vsub.s32 4294967266, %v4791
        %v4797 = vadd.s32 %v4796, 127
        %v4798 = vshll.u32 %v4797, 23
        %v4799 = vor.u32 4788187, %v4798
        %v4800 = vand.u32 2147483647, %v4799
        %v4802 = vcvt.s32.f32 %v4795
        %v4803 = vmul.f32 %v4802, %v4800
        %v4804 = vxor.u32 %v4803, 2147483648
        %v4805 = vsel %vm4722, %v4804, %v4803
        %v4806 = vsub.s32 4, %v4782
        %v4807 = vsel %vm4722, %v4806, %v4782
        %v4808 = vsel %vm4721, %v277, %v4805
        %v4809 = vsel %vm4721, 0, %v4807
        %v4810 = vcosq.f32.pop %v4808
        %v4811 = vsinq.f32.pop %v4808
        %vm4812 = vweird.f32 %v277
        %v4813 = vadd.s32 %v4809, 3
        %v4814 = vand.u32 %v4813, 3
        %vm4815 = vcmp.lt.s32.totalorder %v4814, 2
        %vm4816 = vcmp.eq.s32.totalorder %v4814, 0
        %v4817 = vxor.u32 %v4811, 2147483648
        %v4818 = vsel %vm4816, %v4810, %v4817
        %vm4819 = vcmp.eq.s32.totalorder %v4814, 2
        %v4820 = vxor.u32 %v4810, 2147483648
        %v4821 = vsel %vm4819, %v4820, %v4811
        %v4822 = vsel %vm4815, %v4818, %v4821
        %v4823 = vsel %vm4812, nan, %v4822
        %v4824 = vand.u32 2147483647, %v278
        %vm4825 = vcmp.le.f32.partialorder %v4824, 0.7853982
        %vm4826 = vcmp.lt.s32.totalorder %v278, 0
        %v4827 = vand.u32 %v278, 2139095040
        %v4828 = vshrl.u32 %v4827, 23
        %v4829 = vsub.s32 %v4828, 127
        %v4830 = vand.u32 2147483647, %v278
        %v4831 = vand.u32 %v4830, 8388607
        %v4832 = vor.u32 %v4831, 8388608
        %v4833 = vsub.s32 0, %v4832
        %v4834 = vadd.s32 %v4829, 1
        %vm4835 = vcmp.gt.s32.totalorder %v4834, 0
        %v4836 = vsel %vm4835, %v4834, 0
        %v4837 = vshrl.u32 %v4836, 5
        %v4838 = vand.u32 %v4836, 31
        %v4839 = vsub.s32 32, %v4838
        %v4840 = vshrl.u32 683565275, %v4839
        %v4841 = vshll.u32 683565275, %v4838
        %v4842 = vshrl.u32 2475754826, %v4839
        %v4843 = vor.u32 %v4841, %v4842
        %v4844 = vshll.u32 2475754826, %v4838
        %v4845 = vshrl.u32 2131351028, %v4839
        %v4846 = vor.u32 %v4844, %v4845
        %v4847 = vshll.u32 2131351028, %v4838
        %v4848 = vshrl.u32 2102212464, %v4839
        %v4849 = vor.u32 %v4847, %v4848
        %v4850 = vshll.u32 2102212464, %v4838
        %v4851 = vshrl.u32 920167782, %v4839
        %v4852 = vor.u32 %v4850, %v4851
        %v4853 = vshll.u32 920167782, %v4838
        %v4854 = vshrl.u32 1326507024, %v4839
        %v4855 = vor.u32 %v4853, %v4854
        %vm4856 = vcmp.lt.s32.totalorder %v4837, 1
        %vm4857 = vcmp.lt.s32.totalorder %v4837, 2
        %vm4858 = vcmp.lt.s32.totalorder %v4837, 3
        %vm4859 = vcmp.lt.s32.totalorder %v4837, 4
        %v4860 = vsel %vm4856, %v4840, %v4843
        %v4861 = vsel %vm4859, %v4849, 2102212464
        %v4862 = vsel %vm4858, %v4846, %v4861
        %v4863 = vsel %vm4857, %v4860, %v4862
        %v4864 = vsel %vm4856, %v4843, %v4846
        %v4865 = vsel %vm4859, %v4852, 920167782
        %v4866 = vsel %vm4858, %v4849, %v4865
        %v4867 = vsel %vm4857, %v4864, %v4866
        %v4868 = vsel %vm4856, %v4846, %v4849
        %v4869 = vsel %vm4859, %v4855, 1326507024
        %v4870 = vsel %vm4858, %v4852, %v4869
        %v4871 = vsel %vm4857, %v4868, %v4870
        %v4872 = vshll.u32 %v4832, 8
        %v4873 = vmul.u32.u64.compose %v4872, %v4871
        %v4874 = vextract.low.u32 %v4873
        %v4875 = vextract.high.u32 %v4873
        %v4876 = vmul.u32.u64.compose %v4872, %v4867
        %v4877 = vextract.low.u32 %v4876
        %v4878 = vextract.high.u32 %v4876
        %v4879 = vmul.u32 %v4872, %v4863
        %v4880 = vadd.s32 %v4875, %v4877
        %vm4881 = vc.u32 %v4875, %v4877
        %v4882 = vadd.s32 %v4878, 1
        %v4883 = vsel %vm4881, %v4882, %v4878
        %v4884 = vadd.s32 %v4879, %v4883
        %v4885 = vadd.s32 %v4884, 536870912
        %v4886 = vshrl.u32 %v4885, 30
        %v4887 = vshll.u32 %v4886, 30
        %v4888 = vsub.s32 %v4884, %v4887
        %vm4889 = vcmp.lt.s32.totalorder %v4888, 0
        %v4890 = vsub.s32 0, %v4888
        %v4891 = vsel %vm4889, %v4890, %v4888
        %v4892 = vclz %v4891
        %v4893 = vsub.s32 %v4892, 2
        %vm4894 = vcmp.gt.s32.totalorder 0, %v4893
        %v4895 = vsel %vm4894, 0, %v4893
        %v4896 = vsub.s32 32, %v4895
        %v4897 = vshll.u32 %v4888, %v4895
        %v4898 = vshrl.u32 %v4880, %v4896
        %v4899 = vor.u32 %v4897, %v4898
        %v4900 = vsub.s32 4294967266, %v4895
        %v4901 = vadd.s32 %v4900, 127
        %v4902 = vshll.u32 %v4901, 23
        %v4903 = vor.u32 4788187, %v4902
        %v4904 = vand.u32 2147483647, %v4903
        %v4906 = vcvt.s32.f32 %v4899
        %v4907 = vmul.f32 %v4906, %v4904
        %v4908 = vxor.u32 %v4907, 2147483648
        %v4909 = vsel %vm4826, %v4908, %v4907
        %v4910 = vsub.s32 4, %v4886
        %v4911 = vsel %vm4826, %v4910, %v4886
        %v4912 = vsel %vm4825, %v278, %v4909
        %v4913 = vsel %vm4825, 0, %v4911
        %v4914 = vcosq.f32.pop %v4912
        %v4915 = vsinq.f32.pop %v4912
        %vm4916 = vweird.f32 %v278
        %v4917 = vadd.s32 %v4913, 3
        %v4918 = vand.u32 %v4917, 3
        %vm4919 = vcmp.lt.s32.totalorder %v4918, 2
        %vm4920 = vcmp.eq.s32.totalorder %v4918, 0
        %v4921 = vxor.u32 %v4915, 2147483648
        %v4922 = vsel %vm4920, %v4914, %v4921
        %vm4923 = vcmp.eq.s32.totalorder %v4918, 2
        %v4924 = vxor.u32 %v4914, 2147483648
        %v4925 = vsel %vm4923, %v4924, %v4915
        %v4926 = vsel %vm4919, %v4922, %v4925
        %v4927 = vsel %vm4916, nan, %v4926
        %v4928 = vand.u32 2147483647, %v279
        %vm4929 = vcmp.le.f32.partialorder %v4928, 0.7853982
        %vm4930 = vcmp.lt.s32.totalorder %v279, 0
        %v4931 = vand.u32 %v279, 2139095040
        %v4932 = vshrl.u32 %v4931, 23
        %v4933 = vsub.s32 %v4932, 127
        %v4934 = vand.u32 2147483647, %v279
        %v4935 = vand.u32 %v4934, 8388607
        %v4936 = vor.u32 %v4935, 8388608
        %v4937 = vsub.s32 0, %v4936
        %v4938 = vadd.s32 %v4933, 1
        %vm4939 = vcmp.gt.s32.totalorder %v4938, 0
        %v4940 = vsel %vm4939, %v4938, 0
        %v4941 = vshrl.u32 %v4940, 5
        %v4942 = vand.u32 %v4940, 31
        %v4943 = vsub.s32 32, %v4942
        %v4944 = vshrl.u32 683565275, %v4943
        %v4945 = vshll.u32 683565275, %v4942
        %v4946 = vshrl.u32 2475754826, %v4943
        %v4947 = vor.u32 %v4945, %v4946
        %v4948 = vshll.u32 2475754826, %v4942
        %v4949 = vshrl.u32 2131351028, %v4943
        %v4950 = vor.u32 %v4948, %v4949
        %v4951 = vshll.u32 2131351028, %v4942
        %v4952 = vshrl.u32 2102212464, %v4943
        %v4953 = vor.u32 %v4951, %v4952
        %v4954 = vshll.u32 2102212464, %v4942
        %v4955 = vshrl.u32 920167782, %v4943
        %v4956 = vor.u32 %v4954, %v4955
        %v4957 = vshll.u32 920167782, %v4942
        %v4958 = vshrl.u32 1326507024, %v4943
        %v4959 = vor.u32 %v4957, %v4958
        %vm4960 = vcmp.lt.s32.totalorder %v4941, 1
        %vm4961 = vcmp.lt.s32.totalorder %v4941, 2
        %vm4962 = vcmp.lt.s32.totalorder %v4941, 3
        %vm4963 = vcmp.lt.s32.totalorder %v4941, 4
        %v4964 = vsel %vm4960, %v4944, %v4947
        %v4965 = vsel %vm4963, %v4953, 2102212464
        %v4966 = vsel %vm4962, %v4950, %v4965
        %v4967 = vsel %vm4961, %v4964, %v4966
        %v4968 = vsel %vm4960, %v4947, %v4950
        %v4969 = vsel %vm4963, %v4956, 920167782
        %v4970 = vsel %vm4962, %v4953, %v4969
        %v4971 = vsel %vm4961, %v4968, %v4970
        %v4972 = vsel %vm4960, %v4950, %v4953
        %v4973 = vsel %vm4963, %v4959, 1326507024
        %v4974 = vsel %vm4962, %v4956, %v4973
        %v4975 = vsel %vm4961, %v4972, %v4974
        %v4976 = vshll.u32 %v4936, 8
        %v4977 = vmul.u32.u64.compose %v4976, %v4975
        %v4978 = vextract.low.u32 %v4977
        %v4979 = vextract.high.u32 %v4977
        %v4980 = vmul.u32.u64.compose %v4976, %v4971
        %v4981 = vextract.low.u32 %v4980
        %v4982 = vextract.high.u32 %v4980
        %v4983 = vmul.u32 %v4976, %v4967
        %v4984 = vadd.s32 %v4979, %v4981
        %vm4985 = vc.u32 %v4979, %v4981
        %v4986 = vadd.s32 %v4982, 1
        %v4987 = vsel %vm4985, %v4986, %v4982
        %v4988 = vadd.s32 %v4983, %v4987
        %v4989 = vadd.s32 %v4988, 536870912
        %v4990 = vshrl.u32 %v4989, 30
        %v4991 = vshll.u32 %v4990, 30
        %v4992 = vsub.s32 %v4988, %v4991
        %vm4993 = vcmp.lt.s32.totalorder %v4992, 0
        %v4994 = vsub.s32 0, %v4992
        %v4995 = vsel %vm4993, %v4994, %v4992
        %v4996 = vclz %v4995
        %v4997 = vsub.s32 %v4996, 2
        %vm4998 = vcmp.gt.s32.totalorder 0, %v4997
        %v4999 = vsel %vm4998, 0, %v4997
        %v5000 = vsub.s32 32, %v4999
        %v5001 = vshll.u32 %v4992, %v4999
        %v5002 = vshrl.u32 %v4984, %v5000
        %v5003 = vor.u32 %v5001, %v5002
        %v5004 = vsub.s32 4294967266, %v4999
        %v5005 = vadd.s32 %v5004, 127
        %v5006 = vshll.u32 %v5005, 23
        %v5007 = vor.u32 4788187, %v5006
        %v5008 = vand.u32 2147483647, %v5007
        %v5010 = vcvt.s32.f32 %v5003
        %v5011 = vmul.f32 %v5010, %v5008
        %v5012 = vxor.u32 %v5011, 2147483648
        %v5013 = vsel %vm4930, %v5012, %v5011
        %v5014 = vsub.s32 4, %v4990
        %v5015 = vsel %vm4930, %v5014, %v4990
        %v5016 = vsel %vm4929, %v279, %v5013
        %v5017 = vsel %vm4929, 0, %v5015
        %v5018 = vcosq.f32.pop %v5016
        %v5019 = vsinq.f32.pop %v5016
        %vm5020 = vweird.f32 %v279
        %v5021 = vadd.s32 %v5017, 3
        %v5022 = vand.u32 %v5021, 3
        %vm5023 = vcmp.lt.s32.totalorder %v5022, 2
        %vm5024 = vcmp.eq.s32.totalorder %v5022, 0
        %v5025 = vxor.u32 %v5019, 2147483648
        %v5026 = vsel %vm5024, %v5018, %v5025
        %vm5027 = vcmp.eq.s32.totalorder %v5022, 2
        %v5028 = vxor.u32 %v5018, 2147483648
        %v5029 = vsel %vm5027, %v5028, %v5019
        %v5030 = vsel %vm5023, %v5026, %v5029
        %v5031 = vsel %vm5020, nan, %v5030
        %v5032 = vand.u32 2147483647, %v280
        %vm5033 = vcmp.le.f32.partialorder %v5032, 0.7853982
        %vm5034 = vcmp.lt.s32.totalorder %v280, 0
        %v5035 = vand.u32 %v280, 2139095040
        %v5036 = vshrl.u32 %v5035, 23
        %v5037 = vsub.s32 %v5036, 127
        %v5038 = vand.u32 2147483647, %v280
        %v5039 = vand.u32 %v5038, 8388607
        %v5040 = vor.u32 %v5039, 8388608
        %v5041 = vsub.s32 0, %v5040
        %v5042 = vadd.s32 %v5037, 1
        %vm5043 = vcmp.gt.s32.totalorder %v5042, 0
        %v5044 = vsel %vm5043, %v5042, 0
        %v5045 = vshrl.u32 %v5044, 5
        %v5046 = vand.u32 %v5044, 31
        %v5047 = vsub.s32 32, %v5046
        %v5048 = vshrl.u32 683565275, %v5047
        %v5049 = vshll.u32 683565275, %v5046
        %v5050 = vshrl.u32 2475754826, %v5047
        %v5051 = vor.u32 %v5049, %v5050
        %v5052 = vshll.u32 2475754826, %v5046
        %v5053 = vshrl.u32 2131351028, %v5047
        %v5054 = vor.u32 %v5052, %v5053
        %v5055 = vshll.u32 2131351028, %v5046
        %v5056 = vshrl.u32 2102212464, %v5047
        %v5057 = vor.u32 %v5055, %v5056
        %v5058 = vshll.u32 2102212464, %v5046
        %v5059 = vshrl.u32 920167782, %v5047
        %v5060 = vor.u32 %v5058, %v5059
        %v5061 = vshll.u32 920167782, %v5046
        %v5062 = vshrl.u32 1326507024, %v5047
        %v5063 = vor.u32 %v5061, %v5062
        %vm5064 = vcmp.lt.s32.totalorder %v5045, 1
        %vm5065 = vcmp.lt.s32.totalorder %v5045, 2
        %vm5066 = vcmp.lt.s32.totalorder %v5045, 3
        %vm5067 = vcmp.lt.s32.totalorder %v5045, 4
        %v5068 = vsel %vm5064, %v5048, %v5051
        %v5069 = vsel %vm5067, %v5057, 2102212464
        %v5070 = vsel %vm5066, %v5054, %v5069
        %v5071 = vsel %vm5065, %v5068, %v5070
        %v5072 = vsel %vm5064, %v5051, %v5054
        %v5073 = vsel %vm5067, %v5060, 920167782
        %v5074 = vsel %vm5066, %v5057, %v5073
        %v5075 = vsel %vm5065, %v5072, %v5074
        %v5076 = vsel %vm5064, %v5054, %v5057
        %v5077 = vsel %vm5067, %v5063, 1326507024
        %v5078 = vsel %vm5066, %v5060, %v5077
        %v5079 = vsel %vm5065, %v5076, %v5078
        %v5080 = vshll.u32 %v5040, 8
        %v5081 = vmul.u32.u64.compose %v5080, %v5079
        %v5082 = vextract.low.u32 %v5081
        %v5083 = vextract.high.u32 %v5081
        %v5084 = vmul.u32.u64.compose %v5080, %v5075
        %v5085 = vextract.low.u32 %v5084
        %v5086 = vextract.high.u32 %v5084
        %v5087 = vmul.u32 %v5080, %v5071
        %v5088 = vadd.s32 %v5083, %v5085
        %vm5089 = vc.u32 %v5083, %v5085
        %v5090 = vadd.s32 %v5086, 1
        %v5091 = vsel %vm5089, %v5090, %v5086
        %v5092 = vadd.s32 %v5087, %v5091
        %v5093 = vadd.s32 %v5092, 536870912
        %v5094 = vshrl.u32 %v5093, 30
        %v5095 = vshll.u32 %v5094, 30
        %v5096 = vsub.s32 %v5092, %v5095
        %vm5097 = vcmp.lt.s32.totalorder %v5096, 0
        %v5098 = vsub.s32 0, %v5096
        %v5099 = vsel %vm5097, %v5098, %v5096
        %v5100 = vclz %v5099
        %v5101 = vsub.s32 %v5100, 2
        %vm5102 = vcmp.gt.s32.totalorder 0, %v5101
        %v5103 = vsel %vm5102, 0, %v5101
        %v5104 = vsub.s32 32, %v5103
        %v5105 = vshll.u32 %v5096, %v5103
        %v5106 = vshrl.u32 %v5088, %v5104
        %v5107 = vor.u32 %v5105, %v5106
        %v5108 = vsub.s32 4294967266, %v5103
        %v5109 = vadd.s32 %v5108, 127
        %v5110 = vshll.u32 %v5109, 23
        %v5111 = vor.u32 4788187, %v5110
        %v5112 = vand.u32 2147483647, %v5111
        %v5114 = vcvt.s32.f32 %v5107
        %v5115 = vmul.f32 %v5114, %v5112
        %v5116 = vxor.u32 %v5115, 2147483648
        %v5117 = vsel %vm5034, %v5116, %v5115
        %v5118 = vsub.s32 4, %v5094
        %v5119 = vsel %vm5034, %v5118, %v5094
        %v5120 = vsel %vm5033, %v280, %v5117
        %v5121 = vsel %vm5033, 0, %v5119
        %v5122 = vcosq.f32.pop %v5120
        %v5123 = vsinq.f32.pop %v5120
        %vm5124 = vweird.f32 %v280
        %v5125 = vadd.s32 %v5121, 3
        %v5126 = vand.u32 %v5125, 3
        %vm5127 = vcmp.lt.s32.totalorder %v5126, 2
        %vm5128 = vcmp.eq.s32.totalorder %v5126, 0
        %v5129 = vxor.u32 %v5123, 2147483648
        %v5130 = vsel %vm5128, %v5122, %v5129
        %vm5131 = vcmp.eq.s32.totalorder %v5126, 2
        %v5132 = vxor.u32 %v5122, 2147483648
        %v5133 = vsel %vm5131, %v5132, %v5123
        %v5134 = vsel %vm5127, %v5130, %v5133
        %v5135 = vsel %vm5124, nan, %v5134
        %v5136 = vand.u32 2147483647, %v281
        %vm5137 = vcmp.le.f32.partialorder %v5136, 0.7853982
        %vm5138 = vcmp.lt.s32.totalorder %v281, 0
        %v5139 = vand.u32 %v281, 2139095040
        %v5140 = vshrl.u32 %v5139, 23
        %v5141 = vsub.s32 %v5140, 127
        %v5142 = vand.u32 2147483647, %v281
        %v5143 = vand.u32 %v5142, 8388607
        %v5144 = vor.u32 %v5143, 8388608
        %v5145 = vsub.s32 0, %v5144
        %v5146 = vadd.s32 %v5141, 1
        %vm5147 = vcmp.gt.s32.totalorder %v5146, 0
        %v5148 = vsel %vm5147, %v5146, 0
        %v5149 = vshrl.u32 %v5148, 5
        %v5150 = vand.u32 %v5148, 31
        %v5151 = vsub.s32 32, %v5150
        %v5152 = vshrl.u32 683565275, %v5151
        %v5153 = vshll.u32 683565275, %v5150
        %v5154 = vshrl.u32 2475754826, %v5151
        %v5155 = vor.u32 %v5153, %v5154
        %v5156 = vshll.u32 2475754826, %v5150
        %v5157 = vshrl.u32 2131351028, %v5151
        %v5158 = vor.u32 %v5156, %v5157
        %v5159 = vshll.u32 2131351028, %v5150
        %v5160 = vshrl.u32 2102212464, %v5151
        %v5161 = vor.u32 %v5159, %v5160
        %v5162 = vshll.u32 2102212464, %v5150
        %v5163 = vshrl.u32 920167782, %v5151
        %v5164 = vor.u32 %v5162, %v5163
        %v5165 = vshll.u32 920167782, %v5150
        %v5166 = vshrl.u32 1326507024, %v5151
        %v5167 = vor.u32 %v5165, %v5166
        %vm5168 = vcmp.lt.s32.totalorder %v5149, 1
        %vm5169 = vcmp.lt.s32.totalorder %v5149, 2
        %vm5170 = vcmp.lt.s32.totalorder %v5149, 3
        %vm5171 = vcmp.lt.s32.totalorder %v5149, 4
        %v5172 = vsel %vm5168, %v5152, %v5155
        %v5173 = vsel %vm5171, %v5161, 2102212464
        %v5174 = vsel %vm5170, %v5158, %v5173
        %v5175 = vsel %vm5169, %v5172, %v5174
        %v5176 = vsel %vm5168, %v5155, %v5158
        %v5177 = vsel %vm5171, %v5164, 920167782
        %v5178 = vsel %vm5170, %v5161, %v5177
        %v5179 = vsel %vm5169, %v5176, %v5178
        %v5180 = vsel %vm5168, %v5158, %v5161
        %v5181 = vsel %vm5171, %v5167, 1326507024
        %v5182 = vsel %vm5170, %v5164, %v5181
        %v5183 = vsel %vm5169, %v5180, %v5182
        %v5184 = vshll.u32 %v5144, 8
        %v5185 = vmul.u32.u64.compose %v5184, %v5183
        %v5186 = vextract.low.u32 %v5185
        %v5187 = vextract.high.u32 %v5185
        %v5188 = vmul.u32.u64.compose %v5184, %v5179
        %v5189 = vextract.low.u32 %v5188
        %v5190 = vextract.high.u32 %v5188
        %v5191 = vmul.u32 %v5184, %v5175
        %v5192 = vadd.s32 %v5187, %v5189
        %vm5193 = vc.u32 %v5187, %v5189
        %v5194 = vadd.s32 %v5190, 1
        %v5195 = vsel %vm5193, %v5194, %v5190
        %v5196 = vadd.s32 %v5191, %v5195
        %v5197 = vadd.s32 %v5196, 536870912
        %v5198 = vshrl.u32 %v5197, 30
        %v5199 = vshll.u32 %v5198, 30
        %v5200 = vsub.s32 %v5196, %v5199
        %vm5201 = vcmp.lt.s32.totalorder %v5200, 0
        %v5202 = vsub.s32 0, %v5200
        %v5203 = vsel %vm5201, %v5202, %v5200
        %v5204 = vclz %v5203
        %v5205 = vsub.s32 %v5204, 2
        %vm5206 = vcmp.gt.s32.totalorder 0, %v5205
        %v5207 = vsel %vm5206, 0, %v5205
        %v5208 = vsub.s32 32, %v5207
        %v5209 = vshll.u32 %v5200, %v5207
        %v5210 = vshrl.u32 %v5192, %v5208
        %v5211 = vor.u32 %v5209, %v5210
        %v5212 = vsub.s32 4294967266, %v5207
        %v5213 = vadd.s32 %v5212, 127
        %v5214 = vshll.u32 %v5213, 23
        %v5215 = vor.u32 4788187, %v5214
        %v5216 = vand.u32 2147483647, %v5215
        %v5218 = vcvt.s32.f32 %v5211
        %v5219 = vmul.f32 %v5218, %v5216
        %v5220 = vxor.u32 %v5219, 2147483648
        %v5221 = vsel %vm5138, %v5220, %v5219
        %v5222 = vsub.s32 4, %v5198
        %v5223 = vsel %vm5138, %v5222, %v5198
        %v5224 = vsel %vm5137, %v281, %v5221
        %v5225 = vsel %vm5137, 0, %v5223
        %v5226 = vcosq.f32.pop %v5224
        %v5227 = vsinq.f32.pop %v5224
        %vm5228 = vweird.f32 %v281
        %v5229 = vadd.s32 %v5225, 3
        %v5230 = vand.u32 %v5229, 3
        %vm5231 = vcmp.lt.s32.totalorder %v5230, 2
        %vm5232 = vcmp.eq.s32.totalorder %v5230, 0
        %v5233 = vxor.u32 %v5227, 2147483648
        %v5234 = vsel %vm5232, %v5226, %v5233
        %vm5235 = vcmp.eq.s32.totalorder %v5230, 2
        %v5236 = vxor.u32 %v5226, 2147483648
        %v5237 = vsel %vm5235, %v5236, %v5227
        %v5238 = vsel %vm5231, %v5234, %v5237
        %v5239 = vsel %vm5228, nan, %v5238
        %v5240 = vand.u32 2147483647, %v282
        %vm5241 = vcmp.le.f32.partialorder %v5240, 0.7853982
        %vm5242 = vcmp.lt.s32.totalorder %v282, 0
        %v5243 = vand.u32 %v282, 2139095040
        %v5244 = vshrl.u32 %v5243, 23
        %v5245 = vsub.s32 %v5244, 127
        %v5246 = vand.u32 2147483647, %v282
        %v5247 = vand.u32 %v5246, 8388607
        %v5248 = vor.u32 %v5247, 8388608
        %v5249 = vsub.s32 0, %v5248
        %v5250 = vadd.s32 %v5245, 1
        %vm5251 = vcmp.gt.s32.totalorder %v5250, 0
        %v5252 = vsel %vm5251, %v5250, 0
        %v5253 = vshrl.u32 %v5252, 5
        %v5254 = vand.u32 %v5252, 31
        %v5255 = vsub.s32 32, %v5254
        %v5256 = vshrl.u32 683565275, %v5255
        %v5257 = vshll.u32 683565275, %v5254
        %v5258 = vshrl.u32 2475754826, %v5255
        %v5259 = vor.u32 %v5257, %v5258
        %v5260 = vshll.u32 2475754826, %v5254
        %v5261 = vshrl.u32 2131351028, %v5255
        %v5262 = vor.u32 %v5260, %v5261
        %v5263 = vshll.u32 2131351028, %v5254
        %v5264 = vshrl.u32 2102212464, %v5255
        %v5265 = vor.u32 %v5263, %v5264
        %v5266 = vshll.u32 2102212464, %v5254
        %v5267 = vshrl.u32 920167782, %v5255
        %v5268 = vor.u32 %v5266, %v5267
        %v5269 = vshll.u32 920167782, %v5254
        %v5270 = vshrl.u32 1326507024, %v5255
        %v5271 = vor.u32 %v5269, %v5270
        %vm5272 = vcmp.lt.s32.totalorder %v5253, 1
        %vm5273 = vcmp.lt.s32.totalorder %v5253, 2
        %vm5274 = vcmp.lt.s32.totalorder %v5253, 3
        %vm5275 = vcmp.lt.s32.totalorder %v5253, 4
        %v5276 = vsel %vm5272, %v5256, %v5259
        %v5277 = vsel %vm5275, %v5265, 2102212464
        %v5278 = vsel %vm5274, %v5262, %v5277
        %v5279 = vsel %vm5273, %v5276, %v5278
        %v5280 = vsel %vm5272, %v5259, %v5262
        %v5281 = vsel %vm5275, %v5268, 920167782
        %v5282 = vsel %vm5274, %v5265, %v5281
        %v5283 = vsel %vm5273, %v5280, %v5282
        %v5284 = vsel %vm5272, %v5262, %v5265
        %v5285 = vsel %vm5275, %v5271, 1326507024
        %v5286 = vsel %vm5274, %v5268, %v5285
        %v5287 = vsel %vm5273, %v5284, %v5286
        %v5288 = vshll.u32 %v5248, 8
        %v5289 = vmul.u32.u64.compose %v5288, %v5287
        %v5290 = vextract.low.u32 %v5289
        %v5291 = vextract.high.u32 %v5289
        %v5292 = vmul.u32.u64.compose %v5288, %v5283
        %v5293 = vextract.low.u32 %v5292
        %v5294 = vextract.high.u32 %v5292
        %v5295 = vmul.u32 %v5288, %v5279
        %v5296 = vadd.s32 %v5291, %v5293
        %vm5297 = vc.u32 %v5291, %v5293
        %v5298 = vadd.s32 %v5294, 1
        %v5299 = vsel %vm5297, %v5298, %v5294
        %v5300 = vadd.s32 %v5295, %v5299
        %v5301 = vadd.s32 %v5300, 536870912
        %v5302 = vshrl.u32 %v5301, 30
        %v5303 = vshll.u32 %v5302, 30
        %v5304 = vsub.s32 %v5300, %v5303
        %vm5305 = vcmp.lt.s32.totalorder %v5304, 0
        %v5306 = vsub.s32 0, %v5304
        %v5307 = vsel %vm5305, %v5306, %v5304
        %v5308 = vclz %v5307
        %v5309 = vsub.s32 %v5308, 2
        %vm5310 = vcmp.gt.s32.totalorder 0, %v5309
        %v5311 = vsel %vm5310, 0, %v5309
        %v5312 = vsub.s32 32, %v5311
        %v5313 = vshll.u32 %v5304, %v5311
        %v5314 = vshrl.u32 %v5296, %v5312
        %v5315 = vor.u32 %v5313, %v5314
        %v5316 = vsub.s32 4294967266, %v5311
        %v5317 = vadd.s32 %v5316, 127
        %v5318 = vshll.u32 %v5317, 23
        %v5319 = vor.u32 4788187, %v5318
        %v5320 = vand.u32 2147483647, %v5319
        %v5322 = vcvt.s32.f32 %v5315
        %v5323 = vmul.f32 %v5322, %v5320
        %v5324 = vxor.u32 %v5323, 2147483648
        %v5325 = vsel %vm5242, %v5324, %v5323
        %v5326 = vsub.s32 4, %v5302
        %v5327 = vsel %vm5242, %v5326, %v5302
        %v5328 = vsel %vm5241, %v282, %v5325
        %v5329 = vsel %vm5241, 0, %v5327
        %v5330 = vcosq.f32.pop %v5328
        %v5331 = vsinq.f32.pop %v5328
        %vm5332 = vweird.f32 %v282
        %v5333 = vadd.s32 %v5329, 3
        %v5334 = vand.u32 %v5333, 3
        %vm5335 = vcmp.lt.s32.totalorder %v5334, 2
        %vm5336 = vcmp.eq.s32.totalorder %v5334, 0
        %v5337 = vxor.u32 %v5331, 2147483648
        %v5338 = vsel %vm5336, %v5330, %v5337
        %vm5339 = vcmp.eq.s32.totalorder %v5334, 2
        %v5340 = vxor.u32 %v5330, 2147483648
        %v5341 = vsel %vm5339, %v5340, %v5331
        %v5342 = vsel %vm5335, %v5338, %v5341
        %v5343 = vsel %vm5332, nan, %v5342
        %v5344 = vand.u32 2147483647, %v283
        %vm5345 = vcmp.le.f32.partialorder %v5344, 0.7853982
        %vm5346 = vcmp.lt.s32.totalorder %v283, 0
        %v5347 = vand.u32 %v283, 2139095040
        %v5348 = vshrl.u32 %v5347, 23
        %v5349 = vsub.s32 %v5348, 127
        %v5350 = vand.u32 2147483647, %v283
        %v5351 = vand.u32 %v5350, 8388607
        %v5352 = vor.u32 %v5351, 8388608
        %v5353 = vsub.s32 0, %v5352
        %v5354 = vadd.s32 %v5349, 1
        %vm5355 = vcmp.gt.s32.totalorder %v5354, 0
        %v5356 = vsel %vm5355, %v5354, 0
        %v5357 = vshrl.u32 %v5356, 5
        %v5358 = vand.u32 %v5356, 31
        %v5359 = vsub.s32 32, %v5358
        %v5360 = vshrl.u32 683565275, %v5359
        %v5361 = vshll.u32 683565275, %v5358
        %v5362 = vshrl.u32 2475754826, %v5359
        %v5363 = vor.u32 %v5361, %v5362
        %v5364 = vshll.u32 2475754826, %v5358
        %v5365 = vshrl.u32 2131351028, %v5359
        %v5366 = vor.u32 %v5364, %v5365
        %v5367 = vshll.u32 2131351028, %v5358
        %v5368 = vshrl.u32 2102212464, %v5359
        %v5369 = vor.u32 %v5367, %v5368
        %v5370 = vshll.u32 2102212464, %v5358
        %v5371 = vshrl.u32 920167782, %v5359
        %v5372 = vor.u32 %v5370, %v5371
        %v5373 = vshll.u32 920167782, %v5358
        %v5374 = vshrl.u32 1326507024, %v5359
        %v5375 = vor.u32 %v5373, %v5374
        %vm5376 = vcmp.lt.s32.totalorder %v5357, 1
        %vm5377 = vcmp.lt.s32.totalorder %v5357, 2
        %vm5378 = vcmp.lt.s32.totalorder %v5357, 3
        %vm5379 = vcmp.lt.s32.totalorder %v5357, 4
        %v5380 = vsel %vm5376, %v5360, %v5363
        %v5381 = vsel %vm5379, %v5369, 2102212464
        %v5382 = vsel %vm5378, %v5366, %v5381
        %v5383 = vsel %vm5377, %v5380, %v5382
        %v5384 = vsel %vm5376, %v5363, %v5366
        %v5385 = vsel %vm5379, %v5372, 920167782
        %v5386 = vsel %vm5378, %v5369, %v5385
        %v5387 = vsel %vm5377, %v5384, %v5386
        %v5388 = vsel %vm5376, %v5366, %v5369
        %v5389 = vsel %vm5379, %v5375, 1326507024
        %v5390 = vsel %vm5378, %v5372, %v5389
        %v5391 = vsel %vm5377, %v5388, %v5390
        %v5392 = vshll.u32 %v5352, 8
        %v5393 = vmul.u32.u64.compose %v5392, %v5391
        %v5394 = vextract.low.u32 %v5393
        %v5395 = vextract.high.u32 %v5393
        %v5396 = vmul.u32.u64.compose %v5392, %v5387
        %v5397 = vextract.low.u32 %v5396
        %v5398 = vextract.high.u32 %v5396
        %v5399 = vmul.u32 %v5392, %v5383
        %v5400 = vadd.s32 %v5395, %v5397
        %vm5401 = vc.u32 %v5395, %v5397
        %v5402 = vadd.s32 %v5398, 1
        %v5403 = vsel %vm5401, %v5402, %v5398
        %v5404 = vadd.s32 %v5399, %v5403
        %v5405 = vadd.s32 %v5404, 536870912
        %v5406 = vshrl.u32 %v5405, 30
        %v5407 = vshll.u32 %v5406, 30
        %v5408 = vsub.s32 %v5404, %v5407
        %vm5409 = vcmp.lt.s32.totalorder %v5408, 0
        %v5410 = vsub.s32 0, %v5408
        %v5411 = vsel %vm5409, %v5410, %v5408
        %v5412 = vclz %v5411
        %v5413 = vsub.s32 %v5412, 2
        %vm5414 = vcmp.gt.s32.totalorder 0, %v5413
        %v5415 = vsel %vm5414, 0, %v5413
        %v5416 = vsub.s32 32, %v5415
        %v5417 = vshll.u32 %v5408, %v5415
        %v5418 = vshrl.u32 %v5400, %v5416
        %v5419 = vor.u32 %v5417, %v5418
        %v5420 = vsub.s32 4294967266, %v5415
        %v5421 = vadd.s32 %v5420, 127
        %v5422 = vshll.u32 %v5421, 23
        %v5423 = vor.u32 4788187, %v5422
        %v5424 = vand.u32 2147483647, %v5423
        %v5426 = vcvt.s32.f32 %v5419
        %v5427 = vmul.f32 %v5426, %v5424
        %v5428 = vxor.u32 %v5427, 2147483648
        %v5429 = vsel %vm5346, %v5428, %v5427
        %v5430 = vsub.s32 4, %v5406
        %v5431 = vsel %vm5346, %v5430, %v5406
        %v5432 = vsel %vm5345, %v283, %v5429
        %v5433 = vsel %vm5345, 0, %v5431
        %v5434 = vcosq.f32.pop %v5432
        %v5435 = vsinq.f32.pop %v5432
        %vm5436 = vweird.f32 %v283
        %v5437 = vadd.s32 %v5433, 3
        %v5438 = vand.u32 %v5437, 3
        %vm5439 = vcmp.lt.s32.totalorder %v5438, 2
        %vm5440 = vcmp.eq.s32.totalorder %v5438, 0
        %v5441 = vxor.u32 %v5435, 2147483648
        %v5442 = vsel %vm5440, %v5434, %v5441
        %vm5443 = vcmp.eq.s32.totalorder %v5438, 2
        %v5444 = vxor.u32 %v5434, 2147483648
        %v5445 = vsel %vm5443, %v5444, %v5435
        %v5446 = vsel %vm5439, %v5442, %v5445
        %v5447 = vsel %vm5436, nan, %v5446
        %v5448 = vand.u32 2147483647, %v284
        %vm5449 = vcmp.le.f32.partialorder %v5448, 0.7853982
        %vm5450 = vcmp.lt.s32.totalorder %v284, 0
        %v5451 = vand.u32 %v284, 2139095040
        %v5452 = vshrl.u32 %v5451, 23
        %v5453 = vsub.s32 %v5452, 127
        %v5454 = vand.u32 2147483647, %v284
        %v5455 = vand.u32 %v5454, 8388607
        %v5456 = vor.u32 %v5455, 8388608
        %v5457 = vsub.s32 0, %v5456
        %v5458 = vadd.s32 %v5453, 1
        %vm5459 = vcmp.gt.s32.totalorder %v5458, 0
        %v5460 = vsel %vm5459, %v5458, 0
        %v5461 = vshrl.u32 %v5460, 5
        %v5462 = vand.u32 %v5460, 31
        %v5463 = vsub.s32 32, %v5462
        %v5464 = vshrl.u32 683565275, %v5463
        %v5465 = vshll.u32 683565275, %v5462
        %v5466 = vshrl.u32 2475754826, %v5463
        %v5467 = vor.u32 %v5465, %v5466
        %v5468 = vshll.u32 2475754826, %v5462
        %v5469 = vshrl.u32 2131351028, %v5463
        %v5470 = vor.u32 %v5468, %v5469
        %v5471 = vshll.u32 2131351028, %v5462
        %v5472 = vshrl.u32 2102212464, %v5463
        %v5473 = vor.u32 %v5471, %v5472
        %v5474 = vshll.u32 2102212464, %v5462
        %v5475 = vshrl.u32 920167782, %v5463
        %v5476 = vor.u32 %v5474, %v5475
        %v5477 = vshll.u32 920167782, %v5462
        %v5478 = vshrl.u32 1326507024, %v5463
        %v5479 = vor.u32 %v5477, %v5478
        %vm5480 = vcmp.lt.s32.totalorder %v5461, 1
        %vm5481 = vcmp.lt.s32.totalorder %v5461, 2
        %vm5482 = vcmp.lt.s32.totalorder %v5461, 3
        %vm5483 = vcmp.lt.s32.totalorder %v5461, 4
        %v5484 = vsel %vm5480, %v5464, %v5467
        %v5485 = vsel %vm5483, %v5473, 2102212464
        %v5486 = vsel %vm5482, %v5470, %v5485
        %v5487 = vsel %vm5481, %v5484, %v5486
        %v5488 = vsel %vm5480, %v5467, %v5470
        %v5489 = vsel %vm5483, %v5476, 920167782
        %v5490 = vsel %vm5482, %v5473, %v5489
        %v5491 = vsel %vm5481, %v5488, %v5490
        %v5492 = vsel %vm5480, %v5470, %v5473
        %v5493 = vsel %vm5483, %v5479, 1326507024
        %v5494 = vsel %vm5482, %v5476, %v5493
        %v5495 = vsel %vm5481, %v5492, %v5494
        %v5496 = vshll.u32 %v5456, 8
        %v5497 = vmul.u32.u64.compose %v5496, %v5495
        %v5498 = vextract.low.u32 %v5497
        %v5499 = vextract.high.u32 %v5497
        %v5500 = vmul.u32.u64.compose %v5496, %v5491
        %v5501 = vextract.low.u32 %v5500
        %v5502 = vextract.high.u32 %v5500
        %v5503 = vmul.u32 %v5496, %v5487
        %v5504 = vadd.s32 %v5499, %v5501
        %vm5505 = vc.u32 %v5499, %v5501
        %v5506 = vadd.s32 %v5502, 1
        %v5507 = vsel %vm5505, %v5506, %v5502
        %v5508 = vadd.s32 %v5503, %v5507
        %v5509 = vadd.s32 %v5508, 536870912
        %v5510 = vshrl.u32 %v5509, 30
        %v5511 = vshll.u32 %v5510, 30
        %v5512 = vsub.s32 %v5508, %v5511
        %vm5513 = vcmp.lt.s32.totalorder %v5512, 0
        %v5514 = vsub.s32 0, %v5512
        %v5515 = vsel %vm5513, %v5514, %v5512
        %v5516 = vclz %v5515
        %v5517 = vsub.s32 %v5516, 2
        %vm5518 = vcmp.gt.s32.totalorder 0, %v5517
        %v5519 = vsel %vm5518, 0, %v5517
        %v5520 = vsub.s32 32, %v5519
        %v5521 = vshll.u32 %v5512, %v5519
        %v5522 = vshrl.u32 %v5504, %v5520
        %v5523 = vor.u32 %v5521, %v5522
        %v5524 = vsub.s32 4294967266, %v5519
        %v5525 = vadd.s32 %v5524, 127
        %v5526 = vshll.u32 %v5525, 23
        %v5527 = vor.u32 4788187, %v5526
        %v5528 = vand.u32 2147483647, %v5527
        %v5530 = vcvt.s32.f32 %v5523
        %v5531 = vmul.f32 %v5530, %v5528
        %v5532 = vxor.u32 %v5531, 2147483648
        %v5533 = vsel %vm5450, %v5532, %v5531
        %v5534 = vsub.s32 4, %v5510
        %v5535 = vsel %vm5450, %v5534, %v5510
        %v5536 = vsel %vm5449, %v284, %v5533
        %v5537 = vsel %vm5449, 0, %v5535
        %v5538 = vcosq.f32.pop %v5536
        %v5539 = vsinq.f32.pop %v5536
        %vm5540 = vweird.f32 %v284
        %v5541 = vadd.s32 %v5537, 3
        %v5542 = vand.u32 %v5541, 3
        %vm5543 = vcmp.lt.s32.totalorder %v5542, 2
        %vm5544 = vcmp.eq.s32.totalorder %v5542, 0
        %v5545 = vxor.u32 %v5539, 2147483648
        %v5546 = vsel %vm5544, %v5538, %v5545
        %vm5547 = vcmp.eq.s32.totalorder %v5542, 2
        %v5548 = vxor.u32 %v5538, 2147483648
        %v5549 = vsel %vm5547, %v5548, %v5539
        %v5550 = vsel %vm5543, %v5546, %v5549
        %v5551 = vsel %vm5540, nan, %v5550
        %v5552 = vand.u32 2147483647, %v285
        %vm5553 = vcmp.le.f32.partialorder %v5552, 0.7853982
        %vm5554 = vcmp.lt.s32.totalorder %v285, 0
        %v5555 = vand.u32 %v285, 2139095040
        %v5556 = vshrl.u32 %v5555, 23
        %v5557 = vsub.s32 %v5556, 127
        %v5558 = vand.u32 2147483647, %v285
        %v5559 = vand.u32 %v5558, 8388607
        %v5560 = vor.u32 %v5559, 8388608
        %v5561 = vsub.s32 0, %v5560
        %v5562 = vadd.s32 %v5557, 1
        %vm5563 = vcmp.gt.s32.totalorder %v5562, 0
        %v5564 = vsel %vm5563, %v5562, 0
        %v5565 = vshrl.u32 %v5564, 5
        %v5566 = vand.u32 %v5564, 31
        %v5567 = vsub.s32 32, %v5566
        %v5568 = vshrl.u32 683565275, %v5567
        %v5569 = vshll.u32 683565275, %v5566
        %v5570 = vshrl.u32 2475754826, %v5567
        %v5571 = vor.u32 %v5569, %v5570
        %v5572 = vshll.u32 2475754826, %v5566
        %v5573 = vshrl.u32 2131351028, %v5567
        %v5574 = vor.u32 %v5572, %v5573
        %v5575 = vshll.u32 2131351028, %v5566
        %v5576 = vshrl.u32 2102212464, %v5567
        %v5577 = vor.u32 %v5575, %v5576
        %v5578 = vshll.u32 2102212464, %v5566
        %v5579 = vshrl.u32 920167782, %v5567
        %v5580 = vor.u32 %v5578, %v5579
        %v5581 = vshll.u32 920167782, %v5566
        %v5582 = vshrl.u32 1326507024, %v5567
        %v5583 = vor.u32 %v5581, %v5582
        %vm5584 = vcmp.lt.s32.totalorder %v5565, 1
        %vm5585 = vcmp.lt.s32.totalorder %v5565, 2
        %vm5586 = vcmp.lt.s32.totalorder %v5565, 3
        %vm5587 = vcmp.lt.s32.totalorder %v5565, 4
        %v5588 = vsel %vm5584, %v5568, %v5571
        %v5589 = vsel %vm5587, %v5577, 2102212464
        %v5590 = vsel %vm5586, %v5574, %v5589
        %v5591 = vsel %vm5585, %v5588, %v5590
        %v5592 = vsel %vm5584, %v5571, %v5574
        %v5593 = vsel %vm5587, %v5580, 920167782
        %v5594 = vsel %vm5586, %v5577, %v5593
        %v5595 = vsel %vm5585, %v5592, %v5594
        %v5596 = vsel %vm5584, %v5574, %v5577
        %v5597 = vsel %vm5587, %v5583, 1326507024
        %v5598 = vsel %vm5586, %v5580, %v5597
        %v5599 = vsel %vm5585, %v5596, %v5598
        %v5600 = vshll.u32 %v5560, 8
        %v5601 = vmul.u32.u64.compose %v5600, %v5599
        %v5602 = vextract.low.u32 %v5601
        %v5603 = vextract.high.u32 %v5601
        %v5604 = vmul.u32.u64.compose %v5600, %v5595
        %v5605 = vextract.low.u32 %v5604
        %v5606 = vextract.high.u32 %v5604
        %v5607 = vmul.u32 %v5600, %v5591
        %v5608 = vadd.s32 %v5603, %v5605
        %vm5609 = vc.u32 %v5603, %v5605
        %v5610 = vadd.s32 %v5606, 1
        %v5611 = vsel %vm5609, %v5610, %v5606
        %v5612 = vadd.s32 %v5607, %v5611
        %v5613 = vadd.s32 %v5612, 536870912
        %v5614 = vshrl.u32 %v5613, 30
        %v5615 = vshll.u32 %v5614, 30
        %v5616 = vsub.s32 %v5612, %v5615
        %vm5617 = vcmp.lt.s32.totalorder %v5616, 0
        %v5618 = vsub.s32 0, %v5616
        %v5619 = vsel %vm5617, %v5618, %v5616
        %v5620 = vclz %v5619
        %v5621 = vsub.s32 %v5620, 2
        %vm5622 = vcmp.gt.s32.totalorder 0, %v5621
        %v5623 = vsel %vm5622, 0, %v5621
        %v5624 = vsub.s32 32, %v5623
        %v5625 = vshll.u32 %v5616, %v5623
        %v5626 = vshrl.u32 %v5608, %v5624
        %v5627 = vor.u32 %v5625, %v5626
        %v5628 = vsub.s32 4294967266, %v5623
        %v5629 = vadd.s32 %v5628, 127
        %v5630 = vshll.u32 %v5629, 23
        %v5631 = vor.u32 4788187, %v5630
        %v5632 = vand.u32 2147483647, %v5631
        %v5634 = vcvt.s32.f32 %v5627
        %v5635 = vmul.f32 %v5634, %v5632
        %v5636 = vxor.u32 %v5635, 2147483648
        %v5637 = vsel %vm5554, %v5636, %v5635
        %v5638 = vsub.s32 4, %v5614
        %v5639 = vsel %vm5554, %v5638, %v5614
        %v5640 = vsel %vm5553, %v285, %v5637
        %v5641 = vsel %vm5553, 0, %v5639
        %v5642 = vcosq.f32.pop %v5640
        %v5643 = vsinq.f32.pop %v5640
        %vm5644 = vweird.f32 %v285
        %v5645 = vadd.s32 %v5641, 3
        %v5646 = vand.u32 %v5645, 3
        %vm5647 = vcmp.lt.s32.totalorder %v5646, 2
        %vm5648 = vcmp.eq.s32.totalorder %v5646, 0
        %v5649 = vxor.u32 %v5643, 2147483648
        %v5650 = vsel %vm5648, %v5642, %v5649
        %vm5651 = vcmp.eq.s32.totalorder %v5646, 2
        %v5652 = vxor.u32 %v5642, 2147483648
        %v5653 = vsel %vm5651, %v5652, %v5643
        %v5654 = vsel %vm5647, %v5650, %v5653
        %v5655 = vsel %vm5644, nan, %v5654
        %v5656 = vand.u32 2147483647, %v286
        %vm5657 = vcmp.le.f32.partialorder %v5656, 0.7853982
        %vm5658 = vcmp.lt.s32.totalorder %v286, 0
        %v5659 = vand.u32 %v286, 2139095040
        %v5660 = vshrl.u32 %v5659, 23
        %v5661 = vsub.s32 %v5660, 127
        %v5662 = vand.u32 2147483647, %v286
        %v5663 = vand.u32 %v5662, 8388607
        %v5664 = vor.u32 %v5663, 8388608
        %v5665 = vsub.s32 0, %v5664
        %v5666 = vadd.s32 %v5661, 1
        %vm5667 = vcmp.gt.s32.totalorder %v5666, 0
        %v5668 = vsel %vm5667, %v5666, 0
        %v5669 = vshrl.u32 %v5668, 5
        %v5670 = vand.u32 %v5668, 31
        %v5671 = vsub.s32 32, %v5670
        %v5672 = vshrl.u32 683565275, %v5671
        %v5673 = vshll.u32 683565275, %v5670
        %v5674 = vshrl.u32 2475754826, %v5671
        %v5675 = vor.u32 %v5673, %v5674
        %v5676 = vshll.u32 2475754826, %v5670
        %v5677 = vshrl.u32 2131351028, %v5671
        %v5678 = vor.u32 %v5676, %v5677
        %v5679 = vshll.u32 2131351028, %v5670
        %v5680 = vshrl.u32 2102212464, %v5671
        %v5681 = vor.u32 %v5679, %v5680
        %v5682 = vshll.u32 2102212464, %v5670
        %v5683 = vshrl.u32 920167782, %v5671
        %v5684 = vor.u32 %v5682, %v5683
        %v5685 = vshll.u32 920167782, %v5670
        %v5686 = vshrl.u32 1326507024, %v5671
        %v5687 = vor.u32 %v5685, %v5686
        %vm5688 = vcmp.lt.s32.totalorder %v5669, 1
        %vm5689 = vcmp.lt.s32.totalorder %v5669, 2
        %vm5690 = vcmp.lt.s32.totalorder %v5669, 3
        %vm5691 = vcmp.lt.s32.totalorder %v5669, 4
        %v5692 = vsel %vm5688, %v5672, %v5675
        %v5693 = vsel %vm5691, %v5681, 2102212464
        %v5694 = vsel %vm5690, %v5678, %v5693
        %v5695 = vsel %vm5689, %v5692, %v5694
        %v5696 = vsel %vm5688, %v5675, %v5678
        %v5697 = vsel %vm5691, %v5684, 920167782
        %v5698 = vsel %vm5690, %v5681, %v5697
        %v5699 = vsel %vm5689, %v5696, %v5698
        %v5700 = vsel %vm5688, %v5678, %v5681
        %v5701 = vsel %vm5691, %v5687, 1326507024
        %v5702 = vsel %vm5690, %v5684, %v5701
        %v5703 = vsel %vm5689, %v5700, %v5702
        %v5704 = vshll.u32 %v5664, 8
        %v5705 = vmul.u32.u64.compose %v5704, %v5703
        %v5706 = vextract.low.u32 %v5705
        %v5707 = vextract.high.u32 %v5705
        %v5708 = vmul.u32.u64.compose %v5704, %v5699
        %v5709 = vextract.low.u32 %v5708
        %v5710 = vextract.high.u32 %v5708
        %v5711 = vmul.u32 %v5704, %v5695
        %v5712 = vadd.s32 %v5707, %v5709
        %vm5713 = vc.u32 %v5707, %v5709
        %v5714 = vadd.s32 %v5710, 1
        %v5715 = vsel %vm5713, %v5714, %v5710
        %v5716 = vadd.s32 %v5711, %v5715
        %v5717 = vadd.s32 %v5716, 536870912
        %v5718 = vshrl.u32 %v5717, 30
        %v5719 = vshll.u32 %v5718, 30
        %v5720 = vsub.s32 %v5716, %v5719
        %vm5721 = vcmp.lt.s32.totalorder %v5720, 0
        %v5722 = vsub.s32 0, %v5720
        %v5723 = vsel %vm5721, %v5722, %v5720
        %v5724 = vclz %v5723
        %v5725 = vsub.s32 %v5724, 2
        %vm5726 = vcmp.gt.s32.totalorder 0, %v5725
        %v5727 = vsel %vm5726, 0, %v5725
        %v5728 = vsub.s32 32, %v5727
        %v5729 = vshll.u32 %v5720, %v5727
        %v5730 = vshrl.u32 %v5712, %v5728
        %v5731 = vor.u32 %v5729, %v5730
        %v5732 = vsub.s32 4294967266, %v5727
        %v5733 = vadd.s32 %v5732, 127
        %v5734 = vshll.u32 %v5733, 23
        %v5735 = vor.u32 4788187, %v5734
        %v5736 = vand.u32 2147483647, %v5735
        %v5738 = vcvt.s32.f32 %v5731
        %v5739 = vmul.f32 %v5738, %v5736
        %v5740 = vxor.u32 %v5739, 2147483648
        %v5741 = vsel %vm5658, %v5740, %v5739
        %v5742 = vsub.s32 4, %v5718
        %v5743 = vsel %vm5658, %v5742, %v5718
        %v5744 = vsel %vm5657, %v286, %v5741
        %v5745 = vsel %vm5657, 0, %v5743
        %v5746 = vcosq.f32.pop %v5744
        %v5747 = vsinq.f32.pop %v5744
        %vm5748 = vweird.f32 %v286
        %v5749 = vadd.s32 %v5745, 3
        %v5750 = vand.u32 %v5749, 3
        %vm5751 = vcmp.lt.s32.totalorder %v5750, 2
        %vm5752 = vcmp.eq.s32.totalorder %v5750, 0
        %v5753 = vxor.u32 %v5747, 2147483648
        %v5754 = vsel %vm5752, %v5746, %v5753
        %vm5755 = vcmp.eq.s32.totalorder %v5750, 2
        %v5756 = vxor.u32 %v5746, 2147483648
        %v5757 = vsel %vm5755, %v5756, %v5747
        %v5758 = vsel %vm5751, %v5754, %v5757
        %v5759 = vsel %vm5748, nan, %v5758
        %v5760 = vand.u32 2147483647, %v287
        %vm5761 = vcmp.le.f32.partialorder %v5760, 0.7853982
        %vm5762 = vcmp.lt.s32.totalorder %v287, 0
        %v5763 = vand.u32 %v287, 2139095040
        %v5764 = vshrl.u32 %v5763, 23
        %v5765 = vsub.s32 %v5764, 127
        %v5766 = vand.u32 2147483647, %v287
        %v5767 = vand.u32 %v5766, 8388607
        %v5768 = vor.u32 %v5767, 8388608
        %v5769 = vsub.s32 0, %v5768
        %v5770 = vadd.s32 %v5765, 1
        %vm5771 = vcmp.gt.s32.totalorder %v5770, 0
        %v5772 = vsel %vm5771, %v5770, 0
        %v5773 = vshrl.u32 %v5772, 5
        %v5774 = vand.u32 %v5772, 31
        %v5775 = vsub.s32 32, %v5774
        %v5776 = vshrl.u32 683565275, %v5775
        %v5777 = vshll.u32 683565275, %v5774
        %v5778 = vshrl.u32 2475754826, %v5775
        %v5779 = vor.u32 %v5777, %v5778
        %v5780 = vshll.u32 2475754826, %v5774
        %v5781 = vshrl.u32 2131351028, %v5775
        %v5782 = vor.u32 %v5780, %v5781
        %v5783 = vshll.u32 2131351028, %v5774
        %v5784 = vshrl.u32 2102212464, %v5775
        %v5785 = vor.u32 %v5783, %v5784
        %v5786 = vshll.u32 2102212464, %v5774
        %v5787 = vshrl.u32 920167782, %v5775
        %v5788 = vor.u32 %v5786, %v5787
        %v5789 = vshll.u32 920167782, %v5774
        %v5790 = vshrl.u32 1326507024, %v5775
        %v5791 = vor.u32 %v5789, %v5790
        %vm5792 = vcmp.lt.s32.totalorder %v5773, 1
        %vm5793 = vcmp.lt.s32.totalorder %v5773, 2
        %vm5794 = vcmp.lt.s32.totalorder %v5773, 3
        %vm5795 = vcmp.lt.s32.totalorder %v5773, 4
        %v5796 = vsel %vm5792, %v5776, %v5779
        %v5797 = vsel %vm5795, %v5785, 2102212464
        %v5798 = vsel %vm5794, %v5782, %v5797
        %v5799 = vsel %vm5793, %v5796, %v5798
        %v5800 = vsel %vm5792, %v5779, %v5782
        %v5801 = vsel %vm5795, %v5788, 920167782
        %v5802 = vsel %vm5794, %v5785, %v5801
        %v5803 = vsel %vm5793, %v5800, %v5802
        %v5804 = vsel %vm5792, %v5782, %v5785
        %v5805 = vsel %vm5795, %v5791, 1326507024
        %v5806 = vsel %vm5794, %v5788, %v5805
        %v5807 = vsel %vm5793, %v5804, %v5806
        %v5808 = vshll.u32 %v5768, 8
        %v5809 = vmul.u32.u64.compose %v5808, %v5807
        %v5810 = vextract.low.u32 %v5809
        %v5811 = vextract.high.u32 %v5809
        %v5812 = vmul.u32.u64.compose %v5808, %v5803
        %v5813 = vextract.low.u32 %v5812
        %v5814 = vextract.high.u32 %v5812
        %v5815 = vmul.u32 %v5808, %v5799
        %v5816 = vadd.s32 %v5811, %v5813
        %vm5817 = vc.u32 %v5811, %v5813
        %v5818 = vadd.s32 %v5814, 1
        %v5819 = vsel %vm5817, %v5818, %v5814
        %v5820 = vadd.s32 %v5815, %v5819
        %v5821 = vadd.s32 %v5820, 536870912
        %v5822 = vshrl.u32 %v5821, 30
        %v5823 = vshll.u32 %v5822, 30
        %v5824 = vsub.s32 %v5820, %v5823
        %vm5825 = vcmp.lt.s32.totalorder %v5824, 0
        %v5826 = vsub.s32 0, %v5824
        %v5827 = vsel %vm5825, %v5826, %v5824
        %v5828 = vclz %v5827
        %v5829 = vsub.s32 %v5828, 2
        %vm5830 = vcmp.gt.s32.totalorder 0, %v5829
        %v5831 = vsel %vm5830, 0, %v5829
        %v5832 = vsub.s32 32, %v5831
        %v5833 = vshll.u32 %v5824, %v5831
        %v5834 = vshrl.u32 %v5816, %v5832
        %v5835 = vor.u32 %v5833, %v5834
        %v5836 = vsub.s32 4294967266, %v5831
        %v5837 = vadd.s32 %v5836, 127
        %v5838 = vshll.u32 %v5837, 23
        %v5839 = vor.u32 4788187, %v5838
        %v5840 = vand.u32 2147483647, %v5839
        %v5842 = vcvt.s32.f32 %v5835
        %v5843 = vmul.f32 %v5842, %v5840
        %v5844 = vxor.u32 %v5843, 2147483648
        %v5845 = vsel %vm5762, %v5844, %v5843
        %v5846 = vsub.s32 4, %v5822
        %v5847 = vsel %vm5762, %v5846, %v5822
        %v5848 = vsel %vm5761, %v287, %v5845
        %v5849 = vsel %vm5761, 0, %v5847
        %v5850 = vcosq.f32.pop %v5848
        %v5851 = vsinq.f32.pop %v5848
        %vm5852 = vweird.f32 %v287
        %v5853 = vadd.s32 %v5849, 3
        %v5854 = vand.u32 %v5853, 3
        %vm5855 = vcmp.lt.s32.totalorder %v5854, 2
        %vm5856 = vcmp.eq.s32.totalorder %v5854, 0
        %v5857 = vxor.u32 %v5851, 2147483648
        %v5858 = vsel %vm5856, %v5850, %v5857
        %vm5859 = vcmp.eq.s32.totalorder %v5854, 2
        %v5860 = vxor.u32 %v5850, 2147483648
        %v5861 = vsel %vm5859, %v5860, %v5851
        %v5862 = vsel %vm5855, %v5858, %v5861
        %v5863 = vsel %vm5852, nan, %v5862
        %v5864 = vand.u32 2147483647, %v288
        %vm5865 = vcmp.le.f32.partialorder %v5864, 0.7853982
        %vm5866 = vcmp.lt.s32.totalorder %v288, 0
        %v5867 = vand.u32 %v288, 2139095040
        %v5868 = vshrl.u32 %v5867, 23
        %v5869 = vsub.s32 %v5868, 127
        %v5870 = vand.u32 2147483647, %v288
        %v5871 = vand.u32 %v5870, 8388607
        %v5872 = vor.u32 %v5871, 8388608
        %v5873 = vsub.s32 0, %v5872
        %v5874 = vadd.s32 %v5869, 1
        %vm5875 = vcmp.gt.s32.totalorder %v5874, 0
        %v5876 = vsel %vm5875, %v5874, 0
        %v5877 = vshrl.u32 %v5876, 5
        %v5878 = vand.u32 %v5876, 31
        %v5879 = vsub.s32 32, %v5878
        %v5880 = vshrl.u32 683565275, %v5879
        %v5881 = vshll.u32 683565275, %v5878
        %v5882 = vshrl.u32 2475754826, %v5879
        %v5883 = vor.u32 %v5881, %v5882
        %v5884 = vshll.u32 2475754826, %v5878
        %v5885 = vshrl.u32 2131351028, %v5879
        %v5886 = vor.u32 %v5884, %v5885
        %v5887 = vshll.u32 2131351028, %v5878
        %v5888 = vshrl.u32 2102212464, %v5879
        %v5889 = vor.u32 %v5887, %v5888
        %v5890 = vshll.u32 2102212464, %v5878
        %v5891 = vshrl.u32 920167782, %v5879
        %v5892 = vor.u32 %v5890, %v5891
        %v5893 = vshll.u32 920167782, %v5878
        %v5894 = vshrl.u32 1326507024, %v5879
        %v5895 = vor.u32 %v5893, %v5894
        %vm5896 = vcmp.lt.s32.totalorder %v5877, 1
        %vm5897 = vcmp.lt.s32.totalorder %v5877, 2
        %vm5898 = vcmp.lt.s32.totalorder %v5877, 3
        %vm5899 = vcmp.lt.s32.totalorder %v5877, 4
        %v5900 = vsel %vm5896, %v5880, %v5883
        %v5901 = vsel %vm5899, %v5889, 2102212464
        %v5902 = vsel %vm5898, %v5886, %v5901
        %v5903 = vsel %vm5897, %v5900, %v5902
        %v5904 = vsel %vm5896, %v5883, %v5886
        %v5905 = vsel %vm5899, %v5892, 920167782
        %v5906 = vsel %vm5898, %v5889, %v5905
        %v5907 = vsel %vm5897, %v5904, %v5906
        %v5908 = vsel %vm5896, %v5886, %v5889
        %v5909 = vsel %vm5899, %v5895, 1326507024
        %v5910 = vsel %vm5898, %v5892, %v5909
        %v5911 = vsel %vm5897, %v5908, %v5910
        %v5912 = vshll.u32 %v5872, 8
        %v5913 = vmul.u32.u64.compose %v5912, %v5911
        %v5914 = vextract.low.u32 %v5913
        %v5915 = vextract.high.u32 %v5913
        %v5916 = vmul.u32.u64.compose %v5912, %v5907
        %v5917 = vextract.low.u32 %v5916
        %v5918 = vextract.high.u32 %v5916
        %v5919 = vmul.u32 %v5912, %v5903
        %v5920 = vadd.s32 %v5915, %v5917
        %vm5921 = vc.u32 %v5915, %v5917
        %v5922 = vadd.s32 %v5918, 1
        %v5923 = vsel %vm5921, %v5922, %v5918
        %v5924 = vadd.s32 %v5919, %v5923
        %v5925 = vadd.s32 %v5924, 536870912
        %v5926 = vshrl.u32 %v5925, 30
        %v5927 = vshll.u32 %v5926, 30
        %v5928 = vsub.s32 %v5924, %v5927
        %vm5929 = vcmp.lt.s32.totalorder %v5928, 0
        %v5930 = vsub.s32 0, %v5928
        %v5931 = vsel %vm5929, %v5930, %v5928
        %v5932 = vclz %v5931
        %v5933 = vsub.s32 %v5932, 2
        %vm5934 = vcmp.gt.s32.totalorder 0, %v5933
        %v5935 = vsel %vm5934, 0, %v5933
        %v5936 = vsub.s32 32, %v5935
        %v5937 = vshll.u32 %v5928, %v5935
        %v5938 = vshrl.u32 %v5920, %v5936
        %v5939 = vor.u32 %v5937, %v5938
        %v5940 = vsub.s32 4294967266, %v5935
        %v5941 = vadd.s32 %v5940, 127
        %v5942 = vshll.u32 %v5941, 23
        %v5943 = vor.u32 4788187, %v5942
        %v5944 = vand.u32 2147483647, %v5943
        %v5946 = vcvt.s32.f32 %v5939
        %v5947 = vmul.f32 %v5946, %v5944
        %v5948 = vxor.u32 %v5947, 2147483648
        %v5949 = vsel %vm5866, %v5948, %v5947
        %v5950 = vsub.s32 4, %v5926
        %v5951 = vsel %vm5866, %v5950, %v5926
        %v5952 = vsel %vm5865, %v288, %v5949
        %v5953 = vsel %vm5865, 0, %v5951
        %v5954 = vcosq.f32.pop %v5952
        %v5955 = vsinq.f32.pop %v5952
        %vm5956 = vweird.f32 %v288
        %v5957 = vadd.s32 %v5953, 3
        %v5958 = vand.u32 %v5957, 3
        %vm5959 = vcmp.lt.s32.totalorder %v5958, 2
        %vm5960 = vcmp.eq.s32.totalorder %v5958, 0
        %v5961 = vxor.u32 %v5955, 2147483648
        %v5962 = vsel %vm5960, %v5954, %v5961
        %vm5963 = vcmp.eq.s32.totalorder %v5958, 2
        %v5964 = vxor.u32 %v5954, 2147483648
        %v5965 = vsel %vm5963, %v5964, %v5955
        %v5966 = vsel %vm5959, %v5962, %v5965
        %v5967 = vsel %vm5956, nan, %v5966
        %v5968 = vand.u32 2147483647, %v289
        %vm5969 = vcmp.le.f32.partialorder %v5968, 0.7853982
        %vm5970 = vcmp.lt.s32.totalorder %v289, 0
        %v5971 = vand.u32 %v289, 2139095040
        %v5972 = vshrl.u32 %v5971, 23
        %v5973 = vsub.s32 %v5972, 127
        %v5974 = vand.u32 2147483647, %v289
        %v5975 = vand.u32 %v5974, 8388607
        %v5976 = vor.u32 %v5975, 8388608
        %v5977 = vsub.s32 0, %v5976
        %v5978 = vadd.s32 %v5973, 1
        %vm5979 = vcmp.gt.s32.totalorder %v5978, 0
        %v5980 = vsel %vm5979, %v5978, 0
        %v5981 = vshrl.u32 %v5980, 5
        %v5982 = vand.u32 %v5980, 31
        %v5983 = vsub.s32 32, %v5982
        %v5984 = vshrl.u32 683565275, %v5983
        %v5985 = vshll.u32 683565275, %v5982
        %v5986 = vshrl.u32 2475754826, %v5983
        %v5987 = vor.u32 %v5985, %v5986
        %v5988 = vshll.u32 2475754826, %v5982
        %v5989 = vshrl.u32 2131351028, %v5983
        %v5990 = vor.u32 %v5988, %v5989
        %v5991 = vshll.u32 2131351028, %v5982
        %v5992 = vshrl.u32 2102212464, %v5983
        %v5993 = vor.u32 %v5991, %v5992
        %v5994 = vshll.u32 2102212464, %v5982
        %v5995 = vshrl.u32 920167782, %v5983
        %v5996 = vor.u32 %v5994, %v5995
        %v5997 = vshll.u32 920167782, %v5982
        %v5998 = vshrl.u32 1326507024, %v5983
        %v5999 = vor.u32 %v5997, %v5998
        %vm6000 = vcmp.lt.s32.totalorder %v5981, 1
        %vm6001 = vcmp.lt.s32.totalorder %v5981, 2
        %vm6002 = vcmp.lt.s32.totalorder %v5981, 3
        %vm6003 = vcmp.lt.s32.totalorder %v5981, 4
        %v6004 = vsel %vm6000, %v5984, %v5987
        %v6005 = vsel %vm6003, %v5993, 2102212464
        %v6006 = vsel %vm6002, %v5990, %v6005
        %v6007 = vsel %vm6001, %v6004, %v6006
        %v6008 = vsel %vm6000, %v5987, %v5990
        %v6009 = vsel %vm6003, %v5996, 920167782
        %v6010 = vsel %vm6002, %v5993, %v6009
        %v6011 = vsel %vm6001, %v6008, %v6010
        %v6012 = vsel %vm6000, %v5990, %v5993
        %v6013 = vsel %vm6003, %v5999, 1326507024
        %v6014 = vsel %vm6002, %v5996, %v6013
        %v6015 = vsel %vm6001, %v6012, %v6014
        %v6016 = vshll.u32 %v5976, 8
        %v6017 = vmul.u32.u64.compose %v6016, %v6015
        %v6018 = vextract.low.u32 %v6017
        %v6019 = vextract.high.u32 %v6017
        %v6020 = vmul.u32.u64.compose %v6016, %v6011
        %v6021 = vextract.low.u32 %v6020
        %v6022 = vextract.high.u32 %v6020
        %v6023 = vmul.u32 %v6016, %v6007
        %v6024 = vadd.s32 %v6019, %v6021
        %vm6025 = vc.u32 %v6019, %v6021
        %v6026 = vadd.s32 %v6022, 1
        %v6027 = vsel %vm6025, %v6026, %v6022
        %v6028 = vadd.s32 %v6023, %v6027
        %v6029 = vadd.s32 %v6028, 536870912
        %v6030 = vshrl.u32 %v6029, 30
        %v6031 = vshll.u32 %v6030, 30
        %v6032 = vsub.s32 %v6028, %v6031
        %vm6033 = vcmp.lt.s32.totalorder %v6032, 0
        %v6034 = vsub.s32 0, %v6032
        %v6035 = vsel %vm6033, %v6034, %v6032
        %v6036 = vclz %v6035
        %v6037 = vsub.s32 %v6036, 2
        %vm6038 = vcmp.gt.s32.totalorder 0, %v6037
        %v6039 = vsel %vm6038, 0, %v6037
        %v6040 = vsub.s32 32, %v6039
        %v6041 = vshll.u32 %v6032, %v6039
        %v6042 = vshrl.u32 %v6024, %v6040
        %v6043 = vor.u32 %v6041, %v6042
        %v6044 = vsub.s32 4294967266, %v6039
        %v6045 = vadd.s32 %v6044, 127
        %v6046 = vshll.u32 %v6045, 23
        %v6047 = vor.u32 4788187, %v6046
        %v6048 = vand.u32 2147483647, %v6047
        %v6050 = vcvt.s32.f32 %v6043
        %v6051 = vmul.f32 %v6050, %v6048
        %v6052 = vxor.u32 %v6051, 2147483648
        %v6053 = vsel %vm5970, %v6052, %v6051
        %v6054 = vsub.s32 4, %v6030
        %v6055 = vsel %vm5970, %v6054, %v6030
        %v6056 = vsel %vm5969, %v289, %v6053
        %v6057 = vsel %vm5969, 0, %v6055
        %v6058 = vcosq.f32.pop %v6056
        %v6059 = vsinq.f32.pop %v6056
        %vm6060 = vweird.f32 %v289
        %v6061 = vadd.s32 %v6057, 3
        %v6062 = vand.u32 %v6061, 3
        %vm6063 = vcmp.lt.s32.totalorder %v6062, 2
        %vm6064 = vcmp.eq.s32.totalorder %v6062, 0
        %v6065 = vxor.u32 %v6059, 2147483648
        %v6066 = vsel %vm6064, %v6058, %v6065
        %vm6067 = vcmp.eq.s32.totalorder %v6062, 2
        %v6068 = vxor.u32 %v6058, 2147483648
        %v6069 = vsel %vm6067, %v6068, %v6059
        %v6070 = vsel %vm6063, %v6066, %v6069
        %v6071 = vsel %vm6060, nan, %v6070
        %v6072 = vand.u32 2147483647, %v290
        %vm6073 = vcmp.le.f32.partialorder %v6072, 0.7853982
        %vm6074 = vcmp.lt.s32.totalorder %v290, 0
        %v6075 = vand.u32 %v290, 2139095040
        %v6076 = vshrl.u32 %v6075, 23
        %v6077 = vsub.s32 %v6076, 127
        %v6078 = vand.u32 2147483647, %v290
        %v6079 = vand.u32 %v6078, 8388607
        %v6080 = vor.u32 %v6079, 8388608
        %v6081 = vsub.s32 0, %v6080
        %v6082 = vadd.s32 %v6077, 1
        %vm6083 = vcmp.gt.s32.totalorder %v6082, 0
        %v6084 = vsel %vm6083, %v6082, 0
        %v6085 = vshrl.u32 %v6084, 5
        %v6086 = vand.u32 %v6084, 31
        %v6087 = vsub.s32 32, %v6086
        %v6088 = vshrl.u32 683565275, %v6087
        %v6089 = vshll.u32 683565275, %v6086
        %v6090 = vshrl.u32 2475754826, %v6087
        %v6091 = vor.u32 %v6089, %v6090
        %v6092 = vshll.u32 2475754826, %v6086
        %v6093 = vshrl.u32 2131351028, %v6087
        %v6094 = vor.u32 %v6092, %v6093
        %v6095 = vshll.u32 2131351028, %v6086
        %v6096 = vshrl.u32 2102212464, %v6087
        %v6097 = vor.u32 %v6095, %v6096
        %v6098 = vshll.u32 2102212464, %v6086
        %v6099 = vshrl.u32 920167782, %v6087
        %v6100 = vor.u32 %v6098, %v6099
        %v6101 = vshll.u32 920167782, %v6086
        %v6102 = vshrl.u32 1326507024, %v6087
        %v6103 = vor.u32 %v6101, %v6102
        %vm6104 = vcmp.lt.s32.totalorder %v6085, 1
        %vm6105 = vcmp.lt.s32.totalorder %v6085, 2
        %vm6106 = vcmp.lt.s32.totalorder %v6085, 3
        %vm6107 = vcmp.lt.s32.totalorder %v6085, 4
        %v6108 = vsel %vm6104, %v6088, %v6091
        %v6109 = vsel %vm6107, %v6097, 2102212464
        %v6110 = vsel %vm6106, %v6094, %v6109
        %v6111 = vsel %vm6105, %v6108, %v6110
        %v6112 = vsel %vm6104, %v6091, %v6094
        %v6113 = vsel %vm6107, %v6100, 920167782
        %v6114 = vsel %vm6106, %v6097, %v6113
        %v6115 = vsel %vm6105, %v6112, %v6114
        %v6116 = vsel %vm6104, %v6094, %v6097
        %v6117 = vsel %vm6107, %v6103, 1326507024
        %v6118 = vsel %vm6106, %v6100, %v6117
        %v6119 = vsel %vm6105, %v6116, %v6118
        %v6120 = vshll.u32 %v6080, 8
        %v6121 = vmul.u32.u64.compose %v6120, %v6119
        %v6122 = vextract.low.u32 %v6121
        %v6123 = vextract.high.u32 %v6121
        %v6124 = vmul.u32.u64.compose %v6120, %v6115
        %v6125 = vextract.low.u32 %v6124
        %v6126 = vextract.high.u32 %v6124
        %v6127 = vmul.u32 %v6120, %v6111
        %v6128 = vadd.s32 %v6123, %v6125
        %vm6129 = vc.u32 %v6123, %v6125
        %v6130 = vadd.s32 %v6126, 1
        %v6131 = vsel %vm6129, %v6130, %v6126
        %v6132 = vadd.s32 %v6127, %v6131
        %v6133 = vadd.s32 %v6132, 536870912
        %v6134 = vshrl.u32 %v6133, 30
        %v6135 = vshll.u32 %v6134, 30
        %v6136 = vsub.s32 %v6132, %v6135
        %vm6137 = vcmp.lt.s32.totalorder %v6136, 0
        %v6138 = vsub.s32 0, %v6136
        %v6139 = vsel %vm6137, %v6138, %v6136
        %v6140 = vclz %v6139
        %v6141 = vsub.s32 %v6140, 2
        %vm6142 = vcmp.gt.s32.totalorder 0, %v6141
        %v6143 = vsel %vm6142, 0, %v6141
        %v6144 = vsub.s32 32, %v6143
        %v6145 = vshll.u32 %v6136, %v6143
        %v6146 = vshrl.u32 %v6128, %v6144
        %v6147 = vor.u32 %v6145, %v6146
        %v6148 = vsub.s32 4294967266, %v6143
        %v6149 = vadd.s32 %v6148, 127
        %v6150 = vshll.u32 %v6149, 23
        %v6151 = vor.u32 4788187, %v6150
        %v6152 = vand.u32 2147483647, %v6151
        %v6154 = vcvt.s32.f32 %v6147
        %v6155 = vmul.f32 %v6154, %v6152
        %v6156 = vxor.u32 %v6155, 2147483648
        %v6157 = vsel %vm6074, %v6156, %v6155
        %v6158 = vsub.s32 4, %v6134
        %v6159 = vsel %vm6074, %v6158, %v6134
        %v6160 = vsel %vm6073, %v290, %v6157
        %v6161 = vsel %vm6073, 0, %v6159
        %v6162 = vcosq.f32.pop %v6160
        %v6163 = vsinq.f32.pop %v6160
        %vm6164 = vweird.f32 %v290
        %v6165 = vadd.s32 %v6161, 3
        %v6166 = vand.u32 %v6165, 3
        %vm6167 = vcmp.lt.s32.totalorder %v6166, 2
        %vm6168 = vcmp.eq.s32.totalorder %v6166, 0
        %v6169 = vxor.u32 %v6163, 2147483648
        %v6170 = vsel %vm6168, %v6162, %v6169
        %vm6171 = vcmp.eq.s32.totalorder %v6166, 2
        %v6172 = vxor.u32 %v6162, 2147483648
        %v6173 = vsel %vm6171, %v6172, %v6163
        %v6174 = vsel %vm6167, %v6170, %v6173
        %v6175 = vsel %vm6164, nan, %v6174
        %v6176 = vand.u32 2147483647, %v291
        %vm6177 = vcmp.le.f32.partialorder %v6176, 0.7853982
        %vm6178 = vcmp.lt.s32.totalorder %v291, 0
        %v6179 = vand.u32 %v291, 2139095040
        %v6180 = vshrl.u32 %v6179, 23
        %v6181 = vsub.s32 %v6180, 127
        %v6182 = vand.u32 2147483647, %v291
        %v6183 = vand.u32 %v6182, 8388607
        %v6184 = vor.u32 %v6183, 8388608
        %v6185 = vsub.s32 0, %v6184
        %v6186 = vadd.s32 %v6181, 1
        %vm6187 = vcmp.gt.s32.totalorder %v6186, 0
        %v6188 = vsel %vm6187, %v6186, 0
        %v6189 = vshrl.u32 %v6188, 5
        %v6190 = vand.u32 %v6188, 31
        %v6191 = vsub.s32 32, %v6190
        %v6192 = vshrl.u32 683565275, %v6191
        %v6193 = vshll.u32 683565275, %v6190
        %v6194 = vshrl.u32 2475754826, %v6191
        %v6195 = vor.u32 %v6193, %v6194
        %v6196 = vshll.u32 2475754826, %v6190
        %v6197 = vshrl.u32 2131351028, %v6191
        %v6198 = vor.u32 %v6196, %v6197
        %v6199 = vshll.u32 2131351028, %v6190
        %v6200 = vshrl.u32 2102212464, %v6191
        %v6201 = vor.u32 %v6199, %v6200
        %v6202 = vshll.u32 2102212464, %v6190
        %v6203 = vshrl.u32 920167782, %v6191
        %v6204 = vor.u32 %v6202, %v6203
        %v6205 = vshll.u32 920167782, %v6190
        %v6206 = vshrl.u32 1326507024, %v6191
        %v6207 = vor.u32 %v6205, %v6206
        %vm6208 = vcmp.lt.s32.totalorder %v6189, 1
        %vm6209 = vcmp.lt.s32.totalorder %v6189, 2
        %vm6210 = vcmp.lt.s32.totalorder %v6189, 3
        %vm6211 = vcmp.lt.s32.totalorder %v6189, 4
        %v6212 = vsel %vm6208, %v6192, %v6195
        %v6213 = vsel %vm6211, %v6201, 2102212464
        %v6214 = vsel %vm6210, %v6198, %v6213
        %v6215 = vsel %vm6209, %v6212, %v6214
        %v6216 = vsel %vm6208, %v6195, %v6198
        %v6217 = vsel %vm6211, %v6204, 920167782
        %v6218 = vsel %vm6210, %v6201, %v6217
        %v6219 = vsel %vm6209, %v6216, %v6218
        %v6220 = vsel %vm6208, %v6198, %v6201
        %v6221 = vsel %vm6211, %v6207, 1326507024
        %v6222 = vsel %vm6210, %v6204, %v6221
        %v6223 = vsel %vm6209, %v6220, %v6222
        %v6224 = vshll.u32 %v6184, 8
        %v6225 = vmul.u32.u64.compose %v6224, %v6223
        %v6226 = vextract.low.u32 %v6225
        %v6227 = vextract.high.u32 %v6225
        %v6228 = vmul.u32.u64.compose %v6224, %v6219
        %v6229 = vextract.low.u32 %v6228
        %v6230 = vextract.high.u32 %v6228
        %v6231 = vmul.u32 %v6224, %v6215
        %v6232 = vadd.s32 %v6227, %v6229
        %vm6233 = vc.u32 %v6227, %v6229
        %v6234 = vadd.s32 %v6230, 1
        %v6235 = vsel %vm6233, %v6234, %v6230
        %v6236 = vadd.s32 %v6231, %v6235
        %v6237 = vadd.s32 %v6236, 536870912
        %v6238 = vshrl.u32 %v6237, 30
        %v6239 = vshll.u32 %v6238, 30
        %v6240 = vsub.s32 %v6236, %v6239
        %vm6241 = vcmp.lt.s32.totalorder %v6240, 0
        %v6242 = vsub.s32 0, %v6240
        %v6243 = vsel %vm6241, %v6242, %v6240
        %v6244 = vclz %v6243
        %v6245 = vsub.s32 %v6244, 2
        %vm6246 = vcmp.gt.s32.totalorder 0, %v6245
        %v6247 = vsel %vm6246, 0, %v6245
        %v6248 = vsub.s32 32, %v6247
        %v6249 = vshll.u32 %v6240, %v6247
        %v6250 = vshrl.u32 %v6232, %v6248
        %v6251 = vor.u32 %v6249, %v6250
        %v6252 = vsub.s32 4294967266, %v6247
        %v6253 = vadd.s32 %v6252, 127
        %v6254 = vshll.u32 %v6253, 23
        %v6255 = vor.u32 4788187, %v6254
        %v6256 = vand.u32 2147483647, %v6255
        %v6258 = vcvt.s32.f32 %v6251
        %v6259 = vmul.f32 %v6258, %v6256
        %v6260 = vxor.u32 %v6259, 2147483648
        %v6261 = vsel %vm6178, %v6260, %v6259
        %v6262 = vsub.s32 4, %v6238
        %v6263 = vsel %vm6178, %v6262, %v6238
        %v6264 = vsel %vm6177, %v291, %v6261
        %v6265 = vsel %vm6177, 0, %v6263
        %v6266 = vcosq.f32.pop %v6264
        %v6267 = vsinq.f32.pop %v6264
        %vm6268 = vweird.f32 %v291
        %v6269 = vadd.s32 %v6265, 3
        %v6270 = vand.u32 %v6269, 3
        %vm6271 = vcmp.lt.s32.totalorder %v6270, 2
        %vm6272 = vcmp.eq.s32.totalorder %v6270, 0
        %v6273 = vxor.u32 %v6267, 2147483648
        %v6274 = vsel %vm6272, %v6266, %v6273
        %vm6275 = vcmp.eq.s32.totalorder %v6270, 2
        %v6276 = vxor.u32 %v6266, 2147483648
        %v6277 = vsel %vm6275, %v6276, %v6267
        %v6278 = vsel %vm6271, %v6274, %v6277
        %v6279 = vsel %vm6268, nan, %v6278
        %v6280 = vand.u32 2147483647, %v292
        %vm6281 = vcmp.le.f32.partialorder %v6280, 0.7853982
        %vm6282 = vcmp.lt.s32.totalorder %v292, 0
        %v6283 = vand.u32 %v292, 2139095040
        %v6284 = vshrl.u32 %v6283, 23
        %v6285 = vsub.s32 %v6284, 127
        %v6286 = vand.u32 2147483647, %v292
        %v6287 = vand.u32 %v6286, 8388607
        %v6288 = vor.u32 %v6287, 8388608
        %v6289 = vsub.s32 0, %v6288
        %v6290 = vadd.s32 %v6285, 1
        %vm6291 = vcmp.gt.s32.totalorder %v6290, 0
        %v6292 = vsel %vm6291, %v6290, 0
        %v6293 = vshrl.u32 %v6292, 5
        %v6294 = vand.u32 %v6292, 31
        %v6295 = vsub.s32 32, %v6294
        %v6296 = vshrl.u32 683565275, %v6295
        %v6297 = vshll.u32 683565275, %v6294
        %v6298 = vshrl.u32 2475754826, %v6295
        %v6299 = vor.u32 %v6297, %v6298
        %v6300 = vshll.u32 2475754826, %v6294
        %v6301 = vshrl.u32 2131351028, %v6295
        %v6302 = vor.u32 %v6300, %v6301
        %v6303 = vshll.u32 2131351028, %v6294
        %v6304 = vshrl.u32 2102212464, %v6295
        %v6305 = vor.u32 %v6303, %v6304
        %v6306 = vshll.u32 2102212464, %v6294
        %v6307 = vshrl.u32 920167782, %v6295
        %v6308 = vor.u32 %v6306, %v6307
        %v6309 = vshll.u32 920167782, %v6294
        %v6310 = vshrl.u32 1326507024, %v6295
        %v6311 = vor.u32 %v6309, %v6310
        %vm6312 = vcmp.lt.s32.totalorder %v6293, 1
        %vm6313 = vcmp.lt.s32.totalorder %v6293, 2
        %vm6314 = vcmp.lt.s32.totalorder %v6293, 3
        %vm6315 = vcmp.lt.s32.totalorder %v6293, 4
        %v6316 = vsel %vm6312, %v6296, %v6299
        %v6317 = vsel %vm6315, %v6305, 2102212464
        %v6318 = vsel %vm6314, %v6302, %v6317
        %v6319 = vsel %vm6313, %v6316, %v6318
        %v6320 = vsel %vm6312, %v6299, %v6302
        %v6321 = vsel %vm6315, %v6308, 920167782
        %v6322 = vsel %vm6314, %v6305, %v6321
        %v6323 = vsel %vm6313, %v6320, %v6322
        %v6324 = vsel %vm6312, %v6302, %v6305
        %v6325 = vsel %vm6315, %v6311, 1326507024
        %v6326 = vsel %vm6314, %v6308, %v6325
        %v6327 = vsel %vm6313, %v6324, %v6326
        %v6328 = vshll.u32 %v6288, 8
        %v6329 = vmul.u32.u64.compose %v6328, %v6327
        %v6330 = vextract.low.u32 %v6329
        %v6331 = vextract.high.u32 %v6329
        %v6332 = vmul.u32.u64.compose %v6328, %v6323
        %v6333 = vextract.low.u32 %v6332
        %v6334 = vextract.high.u32 %v6332
        %v6335 = vmul.u32 %v6328, %v6319
        %v6336 = vadd.s32 %v6331, %v6333
        %vm6337 = vc.u32 %v6331, %v6333
        %v6338 = vadd.s32 %v6334, 1
        %v6339 = vsel %vm6337, %v6338, %v6334
        %v6340 = vadd.s32 %v6335, %v6339
        %v6341 = vadd.s32 %v6340, 536870912
        %v6342 = vshrl.u32 %v6341, 30
        %v6343 = vshll.u32 %v6342, 30
        %v6344 = vsub.s32 %v6340, %v6343
        %vm6345 = vcmp.lt.s32.totalorder %v6344, 0
        %v6346 = vsub.s32 0, %v6344
        %v6347 = vsel %vm6345, %v6346, %v6344
        %v6348 = vclz %v6347
        %v6349 = vsub.s32 %v6348, 2
        %vm6350 = vcmp.gt.s32.totalorder 0, %v6349
        %v6351 = vsel %vm6350, 0, %v6349
        %v6352 = vsub.s32 32, %v6351
        %v6353 = vshll.u32 %v6344, %v6351
        %v6354 = vshrl.u32 %v6336, %v6352
        %v6355 = vor.u32 %v6353, %v6354
        %v6356 = vsub.s32 4294967266, %v6351
        %v6357 = vadd.s32 %v6356, 127
        %v6358 = vshll.u32 %v6357, 23
        %v6359 = vor.u32 4788187, %v6358
        %v6360 = vand.u32 2147483647, %v6359
        %v6362 = vcvt.s32.f32 %v6355
        %v6363 = vmul.f32 %v6362, %v6360
        %v6364 = vxor.u32 %v6363, 2147483648
        %v6365 = vsel %vm6282, %v6364, %v6363
        %v6366 = vsub.s32 4, %v6342
        %v6367 = vsel %vm6282, %v6366, %v6342
        %v6368 = vsel %vm6281, %v292, %v6365
        %v6369 = vsel %vm6281, 0, %v6367
        %v6370 = vcosq.f32.pop %v6368
        %v6371 = vsinq.f32.pop %v6368
        %vm6372 = vweird.f32 %v292
        %v6373 = vadd.s32 %v6369, 3
        %v6374 = vand.u32 %v6373, 3
        %vm6375 = vcmp.lt.s32.totalorder %v6374, 2
        %vm6376 = vcmp.eq.s32.totalorder %v6374, 0
        %v6377 = vxor.u32 %v6371, 2147483648
        %v6378 = vsel %vm6376, %v6370, %v6377
        %vm6379 = vcmp.eq.s32.totalorder %v6374, 2
        %v6380 = vxor.u32 %v6370, 2147483648
        %v6381 = vsel %vm6379, %v6380, %v6371
        %v6382 = vsel %vm6375, %v6378, %v6381
        %v6383 = vsel %vm6372, nan, %v6382
        %v6384 = vand.u32 2147483647, %v293
        %vm6385 = vcmp.le.f32.partialorder %v6384, 0.7853982
        %vm6386 = vcmp.lt.s32.totalorder %v293, 0
        %v6387 = vand.u32 %v293, 2139095040
        %v6388 = vshrl.u32 %v6387, 23
        %v6389 = vsub.s32 %v6388, 127
        %v6390 = vand.u32 2147483647, %v293
        %v6391 = vand.u32 %v6390, 8388607
        %v6392 = vor.u32 %v6391, 8388608
        %v6393 = vsub.s32 0, %v6392
        %v6394 = vadd.s32 %v6389, 1
        %vm6395 = vcmp.gt.s32.totalorder %v6394, 0
        %v6396 = vsel %vm6395, %v6394, 0
        %v6397 = vshrl.u32 %v6396, 5
        %v6398 = vand.u32 %v6396, 31
        %v6399 = vsub.s32 32, %v6398
        %v6400 = vshrl.u32 683565275, %v6399
        %v6401 = vshll.u32 683565275, %v6398
        %v6402 = vshrl.u32 2475754826, %v6399
        %v6403 = vor.u32 %v6401, %v6402
        %v6404 = vshll.u32 2475754826, %v6398
        %v6405 = vshrl.u32 2131351028, %v6399
        %v6406 = vor.u32 %v6404, %v6405
        %v6407 = vshll.u32 2131351028, %v6398
        %v6408 = vshrl.u32 2102212464, %v6399
        %v6409 = vor.u32 %v6407, %v6408
        %v6410 = vshll.u32 2102212464, %v6398
        %v6411 = vshrl.u32 920167782, %v6399
        %v6412 = vor.u32 %v6410, %v6411
        %v6413 = vshll.u32 920167782, %v6398
        %v6414 = vshrl.u32 1326507024, %v6399
        %v6415 = vor.u32 %v6413, %v6414
        %vm6416 = vcmp.lt.s32.totalorder %v6397, 1
        %vm6417 = vcmp.lt.s32.totalorder %v6397, 2
        %vm6418 = vcmp.lt.s32.totalorder %v6397, 3
        %vm6419 = vcmp.lt.s32.totalorder %v6397, 4
        %v6420 = vsel %vm6416, %v6400, %v6403
        %v6421 = vsel %vm6419, %v6409, 2102212464
        %v6422 = vsel %vm6418, %v6406, %v6421
        %v6423 = vsel %vm6417, %v6420, %v6422
        %v6424 = vsel %vm6416, %v6403, %v6406
        %v6425 = vsel %vm6419, %v6412, 920167782
        %v6426 = vsel %vm6418, %v6409, %v6425
        %v6427 = vsel %vm6417, %v6424, %v6426
        %v6428 = vsel %vm6416, %v6406, %v6409
        %v6429 = vsel %vm6419, %v6415, 1326507024
        %v6430 = vsel %vm6418, %v6412, %v6429
        %v6431 = vsel %vm6417, %v6428, %v6430
        %v6432 = vshll.u32 %v6392, 8
        %v6433 = vmul.u32.u64.compose %v6432, %v6431
        %v6434 = vextract.low.u32 %v6433
        %v6435 = vextract.high.u32 %v6433
        %v6436 = vmul.u32.u64.compose %v6432, %v6427
        %v6437 = vextract.low.u32 %v6436
        %v6438 = vextract.high.u32 %v6436
        %v6439 = vmul.u32 %v6432, %v6423
        %v6440 = vadd.s32 %v6435, %v6437
        %vm6441 = vc.u32 %v6435, %v6437
        %v6442 = vadd.s32 %v6438, 1
        %v6443 = vsel %vm6441, %v6442, %v6438
        %v6444 = vadd.s32 %v6439, %v6443
        %v6445 = vadd.s32 %v6444, 536870912
        %v6446 = vshrl.u32 %v6445, 30
        %v6447 = vshll.u32 %v6446, 30
        %v6448 = vsub.s32 %v6444, %v6447
        %vm6449 = vcmp.lt.s32.totalorder %v6448, 0
        %v6450 = vsub.s32 0, %v6448
        %v6451 = vsel %vm6449, %v6450, %v6448
        %v6452 = vclz %v6451
        %v6453 = vsub.s32 %v6452, 2
        %vm6454 = vcmp.gt.s32.totalorder 0, %v6453
        %v6455 = vsel %vm6454, 0, %v6453
        %v6456 = vsub.s32 32, %v6455
        %v6457 = vshll.u32 %v6448, %v6455
        %v6458 = vshrl.u32 %v6440, %v6456
        %v6459 = vor.u32 %v6457, %v6458
        %v6460 = vsub.s32 4294967266, %v6455
        %v6461 = vadd.s32 %v6460, 127
        %v6462 = vshll.u32 %v6461, 23
        %v6463 = vor.u32 4788187, %v6462
        %v6464 = vand.u32 2147483647, %v6463
        %v6466 = vcvt.s32.f32 %v6459
        %v6467 = vmul.f32 %v6466, %v6464
        %v6468 = vxor.u32 %v6467, 2147483648
        %v6469 = vsel %vm6386, %v6468, %v6467
        %v6470 = vsub.s32 4, %v6446
        %v6471 = vsel %vm6386, %v6470, %v6446
        %v6472 = vsel %vm6385, %v293, %v6469
        %v6473 = vsel %vm6385, 0, %v6471
        %v6474 = vcosq.f32.pop %v6472
        %v6475 = vsinq.f32.pop %v6472
        %vm6476 = vweird.f32 %v293
        %v6477 = vadd.s32 %v6473, 3
        %v6478 = vand.u32 %v6477, 3
        %vm6479 = vcmp.lt.s32.totalorder %v6478, 2
        %vm6480 = vcmp.eq.s32.totalorder %v6478, 0
        %v6481 = vxor.u32 %v6475, 2147483648
        %v6482 = vsel %vm6480, %v6474, %v6481
        %vm6483 = vcmp.eq.s32.totalorder %v6478, 2
        %v6484 = vxor.u32 %v6474, 2147483648
        %v6485 = vsel %vm6483, %v6484, %v6475
        %v6486 = vsel %vm6479, %v6482, %v6485
        %v6487 = vsel %vm6476, nan, %v6486
        %v6488 = vand.u32 2147483647, %v294
        %vm6489 = vcmp.le.f32.partialorder %v6488, 0.7853982
        %vm6490 = vcmp.lt.s32.totalorder %v294, 0
        %v6491 = vand.u32 %v294, 2139095040
        %v6492 = vshrl.u32 %v6491, 23
        %v6493 = vsub.s32 %v6492, 127
        %v6494 = vand.u32 2147483647, %v294
        %v6495 = vand.u32 %v6494, 8388607
        %v6496 = vor.u32 %v6495, 8388608
        %v6497 = vsub.s32 0, %v6496
        %v6498 = vadd.s32 %v6493, 1
        %vm6499 = vcmp.gt.s32.totalorder %v6498, 0
        %v6500 = vsel %vm6499, %v6498, 0
        %v6501 = vshrl.u32 %v6500, 5
        %v6502 = vand.u32 %v6500, 31
        %v6503 = vsub.s32 32, %v6502
        %v6504 = vshrl.u32 683565275, %v6503
        %v6505 = vshll.u32 683565275, %v6502
        %v6506 = vshrl.u32 2475754826, %v6503
        %v6507 = vor.u32 %v6505, %v6506
        %v6508 = vshll.u32 2475754826, %v6502
        %v6509 = vshrl.u32 2131351028, %v6503
        %v6510 = vor.u32 %v6508, %v6509
        %v6511 = vshll.u32 2131351028, %v6502
        %v6512 = vshrl.u32 2102212464, %v6503
        %v6513 = vor.u32 %v6511, %v6512
        %v6514 = vshll.u32 2102212464, %v6502
        %v6515 = vshrl.u32 920167782, %v6503
        %v6516 = vor.u32 %v6514, %v6515
        %v6517 = vshll.u32 920167782, %v6502
        %v6518 = vshrl.u32 1326507024, %v6503
        %v6519 = vor.u32 %v6517, %v6518
        %vm6520 = vcmp.lt.s32.totalorder %v6501, 1
        %vm6521 = vcmp.lt.s32.totalorder %v6501, 2
        %vm6522 = vcmp.lt.s32.totalorder %v6501, 3
        %vm6523 = vcmp.lt.s32.totalorder %v6501, 4
        %v6524 = vsel %vm6520, %v6504, %v6507
        %v6525 = vsel %vm6523, %v6513, 2102212464
        %v6526 = vsel %vm6522, %v6510, %v6525
        %v6527 = vsel %vm6521, %v6524, %v6526
        %v6528 = vsel %vm6520, %v6507, %v6510
        %v6529 = vsel %vm6523, %v6516, 920167782
        %v6530 = vsel %vm6522, %v6513, %v6529
        %v6531 = vsel %vm6521, %v6528, %v6530
        %v6532 = vsel %vm6520, %v6510, %v6513
        %v6533 = vsel %vm6523, %v6519, 1326507024
        %v6534 = vsel %vm6522, %v6516, %v6533
        %v6535 = vsel %vm6521, %v6532, %v6534
        %v6536 = vshll.u32 %v6496, 8
        %v6537 = vmul.u32.u64.compose %v6536, %v6535
        %v6538 = vextract.low.u32 %v6537
        %v6539 = vextract.high.u32 %v6537
        %v6540 = vmul.u32.u64.compose %v6536, %v6531
        %v6541 = vextract.low.u32 %v6540
        %v6542 = vextract.high.u32 %v6540
        %v6543 = vmul.u32 %v6536, %v6527
        %v6544 = vadd.s32 %v6539, %v6541
        %vm6545 = vc.u32 %v6539, %v6541
        %v6546 = vadd.s32 %v6542, 1
        %v6547 = vsel %vm6545, %v6546, %v6542
        %v6548 = vadd.s32 %v6543, %v6547
        %v6549 = vadd.s32 %v6548, 536870912
        %v6550 = vshrl.u32 %v6549, 30
        %v6551 = vshll.u32 %v6550, 30
        %v6552 = vsub.s32 %v6548, %v6551
        %vm6553 = vcmp.lt.s32.totalorder %v6552, 0
        %v6554 = vsub.s32 0, %v6552
        %v6555 = vsel %vm6553, %v6554, %v6552
        %v6556 = vclz %v6555
        %v6557 = vsub.s32 %v6556, 2
        %vm6558 = vcmp.gt.s32.totalorder 0, %v6557
        %v6559 = vsel %vm6558, 0, %v6557
        %v6560 = vsub.s32 32, %v6559
        %v6561 = vshll.u32 %v6552, %v6559
        %v6562 = vshrl.u32 %v6544, %v6560
        %v6563 = vor.u32 %v6561, %v6562
        %v6564 = vsub.s32 4294967266, %v6559
        %v6565 = vadd.s32 %v6564, 127
        %v6566 = vshll.u32 %v6565, 23
        %v6567 = vor.u32 4788187, %v6566
        %v6568 = vand.u32 2147483647, %v6567
        %v6570 = vcvt.s32.f32 %v6563
        %v6571 = vmul.f32 %v6570, %v6568
        %v6572 = vxor.u32 %v6571, 2147483648
        %v6573 = vsel %vm6490, %v6572, %v6571
        %v6574 = vsub.s32 4, %v6550
        %v6575 = vsel %vm6490, %v6574, %v6550
        %v6576 = vsel %vm6489, %v294, %v6573
        %v6577 = vsel %vm6489, 0, %v6575
        %v6578 = vcosq.f32.pop %v6576
        %v6579 = vsinq.f32.pop %v6576
        %vm6580 = vweird.f32 %v294
        %v6581 = vadd.s32 %v6577, 3
        %v6582 = vand.u32 %v6581, 3
        %vm6583 = vcmp.lt.s32.totalorder %v6582, 2
        %vm6584 = vcmp.eq.s32.totalorder %v6582, 0
        %v6585 = vxor.u32 %v6579, 2147483648
        %v6586 = vsel %vm6584, %v6578, %v6585
        %vm6587 = vcmp.eq.s32.totalorder %v6582, 2
        %v6588 = vxor.u32 %v6578, 2147483648
        %v6589 = vsel %vm6587, %v6588, %v6579
        %v6590 = vsel %vm6583, %v6586, %v6589
        %v6591 = vsel %vm6580, nan, %v6590
        %v6592 = vand.u32 2147483647, %v295
        %vm6593 = vcmp.le.f32.partialorder %v6592, 0.7853982
        %vm6594 = vcmp.lt.s32.totalorder %v295, 0
        %v6595 = vand.u32 %v295, 2139095040
        %v6596 = vshrl.u32 %v6595, 23
        %v6597 = vsub.s32 %v6596, 127
        %v6598 = vand.u32 2147483647, %v295
        %v6599 = vand.u32 %v6598, 8388607
        %v6600 = vor.u32 %v6599, 8388608
        %v6601 = vsub.s32 0, %v6600
        %v6602 = vadd.s32 %v6597, 1
        %vm6603 = vcmp.gt.s32.totalorder %v6602, 0
        %v6604 = vsel %vm6603, %v6602, 0
        %v6605 = vshrl.u32 %v6604, 5
        %v6606 = vand.u32 %v6604, 31
        %v6607 = vsub.s32 32, %v6606
        %v6608 = vshrl.u32 683565275, %v6607
        %v6609 = vshll.u32 683565275, %v6606
        %v6610 = vshrl.u32 2475754826, %v6607
        %v6611 = vor.u32 %v6609, %v6610
        %v6612 = vshll.u32 2475754826, %v6606
        %v6613 = vshrl.u32 2131351028, %v6607
        %v6614 = vor.u32 %v6612, %v6613
        %v6615 = vshll.u32 2131351028, %v6606
        %v6616 = vshrl.u32 2102212464, %v6607
        %v6617 = vor.u32 %v6615, %v6616
        %v6618 = vshll.u32 2102212464, %v6606
        %v6619 = vshrl.u32 920167782, %v6607
        %v6620 = vor.u32 %v6618, %v6619
        %v6621 = vshll.u32 920167782, %v6606
        %v6622 = vshrl.u32 1326507024, %v6607
        %v6623 = vor.u32 %v6621, %v6622
        %vm6624 = vcmp.lt.s32.totalorder %v6605, 1
        %vm6625 = vcmp.lt.s32.totalorder %v6605, 2
        %vm6626 = vcmp.lt.s32.totalorder %v6605, 3
        %vm6627 = vcmp.lt.s32.totalorder %v6605, 4
        %v6628 = vsel %vm6624, %v6608, %v6611
        %v6629 = vsel %vm6627, %v6617, 2102212464
        %v6630 = vsel %vm6626, %v6614, %v6629
        %v6631 = vsel %vm6625, %v6628, %v6630
        %v6632 = vsel %vm6624, %v6611, %v6614
        %v6633 = vsel %vm6627, %v6620, 920167782
        %v6634 = vsel %vm6626, %v6617, %v6633
        %v6635 = vsel %vm6625, %v6632, %v6634
        %v6636 = vsel %vm6624, %v6614, %v6617
        %v6637 = vsel %vm6627, %v6623, 1326507024
        %v6638 = vsel %vm6626, %v6620, %v6637
        %v6639 = vsel %vm6625, %v6636, %v6638
        %v6640 = vshll.u32 %v6600, 8
        %v6641 = vmul.u32.u64.compose %v6640, %v6639
        %v6642 = vextract.low.u32 %v6641
        %v6643 = vextract.high.u32 %v6641
        %v6644 = vmul.u32.u64.compose %v6640, %v6635
        %v6645 = vextract.low.u32 %v6644
        %v6646 = vextract.high.u32 %v6644
        %v6647 = vmul.u32 %v6640, %v6631
        %v6648 = vadd.s32 %v6643, %v6645
        %vm6649 = vc.u32 %v6643, %v6645
        %v6650 = vadd.s32 %v6646, 1
        %v6651 = vsel %vm6649, %v6650, %v6646
        %v6652 = vadd.s32 %v6647, %v6651
        %v6653 = vadd.s32 %v6652, 536870912
        %v6654 = vshrl.u32 %v6653, 30
        %v6655 = vshll.u32 %v6654, 30
        %v6656 = vsub.s32 %v6652, %v6655
        %vm6657 = vcmp.lt.s32.totalorder %v6656, 0
        %v6658 = vsub.s32 0, %v6656
        %v6659 = vsel %vm6657, %v6658, %v6656
        %v6660 = vclz %v6659
        %v6661 = vsub.s32 %v6660, 2
        %vm6662 = vcmp.gt.s32.totalorder 0, %v6661
        %v6663 = vsel %vm6662, 0, %v6661
        %v6664 = vsub.s32 32, %v6663
        %v6665 = vshll.u32 %v6656, %v6663
        %v6666 = vshrl.u32 %v6648, %v6664
        %v6667 = vor.u32 %v6665, %v6666
        %v6668 = vsub.s32 4294967266, %v6663
        %v6669 = vadd.s32 %v6668, 127
        %v6670 = vshll.u32 %v6669, 23
        %v6671 = vor.u32 4788187, %v6670
        %v6672 = vand.u32 2147483647, %v6671
        %v6674 = vcvt.s32.f32 %v6667
        %v6675 = vmul.f32 %v6674, %v6672
        %v6676 = vxor.u32 %v6675, 2147483648
        %v6677 = vsel %vm6594, %v6676, %v6675
        %v6678 = vsub.s32 4, %v6654
        %v6679 = vsel %vm6594, %v6678, %v6654
        %v6680 = vsel %vm6593, %v295, %v6677
        %v6681 = vsel %vm6593, 0, %v6679
        %v6682 = vcosq.f32.pop %v6680
        %v6683 = vsinq.f32.pop %v6680
        %vm6684 = vweird.f32 %v295
        %v6685 = vadd.s32 %v6681, 3
        %v6686 = vand.u32 %v6685, 3
        %vm6687 = vcmp.lt.s32.totalorder %v6686, 2
        %vm6688 = vcmp.eq.s32.totalorder %v6686, 0
        %v6689 = vxor.u32 %v6683, 2147483648
        %v6690 = vsel %vm6688, %v6682, %v6689
        %vm6691 = vcmp.eq.s32.totalorder %v6686, 2
        %v6692 = vxor.u32 %v6682, 2147483648
        %v6693 = vsel %vm6691, %v6692, %v6683
        %v6694 = vsel %vm6687, %v6690, %v6693
        %v6695 = vsel %vm6684, nan, %v6694
        %v6696 = vand.u32 2147483647, %v296
        %vm6697 = vcmp.le.f32.partialorder %v6696, 0.7853982
        %vm6698 = vcmp.lt.s32.totalorder %v296, 0
        %v6699 = vand.u32 %v296, 2139095040
        %v6700 = vshrl.u32 %v6699, 23
        %v6701 = vsub.s32 %v6700, 127
        %v6702 = vand.u32 2147483647, %v296
        %v6703 = vand.u32 %v6702, 8388607
        %v6704 = vor.u32 %v6703, 8388608
        %v6705 = vsub.s32 0, %v6704
        %v6706 = vadd.s32 %v6701, 1
        %vm6707 = vcmp.gt.s32.totalorder %v6706, 0
        %v6708 = vsel %vm6707, %v6706, 0
        %v6709 = vshrl.u32 %v6708, 5
        %v6710 = vand.u32 %v6708, 31
        %v6711 = vsub.s32 32, %v6710
        %v6712 = vshrl.u32 683565275, %v6711
        %v6713 = vshll.u32 683565275, %v6710
        %v6714 = vshrl.u32 2475754826, %v6711
        %v6715 = vor.u32 %v6713, %v6714
        %v6716 = vshll.u32 2475754826, %v6710
        %v6717 = vshrl.u32 2131351028, %v6711
        %v6718 = vor.u32 %v6716, %v6717
        %v6719 = vshll.u32 2131351028, %v6710
        %v6720 = vshrl.u32 2102212464, %v6711
        %v6721 = vor.u32 %v6719, %v6720
        %v6722 = vshll.u32 2102212464, %v6710
        %v6723 = vshrl.u32 920167782, %v6711
        %v6724 = vor.u32 %v6722, %v6723
        %v6725 = vshll.u32 920167782, %v6710
        %v6726 = vshrl.u32 1326507024, %v6711
        %v6727 = vor.u32 %v6725, %v6726
        %vm6728 = vcmp.lt.s32.totalorder %v6709, 1
        %vm6729 = vcmp.lt.s32.totalorder %v6709, 2
        %vm6730 = vcmp.lt.s32.totalorder %v6709, 3
        %vm6731 = vcmp.lt.s32.totalorder %v6709, 4
        %v6732 = vsel %vm6728, %v6712, %v6715
        %v6733 = vsel %vm6731, %v6721, 2102212464
        %v6734 = vsel %vm6730, %v6718, %v6733
        %v6735 = vsel %vm6729, %v6732, %v6734
        %v6736 = vsel %vm6728, %v6715, %v6718
        %v6737 = vsel %vm6731, %v6724, 920167782
        %v6738 = vsel %vm6730, %v6721, %v6737
        %v6739 = vsel %vm6729, %v6736, %v6738
        %v6740 = vsel %vm6728, %v6718, %v6721
        %v6741 = vsel %vm6731, %v6727, 1326507024
        %v6742 = vsel %vm6730, %v6724, %v6741
        %v6743 = vsel %vm6729, %v6740, %v6742
        %v6744 = vshll.u32 %v6704, 8
        %v6745 = vmul.u32.u64.compose %v6744, %v6743
        %v6746 = vextract.low.u32 %v6745
        %v6747 = vextract.high.u32 %v6745
        %v6748 = vmul.u32.u64.compose %v6744, %v6739
        %v6749 = vextract.low.u32 %v6748
        %v6750 = vextract.high.u32 %v6748
        %v6751 = vmul.u32 %v6744, %v6735
        %v6752 = vadd.s32 %v6747, %v6749
        %vm6753 = vc.u32 %v6747, %v6749
        %v6754 = vadd.s32 %v6750, 1
        %v6755 = vsel %vm6753, %v6754, %v6750
        %v6756 = vadd.s32 %v6751, %v6755
        %v6757 = vadd.s32 %v6756, 536870912
        %v6758 = vshrl.u32 %v6757, 30
        %v6759 = vshll.u32 %v6758, 30
        %v6760 = vsub.s32 %v6756, %v6759
        %vm6761 = vcmp.lt.s32.totalorder %v6760, 0
        %v6762 = vsub.s32 0, %v6760
        %v6763 = vsel %vm6761, %v6762, %v6760
        %v6764 = vclz %v6763
        %v6765 = vsub.s32 %v6764, 2
        %vm6766 = vcmp.gt.s32.totalorder 0, %v6765
        %v6767 = vsel %vm6766, 0, %v6765
        %v6768 = vsub.s32 32, %v6767
        %v6769 = vshll.u32 %v6760, %v6767
        %v6770 = vshrl.u32 %v6752, %v6768
        %v6771 = vor.u32 %v6769, %v6770
        %v6772 = vsub.s32 4294967266, %v6767
        %v6773 = vadd.s32 %v6772, 127
        %v6774 = vshll.u32 %v6773, 23
        %v6775 = vor.u32 4788187, %v6774
        %v6776 = vand.u32 2147483647, %v6775
        %v6778 = vcvt.s32.f32 %v6771
        %v6779 = vmul.f32 %v6778, %v6776
        %v6780 = vxor.u32 %v6779, 2147483648
        %v6781 = vsel %vm6698, %v6780, %v6779
        %v6782 = vsub.s32 4, %v6758
        %v6783 = vsel %vm6698, %v6782, %v6758
        %v6784 = vsel %vm6697, %v296, %v6781
        %v6785 = vsel %vm6697, 0, %v6783
        %v6786 = vcosq.f32.pop %v6784
        %v6787 = vsinq.f32.pop %v6784
        %vm6788 = vweird.f32 %v296
        %v6789 = vadd.s32 %v6785, 3
        %v6790 = vand.u32 %v6789, 3
        %vm6791 = vcmp.lt.s32.totalorder %v6790, 2
        %vm6792 = vcmp.eq.s32.totalorder %v6790, 0
        %v6793 = vxor.u32 %v6787, 2147483648
        %v6794 = vsel %vm6792, %v6786, %v6793
        %vm6795 = vcmp.eq.s32.totalorder %v6790, 2
        %v6796 = vxor.u32 %v6786, 2147483648
        %v6797 = vsel %vm6795, %v6796, %v6787
        %v6798 = vsel %vm6791, %v6794, %v6797
        %v6799 = vsel %vm6788, nan, %v6798
        %v6800 = vand.u32 2147483647, %v297
        %vm6801 = vcmp.le.f32.partialorder %v6800, 0.7853982
        %vm6802 = vcmp.lt.s32.totalorder %v297, 0
        %v6803 = vand.u32 %v297, 2139095040
        %v6804 = vshrl.u32 %v6803, 23
        %v6805 = vsub.s32 %v6804, 127
        %v6806 = vand.u32 2147483647, %v297
        %v6807 = vand.u32 %v6806, 8388607
        %v6808 = vor.u32 %v6807, 8388608
        %v6809 = vsub.s32 0, %v6808
        %v6810 = vadd.s32 %v6805, 1
        %vm6811 = vcmp.gt.s32.totalorder %v6810, 0
        %v6812 = vsel %vm6811, %v6810, 0
        %v6813 = vshrl.u32 %v6812, 5
        %v6814 = vand.u32 %v6812, 31
        %v6815 = vsub.s32 32, %v6814
        %v6816 = vshrl.u32 683565275, %v6815
        %v6817 = vshll.u32 683565275, %v6814
        %v6818 = vshrl.u32 2475754826, %v6815
        %v6819 = vor.u32 %v6817, %v6818
        %v6820 = vshll.u32 2475754826, %v6814
        %v6821 = vshrl.u32 2131351028, %v6815
        %v6822 = vor.u32 %v6820, %v6821
        %v6823 = vshll.u32 2131351028, %v6814
        %v6824 = vshrl.u32 2102212464, %v6815
        %v6825 = vor.u32 %v6823, %v6824
        %v6826 = vshll.u32 2102212464, %v6814
        %v6827 = vshrl.u32 920167782, %v6815
        %v6828 = vor.u32 %v6826, %v6827
        %v6829 = vshll.u32 920167782, %v6814
        %v6830 = vshrl.u32 1326507024, %v6815
        %v6831 = vor.u32 %v6829, %v6830
        %vm6832 = vcmp.lt.s32.totalorder %v6813, 1
        %vm6833 = vcmp.lt.s32.totalorder %v6813, 2
        %vm6834 = vcmp.lt.s32.totalorder %v6813, 3
        %vm6835 = vcmp.lt.s32.totalorder %v6813, 4
        %v6836 = vsel %vm6832, %v6816, %v6819
        %v6837 = vsel %vm6835, %v6825, 2102212464
        %v6838 = vsel %vm6834, %v6822, %v6837
        %v6839 = vsel %vm6833, %v6836, %v6838
        %v6840 = vsel %vm6832, %v6819, %v6822
        %v6841 = vsel %vm6835, %v6828, 920167782
        %v6842 = vsel %vm6834, %v6825, %v6841
        %v6843 = vsel %vm6833, %v6840, %v6842
        %v6844 = vsel %vm6832, %v6822, %v6825
        %v6845 = vsel %vm6835, %v6831, 1326507024
        %v6846 = vsel %vm6834, %v6828, %v6845
        %v6847 = vsel %vm6833, %v6844, %v6846
        %v6848 = vshll.u32 %v6808, 8
        %v6849 = vmul.u32.u64.compose %v6848, %v6847
        %v6850 = vextract.low.u32 %v6849
        %v6851 = vextract.high.u32 %v6849
        %v6852 = vmul.u32.u64.compose %v6848, %v6843
        %v6853 = vextract.low.u32 %v6852
        %v6854 = vextract.high.u32 %v6852
        %v6855 = vmul.u32 %v6848, %v6839
        %v6856 = vadd.s32 %v6851, %v6853
        %vm6857 = vc.u32 %v6851, %v6853
        %v6858 = vadd.s32 %v6854, 1
        %v6859 = vsel %vm6857, %v6858, %v6854
        %v6860 = vadd.s32 %v6855, %v6859
        %v6861 = vadd.s32 %v6860, 536870912
        %v6862 = vshrl.u32 %v6861, 30
        %v6863 = vshll.u32 %v6862, 30
        %v6864 = vsub.s32 %v6860, %v6863
        %vm6865 = vcmp.lt.s32.totalorder %v6864, 0
        %v6866 = vsub.s32 0, %v6864
        %v6867 = vsel %vm6865, %v6866, %v6864
        %v6868 = vclz %v6867
        %v6869 = vsub.s32 %v6868, 2
        %vm6870 = vcmp.gt.s32.totalorder 0, %v6869
        %v6871 = vsel %vm6870, 0, %v6869
        %v6872 = vsub.s32 32, %v6871
        %v6873 = vshll.u32 %v6864, %v6871
        %v6874 = vshrl.u32 %v6856, %v6872
        %v6875 = vor.u32 %v6873, %v6874
        %v6876 = vsub.s32 4294967266, %v6871
        %v6877 = vadd.s32 %v6876, 127
        %v6878 = vshll.u32 %v6877, 23
        %v6879 = vor.u32 4788187, %v6878
        %v6880 = vand.u32 2147483647, %v6879
        %v6882 = vcvt.s32.f32 %v6875
        %v6883 = vmul.f32 %v6882, %v6880
        %v6884 = vxor.u32 %v6883, 2147483648
        %v6885 = vsel %vm6802, %v6884, %v6883
        %v6886 = vsub.s32 4, %v6862
        %v6887 = vsel %vm6802, %v6886, %v6862
        %v6888 = vsel %vm6801, %v297, %v6885
        %v6889 = vsel %vm6801, 0, %v6887
        %v6890 = vcosq.f32.pop %v6888
        %v6891 = vsinq.f32.pop %v6888
        %vm6892 = vweird.f32 %v297
        %v6893 = vadd.s32 %v6889, 3
        %v6894 = vand.u32 %v6893, 3
        %vm6895 = vcmp.lt.s32.totalorder %v6894, 2
        %vm6896 = vcmp.eq.s32.totalorder %v6894, 0
        %v6897 = vxor.u32 %v6891, 2147483648
        %v6898 = vsel %vm6896, %v6890, %v6897
        %vm6899 = vcmp.eq.s32.totalorder %v6894, 2
        %v6900 = vxor.u32 %v6890, 2147483648
        %v6901 = vsel %vm6899, %v6900, %v6891
        %v6902 = vsel %vm6895, %v6898, %v6901
        %v6903 = vsel %vm6892, nan, %v6902
        %v6904 = vand.u32 2147483647, %v298
        %vm6905 = vcmp.le.f32.partialorder %v6904, 0.7853982
        %vm6906 = vcmp.lt.s32.totalorder %v298, 0
        %v6907 = vand.u32 %v298, 2139095040
        %v6908 = vshrl.u32 %v6907, 23
        %v6909 = vsub.s32 %v6908, 127
        %v6910 = vand.u32 2147483647, %v298
        %v6911 = vand.u32 %v6910, 8388607
        %v6912 = vor.u32 %v6911, 8388608
        %v6913 = vsub.s32 0, %v6912
        %v6914 = vadd.s32 %v6909, 1
        %vm6915 = vcmp.gt.s32.totalorder %v6914, 0
        %v6916 = vsel %vm6915, %v6914, 0
        %v6917 = vshrl.u32 %v6916, 5
        %v6918 = vand.u32 %v6916, 31
        %v6919 = vsub.s32 32, %v6918
        %v6920 = vshrl.u32 683565275, %v6919
        %v6921 = vshll.u32 683565275, %v6918
        %v6922 = vshrl.u32 2475754826, %v6919
        %v6923 = vor.u32 %v6921, %v6922
        %v6924 = vshll.u32 2475754826, %v6918
        %v6925 = vshrl.u32 2131351028, %v6919
        %v6926 = vor.u32 %v6924, %v6925
        %v6927 = vshll.u32 2131351028, %v6918
        %v6928 = vshrl.u32 2102212464, %v6919
        %v6929 = vor.u32 %v6927, %v6928
        %v6930 = vshll.u32 2102212464, %v6918
        %v6931 = vshrl.u32 920167782, %v6919
        %v6932 = vor.u32 %v6930, %v6931
        %v6933 = vshll.u32 920167782, %v6918
        %v6934 = vshrl.u32 1326507024, %v6919
        %v6935 = vor.u32 %v6933, %v6934
        %vm6936 = vcmp.lt.s32.totalorder %v6917, 1
        %vm6937 = vcmp.lt.s32.totalorder %v6917, 2
        %vm6938 = vcmp.lt.s32.totalorder %v6917, 3
        %vm6939 = vcmp.lt.s32.totalorder %v6917, 4
        %v6940 = vsel %vm6936, %v6920, %v6923
        %v6941 = vsel %vm6939, %v6929, 2102212464
        %v6942 = vsel %vm6938, %v6926, %v6941
        %v6943 = vsel %vm6937, %v6940, %v6942
        %v6944 = vsel %vm6936, %v6923, %v6926
        %v6945 = vsel %vm6939, %v6932, 920167782
        %v6946 = vsel %vm6938, %v6929, %v6945
        %v6947 = vsel %vm6937, %v6944, %v6946
        %v6948 = vsel %vm6936, %v6926, %v6929
        %v6949 = vsel %vm6939, %v6935, 1326507024
        %v6950 = vsel %vm6938, %v6932, %v6949
        %v6951 = vsel %vm6937, %v6948, %v6950
        %v6952 = vshll.u32 %v6912, 8
        %v6953 = vmul.u32.u64.compose %v6952, %v6951
        %v6954 = vextract.low.u32 %v6953
        %v6955 = vextract.high.u32 %v6953
        %v6956 = vmul.u32.u64.compose %v6952, %v6947
        %v6957 = vextract.low.u32 %v6956
        %v6958 = vextract.high.u32 %v6956
        %v6959 = vmul.u32 %v6952, %v6943
        %v6960 = vadd.s32 %v6955, %v6957
        %vm6961 = vc.u32 %v6955, %v6957
        %v6962 = vadd.s32 %v6958, 1
        %v6963 = vsel %vm6961, %v6962, %v6958
        %v6964 = vadd.s32 %v6959, %v6963
        %v6965 = vadd.s32 %v6964, 536870912
        %v6966 = vshrl.u32 %v6965, 30
        %v6967 = vshll.u32 %v6966, 30
        %v6968 = vsub.s32 %v6964, %v6967
        %vm6969 = vcmp.lt.s32.totalorder %v6968, 0
        %v6970 = vsub.s32 0, %v6968
        %v6971 = vsel %vm6969, %v6970, %v6968
        %v6972 = vclz %v6971
        %v6973 = vsub.s32 %v6972, 2
        %vm6974 = vcmp.gt.s32.totalorder 0, %v6973
        %v6975 = vsel %vm6974, 0, %v6973
        %v6976 = vsub.s32 32, %v6975
        %v6977 = vshll.u32 %v6968, %v6975
        %v6978 = vshrl.u32 %v6960, %v6976
        %v6979 = vor.u32 %v6977, %v6978
        %v6980 = vsub.s32 4294967266, %v6975
        %v6981 = vadd.s32 %v6980, 127
        %v6982 = vshll.u32 %v6981, 23
        %v6983 = vor.u32 4788187, %v6982
        %v6984 = vand.u32 2147483647, %v6983
        %v6986 = vcvt.s32.f32 %v6979
        %v6987 = vmul.f32 %v6986, %v6984
        %v6988 = vxor.u32 %v6987, 2147483648
        %v6989 = vsel %vm6906, %v6988, %v6987
        %v6990 = vsub.s32 4, %v6966
        %v6991 = vsel %vm6906, %v6990, %v6966
        %v6992 = vsel %vm6905, %v298, %v6989
        %v6993 = vsel %vm6905, 0, %v6991
        %v6994 = vcosq.f32.pop %v6992
        %v6995 = vsinq.f32.pop %v6992
        %vm6996 = vweird.f32 %v298
        %v6997 = vadd.s32 %v6993, 3
        %v6998 = vand.u32 %v6997, 3
        %vm6999 = vcmp.lt.s32.totalorder %v6998, 2
        %vm7000 = vcmp.eq.s32.totalorder %v6998, 0
        %v7001 = vxor.u32 %v6995, 2147483648
        %v7002 = vsel %vm7000, %v6994, %v7001
        %vm7003 = vcmp.eq.s32.totalorder %v6998, 2
        %v7004 = vxor.u32 %v6994, 2147483648
        %v7005 = vsel %vm7003, %v7004, %v6995
        %v7006 = vsel %vm6999, %v7002, %v7005
        %v7007 = vsel %vm6996, nan, %v7006
        %v7008 = vand.u32 2147483647, %v299
        %vm7009 = vcmp.le.f32.partialorder %v7008, 0.7853982
        %vm7010 = vcmp.lt.s32.totalorder %v299, 0
        %v7011 = vand.u32 %v299, 2139095040
        %v7012 = vshrl.u32 %v7011, 23
        %v7013 = vsub.s32 %v7012, 127
        %v7014 = vand.u32 2147483647, %v299
        %v7015 = vand.u32 %v7014, 8388607
        %v7016 = vor.u32 %v7015, 8388608
        %v7017 = vsub.s32 0, %v7016
        %v7018 = vadd.s32 %v7013, 1
        %vm7019 = vcmp.gt.s32.totalorder %v7018, 0
        %v7020 = vsel %vm7019, %v7018, 0
        %v7021 = vshrl.u32 %v7020, 5
        %v7022 = vand.u32 %v7020, 31
        %v7023 = vsub.s32 32, %v7022
        %v7024 = vshrl.u32 683565275, %v7023
        %v7025 = vshll.u32 683565275, %v7022
        %v7026 = vshrl.u32 2475754826, %v7023
        %v7027 = vor.u32 %v7025, %v7026
        %v7028 = vshll.u32 2475754826, %v7022
        %v7029 = vshrl.u32 2131351028, %v7023
        %v7030 = vor.u32 %v7028, %v7029
        %v7031 = vshll.u32 2131351028, %v7022
        %v7032 = vshrl.u32 2102212464, %v7023
        %v7033 = vor.u32 %v7031, %v7032
        %v7034 = vshll.u32 2102212464, %v7022
        %v7035 = vshrl.u32 920167782, %v7023
        %v7036 = vor.u32 %v7034, %v7035
        %v7037 = vshll.u32 920167782, %v7022
        %v7038 = vshrl.u32 1326507024, %v7023
        %v7039 = vor.u32 %v7037, %v7038
        %vm7040 = vcmp.lt.s32.totalorder %v7021, 1
        %vm7041 = vcmp.lt.s32.totalorder %v7021, 2
        %vm7042 = vcmp.lt.s32.totalorder %v7021, 3
        %vm7043 = vcmp.lt.s32.totalorder %v7021, 4
        %v7044 = vsel %vm7040, %v7024, %v7027
        %v7045 = vsel %vm7043, %v7033, 2102212464
        %v7046 = vsel %vm7042, %v7030, %v7045
        %v7047 = vsel %vm7041, %v7044, %v7046
        %v7048 = vsel %vm7040, %v7027, %v7030
        %v7049 = vsel %vm7043, %v7036, 920167782
        %v7050 = vsel %vm7042, %v7033, %v7049
        %v7051 = vsel %vm7041, %v7048, %v7050
        %v7052 = vsel %vm7040, %v7030, %v7033
        %v7053 = vsel %vm7043, %v7039, 1326507024
        %v7054 = vsel %vm7042, %v7036, %v7053
        %v7055 = vsel %vm7041, %v7052, %v7054
        %v7056 = vshll.u32 %v7016, 8
        %v7057 = vmul.u32.u64.compose %v7056, %v7055
        %v7058 = vextract.low.u32 %v7057
        %v7059 = vextract.high.u32 %v7057
        %v7060 = vmul.u32.u64.compose %v7056, %v7051
        %v7061 = vextract.low.u32 %v7060
        %v7062 = vextract.high.u32 %v7060
        %v7063 = vmul.u32 %v7056, %v7047
        %v7064 = vadd.s32 %v7059, %v7061
        %vm7065 = vc.u32 %v7059, %v7061
        %v7066 = vadd.s32 %v7062, 1
        %v7067 = vsel %vm7065, %v7066, %v7062
        %v7068 = vadd.s32 %v7063, %v7067
        %v7069 = vadd.s32 %v7068, 536870912
        %v7070 = vshrl.u32 %v7069, 30
        %v7071 = vshll.u32 %v7070, 30
        %v7072 = vsub.s32 %v7068, %v7071
        %vm7073 = vcmp.lt.s32.totalorder %v7072, 0
        %v7074 = vsub.s32 0, %v7072
        %v7075 = vsel %vm7073, %v7074, %v7072
        %v7076 = vclz %v7075
        %v7077 = vsub.s32 %v7076, 2
        %vm7078 = vcmp.gt.s32.totalorder 0, %v7077
        %v7079 = vsel %vm7078, 0, %v7077
        %v7080 = vsub.s32 32, %v7079
        %v7081 = vshll.u32 %v7072, %v7079
        %v7082 = vshrl.u32 %v7064, %v7080
        %v7083 = vor.u32 %v7081, %v7082
        %v7084 = vsub.s32 4294967266, %v7079
        %v7085 = vadd.s32 %v7084, 127
        %v7086 = vshll.u32 %v7085, 23
        %v7087 = vor.u32 4788187, %v7086
        %v7088 = vand.u32 2147483647, %v7087
        %v7090 = vcvt.s32.f32 %v7083
        %v7091 = vmul.f32 %v7090, %v7088
        %v7092 = vxor.u32 %v7091, 2147483648
        %v7093 = vsel %vm7010, %v7092, %v7091
        %v7094 = vsub.s32 4, %v7070
        %v7095 = vsel %vm7010, %v7094, %v7070
        %v7096 = vsel %vm7009, %v299, %v7093
        %v7097 = vsel %vm7009, 0, %v7095
        %v7098 = vcosq.f32.pop %v7096
        %v7099 = vsinq.f32.pop %v7096
        %vm7100 = vweird.f32 %v299
        %v7101 = vadd.s32 %v7097, 3
        %v7102 = vand.u32 %v7101, 3
        %vm7103 = vcmp.lt.s32.totalorder %v7102, 2
        %vm7104 = vcmp.eq.s32.totalorder %v7102, 0
        %v7105 = vxor.u32 %v7099, 2147483648
        %v7106 = vsel %vm7104, %v7098, %v7105
        %vm7107 = vcmp.eq.s32.totalorder %v7102, 2
        %v7108 = vxor.u32 %v7098, 2147483648
        %v7109 = vsel %vm7107, %v7108, %v7099
        %v7110 = vsel %vm7103, %v7106, %v7109
        %v7111 = vsel %vm7100, nan, %v7110
        %v7112 = vand.u32 2147483647, %v300
        %vm7113 = vcmp.le.f32.partialorder %v7112, 0.7853982
        %vm7114 = vcmp.lt.s32.totalorder %v300, 0
        %v7115 = vand.u32 %v300, 2139095040
        %v7116 = vshrl.u32 %v7115, 23
        %v7117 = vsub.s32 %v7116, 127
        %v7118 = vand.u32 2147483647, %v300
        %v7119 = vand.u32 %v7118, 8388607
        %v7120 = vor.u32 %v7119, 8388608
        %v7121 = vsub.s32 0, %v7120
        %v7122 = vadd.s32 %v7117, 1
        %vm7123 = vcmp.gt.s32.totalorder %v7122, 0
        %v7124 = vsel %vm7123, %v7122, 0
        %v7125 = vshrl.u32 %v7124, 5
        %v7126 = vand.u32 %v7124, 31
        %v7127 = vsub.s32 32, %v7126
        %v7128 = vshrl.u32 683565275, %v7127
        %v7129 = vshll.u32 683565275, %v7126
        %v7130 = vshrl.u32 2475754826, %v7127
        %v7131 = vor.u32 %v7129, %v7130
        %v7132 = vshll.u32 2475754826, %v7126
        %v7133 = vshrl.u32 2131351028, %v7127
        %v7134 = vor.u32 %v7132, %v7133
        %v7135 = vshll.u32 2131351028, %v7126
        %v7136 = vshrl.u32 2102212464, %v7127
        %v7137 = vor.u32 %v7135, %v7136
        %v7138 = vshll.u32 2102212464, %v7126
        %v7139 = vshrl.u32 920167782, %v7127
        %v7140 = vor.u32 %v7138, %v7139
        %v7141 = vshll.u32 920167782, %v7126
        %v7142 = vshrl.u32 1326507024, %v7127
        %v7143 = vor.u32 %v7141, %v7142
        %vm7144 = vcmp.lt.s32.totalorder %v7125, 1
        %vm7145 = vcmp.lt.s32.totalorder %v7125, 2
        %vm7146 = vcmp.lt.s32.totalorder %v7125, 3
        %vm7147 = vcmp.lt.s32.totalorder %v7125, 4
        %v7148 = vsel %vm7144, %v7128, %v7131
        %v7149 = vsel %vm7147, %v7137, 2102212464
        %v7150 = vsel %vm7146, %v7134, %v7149
        %v7151 = vsel %vm7145, %v7148, %v7150
        %v7152 = vsel %vm7144, %v7131, %v7134
        %v7153 = vsel %vm7147, %v7140, 920167782
        %v7154 = vsel %vm7146, %v7137, %v7153
        %v7155 = vsel %vm7145, %v7152, %v7154
        %v7156 = vsel %vm7144, %v7134, %v7137
        %v7157 = vsel %vm7147, %v7143, 1326507024
        %v7158 = vsel %vm7146, %v7140, %v7157
        %v7159 = vsel %vm7145, %v7156, %v7158
        %v7160 = vshll.u32 %v7120, 8
        %v7161 = vmul.u32.u64.compose %v7160, %v7159
        %v7162 = vextract.low.u32 %v7161
        %v7163 = vextract.high.u32 %v7161
        %v7164 = vmul.u32.u64.compose %v7160, %v7155
        %v7165 = vextract.low.u32 %v7164
        %v7166 = vextract.high.u32 %v7164
        %v7167 = vmul.u32 %v7160, %v7151
        %v7168 = vadd.s32 %v7163, %v7165
        %vm7169 = vc.u32 %v7163, %v7165
        %v7170 = vadd.s32 %v7166, 1
        %v7171 = vsel %vm7169, %v7170, %v7166
        %v7172 = vadd.s32 %v7167, %v7171
        %v7173 = vadd.s32 %v7172, 536870912
        %v7174 = vshrl.u32 %v7173, 30
        %v7175 = vshll.u32 %v7174, 30
        %v7176 = vsub.s32 %v7172, %v7175
        %vm7177 = vcmp.lt.s32.totalorder %v7176, 0
        %v7178 = vsub.s32 0, %v7176
        %v7179 = vsel %vm7177, %v7178, %v7176
        %v7180 = vclz %v7179
        %v7181 = vsub.s32 %v7180, 2
        %vm7182 = vcmp.gt.s32.totalorder 0, %v7181
        %v7183 = vsel %vm7182, 0, %v7181
        %v7184 = vsub.s32 32, %v7183
        %v7185 = vshll.u32 %v7176, %v7183
        %v7186 = vshrl.u32 %v7168, %v7184
        %v7187 = vor.u32 %v7185, %v7186
        %v7188 = vsub.s32 4294967266, %v7183
        %v7189 = vadd.s32 %v7188, 127
        %v7190 = vshll.u32 %v7189, 23
        %v7191 = vor.u32 4788187, %v7190
        %v7192 = vand.u32 2147483647, %v7191
        %v7194 = vcvt.s32.f32 %v7187
        %v7195 = vmul.f32 %v7194, %v7192
        %v7196 = vxor.u32 %v7195, 2147483648
        %v7197 = vsel %vm7114, %v7196, %v7195
        %v7198 = vsub.s32 4, %v7174
        %v7199 = vsel %vm7114, %v7198, %v7174
        %v7200 = vsel %vm7113, %v300, %v7197
        %v7201 = vsel %vm7113, 0, %v7199
        %v7202 = vcosq.f32.pop %v7200
        %v7203 = vsinq.f32.pop %v7200
        %vm7204 = vweird.f32 %v300
        %v7205 = vadd.s32 %v7201, 3
        %v7206 = vand.u32 %v7205, 3
        %vm7207 = vcmp.lt.s32.totalorder %v7206, 2
        %vm7208 = vcmp.eq.s32.totalorder %v7206, 0
        %v7209 = vxor.u32 %v7203, 2147483648
        %v7210 = vsel %vm7208, %v7202, %v7209
        %vm7211 = vcmp.eq.s32.totalorder %v7206, 2
        %v7212 = vxor.u32 %v7202, 2147483648
        %v7213 = vsel %vm7211, %v7212, %v7203
        %v7214 = vsel %vm7207, %v7210, %v7213
        %v7215 = vsel %vm7204, nan, %v7214
        %v7216 = vstv %s233
        %v7217 = vmul.f32 %v7216, %v663
        %v7218 = vmul.f32 %v7216, %v767
        %v7219 = vmul.f32 %v7216, %v871
        %v7220 = vmul.f32 %v7216, %v975
        %v7221 = vmul.f32 %v7216, %v1079
        %v7222 = vmul.f32 %v7216, %v1183
        %v7223 = vmul.f32 %v7216, %v1287
        %v7224 = vmul.f32 %v7216, %v1391
        %v7225 = vmul.f32 %v7216, %v1495
        %v7226 = vmul.f32 %v7216, %v1599
        %v7227 = vmul.f32 %v7216, %v1703
        %v7228 = vmul.f32 %v7216, %v1807
        %v7229 = vmul.f32 %v7216, %v1911
        %v7230 = vmul.f32 %v7216, %v2015
        %v7231 = vmul.f32 %v7216, %v2119
        %v7232 = vmul.f32 %v7216, %v2223
        %v7233 = vmul.f32 %v7216, %v2327
        %v7234 = vmul.f32 %v7216, %v2431
        %v7235 = vmul.f32 %v7216, %v2535
        %v7236 = vmul.f32 %v7216, %v2639
        %v7237 = vmul.f32 %v7216, %v2743
        %v7238 = vmul.f32 %v7216, %v2847
        %v7239 = vmul.f32 %v7216, %v2951
        %v7240 = vmul.f32 %v7216, %v3055
        %v7241 = vmul.f32 %v7216, %v3159
        %v7242 = vmul.f32 %v7216, %v3263
        %v7243 = vmul.f32 %v7216, %v3367
        %v7244 = vmul.f32 %v7216, %v3471
        %v7245 = vmul.f32 %v7216, %v3575
        %v7246 = vmul.f32 %v7216, %v3679
        %v7247 = vmul.f32 %v7216, %v3783
        %v7248 = vmul.f32 %v7216, %v3887
        %v7249 = vmul.f32 %v7216, %v3991
        %v7250 = vmul.f32 %v7216, %v4095
        %v7251 = vmul.f32 %v7216, %v4199
        %v7252 = vmul.f32 %v7216, %v4303
        %v7253 = vmul.f32 %v7216, %v4407
        %v7254 = vmul.f32 %v7216, %v4511
        %v7255 = vmul.f32 %v7216, %v4615
        %v7256 = vmul.f32 %v7216, %v4719
        %v7257 = vmul.f32 %v7216, %v4823
        %v7258 = vmul.f32 %v7216, %v4927
        %v7259 = vmul.f32 %v7216, %v5031
        %v7260 = vmul.f32 %v7216, %v5135
        %v7261 = vmul.f32 %v7216, %v5239
        %v7262 = vmul.f32 %v7216, %v5343
        %v7263 = vmul.f32 %v7216, %v5447
        %v7264 = vmul.f32 %v7216, %v5551
        %v7265 = vmul.f32 %v7216, %v5655
        %v7266 = vmul.f32 %v7216, %v5759
        %v7267 = vmul.f32 %v7216, %v5863
        %v7268 = vmul.f32 %v7216, %v5967
        %v7269 = vmul.f32 %v7216, %v6071
        %v7270 = vmul.f32 %v7216, %v6175
        %v7271 = vmul.f32 %v7216, %v6279
        %v7272 = vmul.f32 %v7216, %v6383
        %v7273 = vmul.f32 %v7216, %v6487
        %v7274 = vmul.f32 %v7216, %v6591
        %v7275 = vmul.f32 %v7216, %v6695
        %v7276 = vmul.f32 %v7216, %v6799
        %v7277 = vmul.f32 %v7216, %v6903
        %v7278 = vmul.f32 %v7216, %v7007
        %v7279 = vmul.f32 %v7216, %v7111
        %v7280 = vmul.f32 %v7216, %v7215
        %v7281 = vadd.f32 %v496, %v7217
        %v7282 = vadd.f32 %v497, %v7218
        %v7283 = vadd.f32 %v498, %v7219
        %v7284 = vadd.f32 %v499, %v7220
        %v7285 = vadd.f32 %v500, %v7221
        %v7286 = vadd.f32 %v501, %v7222
        %v7287 = vadd.f32 %v502, %v7223
        %v7288 = vadd.f32 %v503, %v7224
        %v7289 = vadd.f32 %v504, %v7225
        %v7290 = vadd.f32 %v505, %v7226
        %v7291 = vadd.f32 %v506, %v7227
        %v7292 = vadd.f32 %v507, %v7228
        %v7293 = vadd.f32 %v508, %v7229
        %v7294 = vadd.f32 %v509, %v7230
        %v7295 = vadd.f32 %v510, %v7231
        %v7296 = vadd.f32 %v511, %v7232
        %v7297 = vadd.f32 %v512, %v7233
        %v7298 = vadd.f32 %v513, %v7234
        %v7299 = vadd.f32 %v514, %v7235
        %v7300 = vadd.f32 %v515, %v7236
        %v7301 = vadd.f32 %v516, %v7237
        %v7302 = vadd.f32 %v517, %v7238
        %v7303 = vadd.f32 %v518, %v7239
        %v7304 = vadd.f32 %v519, %v7240
        %v7305 = vadd.f32 %v520, %v7241
        %v7306 = vadd.f32 %v521, %v7242
        %v7307 = vadd.f32 %v522, %v7243
        %v7308 = vadd.f32 %v523, %v7244
        %v7309 = vadd.f32 %v524, %v7245
        %v7310 = vadd.f32 %v525, %v7246
        %v7311 = vadd.f32 %v526, %v7247
        %v7312 = vadd.f32 %v527, %v7248
        %v7313 = vadd.f32 %v528, %v7249
        %v7314 = vadd.f32 %v529, %v7250
        %v7315 = vadd.f32 %v530, %v7251
        %v7316 = vadd.f32 %v531, %v7252
        %v7317 = vadd.f32 %v532, %v7253
        %v7318 = vadd.f32 %v533, %v7254
        %v7319 = vadd.f32 %v534, %v7255
        %v7320 = vadd.f32 %v535, %v7256
        %v7321 = vadd.f32 %v536, %v7257
        %v7322 = vadd.f32 %v537, %v7258
        %v7323 = vadd.f32 %v538, %v7259
        %v7324 = vadd.f32 %v539, %v7260
        %v7325 = vadd.f32 %v540, %v7261
        %v7326 = vadd.f32 %v541, %v7262
        %v7327 = vadd.f32 %v542, %v7263
        %v7328 = vadd.f32 %v543, %v7264
        %v7329 = vadd.f32 %v544, %v7265
        %v7330 = vadd.f32 %v545, %v7266
        %v7331 = vadd.f32 %v546, %v7267
        %v7332 = vadd.f32 %v547, %v7268
        %v7333 = vadd.f32 %v548, %v7269
        %v7334 = vadd.f32 %v549, %v7270
        %v7335 = vadd.f32 %v550, %v7271
        %v7336 = vadd.f32 %v551, %v7272
        %v7337 = vadd.f32 %v552, %v7273
        %v7338 = vadd.f32 %v553, %v7274
        %v7339 = vadd.f32 %v554, %v7275
        %v7340 = vadd.f32 %v555, %v7276
        %v7341 = vadd.f32 %v556, %v7277
        %v7342 = vadd.f32 %v557, %v7278
        %v7343 = vadd.f32 %v558, %v7279
        %v7344 = vadd.f32 %v559, %v7280
        %v7345 = vstv %s236
        %v7346 = vadd.f32 %v7281, %v7345
        %v7347 = vadd.f32 %v7282, %v7345
        %v7348 = vadd.f32 %v7283, %v7345
        %v7349 = vadd.f32 %v7284, %v7345
        %v7350 = vadd.f32 %v7285, %v7345
        %v7351 = vadd.f32 %v7286, %v7345
        %v7352 = vadd.f32 %v7287, %v7345
        %v7353 = vadd.f32 %v7288, %v7345
        %v7354 = vadd.f32 %v7289, %v7345
        %v7355 = vadd.f32 %v7290, %v7345
        %v7356 = vadd.f32 %v7291, %v7345
        %v7357 = vadd.f32 %v7292, %v7345
        %v7358 = vadd.f32 %v7293, %v7345
        %v7359 = vadd.f32 %v7294, %v7345
        %v7360 = vadd.f32 %v7295, %v7345
        %v7361 = vadd.f32 %v7296, %v7345
        %v7362 = vadd.f32 %v7297, %v7345
        %v7363 = vadd.f32 %v7298, %v7345
        %v7364 = vadd.f32 %v7299, %v7345
        %v7365 = vadd.f32 %v7300, %v7345
        %v7366 = vadd.f32 %v7301, %v7345
        %v7367 = vadd.f32 %v7302, %v7345
        %v7368 = vadd.f32 %v7303, %v7345
        %v7369 = vadd.f32 %v7304, %v7345
        %v7370 = vadd.f32 %v7305, %v7345
        %v7371 = vadd.f32 %v7306, %v7345
        %v7372 = vadd.f32 %v7307, %v7345
        %v7373 = vadd.f32 %v7308, %v7345
        %v7374 = vadd.f32 %v7309, %v7345
        %v7375 = vadd.f32 %v7310, %v7345
        %v7376 = vadd.f32 %v7311, %v7345
        %v7377 = vadd.f32 %v7312, %v7345
        %v7378 = vadd.f32 %v7313, %v7345
        %v7379 = vadd.f32 %v7314, %v7345
        %v7380 = vadd.f32 %v7315, %v7345
        %v7381 = vadd.f32 %v7316, %v7345
        %v7382 = vadd.f32 %v7317, %v7345
        %v7383 = vadd.f32 %v7318, %v7345
        %v7384 = vadd.f32 %v7319, %v7345
        %v7385 = vadd.f32 %v7320, %v7345
        %v7386 = vadd.f32 %v7321, %v7345
        %v7387 = vadd.f32 %v7322, %v7345
        %v7388 = vadd.f32 %v7323, %v7345
        %v7389 = vadd.f32 %v7324, %v7345
        %v7390 = vadd.f32 %v7325, %v7345
        %v7391 = vadd.f32 %v7326, %v7345
        %v7392 = vadd.f32 %v7327, %v7345
        %v7393 = vadd.f32 %v7328, %v7345
        %v7394 = vadd.f32 %v7329, %v7345
        %v7395 = vadd.f32 %v7330, %v7345
        %v7396 = vadd.f32 %v7331, %v7345
        %v7397 = vadd.f32 %v7332, %v7345
        %v7398 = vadd.f32 %v7333, %v7345
        %v7399 = vadd.f32 %v7334, %v7345
        %v7400 = vadd.f32 %v7335, %v7345
        %v7401 = vadd.f32 %v7336, %v7345
        %v7402 = vadd.f32 %v7337, %v7345
        %v7403 = vadd.f32 %v7338, %v7345
        %v7404 = vadd.f32 %v7339, %v7345
        %v7405 = vadd.f32 %v7340, %v7345
        %v7406 = vadd.f32 %v7341, %v7345
        %v7407 = vadd.f32 %v7342, %v7345
        %v7408 = vadd.f32 %v7343, %v7345
        %v7409 = vadd.f32 %v7344, %v7345
        %7410 = vst [vmem:[%s228] sm:$0xff] %v431
        %7411 = vst [vmem:[%s228 + $0x8] sm:$0xff] %v432
        %7412 = vst [vmem:[%s228 + $0x10] sm:$0xff] %v433
        %7413 = vst [vmem:[%s228 + $0x18] sm:$0xff] %v434
        %7414 = vst [vmem:[%s228 + $0x20] sm:$0xff] %v435
        %7415 = vst [vmem:[%s228 + $0x28] sm:$0xff] %v436
        %7416 = vst [vmem:[%s228 + $0x30] sm:$0xff] %v437
        %7417 = vst [vmem:[%s228 + $0x38] sm:$0xff] %v438
        %7418 = vst [vmem:[%s228 + $0x40] sm:$0xff] %v439
        %7419 = vst [vmem:[%s228 + $0x48] sm:$0xff] %v440
        %7420 = vst [vmem:[%s228 + $0x50] sm:$0xff] %v441
        %7421 = vst [vmem:[%s228 + $0x58] sm:$0xff] %v442
        %7422 = vst [vmem:[%s228 + $0x60] sm:$0xff] %v443
        %7423 = vst [vmem:[%s228 + $0x68] sm:$0xff] %v444
        %7424 = vst [vmem:[%s228 + $0x70] sm:$0xff] %v445
        %7425 = vst [vmem:[%s228 + $0x78] sm:$0xff] %v446
        %7426 = vst [vmem:[%s228 + $0x80] sm:$0xff] %v447
        %7427 = vst [vmem:[%s228 + $0x88] sm:$0xff] %v448
        %7428 = vst [vmem:[%s228 + $0x90] sm:$0xff] %v449
        %7429 = vst [vmem:[%s228 + $0x98] sm:$0xff] %v450
        %7430 = vst [vmem:[%s228 + $0xa0] sm:$0xff] %v451
        %7431 = vst [vmem:[%s228 + $0xa8] sm:$0xff] %v452
        %7432 = vst [vmem:[%s228 + $0xb0] sm:$0xff] %v453
        %7433 = vst [vmem:[%s228 + $0xb8] sm:$0xff] %v454
        %7434 = vst [vmem:[%s228 + $0xc0] sm:$0xff] %v455
        %7435 = vst [vmem:[%s228 + $0xc8] sm:$0xff] %v456
        %7436 = vst [vmem:[%s228 + $0xd0] sm:$0xff] %v457
        %7437 = vst [vmem:[%s228 + $0xd8] sm:$0xff] %v458
        %7438 = vst [vmem:[%s228 + $0xe0] sm:$0xff] %v459
        %7439 = vst [vmem:[%s228 + $0xe8] sm:$0xff] %v460
        %7440 = vst [vmem:[%s228 + $0xf0] sm:$0xff] %v461
        %7441 = vst [vmem:[%s228 + $0xf8] sm:$0xff] %v462
        %7442 = vst [vmem:[%s228 + $0x100] sm:$0xff] %v463
        %7443 = vst [vmem:[%s228 + $0x108] sm:$0xff] %v464
        %7444 = vst [vmem:[%s228 + $0x110] sm:$0xff] %v465
        %7445 = vst [vmem:[%s228 + $0x118] sm:$0xff] %v466
        %7446 = vst [vmem:[%s228 + $0x120] sm:$0xff] %v467
        %7447 = vst [vmem:[%s228 + $0x128] sm:$0xff] %v468
        %7448 = vst [vmem:[%s228 + $0x130] sm:$0xff] %v469
        %7449 = vst [vmem:[%s228 + $0x138] sm:$0xff] %v470
        %7450 = vst [vmem:[%s228 + $0x140] sm:$0xff] %v471
        %7451 = vst [vmem:[%s228 + $0x148] sm:$0xff] %v472
        %7452 = vst [vmem:[%s228 + $0x150] sm:$0xff] %v473
        %7453 = vst [vmem:[%s228 + $0x158] sm:$0xff] %v474
        %7454 = vst [vmem:[%s228 + $0x160] sm:$0xff] %v475
        %7455 = vst [vmem:[%s228 + $0x168] sm:$0xff] %v476
        %7456 = vst [vmem:[%s228 + $0x170] sm:$0xff] %v477
        %7457 = vst [vmem:[%s228 + $0x178] sm:$0xff] %v478
        %7458 = vst [vmem:[%s228 + $0x180] sm:$0xff] %v479
        %7459 = vst [vmem:[%s228 + $0x188] sm:$0xff] %v480
        %7460 = vst [vmem:[%s228 + $0x190] sm:$0xff] %v481
        %7461 = vst [vmem:[%s228 + $0x198] sm:$0xff] %v482
        %7462 = vst [vmem:[%s228 + $0x1a0] sm:$0xff] %v483
        %7463 = vst [vmem:[%s228 + $0x1a8] sm:$0xff] %v484
        %7464 = vst [vmem:[%s228 + $0x1b0] sm:$0xff] %v485
        %7465 = vst [vmem:[%s228 + $0x1b8] sm:$0xff] %v486
        %7466 = vst [vmem:[%s228 + $0x1c0] sm:$0xff] %v487
        %7467 = vst [vmem:[%s228 + $0x1c8] sm:$0xff] %v488
        %7468 = vst [vmem:[%s228 + $0x1d0] sm:$0xff] %v489
        %7469 = vst [vmem:[%s228 + $0x1d8] sm:$0xff] %v490
        %7470 = vst [vmem:[%s228 + $0x1e0] sm:$0xff] %v491
        %7471 = vst [vmem:[%s228 + $0x1e8] sm:$0xff] %v492
        %7472 = vst [vmem:[%s228 + $0x1f0] sm:$0xff] %v493
        %7473 = vst [vmem:[%s228 + $0x1f8] sm:$0xff] %v494
        %s7474 = scalar_lea.vmem %s228, 512 [#allocation8]
        %7475 = vst [vmem:[%s7474] sm:$0xff] %v7346
        %7476 = vst [vmem:[%s7474 + $0x8] sm:$0xff] %v7347
        %7477 = vst [vmem:[%s7474 + $0x10] sm:$0xff] %v7348
        %7478 = vst [vmem:[%s7474 + $0x18] sm:$0xff] %v7349
        %7479 = vst [vmem:[%s7474 + $0x20] sm:$0xff] %v7350
        %7480 = vst [vmem:[%s7474 + $0x28] sm:$0xff] %v7351
        %7481 = vst [vmem:[%s7474 + $0x30] sm:$0xff] %v7352
        %7482 = vst [vmem:[%s7474 + $0x38] sm:$0xff] %v7353
        %7483 = vst [vmem:[%s7474 + $0x40] sm:$0xff] %v7354
        %7484 = vst [vmem:[%s7474 + $0x48] sm:$0xff] %v7355
        %7485 = vst [vmem:[%s7474 + $0x50] sm:$0xff] %v7356
        %7486 = vst [vmem:[%s7474 + $0x58] sm:$0xff] %v7357
        %7487 = vst [vmem:[%s7474 + $0x60] sm:$0xff] %v7358
        %7488 = vst [vmem:[%s7474 + $0x68] sm:$0xff] %v7359
        %7489 = vst [vmem:[%s7474 + $0x70] sm:$0xff] %v7360
        %7490 = vst [vmem:[%s7474 + $0x78] sm:$0xff] %v7361
        %7491 = vst [vmem:[%s7474 + $0x80] sm:$0xff] %v7362
        %7492 = vst [vmem:[%s7474 + $0x88] sm:$0xff] %v7363
        %7493 = vst [vmem:[%s7474 + $0x90] sm:$0xff] %v7364
        %7494 = vst [vmem:[%s7474 + $0x98] sm:$0xff] %v7365
        %7495 = vst [vmem:[%s7474 + $0xa0] sm:$0xff] %v7366
        %7496 = vst [vmem:[%s7474 + $0xa8] sm:$0xff] %v7367
        %7497 = vst [vmem:[%s7474 + $0xb0] sm:$0xff] %v7368
        %7498 = vst [vmem:[%s7474 + $0xb8] sm:$0xff] %v7369
        %7499 = vst [vmem:[%s7474 + $0xc0] sm:$0xff] %v7370
        %7500 = vst [vmem:[%s7474 + $0xc8] sm:$0xff] %v7371
        %7501 = vst [vmem:[%s7474 + $0xd0] sm:$0xff] %v7372
        %7502 = vst [vmem:[%s7474 + $0xd8] sm:$0xff] %v7373
        %7503 = vst [vmem:[%s7474 + $0xe0] sm:$0xff] %v7374
        %7504 = vst [vmem:[%s7474 + $0xe8] sm:$0xff] %v7375
        %7505 = vst [vmem:[%s7474 + $0xf0] sm:$0xff] %v7376
        %7506 = vst [vmem:[%s7474 + $0xf8] sm:$0xff] %v7377
        %7507 = vst [vmem:[%s7474 + $0x100] sm:$0xff] %v7378
        %7508 = vst [vmem:[%s7474 + $0x108] sm:$0xff] %v7379
        %7509 = vst [vmem:[%s7474 + $0x110] sm:$0xff] %v7380
        %7510 = vst [vmem:[%s7474 + $0x118] sm:$0xff] %v7381
        %7511 = vst [vmem:[%s7474 + $0x120] sm:$0xff] %v7382
        %7512 = vst [vmem:[%s7474 + $0x128] sm:$0xff] %v7383
        %7513 = vst [vmem:[%s7474 + $0x130] sm:$0xff] %v7384
        %7514 = vst [vmem:[%s7474 + $0x138] sm:$0xff] %v7385
        %7515 = vst [vmem:[%s7474 + $0x140] sm:$0xff] %v7386
        %7516 = vst [vmem:[%s7474 + $0x148] sm:$0xff] %v7387
        %7517 = vst [vmem:[%s7474 + $0x150] sm:$0xff] %v7388
        %7518 = vst [vmem:[%s7474 + $0x158] sm:$0xff] %v7389
        %7519 = vst [vmem:[%s7474 + $0x160] sm:$0xff] %v7390
        %7520 = vst [vmem:[%s7474 + $0x168] sm:$0xff] %v7391
        %7521 = vst [vmem:[%s7474 + $0x170] sm:$0xff] %v7392
        %7522 = vst [vmem:[%s7474 + $0x178] sm:$0xff] %v7393
        %7523 = vst [vmem:[%s7474 + $0x180] sm:$0xff] %v7394
        %7524 = vst [vmem:[%s7474 + $0x188] sm:$0xff] %v7395
        %7525 = vst [vmem:[%s7474 + $0x190] sm:$0xff] %v7396
        %7526 = vst [vmem:[%s7474 + $0x198] sm:$0xff] %v7397
        %7527 = vst [vmem:[%s7474 + $0x1a0] sm:$0xff] %v7398
        %7528 = vst [vmem:[%s7474 + $0x1a8] sm:$0xff] %v7399
        %7529 = vst [vmem:[%s7474 + $0x1b0] sm:$0xff] %v7400
        %7530 = vst [vmem:[%s7474 + $0x1b8] sm:$0xff] %v7401
        %7531 = vst [vmem:[%s7474 + $0x1c0] sm:$0xff] %v7402
        %7532 = vst [vmem:[%s7474 + $0x1c8] sm:$0xff] %v7403
        %7533 = vst [vmem:[%s7474 + $0x1d0] sm:$0xff] %v7404
        %7534 = vst [vmem:[%s7474 + $0x1d8] sm:$0xff] %v7405
        %7535 = vst [vmem:[%s7474 + $0x1e0] sm:$0xff] %v7406
        %7536 = vst [vmem:[%s7474 + $0x1e8] sm:$0xff] %v7407
        %7537 = vst [vmem:[%s7474 + $0x1f0] sm:$0xff] %v7408
        %7538 = vst [vmem:[%s7474 + $0x1f8] sm:$0xff] %v7409
        %s7539 = sand.u32 %s98, 1
        %s7540 = scalar_lea.sflag [#allocation5], %s7539
        %s7541 = sand.u32 %s98, 1
        %s7542 = smul.addr %s7541, 1024
        %s7543 = scalar_lea.vmem [#allocation8], %s7542
        // Predicated region
        $region41: #{inverse_pendulum_forward.1} parent=31 // pred_check
          %p7544 = pneg %p108
        $region42: #{inverse_pendulum_forward.1} parent=31 // pred_check_branch
          %7546 = sbr.rel (%p7544) target = $region44
        $region43: #{inverse_pendulum_forward.1} parent=31 // pred_region
          #allocation12 [shape = 'u32[6]{0}', space=smem, size = 0x18, scoped, tag = 'DMA stride descriptor']
          %s7547 = smul.u32 64, %s22
          %s7549 = ssub.s32 16384, 16384
          %7550 = vsyncadd %s7540, %s7549
          %s7551 = smul.addr %s7547, 128
          %s7552 = scalar_lea.hbm %s3, %s7551
          %s7554 = sshll.u32 1, 14
          %s7555 = sxor.u32 4294967295, %s7554
          %s7558 = sshll.u32 7, 18
          %s7559 = sxor.u32 4294967295, %s7558
          %s7560 = sand.u32 0, %s7559
          %s7562 = sor.u32 %s7560, 0
          %s7563 = sshll.u32 %s7543, 4
          %s7564 = int_to_ptr.vmem [resolvable:$true] %s7563
          %7570 = sst [smem:[#allocation12]] 8192
          %s7571 = scalar_lea.smem [#allocation12], 1
          %7572 = sst [smem:[%s7571]] 16384
          %s7573 = scalar_lea.smem [#allocation12], 2
          %7574 = sst [smem:[%s7573]] 64
          %s7575 = scalar_lea.smem [#allocation12], 3
          %7576 = sst [smem:[%s7575]] 128
          %s7577 = scalar_lea.smem [#allocation12], 4
          %7578 = sst [smem:[%s7577]] 128
          %s7579 = scalar_lea.smem [#allocation12], 5
          %7580 = sst [smem:[%s7579]] 8
          %7582 = dma.general %s7564, 16384, %s7552, %s7540, 131072, [#allocation12], %s7562, 0
        $region44: #{inverse_pendulum_forward.1} parent=31 // pred_fallthru
          _
      $region32: #{inverse_pendulum_forward.1} parent=5 // pred_fallthru
        _
      %p7583 = scmp.le.s32.totalorder 2, %s17
      // Predicated region
      $region45: #{inverse_pendulum_forward.1} parent=5 // pred_check
        %p7584 = pneg %p7583
      $region46: #{inverse_pendulum_forward.1} parent=5 // pred_check_branch
        %7586 = sbr.rel (%p7584) target = $region48
      $region47: #{inverse_pendulum_forward.1} parent=5 // pred_region
        %s7587 = ssub.s32 %s17, 2
        // Predicated region
        $region49: #{inverse_pendulum_forward.1} parent=47 // pred_check
          %p7588 = pneg %p114
        $region50: #{inverse_pendulum_forward.1} parent=47 // pred_check_branch
          %7590 = sbr.rel (%p7588) target = $region52
        $region51: #{inverse_pendulum_forward.1} parent=47 // pred_region
          %s7591 = sand.u32 %s99, 1
          %s7592 = scalar_lea.sflag [#allocation5], %s7591
          %s7593 = sand.u32 %s99, 1
          %s7594 = smul.addr %s7593, 1024
          %s7595 = scalar_lea.vmem [#allocation8], %s7594
          %7596 = dma.done %s7592, 16384
        $region52: #{inverse_pendulum_forward.1} parent=47 // pred_fallthru
          _
      $region48: #{inverse_pendulum_forward.1} parent=5 // pred_fallthru
        _
    $region6: #{inverse_pendulum_forward.1} parent=1 // loop_footer
      %s21 = sadd.s32 1, %s17
    $region7: #{inverse_pendulum_forward.1} parent=1 // loop_footer_branch
      %16 = sbr.rel target = $region3
    $region8: #{inverse_pendulum_forward.1} parent=1 // loop_exit
      _
    %7597 = vsyncpa [#allocation4], 1
    %s7598 = scalar_lea.sflag [#allocation4], 1
    %7599 = vsyncpa %s7598, 1
    %7600 = vsyncpa [#allocation5], 1
    %s7601 = scalar_lea.sflag [#allocation5], 1
    %7602 = vsyncpa %s7601, 1
    %7603 = vsyncpa [#allocation6], 1
    %s7604 = scalar_lea.sflag [#allocation6], 1
    %7605 = vsyncpa %s7604, 1

</llo_original>
